<compile_context>
chip_gen: v6e
topology: v6e:2x2x1
jax: 0.10.0
libtpu: 0.0.40
codegen_flags: <defaults>
</compile_context>

<pallas_src>
import functools
import math

import jax
import jax.numpy as jnp
from jax.experimental import pallas as pl
from jax.experimental.pallas import tpu as pltpu


def _attn_layer_kernel(tgt_ref, pos_ref,
                       wqk_ref, wv_ref, wo_ref,
                       bq_ref, bv_ref, bo_ref,
                       ln_g_ref, ln_b_ref,
                       out_ref, attn_scratch,
                       *, nhead: int):
    L, Bt, D = tgt_ref.shape          # block: (seq, batch_tile, d_model)
    hd = D // nhead

    x_lbd = tgt_ref[...]                              # (L, Bt, D) f32
    qk_lbd = x_lbd + pos_ref[...]                     # with_pos_embed

    # One batch-leading relayout per streamed operand (minor dim D stays put);
    # everything below runs in (Bt, L, ...) / (Bt*L, D) order.
    x = jnp.transpose(x_lbd, (1, 0, 2)).reshape(Bt * L, D)
    qk_in = jnp.transpose(qk_lbd, (1, 0, 2)).reshape(Bt * L, D)

    # Fused q/k projection and v projection: bf16 MXU operands, f32 accum.
    # Weights are pre-transposed (x @ W) and the q half carries 1/sqrt(hd).
    qk = jnp.dot(qk_in.astype(jnp.bfloat16), wqk_ref[...],
                 preferred_element_type=jnp.float32)                  # (Bt*L, 2D)
    v = jnp.dot(x.astype(jnp.bfloat16), wv_ref[...],
                preferred_element_type=jnp.float32) + bv_ref[...]     # (Bt*L, D)

    # k-bias dropped: it adds the same offset to every score of a row and
    # cancels in softmax.  q keeps its (pre-scaled) bias.
    q3 = (qk[:, :D] + bq_ref[...]).reshape(Bt, L, D).astype(jnp.bfloat16)
    k3 = qk[:, D:].reshape(Bt, L, D).astype(jnp.bfloat16)
    v3 = v.reshape(Bt, L, D).astype(jnp.bfloat16)

    # Head-batched attention: gather the hd-wide lane slices once per operand,
    # stack them on the leading (batch) axis, and run a single batched
    # score -> softmax -> P.V chain (bounded live ranges, one exp pass) instead
    # of an unrolled per-head loop.
    def split_heads(t):                               # (Bt, L, D) -> (H*Bt, L, hd)
        return jnp.concatenate(
            [t[:, :, h * hd:(h + 1) * hd] for h in range(nhead)], axis=0)

    qh, kh, vh = split_heads(q3), split_heads(k3), split_heads(v3)

    s = jnp.einsum("bqd,bkd->bqk", qh, kh,
                   preferred_element_type=jnp.float32)                # (H*Bt, L, L)
    s = s - jnp.max(s, axis=-1, keepdims=True)
    e = jnp.exp(s)
    p = e * pl.reciprocal(jnp.sum(e, axis=-1, keepdims=True), approx=True)
    o = jnp.einsum("bqk,bkd->bqd", p.astype(jnp.bfloat16), vh,
                   preferred_element_type=jnp.float32)                # (H*Bt, L, hd)

    # Merge heads back onto the lane axis via the bf16 scratch (half the
    # masked-store traffic of the previous f32 scratch).
    o4 = o.astype(jnp.bfloat16).reshape(nhead, Bt, L, hd)
    for h in range(nhead):
        attn_scratch[:, :, h * hd:(h + 1) * hd] = o4[h]

    attn = attn_scratch[...].reshape(Bt * L, D)       # bf16, lane-dense

    # Output projection (bf16 operands, f32 accumulation) + residual + LN (f32).
    y = jnp.dot(attn, wo_ref[...],
                preferred_element_type=jnp.float32) + bo_ref[...]     # (Bt*L, D)
    y = x + y
    mean = jnp.mean(y, axis=-1, keepdims=True)
    var = jnp.mean(jnp.square(y - mean), axis=-1, keepdims=True)
    y = (y - mean) * jax.lax.rsqrt(var + 1e-5)
    y = y * ln_g_ref[...] + ln_b_ref[...]

    out_ref[...] = jnp.transpose(y.reshape(Bt, L, D), (1, 0, 2)).astype(out_ref.dtype)


def _vmem_bytes_estimate(L, bt, D, nhead):
    """Rough per-grid-step VMEM footprint (bytes) for an (L, bt, D) batch tile."""
    f32, bf16 = 4, 2
    seq = L * bt * D
    # Streamed tiles (tgt, query_pos in; out), double-buffered by the pipeline.
    stream = 2 * (2 * seq + seq) * f32
    # Grid-invariant weights / biases (conservatively counted double-buffered).
    weights = 2 * (4 * D * D * bf16 + 5 * D * f32)
    # In-kernel intermediates: qk/v projections, relayouts, head-split bf16
    # copies, scores + probabilities, attention output, bf16 merge scratch,
    # residual / LayerNorm temporaries.
    work = (3 * seq * f32                       # qk (2D wide) + v
            + 2 * seq * f32                     # batch-leading relayouts of x / qk_in
            + 3 * seq * bf16                    # head-split q/k/v copies
            + nhead * bt * L * L * (f32 + bf16)  # scores + bf16 probabilities
            + seq * f32 + seq * bf16            # P.V output + bf16 merge scratch
            + 2 * seq * f32)                    # out-proj result + LN temporaries
    return stream + weights + work


def _pick_batch_tile(L, N, D, nhead, budget_bytes):
    """VMEM-aware batch tile.  Tile must be a multiple of 8 (sublane rule) or
    the full batch; prefer >=4 grid steps (megacore + DMA pipelining), then >=2."""
    cands = [bt for bt in (64, 32, 16, 8) if N % bt == 0]
    if not cands:
        return N                                  # tiny / odd batch: one full step
    fitting = [bt for bt in cands
               if _vmem_bytes_estimate(L, bt, D, nhead) <= budget_bytes]
    pool = fitting if fitting else cands[-1:]     # fall back to the smallest tile
    for min_steps in (4, 2, 1):
        for bt in pool:                           # pool is descending in size
            if N // bt >= min_steps:
                return bt
    return pool[-1]


def self_attention_layer(tgt, query_pos, params, *, nhead: int,
                         batch_tile=None, vmem_budget_bytes=12 * 1024 * 1024):
    """tgt, query_pos: (L, N, D) float32 (PyTorch seq-first layout)."""
    L, N, D = tgt.shape
    assert D % nhead == 0
    hd = D // nhead
    scale = 1.0 / math.sqrt(hd)

    in_w = params["in_proj_weight"]          # (3D, D)  (PyTorch: y = x @ W.T + b)
    in_b = params["in_proj_bias"]            # (3D,)
    wq, wk, wv = in_w[:D], in_w[D:2 * D], in_w[2 * D:]
    bq, bv = in_b[:D], in_b[2 * D:]          # bk intentionally dropped (cancels)

    # Pre-transpose to x @ W form, fuse Wq/Wk, fold the softmax scale into the
    # q half, cast weights to bf16 once (halves weight DMA, native MXU dtype).
    wqk_t = jnp.concatenate([wq.T * scale, wk.T], axis=1).astype(jnp.bfloat16)  # (D, 2D)
    wv_t = wv.T.astype(jnp.bfloat16)                                            # (D, D)
    wo_t = params["out_proj_weight"].T.astype(jnp.bfloat16)                     # (D, D)
    bq_r = (bq * scale).reshape(1, D).astype(jnp.float32)
    bv_r = bv.reshape(1, D).astype(jnp.float32)
    bo_r = params["out_proj_bias"].reshape(1, D).astype(jnp.float32)
    ln_g = params["ln_weight"].reshape(1, D).astype(jnp.float32)
    ln_b = params["ln_bias"].reshape(1, D).astype(jnp.float32)

    if batch_tile is None:
        batch_tile = _pick_batch_tile(L, N, D, nhead, vmem_budget_bytes)
    Bt = batch_tile
    assert N % Bt == 0 and (Bt % 8 == 0 or Bt == N)

    seq_spec = pl.BlockSpec((L, Bt, D), lambda b: (0, b, 0))
    wqk_spec = pl.BlockSpec((D, 2 * D), lambda b: (0, 0))
    mat_spec = pl.BlockSpec((D, D), lambda b: (0, 0))
    vec_spec = pl.BlockSpec((1, D), lambda b: (0, 0))

    kernel = functools.partial(_attn_layer_kernel, nhead=nhead)

    out = pl.pallas_call(
        kernel,
        out_shape=jax.ShapeDtypeStruct((L, N, D), tgt.dtype),
        grid_spec=pltpu.PrefetchScalarGridSpec(
            num_scalar_prefetch=0,
            grid=(N // Bt,),
            in_specs=[seq_spec, seq_spec,
                      wqk_spec, mat_spec, mat_spec,
                      vec_spec, vec_spec, vec_spec,
                      vec_spec, vec_spec],
            out_specs=seq_spec,
            scratch_shapes=[pltpu.VMEM((Bt, L, D), jnp.bfloat16)],
        ),
        compiler_params=pltpu.CompilerParams(
            dimension_semantics=("parallel",),
            vmem_limit_bytes=32 * 1024 * 1024,
        ),
    )(tgt, query_pos, wqk_t, wv_t, wo_t, bq_r, bv_r, bo_r, ln_g, ln_b)

    return out


# ---------------- pure-JAX reference (for verification) ----------------
def _reference(tgt, query_pos, params, *, nhead: int):
    L, N, D = tgt.shape
    hd = D // nhead
    in_w = params["in_proj_weight"]
    in_b = params["in_proj_bias"]
    wq, wk, wv = in_w[:D], in_w[D:2 * D], in_w[2 * D:]
    bq, bk, bv = in_b[:D], in_b[D:2 * D], in_b[2 * D:]
    qk_in = tgt + query_pos
    q = qk_in @ wq.T + bq
    k = qk_in @ wk.T + bk
    v = tgt @ wv.T + bv

    def split(x):  # (L, N, D) -> (N, H, L, hd)
        return jnp.transpose(x.reshape(L, N, nhead, hd), (1, 2, 0, 3))

    qh, kh, vh = split(q), split(k), split(v)
    s = jnp.einsum("nhld,nhmd->nhlm", qh / math.sqrt(hd), kh)
    a = jax.nn.softmax(s, axis=-1)
    o = jnp.einsum("nhlm,nhmd->nhld", a, vh)
    o = jnp.transpose(o, (2, 0, 1, 3)).reshape(L, N, D)
    o = o @ params["out_proj_weight"].T + params["out_proj_bias"]
    y = tgt + o
    mean = jnp.mean(y, axis=-1, keepdims=True)
    var = jnp.mean((y - mean) ** 2, axis=-1, keepdims=True)
    y = (y - mean) / jnp.sqrt(var + 1e-5)
    return y * params["ln_weight"] + params["ln_bias"]


def _xavier_uniform(key, shape):
    fan_out, fan_in = shape
    limit = math.sqrt(6.0 / (fan_in + fan_out))
    return jax.random.uniform(key, shape, jnp.float32, -limit, limit)


if __name__ == "__main__":
    # Small but tiling-exercising shape: (8,128)-aligned tiles, D lane-dense,
    # and a batch that gives a multi-step grid (Bt=8 -> 2 grid steps).
    L, N, D, H = 16, 16, 128, 4   # seq, batch, d_model, nhead

    key = jax.random.PRNGKey(0)
    k_tgt, k_pos, k_inw, k_inb, k_outw, k_outb, k_lng, k_lnb = jax.random.split(key, 8)

    tgt = jax.random.normal(k_tgt, (L, N, D), jnp.float32)
    query_pos = jax.random.normal(k_pos, (L, N, D), jnp.float32)

    params = {
        "in_proj_weight": _xavier_uniform(k_inw, (3 * D, D)),
        "in_proj_bias": 0.1 * jax.random.normal(k_inb, (3 * D,), jnp.float32),
        "out_proj_weight": _xavier_uniform(k_outw, (D, D)),
        "out_proj_bias": 0.1 * jax.random.normal(k_outb, (D,), jnp.float32),
        "ln_weight": 1.0 + 0.1 * jax.random.normal(k_lng, (D,), jnp.float32),
        "ln_bias": 0.1 * jax.random.normal(k_lnb, (D,), jnp.float32),
    }

    out = self_attention_layer(tgt, query_pos, params, nhead=H)
    out = jax.block_until_ready(out)

    ref = _reference(tgt, query_pos, params, nhead=H)
    assert out.shape == (L, N, D)
    assert not bool(jnp.any(jnp.isnan(out))), "NaN in kernel output"
    # bf16 MXU operands (f32 accumulation) vs. an f32 reference -> loose tol.
    assert jnp.allclose(out, ref, atol=5e-2, rtol=5e-2), "mismatch vs reference"

    print("KERNEL_OK")
</pallas_src>

<mosaic_0001>
module attributes {stable_mosaic.version = 11 : i64} {
  func.func @_attn_layer_kernel(%arg0: i32, %arg1: memref<16x8x128xf32, #tpu.memory_space<vmem>>, %arg2: memref<16x8x128xf32, #tpu.memory_space<vmem>>, %arg3: memref<128x256xbf16, #tpu.memory_space<vmem>>, %arg4: memref<128x128xbf16, #tpu.memory_space<vmem>>, %arg5: memref<128x128xbf16, #tpu.memory_space<vmem>>, %arg6: memref<1x128xf32, #tpu.memory_space<vmem>>, %arg7: memref<1x128xf32, #tpu.memory_space<vmem>>, %arg8: memref<1x128xf32, #tpu.memory_space<vmem>>, %arg9: memref<1x128xf32, #tpu.memory_space<vmem>>, %arg10: memref<1x128xf32, #tpu.memory_space<vmem>>, %arg11: memref<16x8x128xf32, #tpu.memory_space<vmem>>, %arg12: memref<8x16x128xbf16, #tpu.memory_space<vmem>>) attributes {dimension_semantics = [#tpu.dimension_semantics<parallel>], iteration_bounds = array<i64: 2>, scalar_prefetch = 0 : i64, scratch_operands = 1 : i64, tpu.core_type = #tpu.core_type<tc>, window_params = [{transform_indices = @transform_0, window_bounds = array<i64: 16, 8, 128>}, {transform_indices = @transform_1, window_bounds = array<i64: 16, 8, 128>}, {pipeline_mode = #tpu.pipeline_mode<synchronous>, transform_indices = @transform_2, window_bounds = array<i64: 128, 256>}, {pipeline_mode = #tpu.pipeline_mode<synchronous>, transform_indices = @transform_3, window_bounds = array<i64: 128, 128>}, {pipeline_mode = #tpu.pipeline_mode<synchronous>, transform_indices = @transform_4, window_bounds = array<i64: 128, 128>}, {pipeline_mode = #tpu.pipeline_mode<synchronous>, transform_indices = @transform_5, window_bounds = array<i64: 1, 128>}, {pipeline_mode = #tpu.pipeline_mode<synchronous>, transform_indices = @transform_6, window_bounds = array<i64: 1, 128>}, {pipeline_mode = #tpu.pipeline_mode<synchronous>, transform_indices = @transform_7, window_bounds = array<i64: 1, 128>}, {pipeline_mode = #tpu.pipeline_mode<synchronous>, transform_indices = @transform_8, window_bounds = array<i64: 1, 128>}, {pipeline_mode = #tpu.pipeline_mode<synchronous>, transform_indices = @transform_9, window_bounds = array<i64: 1, 128>}, {transform_indices = @transform_10, window_bounds = array<i64: 16, 8, 128>}]} {
    %c0 = arith.constant 0 : index
    %c0_0 = arith.constant 0 : index
    %c0_1 = arith.constant 0 : index
    %0 = vector.load %arg1[%c0, %c0_0, %c0_1] : memref<16x8x128xf32, #tpu.memory_space<vmem>>, vector<16x8x128xf32>
    %c0_2 = arith.constant 0 : index
    %c0_3 = arith.constant 0 : index
    %c0_4 = arith.constant 0 : index
    %1 = vector.load %arg2[%c0_2, %c0_3, %c0_4] : memref<16x8x128xf32, #tpu.memory_space<vmem>>, vector<16x8x128xf32>
    %2 = arith.addf %0, %1 : vector<16x8x128xf32>
    %3 = tpu.transpose %0, [1, 0, 2] : vector<16x8x128xf32> -> vector<8x16x128xf32>
    %4 = vector.shape_cast %3 : vector<8x16x128xf32> to vector<128x128xf32>
    %5 = tpu.transpose %2, [1, 0, 2] : vector<16x8x128xf32> -> vector<8x16x128xf32>
    %6 = vector.shape_cast %5 : vector<8x16x128xf32> to vector<128x128xf32>
    %7 = arith.truncf %6 : vector<128x128xf32> to vector<128x128xbf16>
    %c0_5 = arith.constant 0 : index
    %c0_6 = arith.constant 0 : index
    %8 = vector.load %arg3[%c0_5, %c0_6] : memref<128x256xbf16, #tpu.memory_space<vmem>>, vector<128x256xbf16>
    %cst = arith.constant dense<0.000000e+00> : vector<128x256xf32>
    %9 = tpu.matmul %7, %8, %cst {dimension_numbers = #tpu.dot_dimension_numbers<[1], [0], [0], [1], [0, 0, 1, 1], [], []>} : vector<128x128xbf16>, vector<128x256xbf16>, vector<128x256xf32> -> vector<128x256xf32>
    %10 = arith.truncf %4 : vector<128x128xf32> to vector<128x128xbf16>
    %c0_7 = arith.constant 0 : index
    %c0_8 = arith.constant 0 : index
    %11 = vector.load %arg4[%c0_7, %c0_8] : memref<128x128xbf16, #tpu.memory_space<vmem>>, vector<128x128xbf16>
    %cst_9 = arith.constant dense<0.000000e+00> : vector<128x128xf32>
    %12 = tpu.matmul %10, %11, %cst_9 {dimension_numbers = #tpu.dot_dimension_numbers<[1], [0], [0], [1], [0, 0, 1, 1], [], []>} : vector<128x128xbf16>, vector<128x128xbf16>, vector<128x128xf32> -> vector<128x128xf32>
    %c0_10 = arith.constant 0 : index
    %c0_11 = arith.constant 0 : index
    %13 = vector.load %arg7[%c0_10, %c0_11] : memref<1x128xf32, #tpu.memory_space<vmem>>, vector<1x128xf32>
    %14 = vector.broadcast %13 : vector<1x128xf32> to vector<128x128xf32>
    %15 = arith.addf %12, %14 : vector<128x128xf32>
    %16 = vector.extract_strided_slice %9 {offsets = [0, 0], sizes = [128, 128], strides = [1, 1]} : vector<128x256xf32> to vector<128x128xf32>
    %c0_12 = arith.constant 0 : index
    %c0_13 = arith.constant 0 : index
    %17 = vector.load %arg6[%c0_12, %c0_13] : memref<1x128xf32, #tpu.memory_space<vmem>>, vector<1x128xf32>
    %18 = vector.broadcast %17 : vector<1x128xf32> to vector<128x128xf32>
    %19 = arith.addf %16, %18 : vector<128x128xf32>
    %20 = vector.shape_cast %19 : vector<128x128xf32> to vector<8x16x128xf32>
    %21 = arith.truncf %20 : vector<8x16x128xf32> to vector<8x16x128xbf16>
    %22 = vector.extract_strided_slice %9 {offsets = [0, 128], sizes = [128, 128], strides = [1, 1]} : vector<128x256xf32> to vector<128x128xf32>
    %23 = vector.shape_cast %22 : vector<128x128xf32> to vector<8x16x128xf32>
    %24 = arith.truncf %23 : vector<8x16x128xf32> to vector<8x16x128xbf16>
    %25 = vector.shape_cast %15 : vector<128x128xf32> to vector<8x16x128xf32>
    %26 = arith.truncf %25 : vector<8x16x128xf32> to vector<8x16x128xbf16>
    %27 = vector.extract_strided_slice %21 {offsets = [0, 0, 0], sizes = [8, 16, 32], strides = [1, 1, 1]} : vector<8x16x128xbf16> to vector<8x16x32xbf16>
    %28 = vector.extract_strided_slice %21 {offsets = [0, 0, 32], sizes = [8, 16, 32], strides = [1, 1, 1]} : vector<8x16x128xbf16> to vector<8x16x32xbf16>
    %29 = vector.extract_strided_slice %21 {offsets = [0, 0, 64], sizes = [8, 16, 32], strides = [1, 1, 1]} : vector<8x16x128xbf16> to vector<8x16x32xbf16>
    %30 = vector.extract_strided_slice %21 {offsets = [0, 0, 96], sizes = [8, 16, 32], strides = [1, 1, 1]} : vector<8x16x128xbf16> to vector<8x16x32xbf16>
    %31 = tpu.concatenate %27, %28, %29, %30 in 0 : vector<8x16x32xbf16>, vector<8x16x32xbf16>, vector<8x16x32xbf16>, vector<8x16x32xbf16> -> vector<32x16x32xbf16>
    %32 = vector.extract_strided_slice %24 {offsets = [0, 0, 0], sizes = [8, 16, 32], strides = [1, 1, 1]} : vector<8x16x128xbf16> to vector<8x16x32xbf16>
    %33 = vector.extract_strided_slice %24 {offsets = [0, 0, 32], sizes = [8, 16, 32], strides = [1, 1, 1]} : vector<8x16x128xbf16> to vector<8x16x32xbf16>
    %34 = vector.extract_strided_slice %24 {offsets = [0, 0, 64], sizes = [8, 16, 32], strides = [1, 1, 1]} : vector<8x16x128xbf16> to vector<8x16x32xbf16>
    %35 = vector.extract_strided_slice %24 {offsets = [0, 0, 96], sizes = [8, 16, 32], strides = [1, 1, 1]} : vector<8x16x128xbf16> to vector<8x16x32xbf16>
    %36 = tpu.concatenate %32, %33, %34, %35 in 0 : vector<8x16x32xbf16>, vector<8x16x32xbf16>, vector<8x16x32xbf16>, vector<8x16x32xbf16> -> vector<32x16x32xbf16>
    %37 = vector.extract_strided_slice %26 {offsets = [0, 0, 0], sizes = [8, 16, 32], strides = [1, 1, 1]} : vector<8x16x128xbf16> to vector<8x16x32xbf16>
    %38 = vector.extract_strided_slice %26 {offsets = [0, 0, 32], sizes = [8, 16, 32], strides = [1, 1, 1]} : vector<8x16x128xbf16> to vector<8x16x32xbf16>
    %39 = vector.extract_strided_slice %26 {offsets = [0, 0, 64], sizes = [8, 16, 32], strides = [1, 1, 1]} : vector<8x16x128xbf16> to vector<8x16x32xbf16>
    %40 = vector.extract_strided_slice %26 {offsets = [0, 0, 96], sizes = [8, 16, 32], strides = [1, 1, 1]} : vector<8x16x128xbf16> to vector<8x16x32xbf16>
    %41 = tpu.concatenate %37, %38, %39, %40 in 0 : vector<8x16x32xbf16>, vector<8x16x32xbf16>, vector<8x16x32xbf16>, vector<8x16x32xbf16> -> vector<32x16x32xbf16>
    "tpu.trace_start"() <{level = 10 : i32, message = "bqd,bkd->bqk"}> : () -> ()
    %cst_14 = arith.constant dense<0.000000e+00> : vector<32x16x16xf32>
    %42 = tpu.matmul %31, %36, %cst_14 {dimension_numbers = #tpu.dot_dimension_numbers<[2], [2], [1], [1], [0, 0, 0, 1, 1, 1], [0], [0]>} : vector<32x16x32xbf16>, vector<32x16x32xbf16>, vector<32x16x16xf32> -> vector<32x16x16xf32>
    "tpu.trace_stop"() : () -> ()
    %cst_15 = arith.constant dense<0xFF800000> : vector<32x16xf32>
    %43 = vector.multi_reduction <maximumf>, %42, %cst_15 [2] : vector<32x16x16xf32> to vector<32x16xf32>
    %44 = vector.shape_cast %43 : vector<32x16xf32> to vector<32x16x1xf32>
    %45 = vector.broadcast %44 : vector<32x16x1xf32> to vector<32x16x16xf32>
    %46 = arith.subf %42, %45 : vector<32x16x16xf32>
    %47 = math.exp %46 : vector<32x16x16xf32>
    %cst_16 = arith.constant dense<0.000000e+00> : vector<32x16xf32>
    %48 = vector.multi_reduction <add>, %47, %cst_16 [2] : vector<32x16x16xf32> to vector<32x16xf32>
    %49 = vector.shape_cast %48 : vector<32x16xf32> to vector<32x16x1xf32>
    %50 = tpu.reciprocal %49 {approx = true} : vector<32x16x1xf32> -> vector<32x16x1xf32>
    %51 = vector.broadcast %50 : vector<32x16x1xf32> to vector<32x16x16xf32>
    %52 = arith.mulf %47, %51 : vector<32x16x16xf32>
    %53 = arith.truncf %52 : vector<32x16x16xf32> to vector<32x16x16xbf16>
    "tpu.trace_start"() <{level = 10 : i32, message = "bqk,bkd->bqd"}> : () -> ()
    %cst_17 = arith.constant dense<0.000000e+00> : vector<32x16x32xf32>
    %54 = tpu.matmul %53, %41, %cst_17 {dimension_numbers = #tpu.dot_dimension_numbers<[2], [1], [1], [2], [0, 0, 0, 1, 1, 2], [0], [0]>} : vector<32x16x16xbf16>, vector<32x16x32xbf16>, vector<32x16x32xf32> -> vector<32x16x32xf32>
    "tpu.trace_stop"() : () -> ()
    %55 = arith.truncf %54 : vector<32x16x32xf32> to vector<32x16x32xbf16>
    %56 = vector.shape_cast %55 : vector<32x16x32xbf16> to vector<4x8x16x32xbf16>
    %57 = vector.extract_strided_slice %56 {offsets = [0, 0, 0, 0], sizes = [1, 8, 16, 32], strides = [1, 1, 1, 1]} : vector<4x8x16x32xbf16> to vector<1x8x16x32xbf16>
    %58 = vector.shape_cast %57 : vector<1x8x16x32xbf16> to vector<8x16x32xbf16>
    %c0_18 = arith.constant 0 : index
    %c0_19 = arith.constant 0 : index
    %c0_20 = arith.constant 0 : index
    %59 = vector.load %arg12[%c0_18, %c0_19, %c0_20] : memref<8x16x128xbf16, #tpu.memory_space<vmem>>, vector<8x16x32xbf16>
    tpu.vector_store %arg12[%c0_18, %c0_19, %c0_20], %58 {strides = array<i32>} : memref<8x16x128xbf16, #tpu.memory_space<vmem>>, vector<8x16x32xbf16>,
    %60 = vector.extract_strided_slice %56 {offsets = [1, 0, 0, 0], sizes = [1, 8, 16, 32], strides = [1, 1, 1, 1]} : vector<4x8x16x32xbf16> to vector<1x8x16x32xbf16>
    %61 = vector.shape_cast %60 : vector<1x8x16x32xbf16> to vector<8x16x32xbf16>
    %c0_21 = arith.constant 0 : index
    %c0_22 = arith.constant 0 : index
    %c32 = arith.constant 32 : index
    %62 = vector.load %arg12[%c0_21, %c0_22, %c32] : memref<8x16x128xbf16, #tpu.memory_space<vmem>>, vector<8x16x32xbf16>
    tpu.vector_store %arg12[%c0_21, %c0_22, %c32], %61 {strides = array<i32>} : memref<8x16x128xbf16, #tpu.memory_space<vmem>>, vector<8x16x32xbf16>,
    %63 = vector.extract_strided_slice %56 {offsets = [2, 0, 0, 0], sizes = [1, 8, 16, 32], strides = [1, 1, 1, 1]} : vector<4x8x16x32xbf16> to vector<1x8x16x32xbf16>
    %64 = vector.shape_cast %63 : vector<1x8x16x32xbf16> to vector<8x16x32xbf16>
    %c0_23 = arith.constant 0 : index
    %c0_24 = arith.constant 0 : index
    %c64 = arith.constant 64 : index
    %65 = vector.load %arg12[%c0_23, %c0_24, %c64] : memref<8x16x128xbf16, #tpu.memory_space<vmem>>, vector<8x16x32xbf16>
    tpu.vector_store %arg12[%c0_23, %c0_24, %c64], %64 {strides = array<i32>} : memref<8x16x128xbf16, #tpu.memory_space<vmem>>, vector<8x16x32xbf16>,
    %66 = vector.extract_strided_slice %56 {offsets = [3, 0, 0, 0], sizes = [1, 8, 16, 32], strides = [1, 1, 1, 1]} : vector<4x8x16x32xbf16> to vector<1x8x16x32xbf16>
    %67 = vector.shape_cast %66 : vector<1x8x16x32xbf16> to vector<8x16x32xbf16>
    %c0_25 = arith.constant 0 : index
    %c0_26 = arith.constant 0 : index
    %c96 = arith.constant 96 : index
    %68 = vector.load %arg12[%c0_25, %c0_26, %c96] : memref<8x16x128xbf16, #tpu.memory_space<vmem>>, vector<8x16x32xbf16>
    tpu.vector_store %arg12[%c0_25, %c0_26, %c96], %67 {strides = array<i32>} : memref<8x16x128xbf16, #tpu.memory_space<vmem>>, vector<8x16x32xbf16>,
    %c0_27 = arith.constant 0 : index
    %c0_28 = arith.constant 0 : index
    %c0_29 = arith.constant 0 : index
    %69 = vector.load %arg12[%c0_27, %c0_28, %c0_29] : memref<8x16x128xbf16, #tpu.memory_space<vmem>>, vector<8x16x128xbf16>
    %70 = vector.shape_cast %69 : vector<8x16x128xbf16> to vector<128x128xbf16>
    %c0_30 = arith.constant 0 : index
    %c0_31 = arith.constant 0 : index
    %71 = vector.load %arg5[%c0_30, %c0_31] : memref<128x128xbf16, #tpu.memory_space<vmem>>, vector<128x128xbf16>
    %cst_32 = arith.constant dense<0.000000e+00> : vector<128x128xf32>
    %72 = tpu.matmul %70, %71, %cst_32 {dimension_numbers = #tpu.dot_dimension_numbers<[1], [0], [0], [1], [0, 0, 1, 1], [], []>} : vector<128x128xbf16>, vector<128x128xbf16>, vector<128x128xf32> -> vector<128x128xf32>
    %c0_33 = arith.constant 0 : index
    %c0_34 = arith.constant 0 : index
    %73 = vector.load %arg8[%c0_33, %c0_34] : memref<1x128xf32, #tpu.memory_space<vmem>>, vector<1x128xf32>
    %74 = vector.broadcast %73 : vector<1x128xf32> to vector<128x128xf32>
    %75 = arith.addf %72, %74 : vector<128x128xf32>
    %76 = arith.addf %4, %75 : vector<128x128xf32>
    %cst_35 = arith.constant dense<0.000000e+00> : vector<128xf32>
    %77 = vector.multi_reduction <add>, %76, %cst_35 [1] : vector<128x128xf32> to vector<128xf32>
    %78 = vector.shape_cast %77 : vector<128xf32> to vector<128x1xf32>
    %cst_36 = arith.constant 1.280000e+02 : f32
    %79 = vector.broadcast %cst_36 : f32 to vector<128x1xf32>
    %80 = arith.divf %78, %79 : vector<128x1xf32>
    %81 = vector.broadcast %80 : vector<128x1xf32> to vector<128x128xf32>
    %82 = arith.subf %76, %81 : vector<128x128xf32>
    %83 = arith.mulf %82, %82 : vector<128x128xf32>
    %cst_37 = arith.constant dense<0.000000e+00> : vector<128xf32>
    %84 = vector.multi_reduction <add>, %83, %cst_37 [1] : vector<128x128xf32> to vector<128xf32>
    %85 = vector.shape_cast %84 : vector<128xf32> to vector<128x1xf32>
    %cst_38 = arith.constant 1.280000e+02 : f32
    %86 = vector.broadcast %cst_38 : f32 to vector<128x1xf32>
    %87 = arith.divf %85, %86 : vector<128x1xf32>
    %88 = vector.broadcast %80 : vector<128x1xf32> to vector<128x128xf32>
    %89 = arith.subf %76, %88 : vector<128x128xf32>
    %cst_39 = arith.constant 9.99999974E-6 : f32
    %90 = vector.broadcast %cst_39 : f32 to vector<128x1xf32>
    %91 = arith.addf %87, %90 : vector<128x1xf32>
    %92 = math.rsqrt %91 : vector<128x1xf32>
    %93 = vector.broadcast %92 : vector<128x1xf32> to vector<128x128xf32>
    %94 = arith.mulf %89, %93 : vector<128x128xf32>
    %c0_40 = arith.constant 0 : index
    %c0_41 = arith.constant 0 : index
    %95 = vector.load %arg9[%c0_40, %c0_41] : memref<1x128xf32, #tpu.memory_space<vmem>>, vector<1x128xf32>
    %96 = vector.broadcast %95 : vector<1x128xf32> to vector<128x128xf32>
    %97 = arith.mulf %94, %96 : vector<128x128xf32>
    %c0_42 = arith.constant 0 : index
    %c0_43 = arith.constant 0 : index
    %98 = vector.load %arg10[%c0_42, %c0_43] : memref<1x128xf32, #tpu.memory_space<vmem>>, vector<1x128xf32>
    %99 = vector.broadcast %98 : vector<1x128xf32> to vector<128x128xf32>
    %100 = arith.addf %97, %99 : vector<128x128xf32>
    %101 = vector.shape_cast %100 : vector<128x128xf32> to vector<8x16x128xf32>
    %102 = tpu.transpose %101, [1, 0, 2] : vector<8x16x128xf32> -> vector<16x8x128xf32>
    %c0_44 = arith.constant 0 : index
    %c0_45 = arith.constant 0 : index
    %c0_46 = arith.constant 0 : index
    %103 = vector.load %arg11[%c0_44, %c0_45, %c0_46] : memref<16x8x128xf32, #tpu.memory_space<vmem>>, vector<16x8x128xf32>
    tpu.vector_store %arg11[%c0_44, %c0_45, %c0_46], %102 {strides = array<i32>} : memref<16x8x128xf32, #tpu.memory_space<vmem>>, vector<16x8x128xf32>,
    return
  }
  func.func @transform_0(%arg0: i32) -> (i32, i32, i32) {
    %c0_i32 = arith.constant 0 : i32
    %c0_i32_0 = arith.constant 0 : i32
    %c0_i32_1 = arith.constant 0 : i32
    return %c0_i32, %arg0, %c0_i32_0 : i32, i32, i32
  }
  func.func @transform_1(%arg0: i32) -> (i32, i32, i32) {
    %c0_i32 = arith.constant 0 : i32
    %c0_i32_0 = arith.constant 0 : i32
    %c0_i32_1 = arith.constant 0 : i32
    return %c0_i32, %arg0, %c0_i32_0 : i32, i32, i32
  }
  func.func @transform_2(%arg0: i32) -> (i32, i32) {
    %c0_i32 = arith.constant 0 : i32
    %c0_i32_0 = arith.constant 0 : i32
    %c0_i32_1 = arith.constant 0 : i32
    return %c0_i32, %c0_i32_0 : i32, i32
  }
  func.func @transform_3(%arg0: i32) -> (i32, i32) {
    %c0_i32 = arith.constant 0 : i32
    %c0_i32_0 = arith.constant 0 : i32
    %c0_i32_1 = arith.constant 0 : i32
    return %c0_i32, %c0_i32_0 : i32, i32
  }
  func.func @transform_4(%arg0: i32) -> (i32, i32) {
    %c0_i32 = arith.constant 0 : i32
    %c0_i32_0 = arith.constant 0 : i32
    %c0_i32_1 = arith.constant 0 : i32
    return %c0_i32, %c0_i32_0 : i32, i32
  }
  func.func @transform_5(%arg0: i32) -> (i32, i32) {
    %c0_i32 = arith.constant 0 : i32
    %c0_i32_0 = arith.constant 0 : i32
    %c0_i32_1 = arith.constant 0 : i32
    return %c0_i32, %c0_i32_0 : i32, i32
  }
  func.func @transform_6(%arg0: i32) -> (i32, i32) {
    %c0_i32 = arith.constant 0 : i32
    %c0_i32_0 = arith.constant 0 : i32
    %c0_i32_1 = arith.constant 0 : i32
    return %c0_i32, %c0_i32_0 : i32, i32
  }
  func.func @transform_7(%arg0: i32) -> (i32, i32) {
    %c0_i32 = arith.constant 0 : i32
    %c0_i32_0 = arith.constant 0 : i32
    %c0_i32_1 = arith.constant 0 : i32
    return %c0_i32, %c0_i32_0 : i32, i32
  }
  func.func @transform_8(%arg0: i32) -> (i32, i32) {
    %c0_i32 = arith.constant 0 : i32
    %c0_i32_0 = arith.constant 0 : i32
    %c0_i32_1 = arith.constant 0 : i32
    return %c0_i32, %c0_i32_0 : i32, i32
  }
  func.func @transform_9(%arg0: i32) -> (i32, i32) {
    %c0_i32 = arith.constant 0 : i32
    %c0_i32_0 = arith.constant 0 : i32
    %c0_i32_1 = arith.constant 0 : i32
    return %c0_i32, %c0_i32_0 : i32, i32
  }
  func.func @transform_10(%arg0: i32) -> (i32, i32, i32) {
    %c0_i32 = arith.constant 0 : i32
    %c0_i32_0 = arith.constant 0 : i32
    %c0_i32_1 = arith.constant 0 : i32
    return %c0_i32, %arg0, %c0_i32_0 : i32, i32, i32
  }
}

</mosaic_0001>

<llo_original>
// kernel: tpu_custom_call.1
$region0: #{tpu_custom_call.1}
  #allocation0 [shape = 'u32[]', space=smem, size = 0x4, offset = 0x4, fixed_abs, tag = 'smem constant byte address 0x4 - core index']
  #allocation1 [shape = 'u32[144,128]{1,0:T(1,128)}', space=vmem, size = 0x12000, scoped, tag = 'internal scratch']
  #allocation2 [shape = 'bf16[8,16,128]{2,1,0:T(8,128)(2,1)}', space=vmem, size = 0x8000, scoped, tag = 'scratch operand']
  %s0 = inlined_call_operand.hbm [shape: f32[16,16,128], index: 0, kind: input, shape index: {}]
  %s1 = inlined_call_operand.hbm [shape: f32[16,16,128], index: 1, kind: input, shape index: {}]
  %s2 = inlined_call_operand.hbm [shape: bf16[128,256], index: 2, kind: input, shape index: {}]
  %s3 = inlined_call_operand.hbm [shape: bf16[128,128], index: 3, kind: input, shape index: {}]
  %s4 = inlined_call_operand.hbm [shape: bf16[128,128], index: 4, kind: input, shape index: {}]
  %s5 = inlined_call_operand.vmem [shape: f32[1,128], index: 5, kind: input, shape index: {}]
  %s6 = inlined_call_operand.vmem [shape: f32[1,128], index: 6, kind: input, shape index: {}]
  %s7 = inlined_call_operand.vmem [shape: f32[1,128], index: 7, kind: input, shape index: {}]
  %s8 = inlined_call_operand.vmem [shape: f32[1,128], index: 8, kind: input, shape index: {}]
  %s9 = inlined_call_operand.vmem [shape: f32[1,128], index: 9, kind: input, shape index: {}]
  %s10 = inlined_call_operand.hbm [shape: f32[16,16,128], index: 10, kind: output, shape index: {}]
  %s11 = sld [smem:[#allocation0]]
  $region93: #{tpu_custom_call.1} parent=0
    _
  %s13 = ssub.s32 1, %s11
  %s14 = scalar_select 0, %s13, %s11
  $region1: #{tpu_custom_call.1} parent=0
    #allocation3 [shape = 'u8[131072]{0}', space=vmem, size = 0x20000, scoped, tag = 'input window, operand 0']
    #allocation4 [shape = 's32[2]{0}', space=sflag, size = 0x8, scoped, tag = 'scoped memory for tpu_custom_call.1']
    #allocation5 [shape = 's32[2]{0}', space=sflag, size = 0x8, scoped, tag = 'scoped memory for tpu_custom_call.1']
    #allocation6 [shape = 'u8[131072]{0}', space=vmem, size = 0x20000, scoped, tag = 'input window, operand 1']
    #allocation7 [shape = 's32[2]{0}', space=sflag, size = 0x8, scoped, tag = 'scoped memory for tpu_custom_call.1']
    #allocation8 [shape = 'u8[65536]{0}', space=vmem, size = 0x10000, scoped, tag = 'input window, operand 2, single buffered']
    #allocation9 [shape = 'u8[32768]{0}', space=vmem, size = 0x8000, scoped, tag = 'input window, operand 3, single buffered']
    #allocation10 [shape = 's32[1]{0}', space=sflag, size = 0x4, scoped, tag = 'scoped memory for tpu_custom_call.1']
    #allocation11 [shape = 'u8[32768]{0}', space=vmem, size = 0x8000, scoped, tag = 'input window, operand 4, single buffered']
    #allocation12 [shape = 'u8[131072]{0}', space=vmem, size = 0x20000, scoped, tag = 'output window, operand 0']
    %15 = vsyncpa [#allocation4], 0
    %s16 = scalar_lea.sflag [#allocation4], 1
    %17 = vsyncpa %s16, 0
    %18 = vsyncpa [#allocation7], 0
    %s19 = scalar_lea.sflag [#allocation7], 1
    %20 = vsyncpa %s19, 0
    %21 = vsyncpa [#allocation10], 0
    %22 = vsyncpa [#allocation5], 0
    %s23 = scalar_lea.sflag [#allocation5], 1
    %24 = vsyncpa %s23, 0
    loop: start=0, step=1, limit=4
    $region2: #{tpu_custom_call.1} parent=1 // loop_pre_header
      _
    $region3: #{tpu_custom_call.1} parent=1 // loop_header
      %s26 = sphi 0, %s30
      %p27 = scmp.ge.s32.totalorder %s26, 4
      %s36 = sphi 0, %s38
      %s39 = sphi 0, %s36
      %s40 = sphi 0, %s39
      %s56 = sphi 0, %s40
      %s62 = sphi 0, %s64
      %s65 = sphi 0, %s62
      %s66 = sphi 0, %s65
      %s82 = sphi 0, %s66
      %s86 = sphi 0, %s86
      %s88 = sphi 0, %s86
      %s89 = sphi 0, %s88
      %s103 = sphi 0, %s89
      %s107 = sphi 0, %s107
      %s109 = sphi 0, %s107
      %s110 = sphi 0, %s109
      %s124 = sphi 0, %s110
      %s128 = sphi 0, %s128
      %s130 = sphi 0, %s128
      %s131 = sphi 0, %s130
      %s145 = sphi 0, %s131
      %s149 = sphi 0, %s149
      %s151 = sphi 0, %s149
      %s152 = sphi 0, %s151
      %s166 = sphi 0, %s152
      %s170 = sphi 0, %s170
      %s172 = sphi 0, %s170
      %s173 = sphi 0, %s172
      %s187 = sphi 0, %s173
      %s191 = sphi 0, %s191
      %s193 = sphi 0, %s191
      %s194 = sphi 0, %s193
      %s208 = sphi 0, %s194
      %s212 = sphi 0, %s212
      %s214 = sphi 0, %s212
      %s215 = sphi 0, %s214
      %s229 = sphi 0, %s215
      %s233 = sphi 0, %s233
      %s235 = sphi 0, %s233
      %s236 = sphi 0, %s235
      %s250 = sphi 0, %s236
      %s256 = sphi 0, %s258
      %s259 = sphi 0, %s256
      %s260 = sphi 0, %s259
      %s276 = sphi 0, %s260
    $region4: #{tpu_custom_call.1} parent=1 // loop_header_branch
      %29 = sbr.rel (%p27) target = $region8
    $region5: #{tpu_custom_call.1} parent=1 // loop_body
      %s31 = ssub.s32 %s26, 1
      %s32 = ssub.s32 %s26, 2
      %s33 = sadd.s32 %s26, 1
      %s34 = ssub.s32 %s26, %s33
      %p35 = scmp.eq.s32.totalorder %s34, 0
      %s37 = sadd.s32 %s36, 1
      %s38 = scalar_select %p35, %s36, %s37
      %p41 = pneg %p35
      %p42 = scmp.eq.s32.totalorder %s26, 1
      %p43 = por %p41, %p42
      %p44 = scmp.ne.s32.totalorder %s36, %s39
      %p45 = scmp.eq.s32.totalorder %s26, 0
      %p46 = por %p44, %p45
      %p47 = scmp.ne.s32.totalorder %s36, %s39
      %p48 = scmp.eq.s32.totalorder %s31, 1
      %p49 = por %p47, %p48
      %p50 = scmp.ne.s32.totalorder %s39, %s40
      %p51 = scmp.eq.s32.totalorder %s31, 0
      %p52 = por %p50, %p51
      %p53 = scmp.ne.s32.totalorder %s39, %s40
      %p54 = scmp.eq.s32.totalorder %s32, 1
      %p55 = por %p53, %p54
      %p57 = scmp.ne.s32.totalorder %s40, %s56
      %p58 = scmp.eq.s32.totalorder %s32, 0
      %p59 = por %p57, %p58
      %s60 = ssub.s32 %s26, %s33
      %p61 = scmp.eq.s32.totalorder %s60, 0
      %s63 = sadd.s32 %s62, 1
      %s64 = scalar_select %p61, %s62, %s63
      %p67 = pneg %p61
      %p68 = scmp.eq.s32.totalorder %s26, 1
      %p69 = por %p67, %p68
      %p70 = scmp.ne.s32.totalorder %s62, %s65
      %p71 = scmp.eq.s32.totalorder %s26, 0
      %p72 = por %p70, %p71
      %p73 = scmp.ne.s32.totalorder %s62, %s65
      %p74 = scmp.eq.s32.totalorder %s31, 1
      %p75 = por %p73, %p74
      %p76 = scmp.ne.s32.totalorder %s65, %s66
      %p77 = scmp.eq.s32.totalorder %s31, 0
      %p78 = por %p76, %p77
      %p79 = scmp.ne.s32.totalorder %s65, %s66
      %p80 = scmp.eq.s32.totalorder %s32, 1
      %p81 = por %p79, %p80
      %p83 = scmp.ne.s32.totalorder %s66, %s82
      %p84 = scmp.eq.s32.totalorder %s32, 0
      %p85 = por %p83, %p84
      %s87 = sadd.s32 %s86, 1
      %p90 = scmp.eq.s32.totalorder %s26, 1
      %p91 = scmp.ne.s32.totalorder %s86, %s88
      %p92 = scmp.eq.s32.totalorder %s26, 0
      %p93 = por %p91, %p92
      %p94 = scmp.ne.s32.totalorder %s86, %s88
      %p95 = scmp.eq.s32.totalorder %s31, 1
      %p96 = por %p94, %p95
      %p97 = scmp.ne.s32.totalorder %s88, %s89
      %p98 = scmp.eq.s32.totalorder %s31, 0
      %p99 = por %p97, %p98
      %p100 = scmp.ne.s32.totalorder %s88, %s89
      %p101 = scmp.eq.s32.totalorder %s32, 1
      %p102 = por %p100, %p101
      %p104 = scmp.ne.s32.totalorder %s89, %s103
      %p105 = scmp.eq.s32.totalorder %s32, 0
      %p106 = por %p104, %p105
      %s108 = sadd.s32 %s107, 1
      %p111 = scmp.eq.s32.totalorder %s26, 1
      %p112 = scmp.ne.s32.totalorder %s107, %s109
      %p113 = scmp.eq.s32.totalorder %s26, 0
      %p114 = por %p112, %p113
      %p115 = scmp.ne.s32.totalorder %s107, %s109
      %p116 = scmp.eq.s32.totalorder %s31, 1
      %p117 = por %p115, %p116
      %p118 = scmp.ne.s32.totalorder %s109, %s110
      %p119 = scmp.eq.s32.totalorder %s31, 0
      %p120 = por %p118, %p119
      %p121 = scmp.ne.s32.totalorder %s109, %s110
      %p122 = scmp.eq.s32.totalorder %s32, 1
      %p123 = por %p121, %p122
      %p125 = scmp.ne.s32.totalorder %s110, %s124
      %p126 = scmp.eq.s32.totalorder %s32, 0
      %p127 = por %p125, %p126
      %s129 = sadd.s32 %s128, 1
      %p132 = scmp.eq.s32.totalorder %s26, 1
      %p133 = scmp.ne.s32.totalorder %s128, %s130
      %p134 = scmp.eq.s32.totalorder %s26, 0
      %p135 = por %p133, %p134
      %p136 = scmp.ne.s32.totalorder %s128, %s130
      %p137 = scmp.eq.s32.totalorder %s31, 1
      %p138 = por %p136, %p137
      %p139 = scmp.ne.s32.totalorder %s130, %s131
      %p140 = scmp.eq.s32.totalorder %s31, 0
      %p141 = por %p139, %p140
      %p142 = scmp.ne.s32.totalorder %s130, %s131
      %p143 = scmp.eq.s32.totalorder %s32, 1
      %p144 = por %p142, %p143
      %p146 = scmp.ne.s32.totalorder %s131, %s145
      %p147 = scmp.eq.s32.totalorder %s32, 0
      %p148 = por %p146, %p147
      %s150 = sadd.s32 %s149, 1
      %p153 = scmp.eq.s32.totalorder %s26, 1
      %p154 = scmp.ne.s32.totalorder %s149, %s151
      %p155 = scmp.eq.s32.totalorder %s26, 0
      %p156 = por %p154, %p155
      %p157 = scmp.ne.s32.totalorder %s149, %s151
      %p158 = scmp.eq.s32.totalorder %s31, 1
      %p159 = por %p157, %p158
      %p160 = scmp.ne.s32.totalorder %s151, %s152
      %p161 = scmp.eq.s32.totalorder %s31, 0
      %p162 = por %p160, %p161
      %p163 = scmp.ne.s32.totalorder %s151, %s152
      %p164 = scmp.eq.s32.totalorder %s32, 1
      %p165 = por %p163, %p164
      %p167 = scmp.ne.s32.totalorder %s152, %s166
      %p168 = scmp.eq.s32.totalorder %s32, 0
      %p169 = por %p167, %p168
      %s171 = sadd.s32 %s170, 1
      %p174 = scmp.eq.s32.totalorder %s26, 1
      %p175 = scmp.ne.s32.totalorder %s170, %s172
      %p176 = scmp.eq.s32.totalorder %s26, 0
      %p177 = por %p175, %p176
      %p178 = scmp.ne.s32.totalorder %s170, %s172
      %p179 = scmp.eq.s32.totalorder %s31, 1
      %p180 = por %p178, %p179
      %p181 = scmp.ne.s32.totalorder %s172, %s173
      %p182 = scmp.eq.s32.totalorder %s31, 0
      %p183 = por %p181, %p182
      %p184 = scmp.ne.s32.totalorder %s172, %s173
      %p185 = scmp.eq.s32.totalorder %s32, 1
      %p186 = por %p184, %p185
      %p188 = scmp.ne.s32.totalorder %s173, %s187
      %p189 = scmp.eq.s32.totalorder %s32, 0
      %p190 = por %p188, %p189
      %s192 = sadd.s32 %s191, 1
      %p195 = scmp.eq.s32.totalorder %s26, 1
      %p196 = scmp.ne.s32.totalorder %s191, %s193
      %p197 = scmp.eq.s32.totalorder %s26, 0
      %p198 = por %p196, %p197
      %p199 = scmp.ne.s32.totalorder %s191, %s193
      %p200 = scmp.eq.s32.totalorder %s31, 1
      %p201 = por %p199, %p200
      %p202 = scmp.ne.s32.totalorder %s193, %s194
      %p203 = scmp.eq.s32.totalorder %s31, 0
      %p204 = por %p202, %p203
      %p205 = scmp.ne.s32.totalorder %s193, %s194
      %p206 = scmp.eq.s32.totalorder %s32, 1
      %p207 = por %p205, %p206
      %p209 = scmp.ne.s32.totalorder %s194, %s208
      %p210 = scmp.eq.s32.totalorder %s32, 0
      %p211 = por %p209, %p210
      %s213 = sadd.s32 %s212, 1
      %p216 = scmp.eq.s32.totalorder %s26, 1
      %p217 = scmp.ne.s32.totalorder %s212, %s214
      %p218 = scmp.eq.s32.totalorder %s26, 0
      %p219 = por %p217, %p218
      %p220 = scmp.ne.s32.totalorder %s212, %s214
      %p221 = scmp.eq.s32.totalorder %s31, 1
      %p222 = por %p220, %p221
      %p223 = scmp.ne.s32.totalorder %s214, %s215
      %p224 = scmp.eq.s32.totalorder %s31, 0
      %p225 = por %p223, %p224
      %p226 = scmp.ne.s32.totalorder %s214, %s215
      %p227 = scmp.eq.s32.totalorder %s32, 1
      %p228 = por %p226, %p227
      %p230 = scmp.ne.s32.totalorder %s215, %s229
      %p231 = scmp.eq.s32.totalorder %s32, 0
      %p232 = por %p230, %p231
      %s234 = sadd.s32 %s233, 1
      %p237 = scmp.eq.s32.totalorder %s26, 1
      %p238 = scmp.ne.s32.totalorder %s233, %s235
      %p239 = scmp.eq.s32.totalorder %s26, 0
      %p240 = por %p238, %p239
      %p241 = scmp.ne.s32.totalorder %s233, %s235
      %p242 = scmp.eq.s32.totalorder %s31, 1
      %p243 = por %p241, %p242
      %p244 = scmp.ne.s32.totalorder %s235, %s236
      %p245 = scmp.eq.s32.totalorder %s31, 0
      %p246 = por %p244, %p245
      %p247 = scmp.ne.s32.totalorder %s235, %s236
      %p248 = scmp.eq.s32.totalorder %s32, 1
      %p249 = por %p247, %p248
      %p251 = scmp.ne.s32.totalorder %s236, %s250
      %p252 = scmp.eq.s32.totalorder %s32, 0
      %p253 = por %p251, %p252
      %s254 = ssub.s32 %s26, %s33
      %p255 = scmp.eq.s32.totalorder %s254, 0
      %s257 = sadd.s32 %s256, 1
      %s258 = scalar_select %p255, %s256, %s257
      %p261 = pneg %p255
      %p262 = scmp.eq.s32.totalorder %s26, 1
      %p263 = por %p261, %p262
      %p264 = scmp.ne.s32.totalorder %s256, %s259
      %p265 = scmp.eq.s32.totalorder %s26, 0
      %p266 = por %p264, %p265
      %p267 = scmp.ne.s32.totalorder %s256, %s259
      %p268 = scmp.eq.s32.totalorder %s31, 1
      %p269 = por %p267, %p268
      %p270 = scmp.ne.s32.totalorder %s259, %s260
      %p271 = scmp.eq.s32.totalorder %s31, 0
      %p272 = por %p270, %p271
      %p273 = scmp.ne.s32.totalorder %s259, %s260
      %p274 = scmp.eq.s32.totalorder %s32, 1
      %p275 = por %p273, %p274
      %p277 = scmp.ne.s32.totalorder %s260, %s276
      %p278 = scmp.eq.s32.totalorder %s32, 0
      %p279 = por %p277, %p278
      %p280 = scmp.le.s32.totalorder 1, %s26
      %p281 = scmp.lt.s32.totalorder %s26, 3
      %p282 = pnand %p280, %p281
      %p283 = pneg %p282
      // Predicated region
      $region9: #{tpu_custom_call.1} parent=5 // pred_check
        _
      $region10: #{tpu_custom_call.1} parent=5 // pred_check_branch
        %285 = sbr.rel (%p282) target = $region12
      $region11: #{tpu_custom_call.1} parent=5 // pred_region
        %s286 = ssub.s32 %s26, 1
        // Predicated region
        $region13: #{tpu_custom_call.1} parent=11 // pred_check
          %p287 = pneg %p99
        $region14: #{tpu_custom_call.1} parent=11 // pred_check_branch
          %289 = sbr.rel (%p287) target = $region16
        $region15: #{tpu_custom_call.1} parent=11 // pred_region
          %s291 = ssub.s32 2048, 2048
          %292 = vsyncadd [#allocation7], %s291
          %s293 = sshll.u32 [#allocation8], 4
          %s294 = int_to_ptr.vmem [resolvable:$true] %s293
          %299 = dma.hbm_to_vmem [thread:$0]  %s2, 2048, %s294, [#allocation7], 128, 128, 8
        $region16: #{tpu_custom_call.1} parent=11 // pred_fallthru
          _
        // Predicated region
        $region17: #{tpu_custom_call.1} parent=11 // pred_check
          %p300 = pneg %p120
        $region18: #{tpu_custom_call.1} parent=11 // pred_check_branch
          %302 = sbr.rel (%p300) target = $region20
        $region19: #{tpu_custom_call.1} parent=11 // pred_region
          %s304 = ssub.s32 1024, 1024
          %305 = vsyncadd [#allocation10], %s304
          %s306 = sshll.u32 [#allocation9], 4
          %s307 = int_to_ptr.vmem [resolvable:$true] %s306
          %312 = dma.hbm_to_vmem [thread:$0]  %s3, 1024, %s307, [#allocation10], 64, 64, 4
        $region20: #{tpu_custom_call.1} parent=11 // pred_fallthru
          _
        // Predicated region
        $region21: #{tpu_custom_call.1} parent=11 // pred_check
          %p313 = pneg %p141
        $region22: #{tpu_custom_call.1} parent=11 // pred_check_branch
          %315 = sbr.rel (%p313) target = $region24
        $region23: #{tpu_custom_call.1} parent=11 // pred_region
          %s317 = ssub.s32 1024, 1024
          %318 = vsyncadd [#allocation10], %s317
          %s319 = sshll.u32 [#allocation11], 4
          %s320 = int_to_ptr.vmem [resolvable:$true] %s319
          %325 = dma.hbm_to_vmem [thread:$0]  %s4, 1024, %s320, [#allocation10], 64, 64, 4
        $region24: #{tpu_custom_call.1} parent=11 // pred_fallthru
          _
        // Predicated region
        $region25: #{tpu_custom_call.1} parent=11 // pred_check
          %p326 = pneg %p162
        $region26: #{tpu_custom_call.1} parent=11 // pred_check_branch
          %328 = sbr.rel (%p326) target = $region28
        $region27: #{tpu_custom_call.1} parent=11 // pred_region
          _
        $region28: #{tpu_custom_call.1} parent=11 // pred_fallthru
          _
        // Predicated region
        $region29: #{tpu_custom_call.1} parent=11 // pred_check
          %p329 = pneg %p183
        $region30: #{tpu_custom_call.1} parent=11 // pred_check_branch
          %331 = sbr.rel (%p329) target = $region32
        $region31: #{tpu_custom_call.1} parent=11 // pred_region
          _
        $region32: #{tpu_custom_call.1} parent=11 // pred_fallthru
          _
        // Predicated region
        $region33: #{tpu_custom_call.1} parent=11 // pred_check
          %p332 = pneg %p204
        $region34: #{tpu_custom_call.1} parent=11 // pred_check_branch
          %334 = sbr.rel (%p332) target = $region36
        $region35: #{tpu_custom_call.1} parent=11 // pred_region
          _
        $region36: #{tpu_custom_call.1} parent=11 // pred_fallthru
          _
        // Predicated region
        $region37: #{tpu_custom_call.1} parent=11 // pred_check
          %p335 = pneg %p225
        $region38: #{tpu_custom_call.1} parent=11 // pred_check_branch
          %337 = sbr.rel (%p335) target = $region40
        $region39: #{tpu_custom_call.1} parent=11 // pred_region
          _
        $region40: #{tpu_custom_call.1} parent=11 // pred_fallthru
          _
        // Predicated region
        $region41: #{tpu_custom_call.1} parent=11 // pred_check
          %p338 = pneg %p246
        $region42: #{tpu_custom_call.1} parent=11 // pred_check_branch
          %340 = sbr.rel (%p338) target = $region44
        $region43: #{tpu_custom_call.1} parent=11 // pred_region
          _
        $region44: #{tpu_custom_call.1} parent=11 // pred_fallthru
          _
      $region12: #{tpu_custom_call.1} parent=5 // pred_fallthru
        _
      %p341 = scmp.lt.s32.totalorder %s26, 2
      // Predicated region
      $region45: #{tpu_custom_call.1} parent=5 // pred_check
        %p342 = pneg %p341
      $region46: #{tpu_custom_call.1} parent=5 // pred_check_branch
        %344 = sbr.rel (%p342) target = $region48
      $region47: #{tpu_custom_call.1} parent=5 // pred_region
        // Predicated region
        $region49: #{tpu_custom_call.1} parent=47 // pred_check
          %p345 = pneg %p46
        $region50: #{tpu_custom_call.1} parent=47 // pred_check_branch
          %347 = sbr.rel (%p345) target = $region52
        $region51: #{tpu_custom_call.1} parent=47 // pred_region
          %s348 = sand.u32 %s36, 1
          %s349 = scalar_lea.sflag [#allocation4], %s348
          %s350 = sand.u32 %s36, 1
          %s351 = smul.addr %s350, 128
          %s352 = scalar_lea.vmem [#allocation3], %s351
          %s354 = ssub.s32 2048, 2048
          %355 = vsyncadd %s349, %s354
          %s356 = smul.addr %s26, 128
          %s357 = scalar_lea.hbm %s0, %s356
          %s358 = sshll.u32 %s352, 4
          %s359 = int_to_ptr.vmem [resolvable:$true] %s358
          %364 = dma.hbm_to_vmem [thread:$0]  %s357, 2048, %s359, %s349, 256, 128, 8
        $region52: #{tpu_custom_call.1} parent=47 // pred_fallthru
          _
        // Predicated region
        $region53: #{tpu_custom_call.1} parent=47 // pred_check
          %p365 = pneg %p72
        $region54: #{tpu_custom_call.1} parent=47 // pred_check_branch
          %367 = sbr.rel (%p365) target = $region56
        $region55: #{tpu_custom_call.1} parent=47 // pred_region
          %s368 = sand.u32 %s26, 1
          %s369 = scalar_lea.sflag [#allocation7], %s368
          %s370 = sand.u32 %s62, 1
          %s371 = smul.addr %s370, 128
          %s372 = scalar_lea.vmem [#allocation6], %s371
          %s374 = ssub.s32 2048, 2048
          %375 = vsyncadd %s369, %s374
          %s376 = smul.addr %s26, 128
          %s377 = scalar_lea.hbm %s1, %s376
          %s378 = sshll.u32 %s372, 4
          %s379 = int_to_ptr.vmem [resolvable:$true] %s378
          %384 = dma.hbm_to_vmem [thread:$0]  %s377, 2048, %s379, %s369, 256, 128, 8
        $region56: #{tpu_custom_call.1} parent=47 // pred_fallthru
          _
      $region48: #{tpu_custom_call.1} parent=5 // pred_fallthru
        _
      %p385 = scmp.le.s32.totalorder 1, %s26
      %p386 = scmp.lt.s32.totalorder %s26, 3
      %p387 = pnand %p385, %p386
      %p388 = pneg %p387
      // Predicated region
      $region57: #{tpu_custom_call.1} parent=5 // pred_check
        _
      $region58: #{tpu_custom_call.1} parent=5 // pred_check_branch
        %390 = sbr.rel (%p387) target = $region60
      $region59: #{tpu_custom_call.1} parent=5 // pred_region
        %s391 = ssub.s32 %s26, 1
        %s392 = sand.u32 %s39, 1
        %s393 = scalar_lea.sflag [#allocation4], %s392
        %s394 = sand.u32 %s39, 1
        %s395 = smul.addr %s394, 128
        %s396 = scalar_lea.vmem [#allocation3], %s395
        // Predicated region
        $region61: #{tpu_custom_call.1} parent=59 // pred_check
          %p397 = pneg %p52
        $region62: #{tpu_custom_call.1} parent=59 // pred_check_branch
          %399 = sbr.rel (%p397) target = $region64
        $region63: #{tpu_custom_call.1} parent=59 // pred_region
          %400 = dma.done %s393, 2048
        $region64: #{tpu_custom_call.1} parent=59 // pred_fallthru
          _
        %s401 = sand.u32 %s31, 1
        %s402 = scalar_lea.sflag [#allocation7], %s401
        %s403 = sand.u32 %s65, 1
        %s404 = smul.addr %s403, 128
        %s405 = scalar_lea.vmem [#allocation6], %s404
        // Predicated region
        $region65: #{tpu_custom_call.1} parent=59 // pred_check
          %p406 = pneg %p78
        $region66: #{tpu_custom_call.1} parent=59 // pred_check_branch
          %408 = sbr.rel (%p406) target = $region68
        $region67: #{tpu_custom_call.1} parent=59 // pred_region
          %409 = dma.done %s402, 2048
        $region68: #{tpu_custom_call.1} parent=59 // pred_fallthru
          _
        // Predicated region
        $region69: #{tpu_custom_call.1} parent=59 // pred_check
          %p410 = pneg %p99
        $region70: #{tpu_custom_call.1} parent=59 // pred_check_branch
          %412 = sbr.rel (%p410) target = $region72
        $region71: #{tpu_custom_call.1} parent=59 // pred_region
          %413 = dma.done [#allocation7], 2048
        $region72: #{tpu_custom_call.1} parent=59 // pred_fallthru
          _
        // Predicated region
        $region73: #{tpu_custom_call.1} parent=59 // pred_check
          %p414 = pneg %p120
        $region74: #{tpu_custom_call.1} parent=59 // pred_check_branch
          %416 = sbr.rel (%p414) target = $region76
        $region75: #{tpu_custom_call.1} parent=59 // pred_region
          %417 = dma.done [#allocation10], 1024
        $region76: #{tpu_custom_call.1} parent=59 // pred_fallthru
          _
        // Predicated region
        $region77: #{tpu_custom_call.1} parent=59 // pred_check
          %p418 = pneg %p141
        $region78: #{tpu_custom_call.1} parent=59 // pred_check_branch
          %420 = sbr.rel (%p418) target = $region80
        $region79: #{tpu_custom_call.1} parent=59 // pred_region
          %421 = dma.done [#allocation10], 1024
        $region80: #{tpu_custom_call.1} parent=59 // pred_fallthru
          _
        %s422 = sand.u32 %s39, 1
        %s423 = scalar_lea.sflag [#allocation4], %s422
        %s424 = sand.u32 %s39, 1
        %s425 = smul.addr %s424, 128
        %s426 = scalar_lea.vmem [#allocation3], %s425
        %p427 = pneg %p52
        %p428 = pneg %p49
        %s429 = sand.u32 %s31, 1
        %s430 = scalar_lea.sflag [#allocation7], %s429
        %s431 = sand.u32 %s65, 1
        %s432 = smul.addr %s431, 128
        %s433 = scalar_lea.vmem [#allocation6], %s432
        %p434 = pneg %p78
        %p435 = pneg %p75
        %p436 = pneg %p99
        %p437 = pneg %p96
        %p438 = pneg %p120
        %p439 = pneg %p117
        %p440 = pneg %p141
        %p441 = pneg %p138
        %p442 = pneg %p162
        %p443 = pneg %p159
        %p444 = pneg %p183
        %p445 = pneg %p180
        %p446 = pneg %p204
        %p447 = pneg %p201
        %p448 = pneg %p225
        %p449 = pneg %p222
        %p450 = pneg %p246
        %p451 = pneg %p243
        %p452 = pneg %p272
        %p453 = pneg %p269
        %s454 = sand.u32 %s259, 1
        %s455 = scalar_lea.sflag [#allocation5], %s454
        %s456 = sand.u32 %s259, 1
        %s457 = smul.addr %s456, 128
        %s458 = scalar_lea.vmem [#allocation12], %s457
        %v460 = vld [vmem:[%s396] sm:$0xff]
        %v461 = vld [vmem:[%s396 + $0x8] sm:$0xff]
        %v462 = vld [vmem:[%s396 + $0x10] sm:$0xff]
        %v463 = vld [vmem:[%s396 + $0x18] sm:$0xff]
        %v464 = vld [vmem:[%s396 + $0x20] sm:$0xff]
        %v465 = vld [vmem:[%s396 + $0x28] sm:$0xff]
        %v466 = vld [vmem:[%s396 + $0x30] sm:$0xff]
        %v467 = vld [vmem:[%s396 + $0x38] sm:$0xff]
        %v468 = vld [vmem:[%s396 + $0x40] sm:$0xff]
        %v469 = vld [vmem:[%s396 + $0x48] sm:$0xff]
        %v470 = vld [vmem:[%s396 + $0x50] sm:$0xff]
        %v471 = vld [vmem:[%s396 + $0x58] sm:$0xff]
        %v472 = vld [vmem:[%s396 + $0x60] sm:$0xff]
        %v473 = vld [vmem:[%s396 + $0x68] sm:$0xff]
        %v474 = vld [vmem:[%s396 + $0x70] sm:$0xff]
        %v475 = vld [vmem:[%s396 + $0x78] sm:$0xff]
        %v476 = vld [vmem:[%s405] sm:$0xff]
        %v477 = vld [vmem:[%s405 + $0x8] sm:$0xff]
        %v478 = vld [vmem:[%s405 + $0x10] sm:$0xff]
        %v479 = vld [vmem:[%s405 + $0x18] sm:$0xff]
        %v480 = vld [vmem:[%s405 + $0x20] sm:$0xff]
        %v481 = vld [vmem:[%s405 + $0x28] sm:$0xff]
        %v482 = vld [vmem:[%s405 + $0x30] sm:$0xff]
        %v483 = vld [vmem:[%s405 + $0x38] sm:$0xff]
        %v484 = vld [vmem:[%s405 + $0x40] sm:$0xff]
        %v485 = vld [vmem:[%s405 + $0x48] sm:$0xff]
        %v486 = vld [vmem:[%s405 + $0x50] sm:$0xff]
        %v487 = vld [vmem:[%s405 + $0x58] sm:$0xff]
        %v488 = vld [vmem:[%s405 + $0x60] sm:$0xff]
        %v489 = vld [vmem:[%s405 + $0x68] sm:$0xff]
        %v490 = vld [vmem:[%s405 + $0x70] sm:$0xff]
        %v491 = vld [vmem:[%s405 + $0x78] sm:$0xff]
        %v492 = vadd.f32 %v460, %v476
        %v493 = vadd.f32 %v461, %v477
        %v494 = vadd.f32 %v462, %v478
        %v495 = vadd.f32 %v463, %v479
        %v496 = vadd.f32 %v464, %v480
        %v497 = vadd.f32 %v465, %v481
        %v498 = vadd.f32 %v466, %v482
        %v499 = vadd.f32 %v467, %v483
        %v500 = vadd.f32 %v468, %v484
        %v501 = vadd.f32 %v469, %v485
        %v502 = vadd.f32 %v470, %v486
        %v503 = vadd.f32 %v471, %v487
        %v504 = vadd.f32 %v472, %v488
        %v505 = vadd.f32 %v473, %v489
        %v506 = vadd.f32 %v474, %v490
        %v507 = vadd.f32 %v475, %v491
        %v508 = vcombine.low %v460, %v462
        %v509 = vcombine.high %v460, %v462
        %v511 = vunpack.c.l.s4 1983009808
        %v512 = vunpack.c.0.s8 %v511
        %v513 = vlaneseq
        %v514 = vshrl.u32 %v513, 7
        %v515 = vsub.s32 %v512, %v514
        %v516 = vrot.slane %v508, %v515
        %v518 = vunpack.c.l.s4 1983009808
        %v519 = vunpack.c.0.s8 %v518
        %v520 = vlaneseq
        %v521 = vshrl.u32 %v520, 7
        %v522 = vsub.s32 %v519, %v521
        %v523 = vrot.slane %v509, %v522
        %v524 = vcombine.low %v461, %v463
        %v525 = vcombine.high %v461, %v463
        %v527 = vunpack.c.l.s4 1983009808
        %v528 = vunpack.c.0.s8 %v527
        %v529 = vlaneseq
        %v530 = vshrl.u32 %v529, 7
        %v531 = vsub.s32 %v528, %v530
        %v532 = vrot.slane %v524, %v531
        %v534 = vunpack.c.l.s4 1983009808
        %v535 = vunpack.c.0.s8 %v534
        %v536 = vlaneseq
        %v537 = vshrl.u32 %v536, 7
        %v538 = vsub.s32 %v535, %v537
        %v539 = vrot.slane %v525, %v538
        %v540 = vcombine.low %v464, %v466
        %v541 = vcombine.high %v464, %v466
        %v543 = vunpack.c.l.s4 1983009808
        %v544 = vunpack.c.0.s8 %v543
        %v545 = vlaneseq
        %v546 = vshrl.u32 %v545, 7
        %v547 = vsub.s32 %v544, %v546
        %v548 = vrot.slane %v540, %v547
        %v550 = vunpack.c.l.s4 1983009808
        %v551 = vunpack.c.0.s8 %v550
        %v552 = vlaneseq
        %v553 = vshrl.u32 %v552, 7
        %v554 = vsub.s32 %v551, %v553
        %v555 = vrot.slane %v541, %v554
        %v556 = vcombine.low %v465, %v467
        %v557 = vcombine.high %v465, %v467
        %v559 = vunpack.c.l.s4 1983009808
        %v560 = vunpack.c.0.s8 %v559
        %v561 = vlaneseq
        %v562 = vshrl.u32 %v561, 7
        %v563 = vsub.s32 %v560, %v562
        %v564 = vrot.slane %v556, %v563
        %v566 = vunpack.c.l.s4 1983009808
        %v567 = vunpack.c.0.s8 %v566
        %v568 = vlaneseq
        %v569 = vshrl.u32 %v568, 7
        %v570 = vsub.s32 %v567, %v569
        %v571 = vrot.slane %v557, %v570
        %v572 = vcombine.low %v516, %v532
        %v573 = vcombine.high %v516, %v532
        %v575 = vunpack.c.l.s4 1934713408
        %v576 = vunpack.c.0.s8 %v575
        %v577 = vlaneseq
        %v578 = vshrl.u32 %v577, 7
        %v579 = vsub.s32 %v576, %v578
        %v580 = vrot.slane %v572, %v579
        %v582 = vunpack.c.l.s4 1934713408
        %v583 = vunpack.c.0.s8 %v582
        %v584 = vlaneseq
        %v585 = vshrl.u32 %v584, 7
        %v586 = vsub.s32 %v583, %v585
        %v587 = vrot.slane %v573, %v586
        %v588 = vcombine.low %v523, %v539
        %v589 = vcombine.high %v523, %v539
        %v591 = vunpack.c.l.s4 1934713408
        %v592 = vunpack.c.0.s8 %v591
        %v593 = vlaneseq
        %v594 = vshrl.u32 %v593, 7
        %v595 = vsub.s32 %v592, %v594
        %v596 = vrot.slane %v588, %v595
        %v598 = vunpack.c.l.s4 1934713408
        %v599 = vunpack.c.0.s8 %v598
        %v600 = vlaneseq
        %v601 = vshrl.u32 %v600, 7
        %v602 = vsub.s32 %v599, %v601
        %v603 = vrot.slane %v589, %v602
        %v604 = vcombine.low %v548, %v564
        %v605 = vcombine.high %v548, %v564
        %v607 = vunpack.c.l.s4 1934713408
        %v608 = vunpack.c.0.s8 %v607
        %v609 = vlaneseq
        %v610 = vshrl.u32 %v609, 7
        %v611 = vsub.s32 %v608, %v610
        %v612 = vrot.slane %v604, %v611
        %v614 = vunpack.c.l.s4 1934713408
        %v615 = vunpack.c.0.s8 %v614
        %v616 = vlaneseq
        %v617 = vshrl.u32 %v616, 7
        %v618 = vsub.s32 %v615, %v617
        %v619 = vrot.slane %v605, %v618
        %v620 = vcombine.low %v555, %v571
        %v621 = vcombine.high %v555, %v571
        %v623 = vunpack.c.l.s4 1934713408
        %v624 = vunpack.c.0.s8 %v623
        %v625 = vlaneseq
        %v626 = vshrl.u32 %v625, 7
        %v627 = vsub.s32 %v624, %v626
        %v628 = vrot.slane %v620, %v627
        %v630 = vunpack.c.l.s4 1934713408
        %v631 = vunpack.c.0.s8 %v630
        %v632 = vlaneseq
        %v633 = vshrl.u32 %v632, 7
        %v634 = vsub.s32 %v631, %v633
        %v635 = vrot.slane %v621, %v634
        %v636 = vcombine.low %v580, %v612
        %v637 = vcombine.high %v580, %v612
        %v638 = vcombine.low %v587, %v619
        %v639 = vcombine.high %v587, %v619
        %v640 = vcombine.low %v596, %v628
        %v641 = vcombine.high %v596, %v628
        %v642 = vcombine.low %v603, %v635
        %v643 = vcombine.high %v603, %v635
        %v644 = vcombine.low %v468, %v470
        %v645 = vcombine.high %v468, %v470
        %v647 = vunpack.c.l.s4 1983009808
        %v648 = vunpack.c.0.s8 %v647
        %v649 = vlaneseq
        %v650 = vshrl.u32 %v649, 7
        %v651 = vsub.s32 %v648, %v650
        %v652 = vrot.slane %v644, %v651
        %v654 = vunpack.c.l.s4 1983009808
        %v655 = vunpack.c.0.s8 %v654
        %v656 = vlaneseq
        %v657 = vshrl.u32 %v656, 7
        %v658 = vsub.s32 %v655, %v657
        %v659 = vrot.slane %v645, %v658
        %v660 = vcombine.low %v469, %v471
        %v661 = vcombine.high %v469, %v471
        %v663 = vunpack.c.l.s4 1983009808
        %v664 = vunpack.c.0.s8 %v663
        %v665 = vlaneseq
        %v666 = vshrl.u32 %v665, 7
        %v667 = vsub.s32 %v664, %v666
        %v668 = vrot.slane %v660, %v667
        %v670 = vunpack.c.l.s4 1983009808
        %v671 = vunpack.c.0.s8 %v670
        %v672 = vlaneseq
        %v673 = vshrl.u32 %v672, 7
        %v674 = vsub.s32 %v671, %v673
        %v675 = vrot.slane %v661, %v674
        %v676 = vcombine.low %v472, %v474
        %v677 = vcombine.high %v472, %v474
        %v679 = vunpack.c.l.s4 1983009808
        %v680 = vunpack.c.0.s8 %v679
        %v681 = vlaneseq
        %v682 = vshrl.u32 %v681, 7
        %v683 = vsub.s32 %v680, %v682
        %v684 = vrot.slane %v676, %v683
        %v686 = vunpack.c.l.s4 1983009808
        %v687 = vunpack.c.0.s8 %v686
        %v688 = vlaneseq
        %v689 = vshrl.u32 %v688, 7
        %v690 = vsub.s32 %v687, %v689
        %v691 = vrot.slane %v677, %v690
        %v692 = vcombine.low %v473, %v475
        %v693 = vcombine.high %v473, %v475
        %v695 = vunpack.c.l.s4 1983009808
        %v696 = vunpack.c.0.s8 %v695
        %v697 = vlaneseq
        %v698 = vshrl.u32 %v697, 7
        %v699 = vsub.s32 %v696, %v698
        %v700 = vrot.slane %v692, %v699
        %v702 = vunpack.c.l.s4 1983009808
        %v703 = vunpack.c.0.s8 %v702
        %v704 = vlaneseq
        %v705 = vshrl.u32 %v704, 7
        %v706 = vsub.s32 %v703, %v705
        %v707 = vrot.slane %v693, %v706
        %v708 = vcombine.low %v652, %v668
        %v709 = vcombine.high %v652, %v668
        %v711 = vunpack.c.l.s4 1934713408
        %v712 = vunpack.c.0.s8 %v711
        %v713 = vlaneseq
        %v714 = vshrl.u32 %v713, 7
        %v715 = vsub.s32 %v712, %v714
        %v716 = vrot.slane %v708, %v715
        %v718 = vunpack.c.l.s4 1934713408
        %v719 = vunpack.c.0.s8 %v718
        %v720 = vlaneseq
        %v721 = vshrl.u32 %v720, 7
        %v722 = vsub.s32 %v719, %v721
        %v723 = vrot.slane %v709, %v722
        %v724 = vcombine.low %v659, %v675
        %v725 = vcombine.high %v659, %v675
        %v727 = vunpack.c.l.s4 1934713408
        %v728 = vunpack.c.0.s8 %v727
        %v729 = vlaneseq
        %v730 = vshrl.u32 %v729, 7
        %v731 = vsub.s32 %v728, %v730
        %v732 = vrot.slane %v724, %v731
        %v734 = vunpack.c.l.s4 1934713408
        %v735 = vunpack.c.0.s8 %v734
        %v736 = vlaneseq
        %v737 = vshrl.u32 %v736, 7
        %v738 = vsub.s32 %v735, %v737
        %v739 = vrot.slane %v725, %v738
        %v740 = vcombine.low %v684, %v700
        %v741 = vcombine.high %v684, %v700
        %v743 = vunpack.c.l.s4 1934713408
        %v744 = vunpack.c.0.s8 %v743
        %v745 = vlaneseq
        %v746 = vshrl.u32 %v745, 7
        %v747 = vsub.s32 %v744, %v746
        %v748 = vrot.slane %v740, %v747
        %v750 = vunpack.c.l.s4 1934713408
        %v751 = vunpack.c.0.s8 %v750
        %v752 = vlaneseq
        %v753 = vshrl.u32 %v752, 7
        %v754 = vsub.s32 %v751, %v753
        %v755 = vrot.slane %v741, %v754
        %v756 = vcombine.low %v691, %v707
        %v757 = vcombine.high %v691, %v707
        %v759 = vunpack.c.l.s4 1934713408
        %v760 = vunpack.c.0.s8 %v759
        %v761 = vlaneseq
        %v762 = vshrl.u32 %v761, 7
        %v763 = vsub.s32 %v760, %v762
        %v764 = vrot.slane %v756, %v763
        %v766 = vunpack.c.l.s4 1934713408
        %v767 = vunpack.c.0.s8 %v766
        %v768 = vlaneseq
        %v769 = vshrl.u32 %v768, 7
        %v770 = vsub.s32 %v767, %v769
        %v771 = vrot.slane %v757, %v770
        %v772 = vcombine.low %v716, %v748
        %v773 = vcombine.high %v716, %v748
        %v774 = vcombine.low %v723, %v755
        %v775 = vcombine.high %v723, %v755
        %v776 = vcombine.low %v732, %v764
        %v777 = vcombine.high %v732, %v764
        %v778 = vcombine.low %v739, %v771
        %v779 = vcombine.high %v739, %v771
        %v780 = vcombine.low %v492, %v494
        %v781 = vcombine.high %v492, %v494
        %v783 = vunpack.c.l.s4 1983009808
        %v784 = vunpack.c.0.s8 %v783
        %v785 = vlaneseq
        %v786 = vshrl.u32 %v785, 7
        %v787 = vsub.s32 %v784, %v786
        %v788 = vrot.slane %v780, %v787
        %v790 = vunpack.c.l.s4 1983009808
        %v791 = vunpack.c.0.s8 %v790
        %v792 = vlaneseq
        %v793 = vshrl.u32 %v792, 7
        %v794 = vsub.s32 %v791, %v793
        %v795 = vrot.slane %v781, %v794
        %v796 = vcombine.low %v493, %v495
        %v797 = vcombine.high %v493, %v495
        %v799 = vunpack.c.l.s4 1983009808
        %v800 = vunpack.c.0.s8 %v799
        %v801 = vlaneseq
        %v802 = vshrl.u32 %v801, 7
        %v803 = vsub.s32 %v800, %v802
        %v804 = vrot.slane %v796, %v803
        %v806 = vunpack.c.l.s4 1983009808
        %v807 = vunpack.c.0.s8 %v806
        %v808 = vlaneseq
        %v809 = vshrl.u32 %v808, 7
        %v810 = vsub.s32 %v807, %v809
        %v811 = vrot.slane %v797, %v810
        %v812 = vcombine.low %v496, %v498
        %v813 = vcombine.high %v496, %v498
        %v815 = vunpack.c.l.s4 1983009808
        %v816 = vunpack.c.0.s8 %v815
        %v817 = vlaneseq
        %v818 = vshrl.u32 %v817, 7
        %v819 = vsub.s32 %v816, %v818
        %v820 = vrot.slane %v812, %v819
        %v822 = vunpack.c.l.s4 1983009808
        %v823 = vunpack.c.0.s8 %v822
        %v824 = vlaneseq
        %v825 = vshrl.u32 %v824, 7
        %v826 = vsub.s32 %v823, %v825
        %v827 = vrot.slane %v813, %v826
        %v828 = vcombine.low %v497, %v499
        %v829 = vcombine.high %v497, %v499
        %v831 = vunpack.c.l.s4 1983009808
        %v832 = vunpack.c.0.s8 %v831
        %v833 = vlaneseq
        %v834 = vshrl.u32 %v833, 7
        %v835 = vsub.s32 %v832, %v834
        %v836 = vrot.slane %v828, %v835
        %v838 = vunpack.c.l.s4 1983009808
        %v839 = vunpack.c.0.s8 %v838
        %v840 = vlaneseq
        %v841 = vshrl.u32 %v840, 7
        %v842 = vsub.s32 %v839, %v841
        %v843 = vrot.slane %v829, %v842
        %v844 = vcombine.low %v788, %v804
        %v845 = vcombine.high %v788, %v804
        %v847 = vunpack.c.l.s4 1934713408
        %v848 = vunpack.c.0.s8 %v847
        %v849 = vlaneseq
        %v850 = vshrl.u32 %v849, 7
        %v851 = vsub.s32 %v848, %v850
        %v852 = vrot.slane %v844, %v851
        %v854 = vunpack.c.l.s4 1934713408
        %v855 = vunpack.c.0.s8 %v854
        %v856 = vlaneseq
        %v857 = vshrl.u32 %v856, 7
        %v858 = vsub.s32 %v855, %v857
        %v859 = vrot.slane %v845, %v858
        %v860 = vcombine.low %v795, %v811
        %v861 = vcombine.high %v795, %v811
        %v863 = vunpack.c.l.s4 1934713408
        %v864 = vunpack.c.0.s8 %v863
        %v865 = vlaneseq
        %v866 = vshrl.u32 %v865, 7
        %v867 = vsub.s32 %v864, %v866
        %v868 = vrot.slane %v860, %v867
        %v870 = vunpack.c.l.s4 1934713408
        %v871 = vunpack.c.0.s8 %v870
        %v872 = vlaneseq
        %v873 = vshrl.u32 %v872, 7
        %v874 = vsub.s32 %v871, %v873
        %v875 = vrot.slane %v861, %v874
        %v876 = vcombine.low %v820, %v836
        %v877 = vcombine.high %v820, %v836
        %v879 = vunpack.c.l.s4 1934713408
        %v880 = vunpack.c.0.s8 %v879
        %v881 = vlaneseq
        %v882 = vshrl.u32 %v881, 7
        %v883 = vsub.s32 %v880, %v882
        %v884 = vrot.slane %v876, %v883
        %v886 = vunpack.c.l.s4 1934713408
        %v887 = vunpack.c.0.s8 %v886
        %v888 = vlaneseq
        %v889 = vshrl.u32 %v888, 7
        %v890 = vsub.s32 %v887, %v889
        %v891 = vrot.slane %v877, %v890
        %v892 = vcombine.low %v827, %v843
        %v893 = vcombine.high %v827, %v843
        %v895 = vunpack.c.l.s4 1934713408
        %v896 = vunpack.c.0.s8 %v895
        %v897 = vlaneseq
        %v898 = vshrl.u32 %v897, 7
        %v899 = vsub.s32 %v896, %v898
        %v900 = vrot.slane %v892, %v899
        %v902 = vunpack.c.l.s4 1934713408
        %v903 = vunpack.c.0.s8 %v902
        %v904 = vlaneseq
        %v905 = vshrl.u32 %v904, 7
        %v906 = vsub.s32 %v903, %v905
        %v907 = vrot.slane %v893, %v906
        %v908 = vcombine.low %v852, %v884
        %v909 = vcombine.high %v852, %v884
        %v910 = vcombine.low %v859, %v891
        %v911 = vcombine.high %v859, %v891
        %v912 = vcombine.low %v868, %v900
        %v913 = vcombine.high %v868, %v900
        %v914 = vcombine.low %v875, %v907
        %v915 = vcombine.high %v875, %v907
        %v916 = vcombine.low %v500, %v502
        %v917 = vcombine.high %v500, %v502
        %v919 = vunpack.c.l.s4 1983009808
        %v920 = vunpack.c.0.s8 %v919
        %v921 = vlaneseq
        %v922 = vshrl.u32 %v921, 7
        %v923 = vsub.s32 %v920, %v922
        %v924 = vrot.slane %v916, %v923
        %v926 = vunpack.c.l.s4 1983009808
        %v927 = vunpack.c.0.s8 %v926
        %v928 = vlaneseq
        %v929 = vshrl.u32 %v928, 7
        %v930 = vsub.s32 %v927, %v929
        %v931 = vrot.slane %v917, %v930
        %v932 = vcombine.low %v501, %v503
        %v933 = vcombine.high %v501, %v503
        %v935 = vunpack.c.l.s4 1983009808
        %v936 = vunpack.c.0.s8 %v935
        %v937 = vlaneseq
        %v938 = vshrl.u32 %v937, 7
        %v939 = vsub.s32 %v936, %v938
        %v940 = vrot.slane %v932, %v939
        %v942 = vunpack.c.l.s4 1983009808
        %v943 = vunpack.c.0.s8 %v942
        %v944 = vlaneseq
        %v945 = vshrl.u32 %v944, 7
        %v946 = vsub.s32 %v943, %v945
        %v947 = vrot.slane %v933, %v946
        %v948 = vcombine.low %v504, %v506
        %v949 = vcombine.high %v504, %v506
        %v951 = vunpack.c.l.s4 1983009808
        %v952 = vunpack.c.0.s8 %v951
        %v953 = vlaneseq
        %v954 = vshrl.u32 %v953, 7
        %v955 = vsub.s32 %v952, %v954
        %v956 = vrot.slane %v948, %v955
        %v958 = vunpack.c.l.s4 1983009808
        %v959 = vunpack.c.0.s8 %v958
        %v960 = vlaneseq
        %v961 = vshrl.u32 %v960, 7
        %v962 = vsub.s32 %v959, %v961
        %v963 = vrot.slane %v949, %v962
        %v964 = vcombine.low %v505, %v507
        %v965 = vcombine.high %v505, %v507
        %v967 = vunpack.c.l.s4 1983009808
        %v968 = vunpack.c.0.s8 %v967
        %v969 = vlaneseq
        %v970 = vshrl.u32 %v969, 7
        %v971 = vsub.s32 %v968, %v970
        %v972 = vrot.slane %v964, %v971
        %v974 = vunpack.c.l.s4 1983009808
        %v975 = vunpack.c.0.s8 %v974
        %v976 = vlaneseq
        %v977 = vshrl.u32 %v976, 7
        %v978 = vsub.s32 %v975, %v977
        %v979 = vrot.slane %v965, %v978
        %v980 = vcombine.low %v924, %v940
        %v981 = vcombine.high %v924, %v940
        %v983 = vunpack.c.l.s4 1934713408
        %v984 = vunpack.c.0.s8 %v983
        %v985 = vlaneseq
        %v986 = vshrl.u32 %v985, 7
        %v987 = vsub.s32 %v984, %v986
        %v988 = vrot.slane %v980, %v987
        %v990 = vunpack.c.l.s4 1934713408
        %v991 = vunpack.c.0.s8 %v990
        %v992 = vlaneseq
        %v993 = vshrl.u32 %v992, 7
        %v994 = vsub.s32 %v991, %v993
        %v995 = vrot.slane %v981, %v994
        %v996 = vcombine.low %v931, %v947
        %v997 = vcombine.high %v931, %v947
        %v999 = vunpack.c.l.s4 1934713408
        %v1000 = vunpack.c.0.s8 %v999
        %v1001 = vlaneseq
        %v1002 = vshrl.u32 %v1001, 7
        %v1003 = vsub.s32 %v1000, %v1002
        %v1004 = vrot.slane %v996, %v1003
        %v1006 = vunpack.c.l.s4 1934713408
        %v1007 = vunpack.c.0.s8 %v1006
        %v1008 = vlaneseq
        %v1009 = vshrl.u32 %v1008, 7
        %v1010 = vsub.s32 %v1007, %v1009
        %v1011 = vrot.slane %v997, %v1010
        %v1012 = vcombine.low %v956, %v972
        %v1013 = vcombine.high %v956, %v972
        %v1015 = vunpack.c.l.s4 1934713408
        %v1016 = vunpack.c.0.s8 %v1015
        %v1017 = vlaneseq
        %v1018 = vshrl.u32 %v1017, 7
        %v1019 = vsub.s32 %v1016, %v1018
        %v1020 = vrot.slane %v1012, %v1019
        %v1022 = vunpack.c.l.s4 1934713408
        %v1023 = vunpack.c.0.s8 %v1022
        %v1024 = vlaneseq
        %v1025 = vshrl.u32 %v1024, 7
        %v1026 = vsub.s32 %v1023, %v1025
        %v1027 = vrot.slane %v1013, %v1026
        %v1028 = vcombine.low %v963, %v979
        %v1029 = vcombine.high %v963, %v979
        %v1031 = vunpack.c.l.s4 1934713408
        %v1032 = vunpack.c.0.s8 %v1031
        %v1033 = vlaneseq
        %v1034 = vshrl.u32 %v1033, 7
        %v1035 = vsub.s32 %v1032, %v1034
        %v1036 = vrot.slane %v1028, %v1035
        %v1038 = vunpack.c.l.s4 1934713408
        %v1039 = vunpack.c.0.s8 %v1038
        %v1040 = vlaneseq
        %v1041 = vshrl.u32 %v1040, 7
        %v1042 = vsub.s32 %v1039, %v1041
        %v1043 = vrot.slane %v1029, %v1042
        %v1044 = vcombine.low %v988, %v1020
        %v1045 = vcombine.high %v988, %v1020
        %v1046 = vcombine.low %v995, %v1027
        %v1047 = vcombine.high %v995, %v1027
        %v1048 = vcombine.low %v1004, %v1036
        %v1049 = vcombine.high %v1004, %v1036
        %v1050 = vcombine.low %v1011, %v1043
        %v1051 = vcombine.high %v1011, %v1043
        %v1052 = vpack.c.bf16 %v1044, %v908
        %v1053 = vpack.c.bf16 %v1045, %v909
        %v1054 = vpack.c.bf16 %v1046, %v910
        %v1055 = vpack.c.bf16 %v1047, %v911
        %v1056 = vpack.c.bf16 %v1048, %v912
        %v1057 = vpack.c.bf16 %v1049, %v913
        %v1058 = vpack.c.bf16 %v1050, %v914
        %v1059 = vpack.c.bf16 %v1051, %v915
        %v1060 = vld [vmem:[#allocation8] sm:$0xff]
        %v1061 = vld [vmem:[#allocation8 + $0x8] sm:$0xff]
        %v1062 = vld [vmem:[#allocation8 + $0x10] sm:$0xff]
        %v1063 = vld [vmem:[#allocation8 + $0x18] sm:$0xff]
        %v1064 = vld [vmem:[#allocation8 + $0x20] sm:$0xff]
        %v1065 = vld [vmem:[#allocation8 + $0x28] sm:$0xff]
        %v1066 = vld [vmem:[#allocation8 + $0x30] sm:$0xff]
        %v1067 = vld [vmem:[#allocation8 + $0x38] sm:$0xff]
        %v1068 = vld [vmem:[#allocation8 + $0x40] sm:$0xff]
        %v1069 = vld [vmem:[#allocation8 + $0x48] sm:$0xff]
        %v1070 = vld [vmem:[#allocation8 + $0x50] sm:$0xff]
        %v1071 = vld [vmem:[#allocation8 + $0x58] sm:$0xff]
        %v1072 = vld [vmem:[#allocation8 + $0x60] sm:$0xff]
        %v1073 = vld [vmem:[#allocation8 + $0x68] sm:$0xff]
        %v1074 = vld [vmem:[#allocation8 + $0x70] sm:$0xff]
        %v1075 = vld [vmem:[#allocation8 + $0x78] sm:$0xff]
        %v1092 = vunpack.c.l.b16 %v1060
        %v1093 = vunpack.c.h.b16 %v1060
        %v1094 = vunpack.c.l.b16 %v1061
        %v1095 = vunpack.c.h.b16 %v1061
        %v1096 = vunpack.c.l.b16 %v1062
        %v1097 = vunpack.c.h.b16 %v1062
        %v1098 = vunpack.c.l.b16 %v1063
        %v1099 = vunpack.c.h.b16 %v1063
        %v1100 = vunpack.c.l.b16 %v1064
        %v1101 = vunpack.c.h.b16 %v1064
        %v1102 = vunpack.c.l.b16 %v1065
        %v1103 = vunpack.c.h.b16 %v1065
        %v1104 = vunpack.c.l.b16 %v1066
        %v1105 = vunpack.c.h.b16 %v1066
        %v1106 = vunpack.c.l.b16 %v1067
        %v1107 = vunpack.c.h.b16 %v1067
        %v1108 = vunpack.c.l.b16 %v1068
        %v1109 = vunpack.c.h.b16 %v1068
        %v1110 = vunpack.c.l.b16 %v1069
        %v1111 = vunpack.c.h.b16 %v1069
        %v1112 = vunpack.c.l.b16 %v1070
        %v1113 = vunpack.c.h.b16 %v1070
        %v1114 = vunpack.c.l.b16 %v1071
        %v1115 = vunpack.c.h.b16 %v1071
        %v1116 = vunpack.c.l.b16 %v1072
        %v1117 = vunpack.c.h.b16 %v1072
        %v1118 = vunpack.c.l.b16 %v1073
        %v1119 = vunpack.c.h.b16 %v1073
        %v1120 = vunpack.c.l.b16 %v1074
        %v1121 = vunpack.c.h.b16 %v1074
        %v1122 = vunpack.c.l.b16 %v1075
        %v1123 = vunpack.c.h.b16 %v1075
        %v1124 = vpack.c.b16 %v1094, %v1092
        %v1125 = vpack.c.b16 %v1095, %v1093
        %v1126 = vpack.c.b16 %v1098, %v1096
        %v1127 = vpack.c.b16 %v1099, %v1097
        %v1128 = vpack.c.b16 %v1102, %v1100
        %v1129 = vpack.c.b16 %v1103, %v1101
        %v1130 = vpack.c.b16 %v1106, %v1104
        %v1131 = vpack.c.b16 %v1107, %v1105
        %v1132 = vpack.c.b16 %v1110, %v1108
        %v1133 = vpack.c.b16 %v1111, %v1109
        %v1134 = vpack.c.b16 %v1114, %v1112
        %v1135 = vpack.c.b16 %v1115, %v1113
        %v1136 = vpack.c.b16 %v1118, %v1116
        %v1137 = vpack.c.b16 %v1119, %v1117
        %v1138 = vpack.c.b16 %v1122, %v1120
        %v1139 = vpack.c.b16 %v1123, %v1121
        %1156 = vmatprep.subr.bf16.mxu0 %v1139
        %1157 = vmatpush1.bf16.msra.mxu0 %v1138
        %1158 = vmatprep.subr.bf16.mxu0 %v1137
        %1159 = vmatpush1.bf16.msra.mxu0 %v1136
        %1160 = vmatprep.subr.bf16.mxu0 %v1135
        %1161 = vmatpush1.bf16.msra.mxu0 %v1134
        %1162 = vmatprep.subr.bf16.mxu0 %v1133
        %1163 = vmatpush1.bf16.msra.mxu0 %v1132
        %1164 = vmatprep.subr.bf16.mxu0 %v1131
        %1165 = vmatpush1.bf16.msra.mxu0 %v1130
        %1166 = vmatprep.subr.bf16.mxu0 %v1129
        %1167 = vmatpush1.bf16.msra.mxu0 %v1128
        %1168 = vmatprep.subr.bf16.mxu0 %v1127
        %1169 = vmatpush1.bf16.msra.mxu0 %v1126
        %1170 = vmatprep.subr.bf16.mxu0 %v1125
        %1171 = vmatpush1.bf16.msra.mxu0 %v1124
        %1172 = vmatprep.subr.bf16.mxu0 0
        %1173 = vmatpush2.bf16.msra.mxu0 0
        %1174 = vmatprep.subr.bf16.mxu0 0
        %1175 = vmatpush2.bf16.msra.mxu0 0
        %1176 = vmatprep.subr.bf16.mxu0 0
        %1177 = vmatpush2.bf16.msra.mxu0 0
        %1178 = vmatprep.subr.bf16.mxu0 0
        %1179 = vmatpush2.bf16.msra.mxu0 0
        %1180 = vmatprep.subr.bf16.mxu0 0
        %1181 = vmatpush2.bf16.msra.mxu0 0
        %1182 = vmatprep.subr.bf16.mxu0 0
        %1183 = vmatpush2.bf16.msra.mxu0 0
        %1184 = vmatprep.subr.bf16.mxu0 0
        %1185 = vmatpush2.bf16.msra.mxu0 0
        %1186 = vmatprep.subr.bf16.mxu0 0
        %1187 = vmatpush2.bf16.msra.mxu0 0
        %1188 = vmatprep.mubr.bf16.mxu0 0
        %1189 = vmatmul.mubr.bf16.gmra.mxu0 %v1052
        %v1190 = vpop.f32.mrf.mxu0
        %v1191 = vadd.f32 0.0, %v1190
        %v1192 = vpop.f32.mrf.mxu0
        %v1193 = vadd.f32 0.0, %v1192
        %v1194 = vpop.f32.mrf.mxu0
        %v1195 = vadd.f32 0.0, %v1194
        %v1196 = vpop.f32.mrf.mxu0
        %v1197 = vadd.f32 0.0, %v1196
        %1198 = vmatprep.mubr.bf16.mxu0 0
        %1199 = vmatmul.mubr.bf16.gmra.mxu0 %v1053
        %v1200 = vpop.f32.mrf.mxu0
        %v1201 = vadd.f32 0.0, %v1200
        %v1202 = vpop.f32.mrf.mxu0
        %v1203 = vadd.f32 0.0, %v1202
        %v1204 = vpop.f32.mrf.mxu0
        %v1205 = vadd.f32 0.0, %v1204
        %v1206 = vpop.f32.mrf.mxu0
        %v1207 = vadd.f32 0.0, %v1206
        %1208 = vmatprep.mubr.bf16.mxu0 0
        %1209 = vmatmul.mubr.bf16.gmra.mxu0 %v1054
        %v1210 = vpop.f32.mrf.mxu0
        %v1211 = vadd.f32 0.0, %v1210
        %v1212 = vpop.f32.mrf.mxu0
        %v1213 = vadd.f32 0.0, %v1212
        %v1214 = vpop.f32.mrf.mxu0
        %v1215 = vadd.f32 0.0, %v1214
        %v1216 = vpop.f32.mrf.mxu0
        %v1217 = vadd.f32 0.0, %v1216
        %1218 = vmatprep.mubr.bf16.mxu0 0
        %1219 = vmatmul.mubr.bf16.gmra.mxu0 %v1055
        %v1220 = vpop.f32.mrf.mxu0
        %v1221 = vadd.f32 0.0, %v1220
        %v1222 = vpop.f32.mrf.mxu0
        %v1223 = vadd.f32 0.0, %v1222
        %v1224 = vpop.f32.mrf.mxu0
        %v1225 = vadd.f32 0.0, %v1224
        %v1226 = vpop.f32.mrf.mxu0
        %v1227 = vadd.f32 0.0, %v1226
        %1228 = vmatprep.mubr.bf16.mxu0 0
        %1229 = vmatmul.mubr.bf16.gmra.mxu0 %v1056
        %v1230 = vpop.f32.mrf.mxu0
        %v1231 = vadd.f32 0.0, %v1230
        %v1232 = vpop.f32.mrf.mxu0
        %v1233 = vadd.f32 0.0, %v1232
        %v1234 = vpop.f32.mrf.mxu0
        %v1235 = vadd.f32 0.0, %v1234
        %v1236 = vpop.f32.mrf.mxu0
        %v1237 = vadd.f32 0.0, %v1236
        %1238 = vmatprep.mubr.bf16.mxu0 0
        %1239 = vmatmul.mubr.bf16.gmra.mxu0 %v1057
        %v1240 = vpop.f32.mrf.mxu0
        %v1241 = vadd.f32 0.0, %v1240
        %v1242 = vpop.f32.mrf.mxu0
        %v1243 = vadd.f32 0.0, %v1242
        %v1244 = vpop.f32.mrf.mxu0
        %v1245 = vadd.f32 0.0, %v1244
        %v1246 = vpop.f32.mrf.mxu0
        %v1247 = vadd.f32 0.0, %v1246
        %1248 = vmatprep.mubr.bf16.mxu0 0
        %1249 = vmatmul.mubr.bf16.gmra.mxu0 %v1058
        %v1250 = vpop.f32.mrf.mxu0
        %v1251 = vadd.f32 0.0, %v1250
        %v1252 = vpop.f32.mrf.mxu0
        %v1253 = vadd.f32 0.0, %v1252
        %v1254 = vpop.f32.mrf.mxu0
        %v1255 = vadd.f32 0.0, %v1254
        %v1256 = vpop.f32.mrf.mxu0
        %v1257 = vadd.f32 0.0, %v1256
        %1258 = vmatprep.mubr.bf16.mxu0 0
        %1259 = vmatmul.mubr.bf16.gmra.mxu0 %v1059
        %v1260 = vpop.f32.mrf.mxu0
        %v1261 = vadd.f32 0.0, %v1260
        %v1262 = vpop.f32.mrf.mxu0
        %v1263 = vadd.f32 0.0, %v1262
        %v1264 = vpop.f32.mrf.mxu0
        %v1265 = vadd.f32 0.0, %v1264
        %v1266 = vpop.f32.mrf.mxu0
        %v1267 = vadd.f32 0.0, %v1266
        %1268 = vdwg.mxu0
        %v1269 = vpack.c.bf16 %v772, %v636
        %v1270 = vpack.c.bf16 %v773, %v637
        %v1271 = vpack.c.bf16 %v774, %v638
        %v1272 = vpack.c.bf16 %v775, %v639
        %v1273 = vpack.c.bf16 %v776, %v640
        %v1274 = vpack.c.bf16 %v777, %v641
        %v1275 = vpack.c.bf16 %v778, %v642
        %v1276 = vpack.c.bf16 %v779, %v643
        %v1277 = vld [vmem:[#allocation9] sm:$0xf]
        %v1278 = vld [vmem:[#allocation9 + $0x4] sm:$0xf]
        %v1279 = vld [vmem:[#allocation9 + $0x8] sm:$0xf]
        %v1280 = vld [vmem:[#allocation9 + $0xc] sm:$0xf]
        %v1281 = vld [vmem:[#allocation9 + $0x10] sm:$0xf]
        %v1282 = vld [vmem:[#allocation9 + $0x14] sm:$0xf]
        %v1283 = vld [vmem:[#allocation9 + $0x18] sm:$0xf]
        %v1284 = vld [vmem:[#allocation9 + $0x1c] sm:$0xf]
        %v1285 = vld [vmem:[#allocation9 + $0x20] sm:$0xf]
        %v1286 = vld [vmem:[#allocation9 + $0x24] sm:$0xf]
        %v1287 = vld [vmem:[#allocation9 + $0x28] sm:$0xf]
        %v1288 = vld [vmem:[#allocation9 + $0x2c] sm:$0xf]
        %v1289 = vld [vmem:[#allocation9 + $0x30] sm:$0xf]
        %v1290 = vld [vmem:[#allocation9 + $0x34] sm:$0xf]
        %v1291 = vld [vmem:[#allocation9 + $0x38] sm:$0xf]
        %v1292 = vld [vmem:[#allocation9 + $0x3c] sm:$0xf]
        %v1293 = vld [vmem:[%s6] sm:$0x1]
        %v1295 = vlaneseq
        %v1296 = vshrl.u32 %v1295, 7
        %v1297 = vsub.s32 0, %v1296
        %v1298 = vrot.slane %v1293, %v1297
        %v1316 = vunpack.c.l.b16 %v1277
        %v1317 = vunpack.c.l.b16 %v1278
        %v1318 = vunpack.c.l.b16 %v1279
        %v1319 = vunpack.c.l.b16 %v1280
        %v1320 = vunpack.c.l.b16 %v1281
        %v1321 = vunpack.c.l.b16 %v1282
        %v1322 = vunpack.c.l.b16 %v1283
        %v1323 = vunpack.c.l.b16 %v1284
        %v1324 = vunpack.c.l.b16 %v1285
        %v1325 = vunpack.c.l.b16 %v1286
        %v1326 = vunpack.c.l.b16 %v1287
        %v1327 = vunpack.c.l.b16 %v1288
        %v1328 = vunpack.c.l.b16 %v1289
        %v1329 = vunpack.c.l.b16 %v1290
        %v1330 = vunpack.c.l.b16 %v1291
        %v1331 = vunpack.c.l.b16 %v1292
        %v1332 = vpack.c.b16 %v1317, %v1316
        %v1333 = vpack.c.b16 %v1319, %v1318
        %v1334 = vpack.c.b16 %v1321, %v1320
        %v1335 = vpack.c.b16 %v1323, %v1322
        %v1336 = vpack.c.b16 %v1325, %v1324
        %v1337 = vpack.c.b16 %v1327, %v1326
        %v1338 = vpack.c.b16 %v1329, %v1328
        %v1339 = vpack.c.b16 %v1331, %v1330
        %1348 = vmatprep.subr.bf16.mxu0 0
        %1349 = vmatpush1.bf16.msra.mxu0 %v1339
        %1350 = vmatprep.subr.bf16.mxu0 0
        %1351 = vmatpush1.bf16.msra.mxu0 %v1338
        %1352 = vmatprep.subr.bf16.mxu0 0
        %1353 = vmatpush1.bf16.msra.mxu0 %v1337
        %1354 = vmatprep.subr.bf16.mxu0 0
        %1355 = vmatpush1.bf16.msra.mxu0 %v1336
        %1356 = vmatprep.subr.bf16.mxu0 0
        %1357 = vmatpush1.bf16.msra.mxu0 %v1335
        %1358 = vmatprep.subr.bf16.mxu0 0
        %1359 = vmatpush1.bf16.msra.mxu0 %v1334
        %1360 = vmatprep.subr.bf16.mxu0 0
        %1361 = vmatpush1.bf16.msra.mxu0 %v1333
        %1362 = vmatprep.subr.bf16.mxu0 0
        %1363 = vmatpush1.bf16.msra.mxu0 %v1332
        %1364 = vmatprep.subr.bf16.mxu0 0
        %1365 = vmatpush2.bf16.msra.mxu0 0
        %1366 = vmatprep.subr.bf16.mxu0 0
        %1367 = vmatpush2.bf16.msra.mxu0 0
        %1368 = vmatprep.subr.bf16.mxu0 0
        %1369 = vmatpush2.bf16.msra.mxu0 0
        %1370 = vmatprep.subr.bf16.mxu0 0
        %1371 = vmatpush2.bf16.msra.mxu0 0
        %1372 = vmatprep.subr.bf16.mxu0 0
        %1373 = vmatpush2.bf16.msra.mxu0 0
        %1374 = vmatprep.subr.bf16.mxu0 0
        %1375 = vmatpush2.bf16.msra.mxu0 0
        %1376 = vmatprep.subr.bf16.mxu0 0
        %1377 = vmatpush2.bf16.msra.mxu0 0
        %1378 = vmatprep.subr.bf16.mxu0 0
        %1379 = vmatpush2.bf16.msra.mxu0 0
        %1380 = vmatprep.mubr.bf16.mxu0 0
        %1381 = vmatmul.mubr.bf16.gmra.mxu0 %v1269
        %v1382 = vpop.f32.mrf.mxu0
        %v1383 = vadd.f32 %v1298, %v1382
        %v1384 = vpop.f32.mrf.mxu0
        %v1385 = vpop.f32.mrf.mxu0
        %v1386 = vadd.f32 %v1298, %v1385
        %v1387 = vpop.f32.mrf.mxu0
        %1388 = vmatprep.mubr.bf16.mxu0 0
        %1389 = vmatmul.mubr.bf16.gmra.mxu0 %v1270
        %v1390 = vpop.f32.mrf.mxu0
        %v1391 = vadd.f32 %v1298, %v1390
        %v1392 = vpop.f32.mrf.mxu0
        %v1393 = vpop.f32.mrf.mxu0
        %v1394 = vadd.f32 %v1298, %v1393
        %v1395 = vpop.f32.mrf.mxu0
        %1396 = vmatprep.mubr.bf16.mxu0 0
        %1397 = vmatmul.mubr.bf16.gmra.mxu0 %v1271
        %v1398 = vpop.f32.mrf.mxu0
        %v1399 = vadd.f32 %v1298, %v1398
        %v1400 = vpop.f32.mrf.mxu0
        %v1401 = vpop.f32.mrf.mxu0
        %v1402 = vadd.f32 %v1298, %v1401
        %v1403 = vpop.f32.mrf.mxu0
        %1404 = vmatprep.mubr.bf16.mxu0 0
        %1405 = vmatmul.mubr.bf16.gmra.mxu0 %v1272
        %v1406 = vpop.f32.mrf.mxu0
        %v1407 = vadd.f32 %v1298, %v1406
        %v1408 = vpop.f32.mrf.mxu0
        %v1409 = vpop.f32.mrf.mxu0
        %v1410 = vadd.f32 %v1298, %v1409
        %v1411 = vpop.f32.mrf.mxu0
        %1412 = vmatprep.mubr.bf16.mxu0 0
        %1413 = vmatmul.mubr.bf16.gmra.mxu0 %v1273
        %v1414 = vpop.f32.mrf.mxu0
        %v1415 = vadd.f32 %v1298, %v1414
        %v1416 = vpop.f32.mrf.mxu0
        %v1417 = vpop.f32.mrf.mxu0
        %v1418 = vadd.f32 %v1298, %v1417
        %v1419 = vpop.f32.mrf.mxu0
        %1420 = vmatprep.mubr.bf16.mxu0 0
        %1421 = vmatmul.mubr.bf16.gmra.mxu0 %v1274
        %v1422 = vpop.f32.mrf.mxu0
        %v1423 = vadd.f32 %v1298, %v1422
        %v1424 = vpop.f32.mrf.mxu0
        %v1425 = vpop.f32.mrf.mxu0
        %v1426 = vadd.f32 %v1298, %v1425
        %v1427 = vpop.f32.mrf.mxu0
        %1428 = vmatprep.mubr.bf16.mxu0 0
        %1429 = vmatmul.mubr.bf16.gmra.mxu0 %v1275
        %v1430 = vpop.f32.mrf.mxu0
        %v1431 = vadd.f32 %v1298, %v1430
        %v1432 = vpop.f32.mrf.mxu0
        %v1433 = vpop.f32.mrf.mxu0
        %v1434 = vadd.f32 %v1298, %v1433
        %v1435 = vpop.f32.mrf.mxu0
        %1436 = vmatprep.mubr.bf16.mxu0 0
        %1437 = vmatmul.mubr.bf16.gmra.mxu0 %v1276
        %v1438 = vpop.f32.mrf.mxu0
        %v1439 = vadd.f32 %v1298, %v1438
        %v1440 = vpop.f32.mrf.mxu0
        %v1441 = vpop.f32.mrf.mxu0
        %v1442 = vadd.f32 %v1298, %v1441
        %v1443 = vpop.f32.mrf.mxu0
        %1444 = vdwg.mxu0
        %v1445 = vld [vmem:[%s5] sm:$0x1]
        %v1447 = vlaneseq
        %v1448 = vshrl.u32 %v1447, 7
        %v1449 = vsub.s32 0, %v1448
        %v1450 = vrot.slane %v1445, %v1449
        %v1452 = vadd.f32 %v1191, %v1450
        %v1453 = vadd.f32 %v1195, %v1450
        %v1454 = vadd.f32 %v1201, %v1450
        %v1455 = vadd.f32 %v1205, %v1450
        %v1456 = vadd.f32 %v1211, %v1450
        %v1457 = vadd.f32 %v1215, %v1450
        %v1458 = vadd.f32 %v1221, %v1450
        %v1459 = vadd.f32 %v1225, %v1450
        %v1460 = vadd.f32 %v1231, %v1450
        %v1461 = vadd.f32 %v1235, %v1450
        %v1462 = vadd.f32 %v1241, %v1450
        %v1463 = vadd.f32 %v1245, %v1450
        %v1464 = vadd.f32 %v1251, %v1450
        %v1465 = vadd.f32 %v1255, %v1450
        %v1466 = vadd.f32 %v1261, %v1450
        %v1467 = vadd.f32 %v1265, %v1450
        %v1468 = vpack.c.bf16 %v1453, %v1452
        %v1469 = vpack.c.bf16 %v1455, %v1454
        %v1470 = vpack.c.bf16 %v1457, %v1456
        %v1471 = vpack.c.bf16 %v1459, %v1458
        %v1472 = vpack.c.bf16 %v1461, %v1460
        %v1473 = vpack.c.bf16 %v1463, %v1462
        %v1474 = vpack.c.bf16 %v1465, %v1464
        %v1475 = vpack.c.bf16 %v1467, %v1466
        %v1476 = vpack.c.bf16 %v1197, %v1193
        %v1477 = vpack.c.bf16 %v1207, %v1203
        %v1478 = vpack.c.bf16 %v1217, %v1213
        %v1479 = vpack.c.bf16 %v1227, %v1223
        %v1480 = vpack.c.bf16 %v1237, %v1233
        %v1481 = vpack.c.bf16 %v1247, %v1243
        %v1482 = vpack.c.bf16 %v1257, %v1253
        %v1483 = vpack.c.bf16 %v1267, %v1263
        %v1484 = vpack.c.bf16 %v1386, %v1383
        %v1485 = vpack.c.bf16 %v1394, %v1391
        %v1486 = vpack.c.bf16 %v1402, %v1399
        %v1487 = vpack.c.bf16 %v1410, %v1407
        %v1488 = vpack.c.bf16 %v1418, %v1415
        %v1489 = vpack.c.bf16 %v1426, %v1423
        %v1490 = vpack.c.bf16 %v1434, %v1431
        %v1491 = vpack.c.bf16 %v1442, %v1439
        %1500 = vrot.lane.b32.xlu0 %v1468, 96
        %v1501 = vpop.permute.xlu0 %1500
        %1502 = vrot.lane.b32.xlu0 %v1469, 96
        %v1503 = vpop.permute.xlu0 %1502
        %1504 = vrot.lane.b32.xlu0 %v1470, 96
        %v1505 = vpop.permute.xlu0 %1504
        %1506 = vrot.lane.b32.xlu0 %v1471, 96
        %v1507 = vpop.permute.xlu0 %1506
        %1508 = vrot.lane.b32.xlu0 %v1472, 96
        %v1509 = vpop.permute.xlu0 %1508
        %1510 = vrot.lane.b32.xlu0 %v1473, 96
        %v1511 = vpop.permute.xlu0 %1510
        %1512 = vrot.lane.b32.xlu0 %v1474, 96
        %v1513 = vpop.permute.xlu0 %1512
        %1514 = vrot.lane.b32.xlu0 %v1475, 96
        %v1515 = vpop.permute.xlu0 %1514
        %1516 = vrot.lane.b32.xlu0 %v1468, 64
        %v1517 = vpop.permute.xlu0 %1516
        %1518 = vrot.lane.b32.xlu0 %v1469, 64
        %v1519 = vpop.permute.xlu0 %1518
        %1520 = vrot.lane.b32.xlu0 %v1470, 64
        %v1521 = vpop.permute.xlu0 %1520
        %1522 = vrot.lane.b32.xlu0 %v1471, 64
        %v1523 = vpop.permute.xlu0 %1522
        %1524 = vrot.lane.b32.xlu0 %v1472, 64
        %v1525 = vpop.permute.xlu0 %1524
        %1526 = vrot.lane.b32.xlu0 %v1473, 64
        %v1527 = vpop.permute.xlu0 %1526
        %1528 = vrot.lane.b32.xlu0 %v1474, 64
        %v1529 = vpop.permute.xlu0 %1528
        %1530 = vrot.lane.b32.xlu0 %v1475, 64
        %v1531 = vpop.permute.xlu0 %1530
        %1532 = vrot.lane.b32.xlu0 %v1468, 32
        %v1533 = vpop.permute.xlu0 %1532
        %1534 = vrot.lane.b32.xlu0 %v1469, 32
        %v1535 = vpop.permute.xlu0 %1534
        %1536 = vrot.lane.b32.xlu0 %v1470, 32
        %v1537 = vpop.permute.xlu0 %1536
        %1538 = vrot.lane.b32.xlu0 %v1471, 32
        %v1539 = vpop.permute.xlu0 %1538
        %1540 = vrot.lane.b32.xlu0 %v1472, 32
        %v1541 = vpop.permute.xlu0 %1540
        %1542 = vrot.lane.b32.xlu0 %v1473, 32
        %v1543 = vpop.permute.xlu0 %1542
        %1544 = vrot.lane.b32.xlu0 %v1474, 32
        %v1545 = vpop.permute.xlu0 %1544
        %1546 = vrot.lane.b32.xlu0 %v1475, 32
        %v1547 = vpop.permute.xlu0 %1546
        %1556 = vrot.lane.b32.xlu0 %v1476, 96
        %v1557 = vpop.permute.xlu0 %1556
        %1558 = vrot.lane.b32.xlu0 %v1477, 96
        %v1559 = vpop.permute.xlu0 %1558
        %1560 = vrot.lane.b32.xlu0 %v1478, 96
        %v1561 = vpop.permute.xlu0 %1560
        %1562 = vrot.lane.b32.xlu0 %v1479, 96
        %v1563 = vpop.permute.xlu0 %1562
        %1564 = vrot.lane.b32.xlu0 %v1480, 96
        %v1565 = vpop.permute.xlu0 %1564
        %1566 = vrot.lane.b32.xlu0 %v1481, 96
        %v1567 = vpop.permute.xlu0 %1566
        %1568 = vrot.lane.b32.xlu0 %v1482, 96
        %v1569 = vpop.permute.xlu0 %1568
        %1570 = vrot.lane.b32.xlu0 %v1483, 96
        %v1571 = vpop.permute.xlu0 %1570
        %1572 = vrot.lane.b32.xlu0 %v1476, 64
        %v1573 = vpop.permute.xlu0 %1572
        %1574 = vrot.lane.b32.xlu0 %v1477, 64
        %v1575 = vpop.permute.xlu0 %1574
        %1576 = vrot.lane.b32.xlu0 %v1478, 64
        %v1577 = vpop.permute.xlu0 %1576
        %1578 = vrot.lane.b32.xlu0 %v1479, 64
        %v1579 = vpop.permute.xlu0 %1578
        %1580 = vrot.lane.b32.xlu0 %v1480, 64
        %v1581 = vpop.permute.xlu0 %1580
        %1582 = vrot.lane.b32.xlu0 %v1481, 64
        %v1583 = vpop.permute.xlu0 %1582
        %1584 = vrot.lane.b32.xlu0 %v1482, 64
        %v1585 = vpop.permute.xlu0 %1584
        %1586 = vrot.lane.b32.xlu0 %v1483, 64
        %v1587 = vpop.permute.xlu0 %1586
        %1588 = vrot.lane.b32.xlu0 %v1476, 32
        %v1589 = vpop.permute.xlu0 %1588
        %1590 = vrot.lane.b32.xlu0 %v1477, 32
        %v1591 = vpop.permute.xlu0 %1590
        %1592 = vrot.lane.b32.xlu0 %v1478, 32
        %v1593 = vpop.permute.xlu0 %1592
        %1594 = vrot.lane.b32.xlu0 %v1479, 32
        %v1595 = vpop.permute.xlu0 %1594
        %1596 = vrot.lane.b32.xlu0 %v1480, 32
        %v1597 = vpop.permute.xlu0 %1596
        %1598 = vrot.lane.b32.xlu0 %v1481, 32
        %v1599 = vpop.permute.xlu0 %1598
        %1600 = vrot.lane.b32.xlu0 %v1482, 32
        %v1601 = vpop.permute.xlu0 %1600
        %1602 = vrot.lane.b32.xlu0 %v1483, 32
        %v1603 = vpop.permute.xlu0 %1602
        %1612 = vrot.lane.b32.xlu0 %v1484, 96
        %v1613 = vpop.permute.xlu0 %1612
        %1614 = vrot.lane.b32.xlu0 %v1485, 96
        %v1615 = vpop.permute.xlu0 %1614
        %1616 = vrot.lane.b32.xlu0 %v1486, 96
        %v1617 = vpop.permute.xlu0 %1616
        %1618 = vrot.lane.b32.xlu0 %v1487, 96
        %v1619 = vpop.permute.xlu0 %1618
        %1620 = vrot.lane.b32.xlu0 %v1488, 96
        %v1621 = vpop.permute.xlu0 %1620
        %1622 = vrot.lane.b32.xlu0 %v1489, 96
        %v1623 = vpop.permute.xlu0 %1622
        %1624 = vrot.lane.b32.xlu0 %v1490, 96
        %v1625 = vpop.permute.xlu0 %1624
        %1626 = vrot.lane.b32.xlu0 %v1491, 96
        %v1627 = vpop.permute.xlu0 %1626
        %1636 = vrot.lane.b32.xlu0 %v1484, 64
        %v1637 = vpop.permute.xlu0 %1636
        %1638 = vrot.lane.b32.xlu0 %v1485, 64
        %v1639 = vpop.permute.xlu0 %1638
        %1640 = vrot.lane.b32.xlu0 %v1486, 64
        %v1641 = vpop.permute.xlu0 %1640
        %1642 = vrot.lane.b32.xlu0 %v1487, 64
        %v1643 = vpop.permute.xlu0 %1642
        %1644 = vrot.lane.b32.xlu0 %v1488, 64
        %v1645 = vpop.permute.xlu0 %1644
        %1646 = vrot.lane.b32.xlu0 %v1489, 64
        %v1647 = vpop.permute.xlu0 %1646
        %1648 = vrot.lane.b32.xlu0 %v1490, 64
        %v1649 = vpop.permute.xlu0 %1648
        %1650 = vrot.lane.b32.xlu0 %v1491, 64
        %v1651 = vpop.permute.xlu0 %1650
        %1660 = vrot.lane.b32.xlu0 %v1484, 32
        %v1661 = vpop.permute.xlu0 %1660
        %1662 = vrot.lane.b32.xlu0 %v1485, 32
        %v1663 = vpop.permute.xlu0 %1662
        %1664 = vrot.lane.b32.xlu0 %v1486, 32
        %v1665 = vpop.permute.xlu0 %1664
        %1666 = vrot.lane.b32.xlu0 %v1487, 32
        %v1667 = vpop.permute.xlu0 %1666
        %1668 = vrot.lane.b32.xlu0 %v1488, 32
        %v1669 = vpop.permute.xlu0 %1668
        %1670 = vrot.lane.b32.xlu0 %v1489, 32
        %v1671 = vpop.permute.xlu0 %1670
        %1672 = vrot.lane.b32.xlu0 %v1490, 32
        %v1673 = vpop.permute.xlu0 %1672
        %1674 = vrot.lane.b32.xlu0 %v1491, 32
        %v1675 = vpop.permute.xlu0 %1674
        %vm1684 = vcmask 261120
        %v1686 = vsel %vm1684, %v1468, 0
        %v1689 = vsel %vm1684, %v1476, 0
        %1691 = vmatprep.subr.bf16.mxu0 0
        %1692 = vmatpush1.bf16.xpose.msra.mxu0 0
        %1693 = vmatprep.subr.bf16.mxu0 0
        %1694 = vmatpush1.bf16.xpose.msra.mxu0 0
        %1695 = vmatprep.subr.bf16.mxu0 0
        %1696 = vmatpush1.bf16.xpose.msra.mxu0 0
        %1697 = vmatprep.subr.bf16.mxu0 0
        %1698 = vmatpush1.bf16.xpose.msra.mxu0 0
        %1699 = vmatprep.subr.bf16.mxu0 0
        %1700 = vmatpush1.bf16.xpose.msra.mxu0 0
        %1701 = vmatprep.subr.bf16.mxu0 0
        %1702 = vmatpush1.bf16.xpose.msra.mxu0 0
        %1703 = vmatprep.subr.bf16.mxu0 0
        %1704 = vmatpush1.bf16.xpose.msra.mxu0 0
        %1705 = vmatprep.subr.bf16.mxu0 0
        %1706 = vmatpush1.bf16.xpose.msra.mxu0 %v1689
        %1707 = vmatprep.subr.bf16.mxu0 0
        %1708 = vmatpush2.bf16.xpose.msra.mxu0 0
        %1709 = vmatprep.subr.bf16.mxu0 0
        %1710 = vmatpush2.bf16.xpose.msra.mxu0 0
        %1711 = vmatprep.subr.bf16.mxu0 0
        %1712 = vmatpush2.bf16.xpose.msra.mxu0 0
        %1713 = vmatprep.subr.bf16.mxu0 0
        %1714 = vmatpush2.bf16.xpose.msra.mxu0 0
        %1715 = vmatprep.subr.bf16.mxu0 0
        %1716 = vmatpush2.bf16.xpose.msra.mxu0 0
        %1717 = vmatprep.subr.bf16.mxu0 0
        %1718 = vmatpush2.bf16.xpose.msra.mxu0 0
        %1719 = vmatprep.subr.bf16.mxu0 0
        %1720 = vmatpush2.bf16.xpose.msra.mxu0 0
        %1721 = vmatprep.subr.bf16.mxu0 0
        %1722 = vmatpush2.bf16.xpose.msra.mxu0 0
        %1723 = vmatprep.mubr.bf16.mxu0 0
        %1724 = vmatmul.mubr.bf16.gmra.mxu0 %v1686
        %v1725 = vpop.f32.mrf.mxu0
        %v1726 = vadd.f32 0.0, %v1725
        %v1727 = vpop.f32.mrf.mxu0
        %v1728 = vpop.f32.mrf.mxu0
        %v1729 = vadd.f32 0.0, %v1728
        %v1730 = vpop.f32.mrf.mxu0
        %1731 = vdwg.mxu0
        %v1733 = vsel %vm1684, %v1469, 0
        %v1736 = vsel %vm1684, %v1477, 0
        %1738 = vmatprep.subr.bf16.mxu0 0
        %1739 = vmatpush1.bf16.xpose.msra.mxu0 0
        %1740 = vmatprep.subr.bf16.mxu0 0
        %1741 = vmatpush1.bf16.xpose.msra.mxu0 0
        %1742 = vmatprep.subr.bf16.mxu0 0
        %1743 = vmatpush1.bf16.xpose.msra.mxu0 0
        %1744 = vmatprep.subr.bf16.mxu0 0
        %1745 = vmatpush1.bf16.xpose.msra.mxu0 0
        %1746 = vmatprep.subr.bf16.mxu0 0
        %1747 = vmatpush1.bf16.xpose.msra.mxu0 0
        %1748 = vmatprep.subr.bf16.mxu0 0
        %1749 = vmatpush1.bf16.xpose.msra.mxu0 0
        %1750 = vmatprep.subr.bf16.mxu0 0
        %1751 = vmatpush1.bf16.xpose.msra.mxu0 0
        %1752 = vmatprep.subr.bf16.mxu0 0
        %1753 = vmatpush1.bf16.xpose.msra.mxu0 %v1736
        %1754 = vmatprep.subr.bf16.mxu0 0
        %1755 = vmatpush2.bf16.xpose.msra.mxu0 0
        %1756 = vmatprep.subr.bf16.mxu0 0
        %1757 = vmatpush2.bf16.xpose.msra.mxu0 0
        %1758 = vmatprep.subr.bf16.mxu0 0
        %1759 = vmatpush2.bf16.xpose.msra.mxu0 0
        %1760 = vmatprep.subr.bf16.mxu0 0
        %1761 = vmatpush2.bf16.xpose.msra.mxu0 0
        %1762 = vmatprep.subr.bf16.mxu0 0
        %1763 = vmatpush2.bf16.xpose.msra.mxu0 0
        %1764 = vmatprep.subr.bf16.mxu0 0
        %1765 = vmatpush2.bf16.xpose.msra.mxu0 0
        %1766 = vmatprep.subr.bf16.mxu0 0
        %1767 = vmatpush2.bf16.xpose.msra.mxu0 0
        %1768 = vmatprep.subr.bf16.mxu0 0
        %1769 = vmatpush2.bf16.xpose.msra.mxu0 0
        %1770 = vmatprep.mubr.bf16.mxu0 0
        %1771 = vmatmul.mubr.bf16.gmra.mxu0 %v1733
        %v1772 = vpop.f32.mrf.mxu0
        %v1773 = vadd.f32 0.0, %v1772
        %v1774 = vpop.f32.mrf.mxu0
        %v1775 = vpop.f32.mrf.mxu0
        %v1776 = vadd.f32 0.0, %v1775
        %v1777 = vpop.f32.mrf.mxu0
        %1778 = vdwg.mxu0
        %v1780 = vsel %vm1684, %v1470, 0
        %v1783 = vsel %vm1684, %v1478, 0
        %1785 = vmatprep.subr.bf16.mxu0 0
        %1786 = vmatpush1.bf16.xpose.msra.mxu0 0
        %1787 = vmatprep.subr.bf16.mxu0 0
        %1788 = vmatpush1.bf16.xpose.msra.mxu0 0
        %1789 = vmatprep.subr.bf16.mxu0 0
        %1790 = vmatpush1.bf16.xpose.msra.mxu0 0
        %1791 = vmatprep.subr.bf16.mxu0 0
        %1792 = vmatpush1.bf16.xpose.msra.mxu0 0
        %1793 = vmatprep.subr.bf16.mxu0 0
        %1794 = vmatpush1.bf16.xpose.msra.mxu0 0
        %1795 = vmatprep.subr.bf16.mxu0 0
        %1796 = vmatpush1.bf16.xpose.msra.mxu0 0
        %1797 = vmatprep.subr.bf16.mxu0 0
        %1798 = vmatpush1.bf16.xpose.msra.mxu0 0
        %1799 = vmatprep.subr.bf16.mxu0 0
        %1800 = vmatpush1.bf16.xpose.msra.mxu0 %v1783
        %1801 = vmatprep.subr.bf16.mxu0 0
        %1802 = vmatpush2.bf16.xpose.msra.mxu0 0
        %1803 = vmatprep.subr.bf16.mxu0 0
        %1804 = vmatpush2.bf16.xpose.msra.mxu0 0
        %1805 = vmatprep.subr.bf16.mxu0 0
        %1806 = vmatpush2.bf16.xpose.msra.mxu0 0
        %1807 = vmatprep.subr.bf16.mxu0 0
        %1808 = vmatpush2.bf16.xpose.msra.mxu0 0
        %1809 = vmatprep.subr.bf16.mxu0 0
        %1810 = vmatpush2.bf16.xpose.msra.mxu0 0
        %1811 = vmatprep.subr.bf16.mxu0 0
        %1812 = vmatpush2.bf16.xpose.msra.mxu0 0
        %1813 = vmatprep.subr.bf16.mxu0 0
        %1814 = vmatpush2.bf16.xpose.msra.mxu0 0
        %1815 = vmatprep.subr.bf16.mxu0 0
        %1816 = vmatpush2.bf16.xpose.msra.mxu0 0
        %1817 = vmatprep.mubr.bf16.mxu0 0
        %1818 = vmatmul.mubr.bf16.gmra.mxu0 %v1780
        %v1819 = vpop.f32.mrf.mxu0
        %v1820 = vadd.f32 0.0, %v1819
        %v1821 = vpop.f32.mrf.mxu0
        %v1822 = vpop.f32.mrf.mxu0
        %v1823 = vadd.f32 0.0, %v1822
        %v1824 = vpop.f32.mrf.mxu0
        %1825 = vdwg.mxu0
        %v1827 = vsel %vm1684, %v1471, 0
        %v1830 = vsel %vm1684, %v1479, 0
        %1832 = vmatprep.subr.bf16.mxu0 0
        %1833 = vmatpush1.bf16.xpose.msra.mxu0 0
        %1834 = vmatprep.subr.bf16.mxu0 0
        %1835 = vmatpush1.bf16.xpose.msra.mxu0 0
        %1836 = vmatprep.subr.bf16.mxu0 0
        %1837 = vmatpush1.bf16.xpose.msra.mxu0 0
        %1838 = vmatprep.subr.bf16.mxu0 0
        %1839 = vmatpush1.bf16.xpose.msra.mxu0 0
        %1840 = vmatprep.subr.bf16.mxu0 0
        %1841 = vmatpush1.bf16.xpose.msra.mxu0 0
        %1842 = vmatprep.subr.bf16.mxu0 0
        %1843 = vmatpush1.bf16.xpose.msra.mxu0 0
        %1844 = vmatprep.subr.bf16.mxu0 0
        %1845 = vmatpush1.bf16.xpose.msra.mxu0 0
        %1846 = vmatprep.subr.bf16.mxu0 0
        %1847 = vmatpush1.bf16.xpose.msra.mxu0 %v1830
        %1848 = vmatprep.subr.bf16.mxu0 0
        %1849 = vmatpush2.bf16.xpose.msra.mxu0 0
        %1850 = vmatprep.subr.bf16.mxu0 0
        %1851 = vmatpush2.bf16.xpose.msra.mxu0 0
        %1852 = vmatprep.subr.bf16.mxu0 0
        %1853 = vmatpush2.bf16.xpose.msra.mxu0 0
        %1854 = vmatprep.subr.bf16.mxu0 0
        %1855 = vmatpush2.bf16.xpose.msra.mxu0 0
        %1856 = vmatprep.subr.bf16.mxu0 0
        %1857 = vmatpush2.bf16.xpose.msra.mxu0 0
        %1858 = vmatprep.subr.bf16.mxu0 0
        %1859 = vmatpush2.bf16.xpose.msra.mxu0 0
        %1860 = vmatprep.subr.bf16.mxu0 0
        %1861 = vmatpush2.bf16.xpose.msra.mxu0 0
        %1862 = vmatprep.subr.bf16.mxu0 0
        %1863 = vmatpush2.bf16.xpose.msra.mxu0 0
        %1864 = vmatprep.mubr.bf16.mxu0 0
        %1865 = vmatmul.mubr.bf16.gmra.mxu0 %v1827
        %v1866 = vpop.f32.mrf.mxu0
        %v1867 = vadd.f32 0.0, %v1866
        %v1868 = vpop.f32.mrf.mxu0
        %v1869 = vpop.f32.mrf.mxu0
        %v1870 = vadd.f32 0.0, %v1869
        %v1871 = vpop.f32.mrf.mxu0
        %1872 = vdwg.mxu0
        %v1874 = vsel %vm1684, %v1472, 0
        %v1877 = vsel %vm1684, %v1480, 0
        %1879 = vmatprep.subr.bf16.mxu0 0
        %1880 = vmatpush1.bf16.xpose.msra.mxu0 0
        %1881 = vmatprep.subr.bf16.mxu0 0
        %1882 = vmatpush1.bf16.xpose.msra.mxu0 0
        %1883 = vmatprep.subr.bf16.mxu0 0
        %1884 = vmatpush1.bf16.xpose.msra.mxu0 0
        %1885 = vmatprep.subr.bf16.mxu0 0
        %1886 = vmatpush1.bf16.xpose.msra.mxu0 0
        %1887 = vmatprep.subr.bf16.mxu0 0
        %1888 = vmatpush1.bf16.xpose.msra.mxu0 0
        %1889 = vmatprep.subr.bf16.mxu0 0
        %1890 = vmatpush1.bf16.xpose.msra.mxu0 0
        %1891 = vmatprep.subr.bf16.mxu0 0
        %1892 = vmatpush1.bf16.xpose.msra.mxu0 0
        %1893 = vmatprep.subr.bf16.mxu0 0
        %1894 = vmatpush1.bf16.xpose.msra.mxu0 %v1877
        %1895 = vmatprep.subr.bf16.mxu0 0
        %1896 = vmatpush2.bf16.xpose.msra.mxu0 0
        %1897 = vmatprep.subr.bf16.mxu0 0
        %1898 = vmatpush2.bf16.xpose.msra.mxu0 0
        %1899 = vmatprep.subr.bf16.mxu0 0
        %1900 = vmatpush2.bf16.xpose.msra.mxu0 0
        %1901 = vmatprep.subr.bf16.mxu0 0
        %1902 = vmatpush2.bf16.xpose.msra.mxu0 0
        %1903 = vmatprep.subr.bf16.mxu0 0
        %1904 = vmatpush2.bf16.xpose.msra.mxu0 0
        %1905 = vmatprep.subr.bf16.mxu0 0
        %1906 = vmatpush2.bf16.xpose.msra.mxu0 0
        %1907 = vmatprep.subr.bf16.mxu0 0
        %1908 = vmatpush2.bf16.xpose.msra.mxu0 0
        %1909 = vmatprep.subr.bf16.mxu0 0
        %1910 = vmatpush2.bf16.xpose.msra.mxu0 0
        %1911 = vmatprep.mubr.bf16.mxu0 0
        %1912 = vmatmul.mubr.bf16.gmra.mxu0 %v1874
        %v1913 = vpop.f32.mrf.mxu0
        %v1914 = vadd.f32 0.0, %v1913
        %v1915 = vpop.f32.mrf.mxu0
        %v1916 = vpop.f32.mrf.mxu0
        %v1917 = vadd.f32 0.0, %v1916
        %v1918 = vpop.f32.mrf.mxu0
        %1919 = vdwg.mxu0
        %v1921 = vsel %vm1684, %v1473, 0
        %v1924 = vsel %vm1684, %v1481, 0
        %1926 = vmatprep.subr.bf16.mxu0 0
        %1927 = vmatpush1.bf16.xpose.msra.mxu0 0
        %1928 = vmatprep.subr.bf16.mxu0 0
        %1929 = vmatpush1.bf16.xpose.msra.mxu0 0
        %1930 = vmatprep.subr.bf16.mxu0 0
        %1931 = vmatpush1.bf16.xpose.msra.mxu0 0
        %1932 = vmatprep.subr.bf16.mxu0 0
        %1933 = vmatpush1.bf16.xpose.msra.mxu0 0
        %1934 = vmatprep.subr.bf16.mxu0 0
        %1935 = vmatpush1.bf16.xpose.msra.mxu0 0
        %1936 = vmatprep.subr.bf16.mxu0 0
        %1937 = vmatpush1.bf16.xpose.msra.mxu0 0
        %1938 = vmatprep.subr.bf16.mxu0 0
        %1939 = vmatpush1.bf16.xpose.msra.mxu0 0
        %1940 = vmatprep.subr.bf16.mxu0 0
        %1941 = vmatpush1.bf16.xpose.msra.mxu0 %v1924
        %1942 = vmatprep.subr.bf16.mxu0 0
        %1943 = vmatpush2.bf16.xpose.msra.mxu0 0
        %1944 = vmatprep.subr.bf16.mxu0 0
        %1945 = vmatpush2.bf16.xpose.msra.mxu0 0
        %1946 = vmatprep.subr.bf16.mxu0 0
        %1947 = vmatpush2.bf16.xpose.msra.mxu0 0
        %1948 = vmatprep.subr.bf16.mxu0 0
        %1949 = vmatpush2.bf16.xpose.msra.mxu0 0
        %1950 = vmatprep.subr.bf16.mxu0 0
        %1951 = vmatpush2.bf16.xpose.msra.mxu0 0
        %1952 = vmatprep.subr.bf16.mxu0 0
        %1953 = vmatpush2.bf16.xpose.msra.mxu0 0
        %1954 = vmatprep.subr.bf16.mxu0 0
        %1955 = vmatpush2.bf16.xpose.msra.mxu0 0
        %1956 = vmatprep.subr.bf16.mxu0 0
        %1957 = vmatpush2.bf16.xpose.msra.mxu0 0
        %1958 = vmatprep.mubr.bf16.mxu0 0
        %1959 = vmatmul.mubr.bf16.gmra.mxu0 %v1921
        %v1960 = vpop.f32.mrf.mxu0
        %v1961 = vadd.f32 0.0, %v1960
        %v1962 = vpop.f32.mrf.mxu0
        %v1963 = vpop.f32.mrf.mxu0
        %v1964 = vadd.f32 0.0, %v1963
        %v1965 = vpop.f32.mrf.mxu0
        %1966 = vdwg.mxu0
        %v1968 = vsel %vm1684, %v1474, 0
        %v1971 = vsel %vm1684, %v1482, 0
        %1973 = vmatprep.subr.bf16.mxu0 0
        %1974 = vmatpush1.bf16.xpose.msra.mxu0 0
        %1975 = vmatprep.subr.bf16.mxu0 0
        %1976 = vmatpush1.bf16.xpose.msra.mxu0 0
        %1977 = vmatprep.subr.bf16.mxu0 0
        %1978 = vmatpush1.bf16.xpose.msra.mxu0 0
        %1979 = vmatprep.subr.bf16.mxu0 0
        %1980 = vmatpush1.bf16.xpose.msra.mxu0 0
        %1981 = vmatprep.subr.bf16.mxu0 0
        %1982 = vmatpush1.bf16.xpose.msra.mxu0 0
        %1983 = vmatprep.subr.bf16.mxu0 0
        %1984 = vmatpush1.bf16.xpose.msra.mxu0 0
        %1985 = vmatprep.subr.bf16.mxu0 0
        %1986 = vmatpush1.bf16.xpose.msra.mxu0 0
        %1987 = vmatprep.subr.bf16.mxu0 0
        %1988 = vmatpush1.bf16.xpose.msra.mxu0 %v1971
        %1989 = vmatprep.subr.bf16.mxu0 0
        %1990 = vmatpush2.bf16.xpose.msra.mxu0 0
        %1991 = vmatprep.subr.bf16.mxu0 0
        %1992 = vmatpush2.bf16.xpose.msra.mxu0 0
        %1993 = vmatprep.subr.bf16.mxu0 0
        %1994 = vmatpush2.bf16.xpose.msra.mxu0 0
        %1995 = vmatprep.subr.bf16.mxu0 0
        %1996 = vmatpush2.bf16.xpose.msra.mxu0 0
        %1997 = vmatprep.subr.bf16.mxu0 0
        %1998 = vmatpush2.bf16.xpose.msra.mxu0 0
        %1999 = vmatprep.subr.bf16.mxu0 0
        %2000 = vmatpush2.bf16.xpose.msra.mxu0 0
        %2001 = vmatprep.subr.bf16.mxu0 0
        %2002 = vmatpush2.bf16.xpose.msra.mxu0 0
        %2003 = vmatprep.subr.bf16.mxu0 0
        %2004 = vmatpush2.bf16.xpose.msra.mxu0 0
        %2005 = vmatprep.mubr.bf16.mxu0 0
        %2006 = vmatmul.mubr.bf16.gmra.mxu0 %v1968
        %v2007 = vpop.f32.mrf.mxu0
        %v2008 = vadd.f32 0.0, %v2007
        %v2009 = vpop.f32.mrf.mxu0
        %v2010 = vpop.f32.mrf.mxu0
        %v2011 = vadd.f32 0.0, %v2010
        %v2012 = vpop.f32.mrf.mxu0
        %2013 = vdwg.mxu0
        %v2015 = vsel %vm1684, %v1475, 0
        %v2018 = vsel %vm1684, %v1483, 0
        %2020 = vmatprep.subr.bf16.mxu0 0
        %2021 = vmatpush1.bf16.xpose.msra.mxu0 0
        %2022 = vmatprep.subr.bf16.mxu0 0
        %2023 = vmatpush1.bf16.xpose.msra.mxu0 0
        %2024 = vmatprep.subr.bf16.mxu0 0
        %2025 = vmatpush1.bf16.xpose.msra.mxu0 0
        %2026 = vmatprep.subr.bf16.mxu0 0
        %2027 = vmatpush1.bf16.xpose.msra.mxu0 0
        %2028 = vmatprep.subr.bf16.mxu0 0
        %2029 = vmatpush1.bf16.xpose.msra.mxu0 0
        %2030 = vmatprep.subr.bf16.mxu0 0
        %2031 = vmatpush1.bf16.xpose.msra.mxu0 0
        %2032 = vmatprep.subr.bf16.mxu0 0
        %2033 = vmatpush1.bf16.xpose.msra.mxu0 0
        %2034 = vmatprep.subr.bf16.mxu0 0
        %2035 = vmatpush1.bf16.xpose.msra.mxu0 %v2018
        %2036 = vmatprep.subr.bf16.mxu0 0
        %2037 = vmatpush2.bf16.xpose.msra.mxu0 0
        %2038 = vmatprep.subr.bf16.mxu0 0
        %2039 = vmatpush2.bf16.xpose.msra.mxu0 0
        %2040 = vmatprep.subr.bf16.mxu0 0
        %2041 = vmatpush2.bf16.xpose.msra.mxu0 0
        %2042 = vmatprep.subr.bf16.mxu0 0
        %2043 = vmatpush2.bf16.xpose.msra.mxu0 0
        %2044 = vmatprep.subr.bf16.mxu0 0
        %2045 = vmatpush2.bf16.xpose.msra.mxu0 0
        %2046 = vmatprep.subr.bf16.mxu0 0
        %2047 = vmatpush2.bf16.xpose.msra.mxu0 0
        %2048 = vmatprep.subr.bf16.mxu0 0
        %2049 = vmatpush2.bf16.xpose.msra.mxu0 0
        %2050 = vmatprep.subr.bf16.mxu0 0
        %2051 = vmatpush2.bf16.xpose.msra.mxu0 0
        %2052 = vmatprep.mubr.bf16.mxu0 0
        %2053 = vmatmul.mubr.bf16.gmra.mxu0 %v2015
        %v2054 = vpop.f32.mrf.mxu0
        %v2055 = vadd.f32 0.0, %v2054
        %v2056 = vpop.f32.mrf.mxu0
        %v2057 = vpop.f32.mrf.mxu0
        %v2058 = vadd.f32 0.0, %v2057
        %v2059 = vpop.f32.mrf.mxu0
        %2060 = vdwg.mxu0
        %v2062 = vsel %vm1684, %v1501, 0
        %v2065 = vsel %vm1684, %v1557, 0
        %2067 = vmatprep.subr.bf16.mxu0 0
        %2068 = vmatpush1.bf16.xpose.msra.mxu0 0
        %2069 = vmatprep.subr.bf16.mxu0 0
        %2070 = vmatpush1.bf16.xpose.msra.mxu0 0
        %2071 = vmatprep.subr.bf16.mxu0 0
        %2072 = vmatpush1.bf16.xpose.msra.mxu0 0
        %2073 = vmatprep.subr.bf16.mxu0 0
        %2074 = vmatpush1.bf16.xpose.msra.mxu0 0
        %2075 = vmatprep.subr.bf16.mxu0 0
        %2076 = vmatpush1.bf16.xpose.msra.mxu0 0
        %2077 = vmatprep.subr.bf16.mxu0 0
        %2078 = vmatpush1.bf16.xpose.msra.mxu0 0
        %2079 = vmatprep.subr.bf16.mxu0 0
        %2080 = vmatpush1.bf16.xpose.msra.mxu0 0
        %2081 = vmatprep.subr.bf16.mxu0 0
        %2082 = vmatpush1.bf16.xpose.msra.mxu0 %v2065
        %2083 = vmatprep.subr.bf16.mxu0 0
        %2084 = vmatpush2.bf16.xpose.msra.mxu0 0
        %2085 = vmatprep.subr.bf16.mxu0 0
        %2086 = vmatpush2.bf16.xpose.msra.mxu0 0
        %2087 = vmatprep.subr.bf16.mxu0 0
        %2088 = vmatpush2.bf16.xpose.msra.mxu0 0
        %2089 = vmatprep.subr.bf16.mxu0 0
        %2090 = vmatpush2.bf16.xpose.msra.mxu0 0
        %2091 = vmatprep.subr.bf16.mxu0 0
        %2092 = vmatpush2.bf16.xpose.msra.mxu0 0
        %2093 = vmatprep.subr.bf16.mxu0 0
        %2094 = vmatpush2.bf16.xpose.msra.mxu0 0
        %2095 = vmatprep.subr.bf16.mxu0 0
        %2096 = vmatpush2.bf16.xpose.msra.mxu0 0
        %2097 = vmatprep.subr.bf16.mxu0 0
        %2098 = vmatpush2.bf16.xpose.msra.mxu0 0
        %2099 = vmatprep.mubr.bf16.mxu0 0
        %2100 = vmatmul.mubr.bf16.gmra.mxu0 %v2062
        %v2101 = vpop.f32.mrf.mxu0
        %v2102 = vadd.f32 0.0, %v2101
        %v2103 = vpop.f32.mrf.mxu0
        %v2104 = vpop.f32.mrf.mxu0
        %v2105 = vadd.f32 0.0, %v2104
        %v2106 = vpop.f32.mrf.mxu0
        %2107 = vdwg.mxu0
        %v2109 = vsel %vm1684, %v1503, 0
        %v2112 = vsel %vm1684, %v1559, 0
        %2114 = vmatprep.subr.bf16.mxu0 0
        %2115 = vmatpush1.bf16.xpose.msra.mxu0 0
        %2116 = vmatprep.subr.bf16.mxu0 0
        %2117 = vmatpush1.bf16.xpose.msra.mxu0 0
        %2118 = vmatprep.subr.bf16.mxu0 0
        %2119 = vmatpush1.bf16.xpose.msra.mxu0 0
        %2120 = vmatprep.subr.bf16.mxu0 0
        %2121 = vmatpush1.bf16.xpose.msra.mxu0 0
        %2122 = vmatprep.subr.bf16.mxu0 0
        %2123 = vmatpush1.bf16.xpose.msra.mxu0 0
        %2124 = vmatprep.subr.bf16.mxu0 0
        %2125 = vmatpush1.bf16.xpose.msra.mxu0 0
        %2126 = vmatprep.subr.bf16.mxu0 0
        %2127 = vmatpush1.bf16.xpose.msra.mxu0 0
        %2128 = vmatprep.subr.bf16.mxu0 0
        %2129 = vmatpush1.bf16.xpose.msra.mxu0 %v2112
        %2130 = vmatprep.subr.bf16.mxu0 0
        %2131 = vmatpush2.bf16.xpose.msra.mxu0 0
        %2132 = vmatprep.subr.bf16.mxu0 0
        %2133 = vmatpush2.bf16.xpose.msra.mxu0 0
        %2134 = vmatprep.subr.bf16.mxu0 0
        %2135 = vmatpush2.bf16.xpose.msra.mxu0 0
        %2136 = vmatprep.subr.bf16.mxu0 0
        %2137 = vmatpush2.bf16.xpose.msra.mxu0 0
        %2138 = vmatprep.subr.bf16.mxu0 0
        %2139 = vmatpush2.bf16.xpose.msra.mxu0 0
        %2140 = vmatprep.subr.bf16.mxu0 0
        %2141 = vmatpush2.bf16.xpose.msra.mxu0 0
        %2142 = vmatprep.subr.bf16.mxu0 0
        %2143 = vmatpush2.bf16.xpose.msra.mxu0 0
        %2144 = vmatprep.subr.bf16.mxu0 0
        %2145 = vmatpush2.bf16.xpose.msra.mxu0 0
        %2146 = vmatprep.mubr.bf16.mxu0 0
        %2147 = vmatmul.mubr.bf16.gmra.mxu0 %v2109
        %v2148 = vpop.f32.mrf.mxu0
        %v2149 = vadd.f32 0.0, %v2148
        %v2150 = vpop.f32.mrf.mxu0
        %v2151 = vpop.f32.mrf.mxu0
        %v2152 = vadd.f32 0.0, %v2151
        %v2153 = vpop.f32.mrf.mxu0
        %2154 = vdwg.mxu0
        %v2156 = vsel %vm1684, %v1505, 0
        %v2159 = vsel %vm1684, %v1561, 0
        %2161 = vmatprep.subr.bf16.mxu0 0
        %2162 = vmatpush1.bf16.xpose.msra.mxu0 0
        %2163 = vmatprep.subr.bf16.mxu0 0
        %2164 = vmatpush1.bf16.xpose.msra.mxu0 0
        %2165 = vmatprep.subr.bf16.mxu0 0
        %2166 = vmatpush1.bf16.xpose.msra.mxu0 0
        %2167 = vmatprep.subr.bf16.mxu0 0
        %2168 = vmatpush1.bf16.xpose.msra.mxu0 0
        %2169 = vmatprep.subr.bf16.mxu0 0
        %2170 = vmatpush1.bf16.xpose.msra.mxu0 0
        %2171 = vmatprep.subr.bf16.mxu0 0
        %2172 = vmatpush1.bf16.xpose.msra.mxu0 0
        %2173 = vmatprep.subr.bf16.mxu0 0
        %2174 = vmatpush1.bf16.xpose.msra.mxu0 0
        %2175 = vmatprep.subr.bf16.mxu0 0
        %2176 = vmatpush1.bf16.xpose.msra.mxu0 %v2159
        %2177 = vmatprep.subr.bf16.mxu0 0
        %2178 = vmatpush2.bf16.xpose.msra.mxu0 0
        %2179 = vmatprep.subr.bf16.mxu0 0
        %2180 = vmatpush2.bf16.xpose.msra.mxu0 0
        %2181 = vmatprep.subr.bf16.mxu0 0
        %2182 = vmatpush2.bf16.xpose.msra.mxu0 0
        %2183 = vmatprep.subr.bf16.mxu0 0
        %2184 = vmatpush2.bf16.xpose.msra.mxu0 0
        %2185 = vmatprep.subr.bf16.mxu0 0
        %2186 = vmatpush2.bf16.xpose.msra.mxu0 0
        %2187 = vmatprep.subr.bf16.mxu0 0
        %2188 = vmatpush2.bf16.xpose.msra.mxu0 0
        %2189 = vmatprep.subr.bf16.mxu0 0
        %2190 = vmatpush2.bf16.xpose.msra.mxu0 0
        %2191 = vmatprep.subr.bf16.mxu0 0
        %2192 = vmatpush2.bf16.xpose.msra.mxu0 0
        %2193 = vmatprep.mubr.bf16.mxu0 0
        %2194 = vmatmul.mubr.bf16.gmra.mxu0 %v2156
        %v2195 = vpop.f32.mrf.mxu0
        %v2196 = vadd.f32 0.0, %v2195
        %v2197 = vpop.f32.mrf.mxu0
        %v2198 = vpop.f32.mrf.mxu0
        %v2199 = vadd.f32 0.0, %v2198
        %v2200 = vpop.f32.mrf.mxu0
        %2201 = vdwg.mxu0
        %v2203 = vsel %vm1684, %v1507, 0
        %v2206 = vsel %vm1684, %v1563, 0
        %2208 = vmatprep.subr.bf16.mxu0 0
        %2209 = vmatpush1.bf16.xpose.msra.mxu0 0
        %2210 = vmatprep.subr.bf16.mxu0 0
        %2211 = vmatpush1.bf16.xpose.msra.mxu0 0
        %2212 = vmatprep.subr.bf16.mxu0 0
        %2213 = vmatpush1.bf16.xpose.msra.mxu0 0
        %2214 = vmatprep.subr.bf16.mxu0 0
        %2215 = vmatpush1.bf16.xpose.msra.mxu0 0
        %2216 = vmatprep.subr.bf16.mxu0 0
        %2217 = vmatpush1.bf16.xpose.msra.mxu0 0
        %2218 = vmatprep.subr.bf16.mxu0 0
        %2219 = vmatpush1.bf16.xpose.msra.mxu0 0
        %2220 = vmatprep.subr.bf16.mxu0 0
        %2221 = vmatpush1.bf16.xpose.msra.mxu0 0
        %2222 = vmatprep.subr.bf16.mxu0 0
        %2223 = vmatpush1.bf16.xpose.msra.mxu0 %v2206
        %2224 = vmatprep.subr.bf16.mxu0 0
        %2225 = vmatpush2.bf16.xpose.msra.mxu0 0
        %2226 = vmatprep.subr.bf16.mxu0 0
        %2227 = vmatpush2.bf16.xpose.msra.mxu0 0
        %2228 = vmatprep.subr.bf16.mxu0 0
        %2229 = vmatpush2.bf16.xpose.msra.mxu0 0
        %2230 = vmatprep.subr.bf16.mxu0 0
        %2231 = vmatpush2.bf16.xpose.msra.mxu0 0
        %2232 = vmatprep.subr.bf16.mxu0 0
        %2233 = vmatpush2.bf16.xpose.msra.mxu0 0
        %2234 = vmatprep.subr.bf16.mxu0 0
        %2235 = vmatpush2.bf16.xpose.msra.mxu0 0
        %2236 = vmatprep.subr.bf16.mxu0 0
        %2237 = vmatpush2.bf16.xpose.msra.mxu0 0
        %2238 = vmatprep.subr.bf16.mxu0 0
        %2239 = vmatpush2.bf16.xpose.msra.mxu0 0
        %2240 = vmatprep.mubr.bf16.mxu0 0
        %2241 = vmatmul.mubr.bf16.gmra.mxu0 %v2203
        %v2242 = vpop.f32.mrf.mxu0
        %v2243 = vadd.f32 0.0, %v2242
        %v2244 = vpop.f32.mrf.mxu0
        %v2245 = vpop.f32.mrf.mxu0
        %v2246 = vadd.f32 0.0, %v2245
        %v2247 = vpop.f32.mrf.mxu0
        %2248 = vdwg.mxu0
        %v2250 = vsel %vm1684, %v1509, 0
        %v2253 = vsel %vm1684, %v1565, 0
        %2255 = vmatprep.subr.bf16.mxu0 0
        %2256 = vmatpush1.bf16.xpose.msra.mxu0 0
        %2257 = vmatprep.subr.bf16.mxu0 0
        %2258 = vmatpush1.bf16.xpose.msra.mxu0 0
        %2259 = vmatprep.subr.bf16.mxu0 0
        %2260 = vmatpush1.bf16.xpose.msra.mxu0 0
        %2261 = vmatprep.subr.bf16.mxu0 0
        %2262 = vmatpush1.bf16.xpose.msra.mxu0 0
        %2263 = vmatprep.subr.bf16.mxu0 0
        %2264 = vmatpush1.bf16.xpose.msra.mxu0 0
        %2265 = vmatprep.subr.bf16.mxu0 0
        %2266 = vmatpush1.bf16.xpose.msra.mxu0 0
        %2267 = vmatprep.subr.bf16.mxu0 0
        %2268 = vmatpush1.bf16.xpose.msra.mxu0 0
        %2269 = vmatprep.subr.bf16.mxu0 0
        %2270 = vmatpush1.bf16.xpose.msra.mxu0 %v2253
        %2271 = vmatprep.subr.bf16.mxu0 0
        %2272 = vmatpush2.bf16.xpose.msra.mxu0 0
        %2273 = vmatprep.subr.bf16.mxu0 0
        %2274 = vmatpush2.bf16.xpose.msra.mxu0 0
        %2275 = vmatprep.subr.bf16.mxu0 0
        %2276 = vmatpush2.bf16.xpose.msra.mxu0 0
        %2277 = vmatprep.subr.bf16.mxu0 0
        %2278 = vmatpush2.bf16.xpose.msra.mxu0 0
        %2279 = vmatprep.subr.bf16.mxu0 0
        %2280 = vmatpush2.bf16.xpose.msra.mxu0 0
        %2281 = vmatprep.subr.bf16.mxu0 0
        %2282 = vmatpush2.bf16.xpose.msra.mxu0 0
        %2283 = vmatprep.subr.bf16.mxu0 0
        %2284 = vmatpush2.bf16.xpose.msra.mxu0 0
        %2285 = vmatprep.subr.bf16.mxu0 0
        %2286 = vmatpush2.bf16.xpose.msra.mxu0 0
        %2287 = vmatprep.mubr.bf16.mxu0 0
        %2288 = vmatmul.mubr.bf16.gmra.mxu0 %v2250
        %v2289 = vpop.f32.mrf.mxu0
        %v2290 = vadd.f32 0.0, %v2289
        %v2291 = vpop.f32.mrf.mxu0
        %v2292 = vpop.f32.mrf.mxu0
        %v2293 = vadd.f32 0.0, %v2292
        %v2294 = vpop.f32.mrf.mxu0
        %2295 = vdwg.mxu0
        %v2297 = vsel %vm1684, %v1511, 0
        %v2300 = vsel %vm1684, %v1567, 0
        %2302 = vmatprep.subr.bf16.mxu0 0
        %2303 = vmatpush1.bf16.xpose.msra.mxu0 0
        %2304 = vmatprep.subr.bf16.mxu0 0
        %2305 = vmatpush1.bf16.xpose.msra.mxu0 0
        %2306 = vmatprep.subr.bf16.mxu0 0
        %2307 = vmatpush1.bf16.xpose.msra.mxu0 0
        %2308 = vmatprep.subr.bf16.mxu0 0
        %2309 = vmatpush1.bf16.xpose.msra.mxu0 0
        %2310 = vmatprep.subr.bf16.mxu0 0
        %2311 = vmatpush1.bf16.xpose.msra.mxu0 0
        %2312 = vmatprep.subr.bf16.mxu0 0
        %2313 = vmatpush1.bf16.xpose.msra.mxu0 0
        %2314 = vmatprep.subr.bf16.mxu0 0
        %2315 = vmatpush1.bf16.xpose.msra.mxu0 0
        %2316 = vmatprep.subr.bf16.mxu0 0
        %2317 = vmatpush1.bf16.xpose.msra.mxu0 %v2300
        %2318 = vmatprep.subr.bf16.mxu0 0
        %2319 = vmatpush2.bf16.xpose.msra.mxu0 0
        %2320 = vmatprep.subr.bf16.mxu0 0
        %2321 = vmatpush2.bf16.xpose.msra.mxu0 0
        %2322 = vmatprep.subr.bf16.mxu0 0
        %2323 = vmatpush2.bf16.xpose.msra.mxu0 0
        %2324 = vmatprep.subr.bf16.mxu0 0
        %2325 = vmatpush2.bf16.xpose.msra.mxu0 0
        %2326 = vmatprep.subr.bf16.mxu0 0
        %2327 = vmatpush2.bf16.xpose.msra.mxu0 0
        %2328 = vmatprep.subr.bf16.mxu0 0
        %2329 = vmatpush2.bf16.xpose.msra.mxu0 0
        %2330 = vmatprep.subr.bf16.mxu0 0
        %2331 = vmatpush2.bf16.xpose.msra.mxu0 0
        %2332 = vmatprep.subr.bf16.mxu0 0
        %2333 = vmatpush2.bf16.xpose.msra.mxu0 0
        %2334 = vmatprep.mubr.bf16.mxu0 0
        %2335 = vmatmul.mubr.bf16.gmra.mxu0 %v2297
        %v2336 = vpop.f32.mrf.mxu0
        %v2337 = vadd.f32 0.0, %v2336
        %v2338 = vpop.f32.mrf.mxu0
        %v2339 = vpop.f32.mrf.mxu0
        %v2340 = vadd.f32 0.0, %v2339
        %v2341 = vpop.f32.mrf.mxu0
        %2342 = vdwg.mxu0
        %v2344 = vsel %vm1684, %v1513, 0
        %v2347 = vsel %vm1684, %v1569, 0
        %2349 = vmatprep.subr.bf16.mxu0 0
        %2350 = vmatpush1.bf16.xpose.msra.mxu0 0
        %2351 = vmatprep.subr.bf16.mxu0 0
        %2352 = vmatpush1.bf16.xpose.msra.mxu0 0
        %2353 = vmatprep.subr.bf16.mxu0 0
        %2354 = vmatpush1.bf16.xpose.msra.mxu0 0
        %2355 = vmatprep.subr.bf16.mxu0 0
        %2356 = vmatpush1.bf16.xpose.msra.mxu0 0
        %2357 = vmatprep.subr.bf16.mxu0 0
        %2358 = vmatpush1.bf16.xpose.msra.mxu0 0
        %2359 = vmatprep.subr.bf16.mxu0 0
        %2360 = vmatpush1.bf16.xpose.msra.mxu0 0
        %2361 = vmatprep.subr.bf16.mxu0 0
        %2362 = vmatpush1.bf16.xpose.msra.mxu0 0
        %2363 = vmatprep.subr.bf16.mxu0 0
        %2364 = vmatpush1.bf16.xpose.msra.mxu0 %v2347
        %2365 = vmatprep.subr.bf16.mxu0 0
        %2366 = vmatpush2.bf16.xpose.msra.mxu0 0
        %2367 = vmatprep.subr.bf16.mxu0 0
        %2368 = vmatpush2.bf16.xpose.msra.mxu0 0
        %2369 = vmatprep.subr.bf16.mxu0 0
        %2370 = vmatpush2.bf16.xpose.msra.mxu0 0
        %2371 = vmatprep.subr.bf16.mxu0 0
        %2372 = vmatpush2.bf16.xpose.msra.mxu0 0
        %2373 = vmatprep.subr.bf16.mxu0 0
        %2374 = vmatpush2.bf16.xpose.msra.mxu0 0
        %2375 = vmatprep.subr.bf16.mxu0 0
        %2376 = vmatpush2.bf16.xpose.msra.mxu0 0
        %2377 = vmatprep.subr.bf16.mxu0 0
        %2378 = vmatpush2.bf16.xpose.msra.mxu0 0
        %2379 = vmatprep.subr.bf16.mxu0 0
        %2380 = vmatpush2.bf16.xpose.msra.mxu0 0
        %2381 = vmatprep.mubr.bf16.mxu0 0
        %2382 = vmatmul.mubr.bf16.gmra.mxu0 %v2344
        %v2383 = vpop.f32.mrf.mxu0
        %v2384 = vadd.f32 0.0, %v2383
        %v2385 = vpop.f32.mrf.mxu0
        %v2386 = vpop.f32.mrf.mxu0
        %v2387 = vadd.f32 0.0, %v2386
        %v2388 = vpop.f32.mrf.mxu0
        %2389 = vdwg.mxu0
        %v2391 = vsel %vm1684, %v1515, 0
        %v2394 = vsel %vm1684, %v1571, 0
        %2396 = vmatprep.subr.bf16.mxu0 0
        %2397 = vmatpush1.bf16.xpose.msra.mxu0 0
        %2398 = vmatprep.subr.bf16.mxu0 0
        %2399 = vmatpush1.bf16.xpose.msra.mxu0 0
        %2400 = vmatprep.subr.bf16.mxu0 0
        %2401 = vmatpush1.bf16.xpose.msra.mxu0 0
        %2402 = vmatprep.subr.bf16.mxu0 0
        %2403 = vmatpush1.bf16.xpose.msra.mxu0 0
        %2404 = vmatprep.subr.bf16.mxu0 0
        %2405 = vmatpush1.bf16.xpose.msra.mxu0 0
        %2406 = vmatprep.subr.bf16.mxu0 0
        %2407 = vmatpush1.bf16.xpose.msra.mxu0 0
        %2408 = vmatprep.subr.bf16.mxu0 0
        %2409 = vmatpush1.bf16.xpose.msra.mxu0 0
        %2410 = vmatprep.subr.bf16.mxu0 0
        %2411 = vmatpush1.bf16.xpose.msra.mxu0 %v2394
        %2412 = vmatprep.subr.bf16.mxu0 0
        %2413 = vmatpush2.bf16.xpose.msra.mxu0 0
        %2414 = vmatprep.subr.bf16.mxu0 0
        %2415 = vmatpush2.bf16.xpose.msra.mxu0 0
        %2416 = vmatprep.subr.bf16.mxu0 0
        %2417 = vmatpush2.bf16.xpose.msra.mxu0 0
        %2418 = vmatprep.subr.bf16.mxu0 0
        %2419 = vmatpush2.bf16.xpose.msra.mxu0 0
        %2420 = vmatprep.subr.bf16.mxu0 0
        %2421 = vmatpush2.bf16.xpose.msra.mxu0 0
        %2422 = vmatprep.subr.bf16.mxu0 0
        %2423 = vmatpush2.bf16.xpose.msra.mxu0 0
        %2424 = vmatprep.subr.bf16.mxu0 0
        %2425 = vmatpush2.bf16.xpose.msra.mxu0 0
        %2426 = vmatprep.subr.bf16.mxu0 0
        %2427 = vmatpush2.bf16.xpose.msra.mxu0 0
        %2428 = vmatprep.mubr.bf16.mxu0 0
        %2429 = vmatmul.mubr.bf16.gmra.mxu0 %v2391
        %v2430 = vpop.f32.mrf.mxu0
        %v2431 = vadd.f32 0.0, %v2430
        %v2432 = vpop.f32.mrf.mxu0
        %v2433 = vpop.f32.mrf.mxu0
        %v2434 = vadd.f32 0.0, %v2433
        %v2435 = vpop.f32.mrf.mxu0
        %2436 = vdwg.mxu0
        %v2438 = vsel %vm1684, %v1517, 0
        %v2441 = vsel %vm1684, %v1573, 0
        %2443 = vmatprep.subr.bf16.mxu0 0
        %2444 = vmatpush1.bf16.xpose.msra.mxu0 0
        %2445 = vmatprep.subr.bf16.mxu0 0
        %2446 = vmatpush1.bf16.xpose.msra.mxu0 0
        %2447 = vmatprep.subr.bf16.mxu0 0
        %2448 = vmatpush1.bf16.xpose.msra.mxu0 0
        %2449 = vmatprep.subr.bf16.mxu0 0
        %2450 = vmatpush1.bf16.xpose.msra.mxu0 0
        %2451 = vmatprep.subr.bf16.mxu0 0
        %2452 = vmatpush1.bf16.xpose.msra.mxu0 0
        %2453 = vmatprep.subr.bf16.mxu0 0
        %2454 = vmatpush1.bf16.xpose.msra.mxu0 0
        %2455 = vmatprep.subr.bf16.mxu0 0
        %2456 = vmatpush1.bf16.xpose.msra.mxu0 0
        %2457 = vmatprep.subr.bf16.mxu0 0
        %2458 = vmatpush1.bf16.xpose.msra.mxu0 %v2441
        %2459 = vmatprep.subr.bf16.mxu0 0
        %2460 = vmatpush2.bf16.xpose.msra.mxu0 0
        %2461 = vmatprep.subr.bf16.mxu0 0
        %2462 = vmatpush2.bf16.xpose.msra.mxu0 0
        %2463 = vmatprep.subr.bf16.mxu0 0
        %2464 = vmatpush2.bf16.xpose.msra.mxu0 0
        %2465 = vmatprep.subr.bf16.mxu0 0
        %2466 = vmatpush2.bf16.xpose.msra.mxu0 0
        %2467 = vmatprep.subr.bf16.mxu0 0
        %2468 = vmatpush2.bf16.xpose.msra.mxu0 0
        %2469 = vmatprep.subr.bf16.mxu0 0
        %2470 = vmatpush2.bf16.xpose.msra.mxu0 0
        %2471 = vmatprep.subr.bf16.mxu0 0
        %2472 = vmatpush2.bf16.xpose.msra.mxu0 0
        %2473 = vmatprep.subr.bf16.mxu0 0
        %2474 = vmatpush2.bf16.xpose.msra.mxu0 0
        %2475 = vmatprep.mubr.bf16.mxu0 0
        %2476 = vmatmul.mubr.bf16.gmra.mxu0 %v2438
        %v2477 = vpop.f32.mrf.mxu0
        %v2478 = vadd.f32 0.0, %v2477
        %v2479 = vpop.f32.mrf.mxu0
        %v2480 = vpop.f32.mrf.mxu0
        %v2481 = vadd.f32 0.0, %v2480
        %v2482 = vpop.f32.mrf.mxu0
        %2483 = vdwg.mxu0
        %v2485 = vsel %vm1684, %v1519, 0
        %v2488 = vsel %vm1684, %v1575, 0
        %2490 = vmatprep.subr.bf16.mxu0 0
        %2491 = vmatpush1.bf16.xpose.msra.mxu0 0
        %2492 = vmatprep.subr.bf16.mxu0 0
        %2493 = vmatpush1.bf16.xpose.msra.mxu0 0
        %2494 = vmatprep.subr.bf16.mxu0 0
        %2495 = vmatpush1.bf16.xpose.msra.mxu0 0
        %2496 = vmatprep.subr.bf16.mxu0 0
        %2497 = vmatpush1.bf16.xpose.msra.mxu0 0
        %2498 = vmatprep.subr.bf16.mxu0 0
        %2499 = vmatpush1.bf16.xpose.msra.mxu0 0
        %2500 = vmatprep.subr.bf16.mxu0 0
        %2501 = vmatpush1.bf16.xpose.msra.mxu0 0
        %2502 = vmatprep.subr.bf16.mxu0 0
        %2503 = vmatpush1.bf16.xpose.msra.mxu0 0
        %2504 = vmatprep.subr.bf16.mxu0 0
        %2505 = vmatpush1.bf16.xpose.msra.mxu0 %v2488
        %2506 = vmatprep.subr.bf16.mxu0 0
        %2507 = vmatpush2.bf16.xpose.msra.mxu0 0
        %2508 = vmatprep.subr.bf16.mxu0 0
        %2509 = vmatpush2.bf16.xpose.msra.mxu0 0
        %2510 = vmatprep.subr.bf16.mxu0 0
        %2511 = vmatpush2.bf16.xpose.msra.mxu0 0
        %2512 = vmatprep.subr.bf16.mxu0 0
        %2513 = vmatpush2.bf16.xpose.msra.mxu0 0
        %2514 = vmatprep.subr.bf16.mxu0 0
        %2515 = vmatpush2.bf16.xpose.msra.mxu0 0
        %2516 = vmatprep.subr.bf16.mxu0 0
        %2517 = vmatpush2.bf16.xpose.msra.mxu0 0
        %2518 = vmatprep.subr.bf16.mxu0 0
        %2519 = vmatpush2.bf16.xpose.msra.mxu0 0
        %2520 = vmatprep.subr.bf16.mxu0 0
        %2521 = vmatpush2.bf16.xpose.msra.mxu0 0
        %2522 = vmatprep.mubr.bf16.mxu0 0
        %2523 = vmatmul.mubr.bf16.gmra.mxu0 %v2485
        %v2524 = vpop.f32.mrf.mxu0
        %v2525 = vadd.f32 0.0, %v2524
        %v2526 = vpop.f32.mrf.mxu0
        %v2527 = vpop.f32.mrf.mxu0
        %v2528 = vadd.f32 0.0, %v2527
        %v2529 = vpop.f32.mrf.mxu0
        %2530 = vdwg.mxu0
        %v2532 = vsel %vm1684, %v1521, 0
        %v2535 = vsel %vm1684, %v1577, 0
        %2537 = vmatprep.subr.bf16.mxu0 0
        %2538 = vmatpush1.bf16.xpose.msra.mxu0 0
        %2539 = vmatprep.subr.bf16.mxu0 0
        %2540 = vmatpush1.bf16.xpose.msra.mxu0 0
        %2541 = vmatprep.subr.bf16.mxu0 0
        %2542 = vmatpush1.bf16.xpose.msra.mxu0 0
        %2543 = vmatprep.subr.bf16.mxu0 0
        %2544 = vmatpush1.bf16.xpose.msra.mxu0 0
        %2545 = vmatprep.subr.bf16.mxu0 0
        %2546 = vmatpush1.bf16.xpose.msra.mxu0 0
        %2547 = vmatprep.subr.bf16.mxu0 0
        %2548 = vmatpush1.bf16.xpose.msra.mxu0 0
        %2549 = vmatprep.subr.bf16.mxu0 0
        %2550 = vmatpush1.bf16.xpose.msra.mxu0 0
        %2551 = vmatprep.subr.bf16.mxu0 0
        %2552 = vmatpush1.bf16.xpose.msra.mxu0 %v2535
        %2553 = vmatprep.subr.bf16.mxu0 0
        %2554 = vmatpush2.bf16.xpose.msra.mxu0 0
        %2555 = vmatprep.subr.bf16.mxu0 0
        %2556 = vmatpush2.bf16.xpose.msra.mxu0 0
        %2557 = vmatprep.subr.bf16.mxu0 0
        %2558 = vmatpush2.bf16.xpose.msra.mxu0 0
        %2559 = vmatprep.subr.bf16.mxu0 0
        %2560 = vmatpush2.bf16.xpose.msra.mxu0 0
        %2561 = vmatprep.subr.bf16.mxu0 0
        %2562 = vmatpush2.bf16.xpose.msra.mxu0 0
        %2563 = vmatprep.subr.bf16.mxu0 0
        %2564 = vmatpush2.bf16.xpose.msra.mxu0 0
        %2565 = vmatprep.subr.bf16.mxu0 0
        %2566 = vmatpush2.bf16.xpose.msra.mxu0 0
        %2567 = vmatprep.subr.bf16.mxu0 0
        %2568 = vmatpush2.bf16.xpose.msra.mxu0 0
        %2569 = vmatprep.mubr.bf16.mxu0 0
        %2570 = vmatmul.mubr.bf16.gmra.mxu0 %v2532
        %v2571 = vpop.f32.mrf.mxu0
        %v2572 = vadd.f32 0.0, %v2571
        %v2573 = vpop.f32.mrf.mxu0
        %v2574 = vpop.f32.mrf.mxu0
        %v2575 = vadd.f32 0.0, %v2574
        %v2576 = vpop.f32.mrf.mxu0
        %2577 = vdwg.mxu0
        %v2579 = vsel %vm1684, %v1523, 0
        %v2582 = vsel %vm1684, %v1579, 0
        %2584 = vmatprep.subr.bf16.mxu0 0
        %2585 = vmatpush1.bf16.xpose.msra.mxu0 0
        %2586 = vmatprep.subr.bf16.mxu0 0
        %2587 = vmatpush1.bf16.xpose.msra.mxu0 0
        %2588 = vmatprep.subr.bf16.mxu0 0
        %2589 = vmatpush1.bf16.xpose.msra.mxu0 0
        %2590 = vmatprep.subr.bf16.mxu0 0
        %2591 = vmatpush1.bf16.xpose.msra.mxu0 0
        %2592 = vmatprep.subr.bf16.mxu0 0
        %2593 = vmatpush1.bf16.xpose.msra.mxu0 0
        %2594 = vmatprep.subr.bf16.mxu0 0
        %2595 = vmatpush1.bf16.xpose.msra.mxu0 0
        %2596 = vmatprep.subr.bf16.mxu0 0
        %2597 = vmatpush1.bf16.xpose.msra.mxu0 0
        %2598 = vmatprep.subr.bf16.mxu0 0
        %2599 = vmatpush1.bf16.xpose.msra.mxu0 %v2582
        %2600 = vmatprep.subr.bf16.mxu0 0
        %2601 = vmatpush2.bf16.xpose.msra.mxu0 0
        %2602 = vmatprep.subr.bf16.mxu0 0
        %2603 = vmatpush2.bf16.xpose.msra.mxu0 0
        %2604 = vmatprep.subr.bf16.mxu0 0
        %2605 = vmatpush2.bf16.xpose.msra.mxu0 0
        %2606 = vmatprep.subr.bf16.mxu0 0
        %2607 = vmatpush2.bf16.xpose.msra.mxu0 0
        %2608 = vmatprep.subr.bf16.mxu0 0
        %2609 = vmatpush2.bf16.xpose.msra.mxu0 0
        %2610 = vmatprep.subr.bf16.mxu0 0
        %2611 = vmatpush2.bf16.xpose.msra.mxu0 0
        %2612 = vmatprep.subr.bf16.mxu0 0
        %2613 = vmatpush2.bf16.xpose.msra.mxu0 0
        %2614 = vmatprep.subr.bf16.mxu0 0
        %2615 = vmatpush2.bf16.xpose.msra.mxu0 0
        %2616 = vmatprep.mubr.bf16.mxu0 0
        %2617 = vmatmul.mubr.bf16.gmra.mxu0 %v2579
        %v2618 = vpop.f32.mrf.mxu0
        %v2619 = vadd.f32 0.0, %v2618
        %v2620 = vpop.f32.mrf.mxu0
        %v2621 = vpop.f32.mrf.mxu0
        %v2622 = vadd.f32 0.0, %v2621
        %v2623 = vpop.f32.mrf.mxu0
        %2624 = vdwg.mxu0
        %v2626 = vsel %vm1684, %v1525, 0
        %v2629 = vsel %vm1684, %v1581, 0
        %2631 = vmatprep.subr.bf16.mxu0 0
        %2632 = vmatpush1.bf16.xpose.msra.mxu0 0
        %2633 = vmatprep.subr.bf16.mxu0 0
        %2634 = vmatpush1.bf16.xpose.msra.mxu0 0
        %2635 = vmatprep.subr.bf16.mxu0 0
        %2636 = vmatpush1.bf16.xpose.msra.mxu0 0
        %2637 = vmatprep.subr.bf16.mxu0 0
        %2638 = vmatpush1.bf16.xpose.msra.mxu0 0
        %2639 = vmatprep.subr.bf16.mxu0 0
        %2640 = vmatpush1.bf16.xpose.msra.mxu0 0
        %2641 = vmatprep.subr.bf16.mxu0 0
        %2642 = vmatpush1.bf16.xpose.msra.mxu0 0
        %2643 = vmatprep.subr.bf16.mxu0 0
        %2644 = vmatpush1.bf16.xpose.msra.mxu0 0
        %2645 = vmatprep.subr.bf16.mxu0 0
        %2646 = vmatpush1.bf16.xpose.msra.mxu0 %v2629
        %2647 = vmatprep.subr.bf16.mxu0 0
        %2648 = vmatpush2.bf16.xpose.msra.mxu0 0
        %2649 = vmatprep.subr.bf16.mxu0 0
        %2650 = vmatpush2.bf16.xpose.msra.mxu0 0
        %2651 = vmatprep.subr.bf16.mxu0 0
        %2652 = vmatpush2.bf16.xpose.msra.mxu0 0
        %2653 = vmatprep.subr.bf16.mxu0 0
        %2654 = vmatpush2.bf16.xpose.msra.mxu0 0
        %2655 = vmatprep.subr.bf16.mxu0 0
        %2656 = vmatpush2.bf16.xpose.msra.mxu0 0
        %2657 = vmatprep.subr.bf16.mxu0 0
        %2658 = vmatpush2.bf16.xpose.msra.mxu0 0
        %2659 = vmatprep.subr.bf16.mxu0 0
        %2660 = vmatpush2.bf16.xpose.msra.mxu0 0
        %2661 = vmatprep.subr.bf16.mxu0 0
        %2662 = vmatpush2.bf16.xpose.msra.mxu0 0
        %2663 = vmatprep.mubr.bf16.mxu0 0
        %2664 = vmatmul.mubr.bf16.gmra.mxu0 %v2626
        %v2665 = vpop.f32.mrf.mxu0
        %v2666 = vadd.f32 0.0, %v2665
        %v2667 = vpop.f32.mrf.mxu0
        %v2668 = vpop.f32.mrf.mxu0
        %v2669 = vadd.f32 0.0, %v2668
        %v2670 = vpop.f32.mrf.mxu0
        %2671 = vdwg.mxu0
        %v2673 = vsel %vm1684, %v1527, 0
        %v2676 = vsel %vm1684, %v1583, 0
        %2678 = vmatprep.subr.bf16.mxu0 0
        %2679 = vmatpush1.bf16.xpose.msra.mxu0 0
        %2680 = vmatprep.subr.bf16.mxu0 0
        %2681 = vmatpush1.bf16.xpose.msra.mxu0 0
        %2682 = vmatprep.subr.bf16.mxu0 0
        %2683 = vmatpush1.bf16.xpose.msra.mxu0 0
        %2684 = vmatprep.subr.bf16.mxu0 0
        %2685 = vmatpush1.bf16.xpose.msra.mxu0 0
        %2686 = vmatprep.subr.bf16.mxu0 0
        %2687 = vmatpush1.bf16.xpose.msra.mxu0 0
        %2688 = vmatprep.subr.bf16.mxu0 0
        %2689 = vmatpush1.bf16.xpose.msra.mxu0 0
        %2690 = vmatprep.subr.bf16.mxu0 0
        %2691 = vmatpush1.bf16.xpose.msra.mxu0 0
        %2692 = vmatprep.subr.bf16.mxu0 0
        %2693 = vmatpush1.bf16.xpose.msra.mxu0 %v2676
        %2694 = vmatprep.subr.bf16.mxu0 0
        %2695 = vmatpush2.bf16.xpose.msra.mxu0 0
        %2696 = vmatprep.subr.bf16.mxu0 0
        %2697 = vmatpush2.bf16.xpose.msra.mxu0 0
        %2698 = vmatprep.subr.bf16.mxu0 0
        %2699 = vmatpush2.bf16.xpose.msra.mxu0 0
        %2700 = vmatprep.subr.bf16.mxu0 0
        %2701 = vmatpush2.bf16.xpose.msra.mxu0 0
        %2702 = vmatprep.subr.bf16.mxu0 0
        %2703 = vmatpush2.bf16.xpose.msra.mxu0 0
        %2704 = vmatprep.subr.bf16.mxu0 0
        %2705 = vmatpush2.bf16.xpose.msra.mxu0 0
        %2706 = vmatprep.subr.bf16.mxu0 0
        %2707 = vmatpush2.bf16.xpose.msra.mxu0 0
        %2708 = vmatprep.subr.bf16.mxu0 0
        %2709 = vmatpush2.bf16.xpose.msra.mxu0 0
        %2710 = vmatprep.mubr.bf16.mxu0 0
        %2711 = vmatmul.mubr.bf16.gmra.mxu0 %v2673
        %v2712 = vpop.f32.mrf.mxu0
        %v2713 = vadd.f32 0.0, %v2712
        %v2714 = vpop.f32.mrf.mxu0
        %v2715 = vpop.f32.mrf.mxu0
        %v2716 = vadd.f32 0.0, %v2715
        %v2717 = vpop.f32.mrf.mxu0
        %2718 = vdwg.mxu0
        %v2720 = vsel %vm1684, %v1529, 0
        %v2723 = vsel %vm1684, %v1585, 0
        %2725 = vmatprep.subr.bf16.mxu0 0
        %2726 = vmatpush1.bf16.xpose.msra.mxu0 0
        %2727 = vmatprep.subr.bf16.mxu0 0
        %2728 = vmatpush1.bf16.xpose.msra.mxu0 0
        %2729 = vmatprep.subr.bf16.mxu0 0
        %2730 = vmatpush1.bf16.xpose.msra.mxu0 0
        %2731 = vmatprep.subr.bf16.mxu0 0
        %2732 = vmatpush1.bf16.xpose.msra.mxu0 0
        %2733 = vmatprep.subr.bf16.mxu0 0
        %2734 = vmatpush1.bf16.xpose.msra.mxu0 0
        %2735 = vmatprep.subr.bf16.mxu0 0
        %2736 = vmatpush1.bf16.xpose.msra.mxu0 0
        %2737 = vmatprep.subr.bf16.mxu0 0
        %2738 = vmatpush1.bf16.xpose.msra.mxu0 0
        %2739 = vmatprep.subr.bf16.mxu0 0
        %2740 = vmatpush1.bf16.xpose.msra.mxu0 %v2723
        %2741 = vmatprep.subr.bf16.mxu0 0
        %2742 = vmatpush2.bf16.xpose.msra.mxu0 0
        %2743 = vmatprep.subr.bf16.mxu0 0
        %2744 = vmatpush2.bf16.xpose.msra.mxu0 0
        %2745 = vmatprep.subr.bf16.mxu0 0
        %2746 = vmatpush2.bf16.xpose.msra.mxu0 0
        %2747 = vmatprep.subr.bf16.mxu0 0
        %2748 = vmatpush2.bf16.xpose.msra.mxu0 0
        %2749 = vmatprep.subr.bf16.mxu0 0
        %2750 = vmatpush2.bf16.xpose.msra.mxu0 0
        %2751 = vmatprep.subr.bf16.mxu0 0
        %2752 = vmatpush2.bf16.xpose.msra.mxu0 0
        %2753 = vmatprep.subr.bf16.mxu0 0
        %2754 = vmatpush2.bf16.xpose.msra.mxu0 0
        %2755 = vmatprep.subr.bf16.mxu0 0
        %2756 = vmatpush2.bf16.xpose.msra.mxu0 0
        %2757 = vmatprep.mubr.bf16.mxu0 0
        %2758 = vmatmul.mubr.bf16.gmra.mxu0 %v2720
        %v2759 = vpop.f32.mrf.mxu0
        %v2760 = vadd.f32 0.0, %v2759
        %v2761 = vpop.f32.mrf.mxu0
        %v2762 = vpop.f32.mrf.mxu0
        %v2763 = vadd.f32 0.0, %v2762
        %v2764 = vpop.f32.mrf.mxu0
        %2765 = vdwg.mxu0
        %v2767 = vsel %vm1684, %v1531, 0
        %v2770 = vsel %vm1684, %v1587, 0
        %2772 = vmatprep.subr.bf16.mxu0 0
        %2773 = vmatpush1.bf16.xpose.msra.mxu0 0
        %2774 = vmatprep.subr.bf16.mxu0 0
        %2775 = vmatpush1.bf16.xpose.msra.mxu0 0
        %2776 = vmatprep.subr.bf16.mxu0 0
        %2777 = vmatpush1.bf16.xpose.msra.mxu0 0
        %2778 = vmatprep.subr.bf16.mxu0 0
        %2779 = vmatpush1.bf16.xpose.msra.mxu0 0
        %2780 = vmatprep.subr.bf16.mxu0 0
        %2781 = vmatpush1.bf16.xpose.msra.mxu0 0
        %2782 = vmatprep.subr.bf16.mxu0 0
        %2783 = vmatpush1.bf16.xpose.msra.mxu0 0
        %2784 = vmatprep.subr.bf16.mxu0 0
        %2785 = vmatpush1.bf16.xpose.msra.mxu0 0
        %2786 = vmatprep.subr.bf16.mxu0 0
        %2787 = vmatpush1.bf16.xpose.msra.mxu0 %v2770
        %2788 = vmatprep.subr.bf16.mxu0 0
        %2789 = vmatpush2.bf16.xpose.msra.mxu0 0
        %2790 = vmatprep.subr.bf16.mxu0 0
        %2791 = vmatpush2.bf16.xpose.msra.mxu0 0
        %2792 = vmatprep.subr.bf16.mxu0 0
        %2793 = vmatpush2.bf16.xpose.msra.mxu0 0
        %2794 = vmatprep.subr.bf16.mxu0 0
        %2795 = vmatpush2.bf16.xpose.msra.mxu0 0
        %2796 = vmatprep.subr.bf16.mxu0 0
        %2797 = vmatpush2.bf16.xpose.msra.mxu0 0
        %2798 = vmatprep.subr.bf16.mxu0 0
        %2799 = vmatpush2.bf16.xpose.msra.mxu0 0
        %2800 = vmatprep.subr.bf16.mxu0 0
        %2801 = vmatpush2.bf16.xpose.msra.mxu0 0
        %2802 = vmatprep.subr.bf16.mxu0 0
        %2803 = vmatpush2.bf16.xpose.msra.mxu0 0
        %2804 = vmatprep.mubr.bf16.mxu0 0
        %2805 = vmatmul.mubr.bf16.gmra.mxu0 %v2767
        %v2806 = vpop.f32.mrf.mxu0
        %v2807 = vadd.f32 0.0, %v2806
        %v2808 = vpop.f32.mrf.mxu0
        %v2809 = vpop.f32.mrf.mxu0
        %v2810 = vadd.f32 0.0, %v2809
        %v2811 = vpop.f32.mrf.mxu0
        %2812 = vdwg.mxu0
        %v2814 = vsel %vm1684, %v1533, 0
        %v2817 = vsel %vm1684, %v1589, 0
        %2819 = vmatprep.subr.bf16.mxu0 0
        %2820 = vmatpush1.bf16.xpose.msra.mxu0 0
        %2821 = vmatprep.subr.bf16.mxu0 0
        %2822 = vmatpush1.bf16.xpose.msra.mxu0 0
        %2823 = vmatprep.subr.bf16.mxu0 0
        %2824 = vmatpush1.bf16.xpose.msra.mxu0 0
        %2825 = vmatprep.subr.bf16.mxu0 0
        %2826 = vmatpush1.bf16.xpose.msra.mxu0 0
        %2827 = vmatprep.subr.bf16.mxu0 0
        %2828 = vmatpush1.bf16.xpose.msra.mxu0 0
        %2829 = vmatprep.subr.bf16.mxu0 0
        %2830 = vmatpush1.bf16.xpose.msra.mxu0 0
        %2831 = vmatprep.subr.bf16.mxu0 0
        %2832 = vmatpush1.bf16.xpose.msra.mxu0 0
        %2833 = vmatprep.subr.bf16.mxu0 0
        %2834 = vmatpush1.bf16.xpose.msra.mxu0 %v2817
        %2835 = vmatprep.subr.bf16.mxu0 0
        %2836 = vmatpush2.bf16.xpose.msra.mxu0 0
        %2837 = vmatprep.subr.bf16.mxu0 0
        %2838 = vmatpush2.bf16.xpose.msra.mxu0 0
        %2839 = vmatprep.subr.bf16.mxu0 0
        %2840 = vmatpush2.bf16.xpose.msra.mxu0 0
        %2841 = vmatprep.subr.bf16.mxu0 0
        %2842 = vmatpush2.bf16.xpose.msra.mxu0 0
        %2843 = vmatprep.subr.bf16.mxu0 0
        %2844 = vmatpush2.bf16.xpose.msra.mxu0 0
        %2845 = vmatprep.subr.bf16.mxu0 0
        %2846 = vmatpush2.bf16.xpose.msra.mxu0 0
        %2847 = vmatprep.subr.bf16.mxu0 0
        %2848 = vmatpush2.bf16.xpose.msra.mxu0 0
        %2849 = vmatprep.subr.bf16.mxu0 0
        %2850 = vmatpush2.bf16.xpose.msra.mxu0 0
        %2851 = vmatprep.mubr.bf16.mxu0 0
        %2852 = vmatmul.mubr.bf16.gmra.mxu0 %v2814
        %v2853 = vpop.f32.mrf.mxu0
        %v2854 = vadd.f32 0.0, %v2853
        %v2855 = vpop.f32.mrf.mxu0
        %v2856 = vpop.f32.mrf.mxu0
        %v2857 = vadd.f32 0.0, %v2856
        %v2858 = vpop.f32.mrf.mxu0
        %2859 = vdwg.mxu0
        %v2861 = vsel %vm1684, %v1535, 0
        %v2864 = vsel %vm1684, %v1591, 0
        %2866 = vmatprep.subr.bf16.mxu0 0
        %2867 = vmatpush1.bf16.xpose.msra.mxu0 0
        %2868 = vmatprep.subr.bf16.mxu0 0
        %2869 = vmatpush1.bf16.xpose.msra.mxu0 0
        %2870 = vmatprep.subr.bf16.mxu0 0
        %2871 = vmatpush1.bf16.xpose.msra.mxu0 0
        %2872 = vmatprep.subr.bf16.mxu0 0
        %2873 = vmatpush1.bf16.xpose.msra.mxu0 0
        %2874 = vmatprep.subr.bf16.mxu0 0
        %2875 = vmatpush1.bf16.xpose.msra.mxu0 0
        %2876 = vmatprep.subr.bf16.mxu0 0
        %2877 = vmatpush1.bf16.xpose.msra.mxu0 0
        %2878 = vmatprep.subr.bf16.mxu0 0
        %2879 = vmatpush1.bf16.xpose.msra.mxu0 0
        %2880 = vmatprep.subr.bf16.mxu0 0
        %2881 = vmatpush1.bf16.xpose.msra.mxu0 %v2864
        %2882 = vmatprep.subr.bf16.mxu0 0
        %2883 = vmatpush2.bf16.xpose.msra.mxu0 0
        %2884 = vmatprep.subr.bf16.mxu0 0
        %2885 = vmatpush2.bf16.xpose.msra.mxu0 0
        %2886 = vmatprep.subr.bf16.mxu0 0
        %2887 = vmatpush2.bf16.xpose.msra.mxu0 0
        %2888 = vmatprep.subr.bf16.mxu0 0
        %2889 = vmatpush2.bf16.xpose.msra.mxu0 0
        %2890 = vmatprep.subr.bf16.mxu0 0
        %2891 = vmatpush2.bf16.xpose.msra.mxu0 0
        %2892 = vmatprep.subr.bf16.mxu0 0
        %2893 = vmatpush2.bf16.xpose.msra.mxu0 0
        %2894 = vmatprep.subr.bf16.mxu0 0
        %2895 = vmatpush2.bf16.xpose.msra.mxu0 0
        %2896 = vmatprep.subr.bf16.mxu0 0
        %2897 = vmatpush2.bf16.xpose.msra.mxu0 0
        %2898 = vmatprep.mubr.bf16.mxu0 0
        %2899 = vmatmul.mubr.bf16.gmra.mxu0 %v2861
        %v2900 = vpop.f32.mrf.mxu0
        %v2901 = vadd.f32 0.0, %v2900
        %v2902 = vpop.f32.mrf.mxu0
        %v2903 = vpop.f32.mrf.mxu0
        %v2904 = vadd.f32 0.0, %v2903
        %v2905 = vpop.f32.mrf.mxu0
        %2906 = vdwg.mxu0
        %v2908 = vsel %vm1684, %v1537, 0
        %v2911 = vsel %vm1684, %v1593, 0
        %2913 = vmatprep.subr.bf16.mxu0 0
        %2914 = vmatpush1.bf16.xpose.msra.mxu0 0
        %2915 = vmatprep.subr.bf16.mxu0 0
        %2916 = vmatpush1.bf16.xpose.msra.mxu0 0
        %2917 = vmatprep.subr.bf16.mxu0 0
        %2918 = vmatpush1.bf16.xpose.msra.mxu0 0
        %2919 = vmatprep.subr.bf16.mxu0 0
        %2920 = vmatpush1.bf16.xpose.msra.mxu0 0
        %2921 = vmatprep.subr.bf16.mxu0 0
        %2922 = vmatpush1.bf16.xpose.msra.mxu0 0
        %2923 = vmatprep.subr.bf16.mxu0 0
        %2924 = vmatpush1.bf16.xpose.msra.mxu0 0
        %2925 = vmatprep.subr.bf16.mxu0 0
        %2926 = vmatpush1.bf16.xpose.msra.mxu0 0
        %2927 = vmatprep.subr.bf16.mxu0 0
        %2928 = vmatpush1.bf16.xpose.msra.mxu0 %v2911
        %2929 = vmatprep.subr.bf16.mxu0 0
        %2930 = vmatpush2.bf16.xpose.msra.mxu0 0
        %2931 = vmatprep.subr.bf16.mxu0 0
        %2932 = vmatpush2.bf16.xpose.msra.mxu0 0
        %2933 = vmatprep.subr.bf16.mxu0 0
        %2934 = vmatpush2.bf16.xpose.msra.mxu0 0
        %2935 = vmatprep.subr.bf16.mxu0 0
        %2936 = vmatpush2.bf16.xpose.msra.mxu0 0
        %2937 = vmatprep.subr.bf16.mxu0 0
        %2938 = vmatpush2.bf16.xpose.msra.mxu0 0
        %2939 = vmatprep.subr.bf16.mxu0 0
        %2940 = vmatpush2.bf16.xpose.msra.mxu0 0
        %2941 = vmatprep.subr.bf16.mxu0 0
        %2942 = vmatpush2.bf16.xpose.msra.mxu0 0
        %2943 = vmatprep.subr.bf16.mxu0 0
        %2944 = vmatpush2.bf16.xpose.msra.mxu0 0
        %2945 = vmatprep.mubr.bf16.mxu0 0
        %2946 = vmatmul.mubr.bf16.gmra.mxu0 %v2908
        %v2947 = vpop.f32.mrf.mxu0
        %v2948 = vadd.f32 0.0, %v2947
        %v2949 = vpop.f32.mrf.mxu0
        %v2950 = vpop.f32.mrf.mxu0
        %v2951 = vadd.f32 0.0, %v2950
        %v2952 = vpop.f32.mrf.mxu0
        %2953 = vdwg.mxu0
        %v2955 = vsel %vm1684, %v1539, 0
        %v2958 = vsel %vm1684, %v1595, 0
        %2960 = vmatprep.subr.bf16.mxu0 0
        %2961 = vmatpush1.bf16.xpose.msra.mxu0 0
        %2962 = vmatprep.subr.bf16.mxu0 0
        %2963 = vmatpush1.bf16.xpose.msra.mxu0 0
        %2964 = vmatprep.subr.bf16.mxu0 0
        %2965 = vmatpush1.bf16.xpose.msra.mxu0 0
        %2966 = vmatprep.subr.bf16.mxu0 0
        %2967 = vmatpush1.bf16.xpose.msra.mxu0 0
        %2968 = vmatprep.subr.bf16.mxu0 0
        %2969 = vmatpush1.bf16.xpose.msra.mxu0 0
        %2970 = vmatprep.subr.bf16.mxu0 0
        %2971 = vmatpush1.bf16.xpose.msra.mxu0 0
        %2972 = vmatprep.subr.bf16.mxu0 0
        %2973 = vmatpush1.bf16.xpose.msra.mxu0 0
        %2974 = vmatprep.subr.bf16.mxu0 0
        %2975 = vmatpush1.bf16.xpose.msra.mxu0 %v2958
        %2976 = vmatprep.subr.bf16.mxu0 0
        %2977 = vmatpush2.bf16.xpose.msra.mxu0 0
        %2978 = vmatprep.subr.bf16.mxu0 0
        %2979 = vmatpush2.bf16.xpose.msra.mxu0 0
        %2980 = vmatprep.subr.bf16.mxu0 0
        %2981 = vmatpush2.bf16.xpose.msra.mxu0 0
        %2982 = vmatprep.subr.bf16.mxu0 0
        %2983 = vmatpush2.bf16.xpose.msra.mxu0 0
        %2984 = vmatprep.subr.bf16.mxu0 0
        %2985 = vmatpush2.bf16.xpose.msra.mxu0 0
        %2986 = vmatprep.subr.bf16.mxu0 0
        %2987 = vmatpush2.bf16.xpose.msra.mxu0 0
        %2988 = vmatprep.subr.bf16.mxu0 0
        %2989 = vmatpush2.bf16.xpose.msra.mxu0 0
        %2990 = vmatprep.subr.bf16.mxu0 0
        %2991 = vmatpush2.bf16.xpose.msra.mxu0 0
        %2992 = vmatprep.mubr.bf16.mxu0 0
        %2993 = vmatmul.mubr.bf16.gmra.mxu0 %v2955
        %v2994 = vpop.f32.mrf.mxu0
        %v2995 = vadd.f32 0.0, %v2994
        %v2996 = vpop.f32.mrf.mxu0
        %v2997 = vpop.f32.mrf.mxu0
        %v2998 = vadd.f32 0.0, %v2997
        %v2999 = vpop.f32.mrf.mxu0
        %3000 = vdwg.mxu0
        %v3002 = vsel %vm1684, %v1541, 0
        %v3005 = vsel %vm1684, %v1597, 0
        %3007 = vmatprep.subr.bf16.mxu0 0
        %3008 = vmatpush1.bf16.xpose.msra.mxu0 0
        %3009 = vmatprep.subr.bf16.mxu0 0
        %3010 = vmatpush1.bf16.xpose.msra.mxu0 0
        %3011 = vmatprep.subr.bf16.mxu0 0
        %3012 = vmatpush1.bf16.xpose.msra.mxu0 0
        %3013 = vmatprep.subr.bf16.mxu0 0
        %3014 = vmatpush1.bf16.xpose.msra.mxu0 0
        %3015 = vmatprep.subr.bf16.mxu0 0
        %3016 = vmatpush1.bf16.xpose.msra.mxu0 0
        %3017 = vmatprep.subr.bf16.mxu0 0
        %3018 = vmatpush1.bf16.xpose.msra.mxu0 0
        %3019 = vmatprep.subr.bf16.mxu0 0
        %3020 = vmatpush1.bf16.xpose.msra.mxu0 0
        %3021 = vmatprep.subr.bf16.mxu0 0
        %3022 = vmatpush1.bf16.xpose.msra.mxu0 %v3005
        %3023 = vmatprep.subr.bf16.mxu0 0
        %3024 = vmatpush2.bf16.xpose.msra.mxu0 0
        %3025 = vmatprep.subr.bf16.mxu0 0
        %3026 = vmatpush2.bf16.xpose.msra.mxu0 0
        %3027 = vmatprep.subr.bf16.mxu0 0
        %3028 = vmatpush2.bf16.xpose.msra.mxu0 0
        %3029 = vmatprep.subr.bf16.mxu0 0
        %3030 = vmatpush2.bf16.xpose.msra.mxu0 0
        %3031 = vmatprep.subr.bf16.mxu0 0
        %3032 = vmatpush2.bf16.xpose.msra.mxu0 0
        %3033 = vmatprep.subr.bf16.mxu0 0
        %3034 = vmatpush2.bf16.xpose.msra.mxu0 0
        %3035 = vmatprep.subr.bf16.mxu0 0
        %3036 = vmatpush2.bf16.xpose.msra.mxu0 0
        %3037 = vmatprep.subr.bf16.mxu0 0
        %3038 = vmatpush2.bf16.xpose.msra.mxu0 0
        %3039 = vmatprep.mubr.bf16.mxu0 0
        %3040 = vmatmul.mubr.bf16.gmra.mxu0 %v3002
        %v3041 = vpop.f32.mrf.mxu0
        %v3042 = vadd.f32 0.0, %v3041
        %v3043 = vpop.f32.mrf.mxu0
        %v3044 = vpop.f32.mrf.mxu0
        %v3045 = vadd.f32 0.0, %v3044
        %v3046 = vpop.f32.mrf.mxu0
        %3047 = vdwg.mxu0
        %v3049 = vsel %vm1684, %v1543, 0
        %v3052 = vsel %vm1684, %v1599, 0
        %3054 = vmatprep.subr.bf16.mxu0 0
        %3055 = vmatpush1.bf16.xpose.msra.mxu0 0
        %3056 = vmatprep.subr.bf16.mxu0 0
        %3057 = vmatpush1.bf16.xpose.msra.mxu0 0
        %3058 = vmatprep.subr.bf16.mxu0 0
        %3059 = vmatpush1.bf16.xpose.msra.mxu0 0
        %3060 = vmatprep.subr.bf16.mxu0 0
        %3061 = vmatpush1.bf16.xpose.msra.mxu0 0
        %3062 = vmatprep.subr.bf16.mxu0 0
        %3063 = vmatpush1.bf16.xpose.msra.mxu0 0
        %3064 = vmatprep.subr.bf16.mxu0 0
        %3065 = vmatpush1.bf16.xpose.msra.mxu0 0
        %3066 = vmatprep.subr.bf16.mxu0 0
        %3067 = vmatpush1.bf16.xpose.msra.mxu0 0
        %3068 = vmatprep.subr.bf16.mxu0 0
        %3069 = vmatpush1.bf16.xpose.msra.mxu0 %v3052
        %3070 = vmatprep.subr.bf16.mxu0 0
        %3071 = vmatpush2.bf16.xpose.msra.mxu0 0
        %3072 = vmatprep.subr.bf16.mxu0 0
        %3073 = vmatpush2.bf16.xpose.msra.mxu0 0
        %3074 = vmatprep.subr.bf16.mxu0 0
        %3075 = vmatpush2.bf16.xpose.msra.mxu0 0
        %3076 = vmatprep.subr.bf16.mxu0 0
        %3077 = vmatpush2.bf16.xpose.msra.mxu0 0
        %3078 = vmatprep.subr.bf16.mxu0 0
        %3079 = vmatpush2.bf16.xpose.msra.mxu0 0
        %3080 = vmatprep.subr.bf16.mxu0 0
        %3081 = vmatpush2.bf16.xpose.msra.mxu0 0
        %3082 = vmatprep.subr.bf16.mxu0 0
        %3083 = vmatpush2.bf16.xpose.msra.mxu0 0
        %3084 = vmatprep.subr.bf16.mxu0 0
        %3085 = vmatpush2.bf16.xpose.msra.mxu0 0
        %3086 = vmatprep.mubr.bf16.mxu0 0
        %3087 = vmatmul.mubr.bf16.gmra.mxu0 %v3049
        %v3088 = vpop.f32.mrf.mxu0
        %v3089 = vadd.f32 0.0, %v3088
        %v3090 = vpop.f32.mrf.mxu0
        %v3091 = vpop.f32.mrf.mxu0
        %v3092 = vadd.f32 0.0, %v3091
        %v3093 = vpop.f32.mrf.mxu0
        %3094 = vdwg.mxu0
        %v3096 = vsel %vm1684, %v1545, 0
        %v3099 = vsel %vm1684, %v1601, 0
        %3101 = vmatprep.subr.bf16.mxu0 0
        %3102 = vmatpush1.bf16.xpose.msra.mxu0 0
        %3103 = vmatprep.subr.bf16.mxu0 0
        %3104 = vmatpush1.bf16.xpose.msra.mxu0 0
        %3105 = vmatprep.subr.bf16.mxu0 0
        %3106 = vmatpush1.bf16.xpose.msra.mxu0 0
        %3107 = vmatprep.subr.bf16.mxu0 0
        %3108 = vmatpush1.bf16.xpose.msra.mxu0 0
        %3109 = vmatprep.subr.bf16.mxu0 0
        %3110 = vmatpush1.bf16.xpose.msra.mxu0 0
        %3111 = vmatprep.subr.bf16.mxu0 0
        %3112 = vmatpush1.bf16.xpose.msra.mxu0 0
        %3113 = vmatprep.subr.bf16.mxu0 0
        %3114 = vmatpush1.bf16.xpose.msra.mxu0 0
        %3115 = vmatprep.subr.bf16.mxu0 0
        %3116 = vmatpush1.bf16.xpose.msra.mxu0 %v3099
        %3117 = vmatprep.subr.bf16.mxu0 0
        %3118 = vmatpush2.bf16.xpose.msra.mxu0 0
        %3119 = vmatprep.subr.bf16.mxu0 0
        %3120 = vmatpush2.bf16.xpose.msra.mxu0 0
        %3121 = vmatprep.subr.bf16.mxu0 0
        %3122 = vmatpush2.bf16.xpose.msra.mxu0 0
        %3123 = vmatprep.subr.bf16.mxu0 0
        %3124 = vmatpush2.bf16.xpose.msra.mxu0 0
        %3125 = vmatprep.subr.bf16.mxu0 0
        %3126 = vmatpush2.bf16.xpose.msra.mxu0 0
        %3127 = vmatprep.subr.bf16.mxu0 0
        %3128 = vmatpush2.bf16.xpose.msra.mxu0 0
        %3129 = vmatprep.subr.bf16.mxu0 0
        %3130 = vmatpush2.bf16.xpose.msra.mxu0 0
        %3131 = vmatprep.subr.bf16.mxu0 0
        %3132 = vmatpush2.bf16.xpose.msra.mxu0 0
        %3133 = vmatprep.mubr.bf16.mxu0 0
        %3134 = vmatmul.mubr.bf16.gmra.mxu0 %v3096
        %v3135 = vpop.f32.mrf.mxu0
        %v3136 = vadd.f32 0.0, %v3135
        %v3137 = vpop.f32.mrf.mxu0
        %v3138 = vpop.f32.mrf.mxu0
        %v3139 = vadd.f32 0.0, %v3138
        %v3140 = vpop.f32.mrf.mxu0
        %3141 = vdwg.mxu0
        %v3143 = vsel %vm1684, %v1547, 0
        %v3146 = vsel %vm1684, %v1603, 0
        %3148 = vmatprep.subr.bf16.mxu0 0
        %3149 = vmatpush1.bf16.xpose.msra.mxu0 0
        %3150 = vmatprep.subr.bf16.mxu0 0
        %3151 = vmatpush1.bf16.xpose.msra.mxu0 0
        %3152 = vmatprep.subr.bf16.mxu0 0
        %3153 = vmatpush1.bf16.xpose.msra.mxu0 0
        %3154 = vmatprep.subr.bf16.mxu0 0
        %3155 = vmatpush1.bf16.xpose.msra.mxu0 0
        %3156 = vmatprep.subr.bf16.mxu0 0
        %3157 = vmatpush1.bf16.xpose.msra.mxu0 0
        %3158 = vmatprep.subr.bf16.mxu0 0
        %3159 = vmatpush1.bf16.xpose.msra.mxu0 0
        %3160 = vmatprep.subr.bf16.mxu0 0
        %3161 = vmatpush1.bf16.xpose.msra.mxu0 0
        %3162 = vmatprep.subr.bf16.mxu0 0
        %3163 = vmatpush1.bf16.xpose.msra.mxu0 %v3146
        %3164 = vmatprep.subr.bf16.mxu0 0
        %3165 = vmatpush2.bf16.xpose.msra.mxu0 0
        %3166 = vmatprep.subr.bf16.mxu0 0
        %3167 = vmatpush2.bf16.xpose.msra.mxu0 0
        %3168 = vmatprep.subr.bf16.mxu0 0
        %3169 = vmatpush2.bf16.xpose.msra.mxu0 0
        %3170 = vmatprep.subr.bf16.mxu0 0
        %3171 = vmatpush2.bf16.xpose.msra.mxu0 0
        %3172 = vmatprep.subr.bf16.mxu0 0
        %3173 = vmatpush2.bf16.xpose.msra.mxu0 0
        %3174 = vmatprep.subr.bf16.mxu0 0
        %3175 = vmatpush2.bf16.xpose.msra.mxu0 0
        %3176 = vmatprep.subr.bf16.mxu0 0
        %3177 = vmatpush2.bf16.xpose.msra.mxu0 0
        %3178 = vmatprep.subr.bf16.mxu0 0
        %3179 = vmatpush2.bf16.xpose.msra.mxu0 0
        %3180 = vmatprep.mubr.bf16.mxu0 0
        %3181 = vmatmul.mubr.bf16.gmra.mxu0 %v3143
        %v3182 = vpop.f32.mrf.mxu0
        %v3183 = vadd.f32 0.0, %v3182
        %v3184 = vpop.f32.mrf.mxu0
        %v3185 = vpop.f32.mrf.mxu0
        %v3186 = vadd.f32 0.0, %v3185
        %v3187 = vpop.f32.mrf.mxu0
        %3188 = vdwg.mxu0
        %vm3189 = vcmask 130048
        %v3190 = vsel %vm3189, %v1726, -inf
        %3191 = vmax.xlane.f32.xlu0 %v3190
        %v3192 = vpop.xlane.xlu0 %3191
        %v3193 = vsel %vm3189, %v1729, -inf
        %3194 = vmax.xlane.f32.xlu0 %v3193
        %v3195 = vpop.xlane.xlu0 %3194
        %v3196 = vsel %vm3189, %v1773, -inf
        %3197 = vmax.xlane.f32.xlu0 %v3196
        %v3198 = vpop.xlane.xlu0 %3197
        %v3199 = vsel %vm3189, %v1776, -inf
        %3200 = vmax.xlane.f32.xlu0 %v3199
        %v3201 = vpop.xlane.xlu0 %3200
        %v3202 = vsel %vm3189, %v1820, -inf
        %3203 = vmax.xlane.f32.xlu0 %v3202
        %v3204 = vpop.xlane.xlu0 %3203
        %v3205 = vsel %vm3189, %v1823, -inf
        %3206 = vmax.xlane.f32.xlu0 %v3205
        %v3207 = vpop.xlane.xlu0 %3206
        %v3208 = vsel %vm3189, %v1867, -inf
        %3209 = vmax.xlane.f32.xlu0 %v3208
        %v3210 = vpop.xlane.xlu0 %3209
        %v3211 = vsel %vm3189, %v1870, -inf
        %3212 = vmax.xlane.f32.xlu0 %v3211
        %v3213 = vpop.xlane.xlu0 %3212
        %v3214 = vsel %vm3189, %v1914, -inf
        %3215 = vmax.xlane.f32.xlu0 %v3214
        %v3216 = vpop.xlane.xlu0 %3215
        %v3217 = vsel %vm3189, %v1917, -inf
        %3218 = vmax.xlane.f32.xlu0 %v3217
        %v3219 = vpop.xlane.xlu0 %3218
        %v3220 = vsel %vm3189, %v1961, -inf
        %3221 = vmax.xlane.f32.xlu0 %v3220
        %v3222 = vpop.xlane.xlu0 %3221
        %v3223 = vsel %vm3189, %v1964, -inf
        %3224 = vmax.xlane.f32.xlu0 %v3223
        %v3225 = vpop.xlane.xlu0 %3224
        %v3226 = vsel %vm3189, %v2008, -inf
        %3227 = vmax.xlane.f32.xlu0 %v3226
        %v3228 = vpop.xlane.xlu0 %3227
        %v3229 = vsel %vm3189, %v2011, -inf
        %3230 = vmax.xlane.f32.xlu0 %v3229
        %v3231 = vpop.xlane.xlu0 %3230
        %v3232 = vsel %vm3189, %v2055, -inf
        %3233 = vmax.xlane.f32.xlu0 %v3232
        %v3234 = vpop.xlane.xlu0 %3233
        %v3235 = vsel %vm3189, %v2058, -inf
        %3236 = vmax.xlane.f32.xlu0 %v3235
        %v3237 = vpop.xlane.xlu0 %3236
        %v3238 = vsel %vm3189, %v2102, -inf
        %3239 = vmax.xlane.f32.xlu0 %v3238
        %v3240 = vpop.xlane.xlu0 %3239
        %v3241 = vsel %vm3189, %v2105, -inf
        %3242 = vmax.xlane.f32.xlu0 %v3241
        %v3243 = vpop.xlane.xlu0 %3242
        %v3244 = vsel %vm3189, %v2149, -inf
        %3245 = vmax.xlane.f32.xlu0 %v3244
        %v3246 = vpop.xlane.xlu0 %3245
        %v3247 = vsel %vm3189, %v2152, -inf
        %3248 = vmax.xlane.f32.xlu0 %v3247
        %v3249 = vpop.xlane.xlu0 %3248
        %v3250 = vsel %vm3189, %v2196, -inf
        %3251 = vmax.xlane.f32.xlu0 %v3250
        %v3252 = vpop.xlane.xlu0 %3251
        %v3253 = vsel %vm3189, %v2199, -inf
        %3254 = vmax.xlane.f32.xlu0 %v3253
        %v3255 = vpop.xlane.xlu0 %3254
        %v3256 = vsel %vm3189, %v2243, -inf
        %3257 = vmax.xlane.f32.xlu0 %v3256
        %v3258 = vpop.xlane.xlu0 %3257
        %v3259 = vsel %vm3189, %v2246, -inf
        %3260 = vmax.xlane.f32.xlu0 %v3259
        %v3261 = vpop.xlane.xlu0 %3260
        %v3262 = vsel %vm3189, %v2290, -inf
        %3263 = vmax.xlane.f32.xlu0 %v3262
        %v3264 = vpop.xlane.xlu0 %3263
        %v3265 = vsel %vm3189, %v2293, -inf
        %3266 = vmax.xlane.f32.xlu0 %v3265
        %v3267 = vpop.xlane.xlu0 %3266
        %v3268 = vsel %vm3189, %v2337, -inf
        %3269 = vmax.xlane.f32.xlu0 %v3268
        %v3270 = vpop.xlane.xlu0 %3269
        %v3271 = vsel %vm3189, %v2340, -inf
        %3272 = vmax.xlane.f32.xlu0 %v3271
        %v3273 = vpop.xlane.xlu0 %3272
        %v3274 = vsel %vm3189, %v2384, -inf
        %3275 = vmax.xlane.f32.xlu0 %v3274
        %v3276 = vpop.xlane.xlu0 %3275
        %v3277 = vsel %vm3189, %v2387, -inf
        %3278 = vmax.xlane.f32.xlu0 %v3277
        %v3279 = vpop.xlane.xlu0 %3278
        %v3280 = vsel %vm3189, %v2431, -inf
        %3281 = vmax.xlane.f32.xlu0 %v3280
        %v3282 = vpop.xlane.xlu0 %3281
        %v3283 = vsel %vm3189, %v2434, -inf
        %3284 = vmax.xlane.f32.xlu0 %v3283
        %v3285 = vpop.xlane.xlu0 %3284
        %v3286 = vsel %vm3189, %v2478, -inf
        %3287 = vmax.xlane.f32.xlu0 %v3286
        %v3288 = vpop.xlane.xlu0 %3287
        %v3289 = vsel %vm3189, %v2481, -inf
        %3290 = vmax.xlane.f32.xlu0 %v3289
        %v3291 = vpop.xlane.xlu0 %3290
        %v3292 = vsel %vm3189, %v2525, -inf
        %3293 = vmax.xlane.f32.xlu0 %v3292
        %v3294 = vpop.xlane.xlu0 %3293
        %v3295 = vsel %vm3189, %v2528, -inf
        %3296 = vmax.xlane.f32.xlu0 %v3295
        %v3297 = vpop.xlane.xlu0 %3296
        %v3298 = vsel %vm3189, %v2572, -inf
        %3299 = vmax.xlane.f32.xlu0 %v3298
        %v3300 = vpop.xlane.xlu0 %3299
        %v3301 = vsel %vm3189, %v2575, -inf
        %3302 = vmax.xlane.f32.xlu0 %v3301
        %v3303 = vpop.xlane.xlu0 %3302
        %v3304 = vsel %vm3189, %v2619, -inf
        %3305 = vmax.xlane.f32.xlu0 %v3304
        %v3306 = vpop.xlane.xlu0 %3305
        %v3307 = vsel %vm3189, %v2622, -inf
        %3308 = vmax.xlane.f32.xlu0 %v3307
        %v3309 = vpop.xlane.xlu0 %3308
        %v3310 = vsel %vm3189, %v2666, -inf
        %3311 = vmax.xlane.f32.xlu0 %v3310
        %v3312 = vpop.xlane.xlu0 %3311
        %v3313 = vsel %vm3189, %v2669, -inf
        %3314 = vmax.xlane.f32.xlu0 %v3313
        %v3315 = vpop.xlane.xlu0 %3314
        %v3316 = vsel %vm3189, %v2713, -inf
        %3317 = vmax.xlane.f32.xlu0 %v3316
        %v3318 = vpop.xlane.xlu0 %3317
        %v3319 = vsel %vm3189, %v2716, -inf
        %3320 = vmax.xlane.f32.xlu0 %v3319
        %v3321 = vpop.xlane.xlu0 %3320
        %v3322 = vsel %vm3189, %v2760, -inf
        %3323 = vmax.xlane.f32.xlu0 %v3322
        %v3324 = vpop.xlane.xlu0 %3323
        %v3325 = vsel %vm3189, %v2763, -inf
        %3326 = vmax.xlane.f32.xlu0 %v3325
        %v3327 = vpop.xlane.xlu0 %3326
        %v3328 = vsel %vm3189, %v2807, -inf
        %3329 = vmax.xlane.f32.xlu0 %v3328
        %v3330 = vpop.xlane.xlu0 %3329
        %v3331 = vsel %vm3189, %v2810, -inf
        %3332 = vmax.xlane.f32.xlu0 %v3331
        %v3333 = vpop.xlane.xlu0 %3332
        %v3334 = vsel %vm3189, %v2854, -inf
        %3335 = vmax.xlane.f32.xlu0 %v3334
        %v3336 = vpop.xlane.xlu0 %3335
        %v3337 = vsel %vm3189, %v2857, -inf
        %3338 = vmax.xlane.f32.xlu0 %v3337
        %v3339 = vpop.xlane.xlu0 %3338
        %v3340 = vsel %vm3189, %v2901, -inf
        %3341 = vmax.xlane.f32.xlu0 %v3340
        %v3342 = vpop.xlane.xlu0 %3341
        %v3343 = vsel %vm3189, %v2904, -inf
        %3344 = vmax.xlane.f32.xlu0 %v3343
        %v3345 = vpop.xlane.xlu0 %3344
        %v3346 = vsel %vm3189, %v2948, -inf
        %3347 = vmax.xlane.f32.xlu0 %v3346
        %v3348 = vpop.xlane.xlu0 %3347
        %v3349 = vsel %vm3189, %v2951, -inf
        %3350 = vmax.xlane.f32.xlu0 %v3349
        %v3351 = vpop.xlane.xlu0 %3350
        %v3352 = vsel %vm3189, %v2995, -inf
        %3353 = vmax.xlane.f32.xlu0 %v3352
        %v3354 = vpop.xlane.xlu0 %3353
        %v3355 = vsel %vm3189, %v2998, -inf
        %3356 = vmax.xlane.f32.xlu0 %v3355
        %v3357 = vpop.xlane.xlu0 %3356
        %v3358 = vsel %vm3189, %v3042, -inf
        %3359 = vmax.xlane.f32.xlu0 %v3358
        %v3360 = vpop.xlane.xlu0 %3359
        %v3361 = vsel %vm3189, %v3045, -inf
        %3362 = vmax.xlane.f32.xlu0 %v3361
        %v3363 = vpop.xlane.xlu0 %3362
        %v3364 = vsel %vm3189, %v3089, -inf
        %3365 = vmax.xlane.f32.xlu0 %v3364
        %v3366 = vpop.xlane.xlu0 %3365
        %v3367 = vsel %vm3189, %v3092, -inf
        %3368 = vmax.xlane.f32.xlu0 %v3367
        %v3369 = vpop.xlane.xlu0 %3368
        %v3370 = vsel %vm3189, %v3136, -inf
        %3371 = vmax.xlane.f32.xlu0 %v3370
        %v3372 = vpop.xlane.xlu0 %3371
        %v3373 = vsel %vm3189, %v3139, -inf
        %3374 = vmax.xlane.f32.xlu0 %v3373
        %v3375 = vpop.xlane.xlu0 %3374
        %v3376 = vsel %vm3189, %v3183, -inf
        %3377 = vmax.xlane.f32.xlu0 %v3376
        %v3378 = vpop.xlane.xlu0 %3377
        %v3379 = vsel %vm3189, %v3186, -inf
        %3380 = vmax.xlane.f32.xlu0 %v3379
        %v3381 = vpop.xlane.xlu0 %3380
        %v3382 = vsub.f32 %v1726, %v3192
        %v3383 = vsub.f32 %v1729, %v3195
        %v3384 = vsub.f32 %v1773, %v3198
        %v3385 = vsub.f32 %v1776, %v3201
        %v3386 = vsub.f32 %v1820, %v3204
        %v3387 = vsub.f32 %v1823, %v3207
        %v3388 = vsub.f32 %v1867, %v3210
        %v3389 = vsub.f32 %v1870, %v3213
        %v3390 = vsub.f32 %v1914, %v3216
        %v3391 = vsub.f32 %v1917, %v3219
        %v3392 = vsub.f32 %v1961, %v3222
        %v3393 = vsub.f32 %v1964, %v3225
        %v3394 = vsub.f32 %v2008, %v3228
        %v3395 = vsub.f32 %v2011, %v3231
        %v3396 = vsub.f32 %v2055, %v3234
        %v3397 = vsub.f32 %v2058, %v3237
        %v3398 = vsub.f32 %v2102, %v3240
        %v3399 = vsub.f32 %v2105, %v3243
        %v3400 = vsub.f32 %v2149, %v3246
        %v3401 = vsub.f32 %v2152, %v3249
        %v3402 = vsub.f32 %v2196, %v3252
        %v3403 = vsub.f32 %v2199, %v3255
        %v3404 = vsub.f32 %v2243, %v3258
        %v3405 = vsub.f32 %v2246, %v3261
        %v3406 = vsub.f32 %v2290, %v3264
        %v3407 = vsub.f32 %v2293, %v3267
        %v3408 = vsub.f32 %v2337, %v3270
        %v3409 = vsub.f32 %v2340, %v3273
        %v3410 = vsub.f32 %v2384, %v3276
        %v3411 = vsub.f32 %v2387, %v3279
        %v3412 = vsub.f32 %v2431, %v3282
        %v3413 = vsub.f32 %v2434, %v3285
        %v3414 = vsub.f32 %v2478, %v3288
        %v3415 = vsub.f32 %v2481, %v3291
        %v3416 = vsub.f32 %v2525, %v3294
        %v3417 = vsub.f32 %v2528, %v3297
        %v3418 = vsub.f32 %v2572, %v3300
        %v3419 = vsub.f32 %v2575, %v3303
        %v3420 = vsub.f32 %v2619, %v3306
        %v3421 = vsub.f32 %v2622, %v3309
        %v3422 = vsub.f32 %v2666, %v3312
        %v3423 = vsub.f32 %v2669, %v3315
        %v3424 = vsub.f32 %v2713, %v3318
        %v3425 = vsub.f32 %v2716, %v3321
        %v3426 = vsub.f32 %v2760, %v3324
        %v3427 = vsub.f32 %v2763, %v3327
        %v3428 = vsub.f32 %v2807, %v3330
        %v3429 = vsub.f32 %v2810, %v3333
        %v3430 = vsub.f32 %v2854, %v3336
        %v3431 = vsub.f32 %v2857, %v3339
        %v3432 = vsub.f32 %v2901, %v3342
        %v3433 = vsub.f32 %v2904, %v3345
        %v3434 = vsub.f32 %v2948, %v3348
        %v3435 = vsub.f32 %v2951, %v3351
        %v3436 = vsub.f32 %v2995, %v3354
        %v3437 = vsub.f32 %v2998, %v3357
        %v3438 = vsub.f32 %v3042, %v3360
        %v3439 = vsub.f32 %v3045, %v3363
        %v3440 = vsub.f32 %v3089, %v3366
        %v3441 = vsub.f32 %v3092, %v3369
        %v3442 = vsub.f32 %v3136, %v3372
        %v3443 = vsub.f32 %v3139, %v3375
        %v3444 = vsub.f32 %v3183, %v3378
        %v3445 = vsub.f32 %v3186, %v3381
        %v3446 = vmul.f32 %v3382, 1.442695
        %v3447 = vpow.pop %v3446
        %v3448 = vmul.f32 %v3383, 1.442695
        %v3449 = vpow.pop %v3448
        %v3450 = vmul.f32 %v3384, 1.442695
        %v3451 = vpow.pop %v3450
        %v3452 = vmul.f32 %v3385, 1.442695
        %v3453 = vpow.pop %v3452
        %v3454 = vmul.f32 %v3386, 1.442695
        %v3455 = vpow.pop %v3454
        %v3456 = vmul.f32 %v3387, 1.442695
        %v3457 = vpow.pop %v3456
        %v3458 = vmul.f32 %v3388, 1.442695
        %v3459 = vpow.pop %v3458
        %v3460 = vmul.f32 %v3389, 1.442695
        %v3461 = vpow.pop %v3460
        %v3462 = vmul.f32 %v3390, 1.442695
        %v3463 = vpow.pop %v3462
        %v3464 = vmul.f32 %v3391, 1.442695
        %v3465 = vpow.pop %v3464
        %v3466 = vmul.f32 %v3392, 1.442695
        %v3467 = vpow.pop %v3466
        %v3468 = vmul.f32 %v3393, 1.442695
        %v3469 = vpow.pop %v3468
        %v3470 = vmul.f32 %v3394, 1.442695
        %v3471 = vpow.pop %v3470
        %v3472 = vmul.f32 %v3395, 1.442695
        %v3473 = vpow.pop %v3472
        %v3474 = vmul.f32 %v3396, 1.442695
        %v3475 = vpow.pop %v3474
        %v3476 = vmul.f32 %v3397, 1.442695
        %v3477 = vpow.pop %v3476
        %v3478 = vmul.f32 %v3398, 1.442695
        %v3479 = vpow.pop %v3478
        %v3480 = vmul.f32 %v3399, 1.442695
        %v3481 = vpow.pop %v3480
        %v3482 = vmul.f32 %v3400, 1.442695
        %v3483 = vpow.pop %v3482
        %v3484 = vmul.f32 %v3401, 1.442695
        %v3485 = vpow.pop %v3484
        %v3486 = vmul.f32 %v3402, 1.442695
        %v3487 = vpow.pop %v3486
        %v3488 = vmul.f32 %v3403, 1.442695
        %v3489 = vpow.pop %v3488
        %v3490 = vmul.f32 %v3404, 1.442695
        %v3491 = vpow.pop %v3490
        %v3492 = vmul.f32 %v3405, 1.442695
        %v3493 = vpow.pop %v3492
        %v3494 = vmul.f32 %v3406, 1.442695
        %v3495 = vpow.pop %v3494
        %v3496 = vmul.f32 %v3407, 1.442695
        %v3497 = vpow.pop %v3496
        %v3498 = vmul.f32 %v3408, 1.442695
        %v3499 = vpow.pop %v3498
        %v3500 = vmul.f32 %v3409, 1.442695
        %v3501 = vpow.pop %v3500
        %v3502 = vmul.f32 %v3410, 1.442695
        %v3503 = vpow.pop %v3502
        %v3504 = vmul.f32 %v3411, 1.442695
        %v3505 = vpow.pop %v3504
        %v3506 = vmul.f32 %v3412, 1.442695
        %v3507 = vpow.pop %v3506
        %v3508 = vmul.f32 %v3413, 1.442695
        %v3509 = vpow.pop %v3508
        %v3510 = vmul.f32 %v3414, 1.442695
        %v3511 = vpow.pop %v3510
        %v3512 = vmul.f32 %v3415, 1.442695
        %v3513 = vpow.pop %v3512
        %v3514 = vmul.f32 %v3416, 1.442695
        %v3515 = vpow.pop %v3514
        %v3516 = vmul.f32 %v3417, 1.442695
        %v3517 = vpow.pop %v3516
        %v3518 = vmul.f32 %v3418, 1.442695
        %v3519 = vpow.pop %v3518
        %v3520 = vmul.f32 %v3419, 1.442695
        %v3521 = vpow.pop %v3520
        %v3522 = vmul.f32 %v3420, 1.442695
        %v3523 = vpow.pop %v3522
        %v3524 = vmul.f32 %v3421, 1.442695
        %v3525 = vpow.pop %v3524
        %v3526 = vmul.f32 %v3422, 1.442695
        %v3527 = vpow.pop %v3526
        %v3528 = vmul.f32 %v3423, 1.442695
        %v3529 = vpow.pop %v3528
        %v3530 = vmul.f32 %v3424, 1.442695
        %v3531 = vpow.pop %v3530
        %v3532 = vmul.f32 %v3425, 1.442695
        %v3533 = vpow.pop %v3532
        %v3534 = vmul.f32 %v3426, 1.442695
        %v3535 = vpow.pop %v3534
        %v3536 = vmul.f32 %v3427, 1.442695
        %v3537 = vpow.pop %v3536
        %v3538 = vmul.f32 %v3428, 1.442695
        %v3539 = vpow.pop %v3538
        %v3540 = vmul.f32 %v3429, 1.442695
        %v3541 = vpow.pop %v3540
        %v3542 = vmul.f32 %v3430, 1.442695
        %v3543 = vpow.pop %v3542
        %v3544 = vmul.f32 %v3431, 1.442695
        %v3545 = vpow.pop %v3544
        %v3546 = vmul.f32 %v3432, 1.442695
        %v3547 = vpow.pop %v3546
        %v3548 = vmul.f32 %v3433, 1.442695
        %v3549 = vpow.pop %v3548
        %v3550 = vmul.f32 %v3434, 1.442695
        %v3551 = vpow.pop %v3550
        %v3552 = vmul.f32 %v3435, 1.442695
        %v3553 = vpow.pop %v3552
        %v3554 = vmul.f32 %v3436, 1.442695
        %v3555 = vpow.pop %v3554
        %v3556 = vmul.f32 %v3437, 1.442695
        %v3557 = vpow.pop %v3556
        %v3558 = vmul.f32 %v3438, 1.442695
        %v3559 = vpow.pop %v3558
        %v3560 = vmul.f32 %v3439, 1.442695
        %v3561 = vpow.pop %v3560
        %v3562 = vmul.f32 %v3440, 1.442695
        %v3563 = vpow.pop %v3562
        %v3564 = vmul.f32 %v3441, 1.442695
        %v3565 = vpow.pop %v3564
        %v3566 = vmul.f32 %v3442, 1.442695
        %v3567 = vpow.pop %v3566
        %v3568 = vmul.f32 %v3443, 1.442695
        %v3569 = vpow.pop %v3568
        %v3570 = vmul.f32 %v3444, 1.442695
        %v3571 = vpow.pop %v3570
        %v3572 = vmul.f32 %v3445, 1.442695
        %v3573 = vpow.pop %v3572
        %v3574 = vsel %vm3189, %v3447, 0.0
        %3575 = vadd.xlane.f32.xlu0 %v3574
        %v3576 = vpop.xlane.xlu0 %3575
        %v3577 = vsel %vm3189, %v3449, 0.0
        %3578 = vadd.xlane.f32.xlu0 %v3577
        %v3579 = vpop.xlane.xlu0 %3578
        %v3580 = vsel %vm3189, %v3451, 0.0
        %3581 = vadd.xlane.f32.xlu0 %v3580
        %v3582 = vpop.xlane.xlu0 %3581
        %v3583 = vsel %vm3189, %v3453, 0.0
        %3584 = vadd.xlane.f32.xlu0 %v3583
        %v3585 = vpop.xlane.xlu0 %3584
        %v3586 = vsel %vm3189, %v3455, 0.0
        %3587 = vadd.xlane.f32.xlu0 %v3586
        %v3588 = vpop.xlane.xlu0 %3587
        %v3589 = vsel %vm3189, %v3457, 0.0
        %3590 = vadd.xlane.f32.xlu0 %v3589
        %v3591 = vpop.xlane.xlu0 %3590
        %v3592 = vsel %vm3189, %v3459, 0.0
        %3593 = vadd.xlane.f32.xlu0 %v3592
        %v3594 = vpop.xlane.xlu0 %3593
        %v3595 = vsel %vm3189, %v3461, 0.0
        %3596 = vadd.xlane.f32.xlu0 %v3595
        %v3597 = vpop.xlane.xlu0 %3596
        %v3598 = vsel %vm3189, %v3463, 0.0
        %3599 = vadd.xlane.f32.xlu0 %v3598
        %v3600 = vpop.xlane.xlu0 %3599
        %v3601 = vsel %vm3189, %v3465, 0.0
        %3602 = vadd.xlane.f32.xlu0 %v3601
        %v3603 = vpop.xlane.xlu0 %3602
        %v3604 = vsel %vm3189, %v3467, 0.0
        %3605 = vadd.xlane.f32.xlu0 %v3604
        %v3606 = vpop.xlane.xlu0 %3605
        %v3607 = vsel %vm3189, %v3469, 0.0
        %3608 = vadd.xlane.f32.xlu0 %v3607
        %v3609 = vpop.xlane.xlu0 %3608
        %v3610 = vsel %vm3189, %v3471, 0.0
        %3611 = vadd.xlane.f32.xlu0 %v3610
        %v3612 = vpop.xlane.xlu0 %3611
        %v3613 = vsel %vm3189, %v3473, 0.0
        %3614 = vadd.xlane.f32.xlu0 %v3613
        %v3615 = vpop.xlane.xlu0 %3614
        %v3616 = vsel %vm3189, %v3475, 0.0
        %3617 = vadd.xlane.f32.xlu0 %v3616
        %v3618 = vpop.xlane.xlu0 %3617
        %v3619 = vsel %vm3189, %v3477, 0.0
        %3620 = vadd.xlane.f32.xlu0 %v3619
        %v3621 = vpop.xlane.xlu0 %3620
        %v3622 = vsel %vm3189, %v3479, 0.0
        %3623 = vadd.xlane.f32.xlu0 %v3622
        %v3624 = vpop.xlane.xlu0 %3623
        %v3625 = vsel %vm3189, %v3481, 0.0
        %3626 = vadd.xlane.f32.xlu0 %v3625
        %v3627 = vpop.xlane.xlu0 %3626
        %v3628 = vsel %vm3189, %v3483, 0.0
        %3629 = vadd.xlane.f32.xlu0 %v3628
        %v3630 = vpop.xlane.xlu0 %3629
        %v3631 = vsel %vm3189, %v3485, 0.0
        %3632 = vadd.xlane.f32.xlu0 %v3631
        %v3633 = vpop.xlane.xlu0 %3632
        %v3634 = vsel %vm3189, %v3487, 0.0
        %3635 = vadd.xlane.f32.xlu0 %v3634
        %v3636 = vpop.xlane.xlu0 %3635
        %v3637 = vsel %vm3189, %v3489, 0.0
        %3638 = vadd.xlane.f32.xlu0 %v3637
        %v3639 = vpop.xlane.xlu0 %3638
        %v3640 = vsel %vm3189, %v3491, 0.0
        %3641 = vadd.xlane.f32.xlu0 %v3640
        %v3642 = vpop.xlane.xlu0 %3641
        %v3643 = vsel %vm3189, %v3493, 0.0
        %3644 = vadd.xlane.f32.xlu0 %v3643
        %v3645 = vpop.xlane.xlu0 %3644
        %v3646 = vsel %vm3189, %v3495, 0.0
        %3647 = vadd.xlane.f32.xlu0 %v3646
        %v3648 = vpop.xlane.xlu0 %3647
        %v3649 = vsel %vm3189, %v3497, 0.0
        %3650 = vadd.xlane.f32.xlu0 %v3649
        %v3651 = vpop.xlane.xlu0 %3650
        %v3652 = vsel %vm3189, %v3499, 0.0
        %3653 = vadd.xlane.f32.xlu0 %v3652
        %v3654 = vpop.xlane.xlu0 %3653
        %v3655 = vsel %vm3189, %v3501, 0.0
        %3656 = vadd.xlane.f32.xlu0 %v3655
        %v3657 = vpop.xlane.xlu0 %3656
        %v3658 = vsel %vm3189, %v3503, 0.0
        %3659 = vadd.xlane.f32.xlu0 %v3658
        %v3660 = vpop.xlane.xlu0 %3659
        %v3661 = vsel %vm3189, %v3505, 0.0
        %3662 = vadd.xlane.f32.xlu0 %v3661
        %v3663 = vpop.xlane.xlu0 %3662
        %v3664 = vsel %vm3189, %v3507, 0.0
        %3665 = vadd.xlane.f32.xlu0 %v3664
        %v3666 = vpop.xlane.xlu0 %3665
        %v3667 = vsel %vm3189, %v3509, 0.0
        %3668 = vadd.xlane.f32.xlu0 %v3667
        %v3669 = vpop.xlane.xlu0 %3668
        %v3670 = vsel %vm3189, %v3511, 0.0
        %3671 = vadd.xlane.f32.xlu0 %v3670
        %v3672 = vpop.xlane.xlu0 %3671
        %v3673 = vsel %vm3189, %v3513, 0.0
        %3674 = vadd.xlane.f32.xlu0 %v3673
        %v3675 = vpop.xlane.xlu0 %3674
        %v3676 = vsel %vm3189, %v3515, 0.0
        %3677 = vadd.xlane.f32.xlu0 %v3676
        %v3678 = vpop.xlane.xlu0 %3677
        %v3679 = vsel %vm3189, %v3517, 0.0
        %3680 = vadd.xlane.f32.xlu0 %v3679
        %v3681 = vpop.xlane.xlu0 %3680
        %v3682 = vsel %vm3189, %v3519, 0.0
        %3683 = vadd.xlane.f32.xlu0 %v3682
        %v3684 = vpop.xlane.xlu0 %3683
        %v3685 = vsel %vm3189, %v3521, 0.0
        %3686 = vadd.xlane.f32.xlu0 %v3685
        %v3687 = vpop.xlane.xlu0 %3686
        %v3688 = vsel %vm3189, %v3523, 0.0
        %3689 = vadd.xlane.f32.xlu0 %v3688
        %v3690 = vpop.xlane.xlu0 %3689
        %v3691 = vsel %vm3189, %v3525, 0.0
        %3692 = vadd.xlane.f32.xlu0 %v3691
        %v3693 = vpop.xlane.xlu0 %3692
        %v3694 = vsel %vm3189, %v3527, 0.0
        %3695 = vadd.xlane.f32.xlu0 %v3694
        %v3696 = vpop.xlane.xlu0 %3695
        %v3697 = vsel %vm3189, %v3529, 0.0
        %3698 = vadd.xlane.f32.xlu0 %v3697
        %v3699 = vpop.xlane.xlu0 %3698
        %v3700 = vsel %vm3189, %v3531, 0.0
        %3701 = vadd.xlane.f32.xlu0 %v3700
        %v3702 = vpop.xlane.xlu0 %3701
        %v3703 = vsel %vm3189, %v3533, 0.0
        %3704 = vadd.xlane.f32.xlu0 %v3703
        %v3705 = vpop.xlane.xlu0 %3704
        %v3706 = vsel %vm3189, %v3535, 0.0
        %3707 = vadd.xlane.f32.xlu0 %v3706
        %v3708 = vpop.xlane.xlu0 %3707
        %v3709 = vsel %vm3189, %v3537, 0.0
        %3710 = vadd.xlane.f32.xlu0 %v3709
        %v3711 = vpop.xlane.xlu0 %3710
        %v3712 = vsel %vm3189, %v3539, 0.0
        %3713 = vadd.xlane.f32.xlu0 %v3712
        %v3714 = vpop.xlane.xlu0 %3713
        %v3715 = vsel %vm3189, %v3541, 0.0
        %3716 = vadd.xlane.f32.xlu0 %v3715
        %v3717 = vpop.xlane.xlu0 %3716
        %v3718 = vsel %vm3189, %v3543, 0.0
        %3719 = vadd.xlane.f32.xlu0 %v3718
        %v3720 = vpop.xlane.xlu0 %3719
        %v3721 = vsel %vm3189, %v3545, 0.0
        %3722 = vadd.xlane.f32.xlu0 %v3721
        %v3723 = vpop.xlane.xlu0 %3722
        %v3724 = vsel %vm3189, %v3547, 0.0
        %3725 = vadd.xlane.f32.xlu0 %v3724
        %v3726 = vpop.xlane.xlu0 %3725
        %v3727 = vsel %vm3189, %v3549, 0.0
        %3728 = vadd.xlane.f32.xlu0 %v3727
        %v3729 = vpop.xlane.xlu0 %3728
        %v3730 = vsel %vm3189, %v3551, 0.0
        %3731 = vadd.xlane.f32.xlu0 %v3730
        %v3732 = vpop.xlane.xlu0 %3731
        %v3733 = vsel %vm3189, %v3553, 0.0
        %3734 = vadd.xlane.f32.xlu0 %v3733
        %v3735 = vpop.xlane.xlu0 %3734
        %v3736 = vsel %vm3189, %v3555, 0.0
        %3737 = vadd.xlane.f32.xlu0 %v3736
        %v3738 = vpop.xlane.xlu0 %3737
        %v3739 = vsel %vm3189, %v3557, 0.0
        %3740 = vadd.xlane.f32.xlu0 %v3739
        %v3741 = vpop.xlane.xlu0 %3740
        %v3742 = vsel %vm3189, %v3559, 0.0
        %3743 = vadd.xlane.f32.xlu0 %v3742
        %v3744 = vpop.xlane.xlu0 %3743
        %v3745 = vsel %vm3189, %v3561, 0.0
        %3746 = vadd.xlane.f32.xlu0 %v3745
        %v3747 = vpop.xlane.xlu0 %3746
        %v3748 = vsel %vm3189, %v3563, 0.0
        %3749 = vadd.xlane.f32.xlu0 %v3748
        %v3750 = vpop.xlane.xlu0 %3749
        %v3751 = vsel %vm3189, %v3565, 0.0
        %3752 = vadd.xlane.f32.xlu0 %v3751
        %v3753 = vpop.xlane.xlu0 %3752
        %v3754 = vsel %vm3189, %v3567, 0.0
        %3755 = vadd.xlane.f32.xlu0 %v3754
        %v3756 = vpop.xlane.xlu0 %3755
        %v3757 = vsel %vm3189, %v3569, 0.0
        %3758 = vadd.xlane.f32.xlu0 %v3757
        %v3759 = vpop.xlane.xlu0 %3758
        %v3760 = vsel %vm3189, %v3571, 0.0
        %3761 = vadd.xlane.f32.xlu0 %v3760
        %v3762 = vpop.xlane.xlu0 %3761
        %v3763 = vsel %vm3189, %v3573, 0.0
        %3764 = vadd.xlane.f32.xlu0 %v3763
        %v3765 = vpop.xlane.xlu0 %3764
        %v3766 = vrcp.pop %v3576
        %v3767 = vrcp.pop %v3579
        %v3768 = vrcp.pop %v3582
        %v3769 = vrcp.pop %v3585
        %v3770 = vrcp.pop %v3588
        %v3771 = vrcp.pop %v3591
        %v3772 = vrcp.pop %v3594
        %v3773 = vrcp.pop %v3597
        %v3774 = vrcp.pop %v3600
        %v3775 = vrcp.pop %v3603
        %v3776 = vrcp.pop %v3606
        %v3777 = vrcp.pop %v3609
        %v3778 = vrcp.pop %v3612
        %v3779 = vrcp.pop %v3615
        %v3780 = vrcp.pop %v3618
        %v3781 = vrcp.pop %v3621
        %v3782 = vrcp.pop %v3624
        %v3783 = vrcp.pop %v3627
        %v3784 = vrcp.pop %v3630
        %v3785 = vrcp.pop %v3633
        %v3786 = vrcp.pop %v3636
        %v3787 = vrcp.pop %v3639
        %v3788 = vrcp.pop %v3642
        %v3789 = vrcp.pop %v3645
        %v3790 = vrcp.pop %v3648
        %v3791 = vrcp.pop %v3651
        %v3792 = vrcp.pop %v3654
        %v3793 = vrcp.pop %v3657
        %v3794 = vrcp.pop %v3660
        %v3795 = vrcp.pop %v3663
        %v3796 = vrcp.pop %v3666
        %v3797 = vrcp.pop %v3669
        %v3798 = vrcp.pop %v3672
        %v3799 = vrcp.pop %v3675
        %v3800 = vrcp.pop %v3678
        %v3801 = vrcp.pop %v3681
        %v3802 = vrcp.pop %v3684
        %v3803 = vrcp.pop %v3687
        %v3804 = vrcp.pop %v3690
        %v3805 = vrcp.pop %v3693
        %v3806 = vrcp.pop %v3696
        %v3807 = vrcp.pop %v3699
        %v3808 = vrcp.pop %v3702
        %v3809 = vrcp.pop %v3705
        %v3810 = vrcp.pop %v3708
        %v3811 = vrcp.pop %v3711
        %v3812 = vrcp.pop %v3714
        %v3813 = vrcp.pop %v3717
        %v3814 = vrcp.pop %v3720
        %v3815 = vrcp.pop %v3723
        %v3816 = vrcp.pop %v3726
        %v3817 = vrcp.pop %v3729
        %v3818 = vrcp.pop %v3732
        %v3819 = vrcp.pop %v3735
        %v3820 = vrcp.pop %v3738
        %v3821 = vrcp.pop %v3741
        %v3822 = vrcp.pop %v3744
        %v3823 = vrcp.pop %v3747
        %v3824 = vrcp.pop %v3750
        %v3825 = vrcp.pop %v3753
        %v3826 = vrcp.pop %v3756
        %v3827 = vrcp.pop %v3759
        %v3828 = vrcp.pop %v3762
        %v3829 = vrcp.pop %v3765
        %v3830 = vmul.f32 %v3447, %v3766
        %v3831 = vmul.f32 %v3449, %v3767
        %v3832 = vmul.f32 %v3451, %v3768
        %v3833 = vmul.f32 %v3453, %v3769
        %v3834 = vmul.f32 %v3455, %v3770
        %v3835 = vmul.f32 %v3457, %v3771
        %v3836 = vmul.f32 %v3459, %v3772
        %v3837 = vmul.f32 %v3461, %v3773
        %v3838 = vmul.f32 %v3463, %v3774
        %v3839 = vmul.f32 %v3465, %v3775
        %v3840 = vmul.f32 %v3467, %v3776
        %v3841 = vmul.f32 %v3469, %v3777
        %v3842 = vmul.f32 %v3471, %v3778
        %v3843 = vmul.f32 %v3473, %v3779
        %v3844 = vmul.f32 %v3475, %v3780
        %v3845 = vmul.f32 %v3477, %v3781
        %v3846 = vmul.f32 %v3479, %v3782
        %v3847 = vmul.f32 %v3481, %v3783
        %v3848 = vmul.f32 %v3483, %v3784
        %v3849 = vmul.f32 %v3485, %v3785
        %v3850 = vmul.f32 %v3487, %v3786
        %v3851 = vmul.f32 %v3489, %v3787
        %v3852 = vmul.f32 %v3491, %v3788
        %v3853 = vmul.f32 %v3493, %v3789
        %v3854 = vmul.f32 %v3495, %v3790
        %v3855 = vmul.f32 %v3497, %v3791
        %v3856 = vmul.f32 %v3499, %v3792
        %v3857 = vmul.f32 %v3501, %v3793
        %v3858 = vmul.f32 %v3503, %v3794
        %v3859 = vmul.f32 %v3505, %v3795
        %v3860 = vmul.f32 %v3507, %v3796
        %v3861 = vmul.f32 %v3509, %v3797
        %v3862 = vmul.f32 %v3511, %v3798
        %v3863 = vmul.f32 %v3513, %v3799
        %v3864 = vmul.f32 %v3515, %v3800
        %v3865 = vmul.f32 %v3517, %v3801
        %v3866 = vmul.f32 %v3519, %v3802
        %v3867 = vmul.f32 %v3521, %v3803
        %v3868 = vmul.f32 %v3523, %v3804
        %v3869 = vmul.f32 %v3525, %v3805
        %v3870 = vmul.f32 %v3527, %v3806
        %v3871 = vmul.f32 %v3529, %v3807
        %v3872 = vmul.f32 %v3531, %v3808
        %v3873 = vmul.f32 %v3533, %v3809
        %v3874 = vmul.f32 %v3535, %v3810
        %v3875 = vmul.f32 %v3537, %v3811
        %v3876 = vmul.f32 %v3539, %v3812
        %v3877 = vmul.f32 %v3541, %v3813
        %v3878 = vmul.f32 %v3543, %v3814
        %v3879 = vmul.f32 %v3545, %v3815
        %v3880 = vmul.f32 %v3547, %v3816
        %v3881 = vmul.f32 %v3549, %v3817
        %v3882 = vmul.f32 %v3551, %v3818
        %v3883 = vmul.f32 %v3553, %v3819
        %v3884 = vmul.f32 %v3555, %v3820
        %v3885 = vmul.f32 %v3557, %v3821
        %v3886 = vmul.f32 %v3559, %v3822
        %v3887 = vmul.f32 %v3561, %v3823
        %v3888 = vmul.f32 %v3563, %v3824
        %v3889 = vmul.f32 %v3565, %v3825
        %v3890 = vmul.f32 %v3567, %v3826
        %v3891 = vmul.f32 %v3569, %v3827
        %v3892 = vmul.f32 %v3571, %v3828
        %v3893 = vmul.f32 %v3573, %v3829
        %v3894 = vpack.c.bf16 %v3831, %v3830
        %v3895 = vpack.c.bf16 %v3833, %v3832
        %v3896 = vpack.c.bf16 %v3835, %v3834
        %v3897 = vpack.c.bf16 %v3837, %v3836
        %v3898 = vpack.c.bf16 %v3839, %v3838
        %v3899 = vpack.c.bf16 %v3841, %v3840
        %v3900 = vpack.c.bf16 %v3843, %v3842
        %v3901 = vpack.c.bf16 %v3845, %v3844
        %v3902 = vpack.c.bf16 %v3847, %v3846
        %v3903 = vpack.c.bf16 %v3849, %v3848
        %v3904 = vpack.c.bf16 %v3851, %v3850
        %v3905 = vpack.c.bf16 %v3853, %v3852
        %v3906 = vpack.c.bf16 %v3855, %v3854
        %v3907 = vpack.c.bf16 %v3857, %v3856
        %v3908 = vpack.c.bf16 %v3859, %v3858
        %v3909 = vpack.c.bf16 %v3861, %v3860
        %v3910 = vpack.c.bf16 %v3863, %v3862
        %v3911 = vpack.c.bf16 %v3865, %v3864
        %v3912 = vpack.c.bf16 %v3867, %v3866
        %v3913 = vpack.c.bf16 %v3869, %v3868
        %v3914 = vpack.c.bf16 %v3871, %v3870
        %v3915 = vpack.c.bf16 %v3873, %v3872
        %v3916 = vpack.c.bf16 %v3875, %v3874
        %v3917 = vpack.c.bf16 %v3877, %v3876
        %v3918 = vpack.c.bf16 %v3879, %v3878
        %v3919 = vpack.c.bf16 %v3881, %v3880
        %v3920 = vpack.c.bf16 %v3883, %v3882
        %v3921 = vpack.c.bf16 %v3885, %v3884
        %v3922 = vpack.c.bf16 %v3887, %v3886
        %v3923 = vpack.c.bf16 %v3889, %v3888
        %v3924 = vpack.c.bf16 %v3891, %v3890
        %v3925 = vpack.c.bf16 %v3893, %v3892
        %v3927 = vsel %vm3189, %v3894, 0
        %3929 = vmatprep.subr.bf16.mxu0 0
        %3930 = vmatpush1.bf16.msra.mxu0 0
        %3931 = vmatprep.subr.bf16.mxu0 0
        %3932 = vmatpush1.bf16.msra.mxu0 0
        %3933 = vmatprep.subr.bf16.mxu0 0
        %3934 = vmatpush1.bf16.msra.mxu0 0
        %3935 = vmatprep.subr.bf16.mxu0 0
        %3936 = vmatpush1.bf16.msra.mxu0 0
        %3937 = vmatprep.subr.bf16.mxu0 0
        %3938 = vmatpush1.bf16.msra.mxu0 0
        %3939 = vmatprep.subr.bf16.mxu0 0
        %3940 = vmatpush1.bf16.msra.mxu0 0
        %3941 = vmatprep.subr.bf16.mxu0 0
        %3942 = vmatpush1.bf16.msra.mxu0 0
        %3943 = vmatprep.subr.bf16.mxu0 0
        %3944 = vmatpush1.bf16.msra.mxu0 %v1484
        %3945 = vmatprep.subr.bf16.mxu0 0
        %3946 = vmatpush2.bf16.msra.mxu0 0
        %3947 = vmatprep.subr.bf16.mxu0 0
        %3948 = vmatpush2.bf16.msra.mxu0 0
        %3949 = vmatprep.subr.bf16.mxu0 0
        %3950 = vmatpush2.bf16.msra.mxu0 0
        %3951 = vmatprep.subr.bf16.mxu0 0
        %3952 = vmatpush2.bf16.msra.mxu0 0
        %3953 = vmatprep.subr.bf16.mxu0 0
        %3954 = vmatpush2.bf16.msra.mxu0 0
        %3955 = vmatprep.subr.bf16.mxu0 0
        %3956 = vmatpush2.bf16.msra.mxu0 0
        %3957 = vmatprep.subr.bf16.mxu0 0
        %3958 = vmatpush2.bf16.msra.mxu0 0
        %3959 = vmatprep.subr.bf16.mxu0 0
        %3960 = vmatpush2.bf16.msra.mxu0 0
        %3961 = vmatprep.mubr.bf16.mxu0 0
        %3962 = vmatmul.mubr.bf16.gmra.mxu0 %v3927
        %v3963 = vpop.f32.mrf.mxu0
        %v3964 = vadd.f32 0.0, %v3963
        %v3965 = vpop.f32.mrf.mxu0
        %v3966 = vpop.f32.mrf.mxu0
        %v3967 = vadd.f32 0.0, %v3966
        %v3968 = vpop.f32.mrf.mxu0
        %3969 = vdwg.mxu0
        %v3971 = vsel %vm3189, %v3895, 0
        %3973 = vmatprep.subr.bf16.mxu0 0
        %3974 = vmatpush1.bf16.msra.mxu0 0
        %3975 = vmatprep.subr.bf16.mxu0 0
        %3976 = vmatpush1.bf16.msra.mxu0 0
        %3977 = vmatprep.subr.bf16.mxu0 0
        %3978 = vmatpush1.bf16.msra.mxu0 0
        %3979 = vmatprep.subr.bf16.mxu0 0
        %3980 = vmatpush1.bf16.msra.mxu0 0
        %3981 = vmatprep.subr.bf16.mxu0 0
        %3982 = vmatpush1.bf16.msra.mxu0 0
        %3983 = vmatprep.subr.bf16.mxu0 0
        %3984 = vmatpush1.bf16.msra.mxu0 0
        %3985 = vmatprep.subr.bf16.mxu0 0
        %3986 = vmatpush1.bf16.msra.mxu0 0
        %3987 = vmatprep.subr.bf16.mxu0 0
        %3988 = vmatpush1.bf16.msra.mxu0 %v1485
        %3989 = vmatprep.subr.bf16.mxu0 0
        %3990 = vmatpush2.bf16.msra.mxu0 0
        %3991 = vmatprep.subr.bf16.mxu0 0
        %3992 = vmatpush2.bf16.msra.mxu0 0
        %3993 = vmatprep.subr.bf16.mxu0 0
        %3994 = vmatpush2.bf16.msra.mxu0 0
        %3995 = vmatprep.subr.bf16.mxu0 0
        %3996 = vmatpush2.bf16.msra.mxu0 0
        %3997 = vmatprep.subr.bf16.mxu0 0
        %3998 = vmatpush2.bf16.msra.mxu0 0
        %3999 = vmatprep.subr.bf16.mxu0 0
        %4000 = vmatpush2.bf16.msra.mxu0 0
        %4001 = vmatprep.subr.bf16.mxu0 0
        %4002 = vmatpush2.bf16.msra.mxu0 0
        %4003 = vmatprep.subr.bf16.mxu0 0
        %4004 = vmatpush2.bf16.msra.mxu0 0
        %4005 = vmatprep.mubr.bf16.mxu0 0
        %4006 = vmatmul.mubr.bf16.gmra.mxu0 %v3971
        %v4007 = vpop.f32.mrf.mxu0
        %v4008 = vadd.f32 0.0, %v4007
        %v4009 = vpop.f32.mrf.mxu0
        %v4010 = vpop.f32.mrf.mxu0
        %v4011 = vadd.f32 0.0, %v4010
        %v4012 = vpop.f32.mrf.mxu0
        %4013 = vdwg.mxu0
        %v4015 = vsel %vm3189, %v3896, 0
        %4017 = vmatprep.subr.bf16.mxu0 0
        %4018 = vmatpush1.bf16.msra.mxu0 0
        %4019 = vmatprep.subr.bf16.mxu0 0
        %4020 = vmatpush1.bf16.msra.mxu0 0
        %4021 = vmatprep.subr.bf16.mxu0 0
        %4022 = vmatpush1.bf16.msra.mxu0 0
        %4023 = vmatprep.subr.bf16.mxu0 0
        %4024 = vmatpush1.bf16.msra.mxu0 0
        %4025 = vmatprep.subr.bf16.mxu0 0
        %4026 = vmatpush1.bf16.msra.mxu0 0
        %4027 = vmatprep.subr.bf16.mxu0 0
        %4028 = vmatpush1.bf16.msra.mxu0 0
        %4029 = vmatprep.subr.bf16.mxu0 0
        %4030 = vmatpush1.bf16.msra.mxu0 0
        %4031 = vmatprep.subr.bf16.mxu0 0
        %4032 = vmatpush1.bf16.msra.mxu0 %v1486
        %4033 = vmatprep.subr.bf16.mxu0 0
        %4034 = vmatpush2.bf16.msra.mxu0 0
        %4035 = vmatprep.subr.bf16.mxu0 0
        %4036 = vmatpush2.bf16.msra.mxu0 0
        %4037 = vmatprep.subr.bf16.mxu0 0
        %4038 = vmatpush2.bf16.msra.mxu0 0
        %4039 = vmatprep.subr.bf16.mxu0 0
        %4040 = vmatpush2.bf16.msra.mxu0 0
        %4041 = vmatprep.subr.bf16.mxu0 0
        %4042 = vmatpush2.bf16.msra.mxu0 0
        %4043 = vmatprep.subr.bf16.mxu0 0
        %4044 = vmatpush2.bf16.msra.mxu0 0
        %4045 = vmatprep.subr.bf16.mxu0 0
        %4046 = vmatpush2.bf16.msra.mxu0 0
        %4047 = vmatprep.subr.bf16.mxu0 0
        %4048 = vmatpush2.bf16.msra.mxu0 0
        %4049 = vmatprep.mubr.bf16.mxu0 0
        %4050 = vmatmul.mubr.bf16.gmra.mxu0 %v4015
        %v4051 = vpop.f32.mrf.mxu0
        %v4052 = vadd.f32 0.0, %v4051
        %v4053 = vpop.f32.mrf.mxu0
        %v4054 = vpop.f32.mrf.mxu0
        %v4055 = vadd.f32 0.0, %v4054
        %v4056 = vpop.f32.mrf.mxu0
        %4057 = vdwg.mxu0
        %v4059 = vsel %vm3189, %v3897, 0
        %4061 = vmatprep.subr.bf16.mxu0 0
        %4062 = vmatpush1.bf16.msra.mxu0 0
        %4063 = vmatprep.subr.bf16.mxu0 0
        %4064 = vmatpush1.bf16.msra.mxu0 0
        %4065 = vmatprep.subr.bf16.mxu0 0
        %4066 = vmatpush1.bf16.msra.mxu0 0
        %4067 = vmatprep.subr.bf16.mxu0 0
        %4068 = vmatpush1.bf16.msra.mxu0 0
        %4069 = vmatprep.subr.bf16.mxu0 0
        %4070 = vmatpush1.bf16.msra.mxu0 0
        %4071 = vmatprep.subr.bf16.mxu0 0
        %4072 = vmatpush1.bf16.msra.mxu0 0
        %4073 = vmatprep.subr.bf16.mxu0 0
        %4074 = vmatpush1.bf16.msra.mxu0 0
        %4075 = vmatprep.subr.bf16.mxu0 0
        %4076 = vmatpush1.bf16.msra.mxu0 %v1487
        %4077 = vmatprep.subr.bf16.mxu0 0
        %4078 = vmatpush2.bf16.msra.mxu0 0
        %4079 = vmatprep.subr.bf16.mxu0 0
        %4080 = vmatpush2.bf16.msra.mxu0 0
        %4081 = vmatprep.subr.bf16.mxu0 0
        %4082 = vmatpush2.bf16.msra.mxu0 0
        %4083 = vmatprep.subr.bf16.mxu0 0
        %4084 = vmatpush2.bf16.msra.mxu0 0
        %4085 = vmatprep.subr.bf16.mxu0 0
        %4086 = vmatpush2.bf16.msra.mxu0 0
        %4087 = vmatprep.subr.bf16.mxu0 0
        %4088 = vmatpush2.bf16.msra.mxu0 0
        %4089 = vmatprep.subr.bf16.mxu0 0
        %4090 = vmatpush2.bf16.msra.mxu0 0
        %4091 = vmatprep.subr.bf16.mxu0 0
        %4092 = vmatpush2.bf16.msra.mxu0 0
        %4093 = vmatprep.mubr.bf16.mxu0 0
        %4094 = vmatmul.mubr.bf16.gmra.mxu0 %v4059
        %v4095 = vpop.f32.mrf.mxu0
        %v4096 = vadd.f32 0.0, %v4095
        %v4097 = vpop.f32.mrf.mxu0
        %v4098 = vpop.f32.mrf.mxu0
        %v4099 = vadd.f32 0.0, %v4098
        %v4100 = vpop.f32.mrf.mxu0
        %4101 = vdwg.mxu0
        %v4103 = vsel %vm3189, %v3898, 0
        %4105 = vmatprep.subr.bf16.mxu0 0
        %4106 = vmatpush1.bf16.msra.mxu0 0
        %4107 = vmatprep.subr.bf16.mxu0 0
        %4108 = vmatpush1.bf16.msra.mxu0 0
        %4109 = vmatprep.subr.bf16.mxu0 0
        %4110 = vmatpush1.bf16.msra.mxu0 0
        %4111 = vmatprep.subr.bf16.mxu0 0
        %4112 = vmatpush1.bf16.msra.mxu0 0
        %4113 = vmatprep.subr.bf16.mxu0 0
        %4114 = vmatpush1.bf16.msra.mxu0 0
        %4115 = vmatprep.subr.bf16.mxu0 0
        %4116 = vmatpush1.bf16.msra.mxu0 0
        %4117 = vmatprep.subr.bf16.mxu0 0
        %4118 = vmatpush1.bf16.msra.mxu0 0
        %4119 = vmatprep.subr.bf16.mxu0 0
        %4120 = vmatpush1.bf16.msra.mxu0 %v1488
        %4121 = vmatprep.subr.bf16.mxu0 0
        %4122 = vmatpush2.bf16.msra.mxu0 0
        %4123 = vmatprep.subr.bf16.mxu0 0
        %4124 = vmatpush2.bf16.msra.mxu0 0
        %4125 = vmatprep.subr.bf16.mxu0 0
        %4126 = vmatpush2.bf16.msra.mxu0 0
        %4127 = vmatprep.subr.bf16.mxu0 0
        %4128 = vmatpush2.bf16.msra.mxu0 0
        %4129 = vmatprep.subr.bf16.mxu0 0
        %4130 = vmatpush2.bf16.msra.mxu0 0
        %4131 = vmatprep.subr.bf16.mxu0 0
        %4132 = vmatpush2.bf16.msra.mxu0 0
        %4133 = vmatprep.subr.bf16.mxu0 0
        %4134 = vmatpush2.bf16.msra.mxu0 0
        %4135 = vmatprep.subr.bf16.mxu0 0
        %4136 = vmatpush2.bf16.msra.mxu0 0
        %4137 = vmatprep.mubr.bf16.mxu0 0
        %4138 = vmatmul.mubr.bf16.gmra.mxu0 %v4103
        %v4139 = vpop.f32.mrf.mxu0
        %v4140 = vadd.f32 0.0, %v4139
        %v4141 = vpop.f32.mrf.mxu0
        %v4142 = vpop.f32.mrf.mxu0
        %v4143 = vadd.f32 0.0, %v4142
        %v4144 = vpop.f32.mrf.mxu0
        %4145 = vdwg.mxu0
        %v4147 = vsel %vm3189, %v3899, 0
        %4149 = vmatprep.subr.bf16.mxu0 0
        %4150 = vmatpush1.bf16.msra.mxu0 0
        %4151 = vmatprep.subr.bf16.mxu0 0
        %4152 = vmatpush1.bf16.msra.mxu0 0
        %4153 = vmatprep.subr.bf16.mxu0 0
        %4154 = vmatpush1.bf16.msra.mxu0 0
        %4155 = vmatprep.subr.bf16.mxu0 0
        %4156 = vmatpush1.bf16.msra.mxu0 0
        %4157 = vmatprep.subr.bf16.mxu0 0
        %4158 = vmatpush1.bf16.msra.mxu0 0
        %4159 = vmatprep.subr.bf16.mxu0 0
        %4160 = vmatpush1.bf16.msra.mxu0 0
        %4161 = vmatprep.subr.bf16.mxu0 0
        %4162 = vmatpush1.bf16.msra.mxu0 0
        %4163 = vmatprep.subr.bf16.mxu0 0
        %4164 = vmatpush1.bf16.msra.mxu0 %v1489
        %4165 = vmatprep.subr.bf16.mxu0 0
        %4166 = vmatpush2.bf16.msra.mxu0 0
        %4167 = vmatprep.subr.bf16.mxu0 0
        %4168 = vmatpush2.bf16.msra.mxu0 0
        %4169 = vmatprep.subr.bf16.mxu0 0
        %4170 = vmatpush2.bf16.msra.mxu0 0
        %4171 = vmatprep.subr.bf16.mxu0 0
        %4172 = vmatpush2.bf16.msra.mxu0 0
        %4173 = vmatprep.subr.bf16.mxu0 0
        %4174 = vmatpush2.bf16.msra.mxu0 0
        %4175 = vmatprep.subr.bf16.mxu0 0
        %4176 = vmatpush2.bf16.msra.mxu0 0
        %4177 = vmatprep.subr.bf16.mxu0 0
        %4178 = vmatpush2.bf16.msra.mxu0 0
        %4179 = vmatprep.subr.bf16.mxu0 0
        %4180 = vmatpush2.bf16.msra.mxu0 0
        %4181 = vmatprep.mubr.bf16.mxu0 0
        %4182 = vmatmul.mubr.bf16.gmra.mxu0 %v4147
        %v4183 = vpop.f32.mrf.mxu0
        %v4184 = vadd.f32 0.0, %v4183
        %v4185 = vpop.f32.mrf.mxu0
        %v4186 = vpop.f32.mrf.mxu0
        %v4187 = vadd.f32 0.0, %v4186
        %v4188 = vpop.f32.mrf.mxu0
        %4189 = vdwg.mxu0
        %v4191 = vsel %vm3189, %v3900, 0
        %4193 = vmatprep.subr.bf16.mxu0 0
        %4194 = vmatpush1.bf16.msra.mxu0 0
        %4195 = vmatprep.subr.bf16.mxu0 0
        %4196 = vmatpush1.bf16.msra.mxu0 0
        %4197 = vmatprep.subr.bf16.mxu0 0
        %4198 = vmatpush1.bf16.msra.mxu0 0
        %4199 = vmatprep.subr.bf16.mxu0 0
        %4200 = vmatpush1.bf16.msra.mxu0 0
        %4201 = vmatprep.subr.bf16.mxu0 0
        %4202 = vmatpush1.bf16.msra.mxu0 0
        %4203 = vmatprep.subr.bf16.mxu0 0
        %4204 = vmatpush1.bf16.msra.mxu0 0
        %4205 = vmatprep.subr.bf16.mxu0 0
        %4206 = vmatpush1.bf16.msra.mxu0 0
        %4207 = vmatprep.subr.bf16.mxu0 0
        %4208 = vmatpush1.bf16.msra.mxu0 %v1490
        %4209 = vmatprep.subr.bf16.mxu0 0
        %4210 = vmatpush2.bf16.msra.mxu0 0
        %4211 = vmatprep.subr.bf16.mxu0 0
        %4212 = vmatpush2.bf16.msra.mxu0 0
        %4213 = vmatprep.subr.bf16.mxu0 0
        %4214 = vmatpush2.bf16.msra.mxu0 0
        %4215 = vmatprep.subr.bf16.mxu0 0
        %4216 = vmatpush2.bf16.msra.mxu0 0
        %4217 = vmatprep.subr.bf16.mxu0 0
        %4218 = vmatpush2.bf16.msra.mxu0 0
        %4219 = vmatprep.subr.bf16.mxu0 0
        %4220 = vmatpush2.bf16.msra.mxu0 0
        %4221 = vmatprep.subr.bf16.mxu0 0
        %4222 = vmatpush2.bf16.msra.mxu0 0
        %4223 = vmatprep.subr.bf16.mxu0 0
        %4224 = vmatpush2.bf16.msra.mxu0 0
        %4225 = vmatprep.mubr.bf16.mxu0 0
        %4226 = vmatmul.mubr.bf16.gmra.mxu0 %v4191
        %v4227 = vpop.f32.mrf.mxu0
        %v4228 = vadd.f32 0.0, %v4227
        %v4229 = vpop.f32.mrf.mxu0
        %v4230 = vpop.f32.mrf.mxu0
        %v4231 = vadd.f32 0.0, %v4230
        %v4232 = vpop.f32.mrf.mxu0
        %4233 = vdwg.mxu0
        %v4235 = vsel %vm3189, %v3901, 0
        %4237 = vmatprep.subr.bf16.mxu0 0
        %4238 = vmatpush1.bf16.msra.mxu0 0
        %4239 = vmatprep.subr.bf16.mxu0 0
        %4240 = vmatpush1.bf16.msra.mxu0 0
        %4241 = vmatprep.subr.bf16.mxu0 0
        %4242 = vmatpush1.bf16.msra.mxu0 0
        %4243 = vmatprep.subr.bf16.mxu0 0
        %4244 = vmatpush1.bf16.msra.mxu0 0
        %4245 = vmatprep.subr.bf16.mxu0 0
        %4246 = vmatpush1.bf16.msra.mxu0 0
        %4247 = vmatprep.subr.bf16.mxu0 0
        %4248 = vmatpush1.bf16.msra.mxu0 0
        %4249 = vmatprep.subr.bf16.mxu0 0
        %4250 = vmatpush1.bf16.msra.mxu0 0
        %4251 = vmatprep.subr.bf16.mxu0 0
        %4252 = vmatpush1.bf16.msra.mxu0 %v1491
        %4253 = vmatprep.subr.bf16.mxu0 0
        %4254 = vmatpush2.bf16.msra.mxu0 0
        %4255 = vmatprep.subr.bf16.mxu0 0
        %4256 = vmatpush2.bf16.msra.mxu0 0
        %4257 = vmatprep.subr.bf16.mxu0 0
        %4258 = vmatpush2.bf16.msra.mxu0 0
        %4259 = vmatprep.subr.bf16.mxu0 0
        %4260 = vmatpush2.bf16.msra.mxu0 0
        %4261 = vmatprep.subr.bf16.mxu0 0
        %4262 = vmatpush2.bf16.msra.mxu0 0
        %4263 = vmatprep.subr.bf16.mxu0 0
        %4264 = vmatpush2.bf16.msra.mxu0 0
        %4265 = vmatprep.subr.bf16.mxu0 0
        %4266 = vmatpush2.bf16.msra.mxu0 0
        %4267 = vmatprep.subr.bf16.mxu0 0
        %4268 = vmatpush2.bf16.msra.mxu0 0
        %4269 = vmatprep.mubr.bf16.mxu0 0
        %4270 = vmatmul.mubr.bf16.gmra.mxu0 %v4235
        %v4271 = vpop.f32.mrf.mxu0
        %v4272 = vadd.f32 0.0, %v4271
        %v4273 = vpop.f32.mrf.mxu0
        %v4274 = vpop.f32.mrf.mxu0
        %v4275 = vadd.f32 0.0, %v4274
        %v4276 = vpop.f32.mrf.mxu0
        %4277 = vdwg.mxu0
        %v4279 = vsel %vm3189, %v3902, 0
        %4281 = vmatprep.subr.bf16.mxu0 0
        %4282 = vmatpush1.bf16.msra.mxu0 0
        %4283 = vmatprep.subr.bf16.mxu0 0
        %4284 = vmatpush1.bf16.msra.mxu0 0
        %4285 = vmatprep.subr.bf16.mxu0 0
        %4286 = vmatpush1.bf16.msra.mxu0 0
        %4287 = vmatprep.subr.bf16.mxu0 0
        %4288 = vmatpush1.bf16.msra.mxu0 0
        %4289 = vmatprep.subr.bf16.mxu0 0
        %4290 = vmatpush1.bf16.msra.mxu0 0
        %4291 = vmatprep.subr.bf16.mxu0 0
        %4292 = vmatpush1.bf16.msra.mxu0 0
        %4293 = vmatprep.subr.bf16.mxu0 0
        %4294 = vmatpush1.bf16.msra.mxu0 0
        %4295 = vmatprep.subr.bf16.mxu0 0
        %4296 = vmatpush1.bf16.msra.mxu0 %v1613
        %4297 = vmatprep.subr.bf16.mxu0 0
        %4298 = vmatpush2.bf16.msra.mxu0 0
        %4299 = vmatprep.subr.bf16.mxu0 0
        %4300 = vmatpush2.bf16.msra.mxu0 0
        %4301 = vmatprep.subr.bf16.mxu0 0
        %4302 = vmatpush2.bf16.msra.mxu0 0
        %4303 = vmatprep.subr.bf16.mxu0 0
        %4304 = vmatpush2.bf16.msra.mxu0 0
        %4305 = vmatprep.subr.bf16.mxu0 0
        %4306 = vmatpush2.bf16.msra.mxu0 0
        %4307 = vmatprep.subr.bf16.mxu0 0
        %4308 = vmatpush2.bf16.msra.mxu0 0
        %4309 = vmatprep.subr.bf16.mxu0 0
        %4310 = vmatpush2.bf16.msra.mxu0 0
        %4311 = vmatprep.subr.bf16.mxu0 0
        %4312 = vmatpush2.bf16.msra.mxu0 0
        %4313 = vmatprep.mubr.bf16.mxu0 0
        %4314 = vmatmul.mubr.bf16.gmra.mxu0 %v4279
        %v4315 = vpop.f32.mrf.mxu0
        %v4316 = vadd.f32 0.0, %v4315
        %v4317 = vpop.f32.mrf.mxu0
        %v4318 = vpop.f32.mrf.mxu0
        %v4319 = vadd.f32 0.0, %v4318
        %v4320 = vpop.f32.mrf.mxu0
        %4321 = vdwg.mxu0
        %v4323 = vsel %vm3189, %v3903, 0
        %4325 = vmatprep.subr.bf16.mxu0 0
        %4326 = vmatpush1.bf16.msra.mxu0 0
        %4327 = vmatprep.subr.bf16.mxu0 0
        %4328 = vmatpush1.bf16.msra.mxu0 0
        %4329 = vmatprep.subr.bf16.mxu0 0
        %4330 = vmatpush1.bf16.msra.mxu0 0
        %4331 = vmatprep.subr.bf16.mxu0 0
        %4332 = vmatpush1.bf16.msra.mxu0 0
        %4333 = vmatprep.subr.bf16.mxu0 0
        %4334 = vmatpush1.bf16.msra.mxu0 0
        %4335 = vmatprep.subr.bf16.mxu0 0
        %4336 = vmatpush1.bf16.msra.mxu0 0
        %4337 = vmatprep.subr.bf16.mxu0 0
        %4338 = vmatpush1.bf16.msra.mxu0 0
        %4339 = vmatprep.subr.bf16.mxu0 0
        %4340 = vmatpush1.bf16.msra.mxu0 %v1615
        %4341 = vmatprep.subr.bf16.mxu0 0
        %4342 = vmatpush2.bf16.msra.mxu0 0
        %4343 = vmatprep.subr.bf16.mxu0 0
        %4344 = vmatpush2.bf16.msra.mxu0 0
        %4345 = vmatprep.subr.bf16.mxu0 0
        %4346 = vmatpush2.bf16.msra.mxu0 0
        %4347 = vmatprep.subr.bf16.mxu0 0
        %4348 = vmatpush2.bf16.msra.mxu0 0
        %4349 = vmatprep.subr.bf16.mxu0 0
        %4350 = vmatpush2.bf16.msra.mxu0 0
        %4351 = vmatprep.subr.bf16.mxu0 0
        %4352 = vmatpush2.bf16.msra.mxu0 0
        %4353 = vmatprep.subr.bf16.mxu0 0
        %4354 = vmatpush2.bf16.msra.mxu0 0
        %4355 = vmatprep.subr.bf16.mxu0 0
        %4356 = vmatpush2.bf16.msra.mxu0 0
        %4357 = vmatprep.mubr.bf16.mxu0 0
        %4358 = vmatmul.mubr.bf16.gmra.mxu0 %v4323
        %v4359 = vpop.f32.mrf.mxu0
        %v4360 = vadd.f32 0.0, %v4359
        %v4361 = vpop.f32.mrf.mxu0
        %v4362 = vpop.f32.mrf.mxu0
        %v4363 = vadd.f32 0.0, %v4362
        %v4364 = vpop.f32.mrf.mxu0
        %4365 = vdwg.mxu0
        %v4367 = vsel %vm3189, %v3904, 0
        %4369 = vmatprep.subr.bf16.mxu0 0
        %4370 = vmatpush1.bf16.msra.mxu0 0
        %4371 = vmatprep.subr.bf16.mxu0 0
        %4372 = vmatpush1.bf16.msra.mxu0 0
        %4373 = vmatprep.subr.bf16.mxu0 0
        %4374 = vmatpush1.bf16.msra.mxu0 0
        %4375 = vmatprep.subr.bf16.mxu0 0
        %4376 = vmatpush1.bf16.msra.mxu0 0
        %4377 = vmatprep.subr.bf16.mxu0 0
        %4378 = vmatpush1.bf16.msra.mxu0 0
        %4379 = vmatprep.subr.bf16.mxu0 0
        %4380 = vmatpush1.bf16.msra.mxu0 0
        %4381 = vmatprep.subr.bf16.mxu0 0
        %4382 = vmatpush1.bf16.msra.mxu0 0
        %4383 = vmatprep.subr.bf16.mxu0 0
        %4384 = vmatpush1.bf16.msra.mxu0 %v1617
        %4385 = vmatprep.subr.bf16.mxu0 0
        %4386 = vmatpush2.bf16.msra.mxu0 0
        %4387 = vmatprep.subr.bf16.mxu0 0
        %4388 = vmatpush2.bf16.msra.mxu0 0
        %4389 = vmatprep.subr.bf16.mxu0 0
        %4390 = vmatpush2.bf16.msra.mxu0 0
        %4391 = vmatprep.subr.bf16.mxu0 0
        %4392 = vmatpush2.bf16.msra.mxu0 0
        %4393 = vmatprep.subr.bf16.mxu0 0
        %4394 = vmatpush2.bf16.msra.mxu0 0
        %4395 = vmatprep.subr.bf16.mxu0 0
        %4396 = vmatpush2.bf16.msra.mxu0 0
        %4397 = vmatprep.subr.bf16.mxu0 0
        %4398 = vmatpush2.bf16.msra.mxu0 0
        %4399 = vmatprep.subr.bf16.mxu0 0
        %4400 = vmatpush2.bf16.msra.mxu0 0
        %4401 = vmatprep.mubr.bf16.mxu0 0
        %4402 = vmatmul.mubr.bf16.gmra.mxu0 %v4367
        %v4403 = vpop.f32.mrf.mxu0
        %v4404 = vadd.f32 0.0, %v4403
        %v4405 = vpop.f32.mrf.mxu0
        %v4406 = vpop.f32.mrf.mxu0
        %v4407 = vadd.f32 0.0, %v4406
        %v4408 = vpop.f32.mrf.mxu0
        %4409 = vdwg.mxu0
        %v4411 = vsel %vm3189, %v3905, 0
        %4413 = vmatprep.subr.bf16.mxu0 0
        %4414 = vmatpush1.bf16.msra.mxu0 0
        %4415 = vmatprep.subr.bf16.mxu0 0
        %4416 = vmatpush1.bf16.msra.mxu0 0
        %4417 = vmatprep.subr.bf16.mxu0 0
        %4418 = vmatpush1.bf16.msra.mxu0 0
        %4419 = vmatprep.subr.bf16.mxu0 0
        %4420 = vmatpush1.bf16.msra.mxu0 0
        %4421 = vmatprep.subr.bf16.mxu0 0
        %4422 = vmatpush1.bf16.msra.mxu0 0
        %4423 = vmatprep.subr.bf16.mxu0 0
        %4424 = vmatpush1.bf16.msra.mxu0 0
        %4425 = vmatprep.subr.bf16.mxu0 0
        %4426 = vmatpush1.bf16.msra.mxu0 0
        %4427 = vmatprep.subr.bf16.mxu0 0
        %4428 = vmatpush1.bf16.msra.mxu0 %v1619
        %4429 = vmatprep.subr.bf16.mxu0 0
        %4430 = vmatpush2.bf16.msra.mxu0 0
        %4431 = vmatprep.subr.bf16.mxu0 0
        %4432 = vmatpush2.bf16.msra.mxu0 0
        %4433 = vmatprep.subr.bf16.mxu0 0
        %4434 = vmatpush2.bf16.msra.mxu0 0
        %4435 = vmatprep.subr.bf16.mxu0 0
        %4436 = vmatpush2.bf16.msra.mxu0 0
        %4437 = vmatprep.subr.bf16.mxu0 0
        %4438 = vmatpush2.bf16.msra.mxu0 0
        %4439 = vmatprep.subr.bf16.mxu0 0
        %4440 = vmatpush2.bf16.msra.mxu0 0
        %4441 = vmatprep.subr.bf16.mxu0 0
        %4442 = vmatpush2.bf16.msra.mxu0 0
        %4443 = vmatprep.subr.bf16.mxu0 0
        %4444 = vmatpush2.bf16.msra.mxu0 0
        %4445 = vmatprep.mubr.bf16.mxu0 0
        %4446 = vmatmul.mubr.bf16.gmra.mxu0 %v4411
        %v4447 = vpop.f32.mrf.mxu0
        %v4448 = vadd.f32 0.0, %v4447
        %v4449 = vpop.f32.mrf.mxu0
        %v4450 = vpop.f32.mrf.mxu0
        %v4451 = vadd.f32 0.0, %v4450
        %v4452 = vpop.f32.mrf.mxu0
        %4453 = vdwg.mxu0
        %v4455 = vsel %vm3189, %v3906, 0
        %4457 = vmatprep.subr.bf16.mxu0 0
        %4458 = vmatpush1.bf16.msra.mxu0 0
        %4459 = vmatprep.subr.bf16.mxu0 0
        %4460 = vmatpush1.bf16.msra.mxu0 0
        %4461 = vmatprep.subr.bf16.mxu0 0
        %4462 = vmatpush1.bf16.msra.mxu0 0
        %4463 = vmatprep.subr.bf16.mxu0 0
        %4464 = vmatpush1.bf16.msra.mxu0 0
        %4465 = vmatprep.subr.bf16.mxu0 0
        %4466 = vmatpush1.bf16.msra.mxu0 0
        %4467 = vmatprep.subr.bf16.mxu0 0
        %4468 = vmatpush1.bf16.msra.mxu0 0
        %4469 = vmatprep.subr.bf16.mxu0 0
        %4470 = vmatpush1.bf16.msra.mxu0 0
        %4471 = vmatprep.subr.bf16.mxu0 0
        %4472 = vmatpush1.bf16.msra.mxu0 %v1621
        %4473 = vmatprep.subr.bf16.mxu0 0
        %4474 = vmatpush2.bf16.msra.mxu0 0
        %4475 = vmatprep.subr.bf16.mxu0 0
        %4476 = vmatpush2.bf16.msra.mxu0 0
        %4477 = vmatprep.subr.bf16.mxu0 0
        %4478 = vmatpush2.bf16.msra.mxu0 0
        %4479 = vmatprep.subr.bf16.mxu0 0
        %4480 = vmatpush2.bf16.msra.mxu0 0
        %4481 = vmatprep.subr.bf16.mxu0 0
        %4482 = vmatpush2.bf16.msra.mxu0 0
        %4483 = vmatprep.subr.bf16.mxu0 0
        %4484 = vmatpush2.bf16.msra.mxu0 0
        %4485 = vmatprep.subr.bf16.mxu0 0
        %4486 = vmatpush2.bf16.msra.mxu0 0
        %4487 = vmatprep.subr.bf16.mxu0 0
        %4488 = vmatpush2.bf16.msra.mxu0 0
        %4489 = vmatprep.mubr.bf16.mxu0 0
        %4490 = vmatmul.mubr.bf16.gmra.mxu0 %v4455
        %v4491 = vpop.f32.mrf.mxu0
        %v4492 = vadd.f32 0.0, %v4491
        %v4493 = vpop.f32.mrf.mxu0
        %v4494 = vpop.f32.mrf.mxu0
        %v4495 = vadd.f32 0.0, %v4494
        %v4496 = vpop.f32.mrf.mxu0
        %4497 = vdwg.mxu0
        %v4499 = vsel %vm3189, %v3907, 0
        %4501 = vmatprep.subr.bf16.mxu0 0
        %4502 = vmatpush1.bf16.msra.mxu0 0
        %4503 = vmatprep.subr.bf16.mxu0 0
        %4504 = vmatpush1.bf16.msra.mxu0 0
        %4505 = vmatprep.subr.bf16.mxu0 0
        %4506 = vmatpush1.bf16.msra.mxu0 0
        %4507 = vmatprep.subr.bf16.mxu0 0
        %4508 = vmatpush1.bf16.msra.mxu0 0
        %4509 = vmatprep.subr.bf16.mxu0 0
        %4510 = vmatpush1.bf16.msra.mxu0 0
        %4511 = vmatprep.subr.bf16.mxu0 0
        %4512 = vmatpush1.bf16.msra.mxu0 0
        %4513 = vmatprep.subr.bf16.mxu0 0
        %4514 = vmatpush1.bf16.msra.mxu0 0
        %4515 = vmatprep.subr.bf16.mxu0 0
        %4516 = vmatpush1.bf16.msra.mxu0 %v1623
        %4517 = vmatprep.subr.bf16.mxu0 0
        %4518 = vmatpush2.bf16.msra.mxu0 0
        %4519 = vmatprep.subr.bf16.mxu0 0
        %4520 = vmatpush2.bf16.msra.mxu0 0
        %4521 = vmatprep.subr.bf16.mxu0 0
        %4522 = vmatpush2.bf16.msra.mxu0 0
        %4523 = vmatprep.subr.bf16.mxu0 0
        %4524 = vmatpush2.bf16.msra.mxu0 0
        %4525 = vmatprep.subr.bf16.mxu0 0
        %4526 = vmatpush2.bf16.msra.mxu0 0
        %4527 = vmatprep.subr.bf16.mxu0 0
        %4528 = vmatpush2.bf16.msra.mxu0 0
        %4529 = vmatprep.subr.bf16.mxu0 0
        %4530 = vmatpush2.bf16.msra.mxu0 0
        %4531 = vmatprep.subr.bf16.mxu0 0
        %4532 = vmatpush2.bf16.msra.mxu0 0
        %4533 = vmatprep.mubr.bf16.mxu0 0
        %4534 = vmatmul.mubr.bf16.gmra.mxu0 %v4499
        %v4535 = vpop.f32.mrf.mxu0
        %v4536 = vadd.f32 0.0, %v4535
        %v4537 = vpop.f32.mrf.mxu0
        %v4538 = vpop.f32.mrf.mxu0
        %v4539 = vadd.f32 0.0, %v4538
        %v4540 = vpop.f32.mrf.mxu0
        %4541 = vdwg.mxu0
        %v4543 = vsel %vm3189, %v3908, 0
        %4545 = vmatprep.subr.bf16.mxu0 0
        %4546 = vmatpush1.bf16.msra.mxu0 0
        %4547 = vmatprep.subr.bf16.mxu0 0
        %4548 = vmatpush1.bf16.msra.mxu0 0
        %4549 = vmatprep.subr.bf16.mxu0 0
        %4550 = vmatpush1.bf16.msra.mxu0 0
        %4551 = vmatprep.subr.bf16.mxu0 0
        %4552 = vmatpush1.bf16.msra.mxu0 0
        %4553 = vmatprep.subr.bf16.mxu0 0
        %4554 = vmatpush1.bf16.msra.mxu0 0
        %4555 = vmatprep.subr.bf16.mxu0 0
        %4556 = vmatpush1.bf16.msra.mxu0 0
        %4557 = vmatprep.subr.bf16.mxu0 0
        %4558 = vmatpush1.bf16.msra.mxu0 0
        %4559 = vmatprep.subr.bf16.mxu0 0
        %4560 = vmatpush1.bf16.msra.mxu0 %v1625
        %4561 = vmatprep.subr.bf16.mxu0 0
        %4562 = vmatpush2.bf16.msra.mxu0 0
        %4563 = vmatprep.subr.bf16.mxu0 0
        %4564 = vmatpush2.bf16.msra.mxu0 0
        %4565 = vmatprep.subr.bf16.mxu0 0
        %4566 = vmatpush2.bf16.msra.mxu0 0
        %4567 = vmatprep.subr.bf16.mxu0 0
        %4568 = vmatpush2.bf16.msra.mxu0 0
        %4569 = vmatprep.subr.bf16.mxu0 0
        %4570 = vmatpush2.bf16.msra.mxu0 0
        %4571 = vmatprep.subr.bf16.mxu0 0
        %4572 = vmatpush2.bf16.msra.mxu0 0
        %4573 = vmatprep.subr.bf16.mxu0 0
        %4574 = vmatpush2.bf16.msra.mxu0 0
        %4575 = vmatprep.subr.bf16.mxu0 0
        %4576 = vmatpush2.bf16.msra.mxu0 0
        %4577 = vmatprep.mubr.bf16.mxu0 0
        %4578 = vmatmul.mubr.bf16.gmra.mxu0 %v4543
        %v4579 = vpop.f32.mrf.mxu0
        %v4580 = vadd.f32 0.0, %v4579
        %v4581 = vpop.f32.mrf.mxu0
        %v4582 = vpop.f32.mrf.mxu0
        %v4583 = vadd.f32 0.0, %v4582
        %v4584 = vpop.f32.mrf.mxu0
        %4585 = vdwg.mxu0
        %v4587 = vsel %vm3189, %v3909, 0
        %4589 = vmatprep.subr.bf16.mxu0 0
        %4590 = vmatpush1.bf16.msra.mxu0 0
        %4591 = vmatprep.subr.bf16.mxu0 0
        %4592 = vmatpush1.bf16.msra.mxu0 0
        %4593 = vmatprep.subr.bf16.mxu0 0
        %4594 = vmatpush1.bf16.msra.mxu0 0
        %4595 = vmatprep.subr.bf16.mxu0 0
        %4596 = vmatpush1.bf16.msra.mxu0 0
        %4597 = vmatprep.subr.bf16.mxu0 0
        %4598 = vmatpush1.bf16.msra.mxu0 0
        %4599 = vmatprep.subr.bf16.mxu0 0
        %4600 = vmatpush1.bf16.msra.mxu0 0
        %4601 = vmatprep.subr.bf16.mxu0 0
        %4602 = vmatpush1.bf16.msra.mxu0 0
        %4603 = vmatprep.subr.bf16.mxu0 0
        %4604 = vmatpush1.bf16.msra.mxu0 %v1627
        %4605 = vmatprep.subr.bf16.mxu0 0
        %4606 = vmatpush2.bf16.msra.mxu0 0
        %4607 = vmatprep.subr.bf16.mxu0 0
        %4608 = vmatpush2.bf16.msra.mxu0 0
        %4609 = vmatprep.subr.bf16.mxu0 0
        %4610 = vmatpush2.bf16.msra.mxu0 0
        %4611 = vmatprep.subr.bf16.mxu0 0
        %4612 = vmatpush2.bf16.msra.mxu0 0
        %4613 = vmatprep.subr.bf16.mxu0 0
        %4614 = vmatpush2.bf16.msra.mxu0 0
        %4615 = vmatprep.subr.bf16.mxu0 0
        %4616 = vmatpush2.bf16.msra.mxu0 0
        %4617 = vmatprep.subr.bf16.mxu0 0
        %4618 = vmatpush2.bf16.msra.mxu0 0
        %4619 = vmatprep.subr.bf16.mxu0 0
        %4620 = vmatpush2.bf16.msra.mxu0 0
        %4621 = vmatprep.mubr.bf16.mxu0 0
        %4622 = vmatmul.mubr.bf16.gmra.mxu0 %v4587
        %v4623 = vpop.f32.mrf.mxu0
        %v4624 = vadd.f32 0.0, %v4623
        %v4625 = vpop.f32.mrf.mxu0
        %v4626 = vpop.f32.mrf.mxu0
        %v4627 = vadd.f32 0.0, %v4626
        %v4628 = vpop.f32.mrf.mxu0
        %4629 = vdwg.mxu0
        %v4631 = vsel %vm3189, %v3910, 0
        %4633 = vmatprep.subr.bf16.mxu0 0
        %4634 = vmatpush1.bf16.msra.mxu0 0
        %4635 = vmatprep.subr.bf16.mxu0 0
        %4636 = vmatpush1.bf16.msra.mxu0 0
        %4637 = vmatprep.subr.bf16.mxu0 0
        %4638 = vmatpush1.bf16.msra.mxu0 0
        %4639 = vmatprep.subr.bf16.mxu0 0
        %4640 = vmatpush1.bf16.msra.mxu0 0
        %4641 = vmatprep.subr.bf16.mxu0 0
        %4642 = vmatpush1.bf16.msra.mxu0 0
        %4643 = vmatprep.subr.bf16.mxu0 0
        %4644 = vmatpush1.bf16.msra.mxu0 0
        %4645 = vmatprep.subr.bf16.mxu0 0
        %4646 = vmatpush1.bf16.msra.mxu0 0
        %4647 = vmatprep.subr.bf16.mxu0 0
        %4648 = vmatpush1.bf16.msra.mxu0 %v1637
        %4649 = vmatprep.subr.bf16.mxu0 0
        %4650 = vmatpush2.bf16.msra.mxu0 0
        %4651 = vmatprep.subr.bf16.mxu0 0
        %4652 = vmatpush2.bf16.msra.mxu0 0
        %4653 = vmatprep.subr.bf16.mxu0 0
        %4654 = vmatpush2.bf16.msra.mxu0 0
        %4655 = vmatprep.subr.bf16.mxu0 0
        %4656 = vmatpush2.bf16.msra.mxu0 0
        %4657 = vmatprep.subr.bf16.mxu0 0
        %4658 = vmatpush2.bf16.msra.mxu0 0
        %4659 = vmatprep.subr.bf16.mxu0 0
        %4660 = vmatpush2.bf16.msra.mxu0 0
        %4661 = vmatprep.subr.bf16.mxu0 0
        %4662 = vmatpush2.bf16.msra.mxu0 0
        %4663 = vmatprep.subr.bf16.mxu0 0
        %4664 = vmatpush2.bf16.msra.mxu0 0
        %4665 = vmatprep.mubr.bf16.mxu0 0
        %4666 = vmatmul.mubr.bf16.gmra.mxu0 %v4631
        %v4667 = vpop.f32.mrf.mxu0
        %v4668 = vadd.f32 0.0, %v4667
        %v4669 = vpop.f32.mrf.mxu0
        %v4670 = vpop.f32.mrf.mxu0
        %v4671 = vadd.f32 0.0, %v4670
        %v4672 = vpop.f32.mrf.mxu0
        %4673 = vdwg.mxu0
        %v4675 = vsel %vm3189, %v3911, 0
        %4677 = vmatprep.subr.bf16.mxu0 0
        %4678 = vmatpush1.bf16.msra.mxu0 0
        %4679 = vmatprep.subr.bf16.mxu0 0
        %4680 = vmatpush1.bf16.msra.mxu0 0
        %4681 = vmatprep.subr.bf16.mxu0 0
        %4682 = vmatpush1.bf16.msra.mxu0 0
        %4683 = vmatprep.subr.bf16.mxu0 0
        %4684 = vmatpush1.bf16.msra.mxu0 0
        %4685 = vmatprep.subr.bf16.mxu0 0
        %4686 = vmatpush1.bf16.msra.mxu0 0
        %4687 = vmatprep.subr.bf16.mxu0 0
        %4688 = vmatpush1.bf16.msra.mxu0 0
        %4689 = vmatprep.subr.bf16.mxu0 0
        %4690 = vmatpush1.bf16.msra.mxu0 0
        %4691 = vmatprep.subr.bf16.mxu0 0
        %4692 = vmatpush1.bf16.msra.mxu0 %v1639
        %4693 = vmatprep.subr.bf16.mxu0 0
        %4694 = vmatpush2.bf16.msra.mxu0 0
        %4695 = vmatprep.subr.bf16.mxu0 0
        %4696 = vmatpush2.bf16.msra.mxu0 0
        %4697 = vmatprep.subr.bf16.mxu0 0
        %4698 = vmatpush2.bf16.msra.mxu0 0
        %4699 = vmatprep.subr.bf16.mxu0 0
        %4700 = vmatpush2.bf16.msra.mxu0 0
        %4701 = vmatprep.subr.bf16.mxu0 0
        %4702 = vmatpush2.bf16.msra.mxu0 0
        %4703 = vmatprep.subr.bf16.mxu0 0
        %4704 = vmatpush2.bf16.msra.mxu0 0
        %4705 = vmatprep.subr.bf16.mxu0 0
        %4706 = vmatpush2.bf16.msra.mxu0 0
        %4707 = vmatprep.subr.bf16.mxu0 0
        %4708 = vmatpush2.bf16.msra.mxu0 0
        %4709 = vmatprep.mubr.bf16.mxu0 0
        %4710 = vmatmul.mubr.bf16.gmra.mxu0 %v4675
        %v4711 = vpop.f32.mrf.mxu0
        %v4712 = vadd.f32 0.0, %v4711
        %v4713 = vpop.f32.mrf.mxu0
        %v4714 = vpop.f32.mrf.mxu0
        %v4715 = vadd.f32 0.0, %v4714
        %v4716 = vpop.f32.mrf.mxu0
        %4717 = vdwg.mxu0
        %v4719 = vsel %vm3189, %v3912, 0
        %4721 = vmatprep.subr.bf16.mxu0 0
        %4722 = vmatpush1.bf16.msra.mxu0 0
        %4723 = vmatprep.subr.bf16.mxu0 0
        %4724 = vmatpush1.bf16.msra.mxu0 0
        %4725 = vmatprep.subr.bf16.mxu0 0
        %4726 = vmatpush1.bf16.msra.mxu0 0
        %4727 = vmatprep.subr.bf16.mxu0 0
        %4728 = vmatpush1.bf16.msra.mxu0 0
        %4729 = vmatprep.subr.bf16.mxu0 0
        %4730 = vmatpush1.bf16.msra.mxu0 0
        %4731 = vmatprep.subr.bf16.mxu0 0
        %4732 = vmatpush1.bf16.msra.mxu0 0
        %4733 = vmatprep.subr.bf16.mxu0 0
        %4734 = vmatpush1.bf16.msra.mxu0 0
        %4735 = vmatprep.subr.bf16.mxu0 0
        %4736 = vmatpush1.bf16.msra.mxu0 %v1641
        %4737 = vmatprep.subr.bf16.mxu0 0
        %4738 = vmatpush2.bf16.msra.mxu0 0
        %4739 = vmatprep.subr.bf16.mxu0 0
        %4740 = vmatpush2.bf16.msra.mxu0 0
        %4741 = vmatprep.subr.bf16.mxu0 0
        %4742 = vmatpush2.bf16.msra.mxu0 0
        %4743 = vmatprep.subr.bf16.mxu0 0
        %4744 = vmatpush2.bf16.msra.mxu0 0
        %4745 = vmatprep.subr.bf16.mxu0 0
        %4746 = vmatpush2.bf16.msra.mxu0 0
        %4747 = vmatprep.subr.bf16.mxu0 0
        %4748 = vmatpush2.bf16.msra.mxu0 0
        %4749 = vmatprep.subr.bf16.mxu0 0
        %4750 = vmatpush2.bf16.msra.mxu0 0
        %4751 = vmatprep.subr.bf16.mxu0 0
        %4752 = vmatpush2.bf16.msra.mxu0 0
        %4753 = vmatprep.mubr.bf16.mxu0 0
        %4754 = vmatmul.mubr.bf16.gmra.mxu0 %v4719
        %v4755 = vpop.f32.mrf.mxu0
        %v4756 = vadd.f32 0.0, %v4755
        %v4757 = vpop.f32.mrf.mxu0
        %v4758 = vpop.f32.mrf.mxu0
        %v4759 = vadd.f32 0.0, %v4758
        %v4760 = vpop.f32.mrf.mxu0
        %4761 = vdwg.mxu0
        %v4763 = vsel %vm3189, %v3913, 0
        %4765 = vmatprep.subr.bf16.mxu0 0
        %4766 = vmatpush1.bf16.msra.mxu0 0
        %4767 = vmatprep.subr.bf16.mxu0 0
        %4768 = vmatpush1.bf16.msra.mxu0 0
        %4769 = vmatprep.subr.bf16.mxu0 0
        %4770 = vmatpush1.bf16.msra.mxu0 0
        %4771 = vmatprep.subr.bf16.mxu0 0
        %4772 = vmatpush1.bf16.msra.mxu0 0
        %4773 = vmatprep.subr.bf16.mxu0 0
        %4774 = vmatpush1.bf16.msra.mxu0 0
        %4775 = vmatprep.subr.bf16.mxu0 0
        %4776 = vmatpush1.bf16.msra.mxu0 0
        %4777 = vmatprep.subr.bf16.mxu0 0
        %4778 = vmatpush1.bf16.msra.mxu0 0
        %4779 = vmatprep.subr.bf16.mxu0 0
        %4780 = vmatpush1.bf16.msra.mxu0 %v1643
        %4781 = vmatprep.subr.bf16.mxu0 0
        %4782 = vmatpush2.bf16.msra.mxu0 0
        %4783 = vmatprep.subr.bf16.mxu0 0
        %4784 = vmatpush2.bf16.msra.mxu0 0
        %4785 = vmatprep.subr.bf16.mxu0 0
        %4786 = vmatpush2.bf16.msra.mxu0 0
        %4787 = vmatprep.subr.bf16.mxu0 0
        %4788 = vmatpush2.bf16.msra.mxu0 0
        %4789 = vmatprep.subr.bf16.mxu0 0
        %4790 = vmatpush2.bf16.msra.mxu0 0
        %4791 = vmatprep.subr.bf16.mxu0 0
        %4792 = vmatpush2.bf16.msra.mxu0 0
        %4793 = vmatprep.subr.bf16.mxu0 0
        %4794 = vmatpush2.bf16.msra.mxu0 0
        %4795 = vmatprep.subr.bf16.mxu0 0
        %4796 = vmatpush2.bf16.msra.mxu0 0
        %4797 = vmatprep.mubr.bf16.mxu0 0
        %4798 = vmatmul.mubr.bf16.gmra.mxu0 %v4763
        %v4799 = vpop.f32.mrf.mxu0
        %v4800 = vadd.f32 0.0, %v4799
        %v4801 = vpop.f32.mrf.mxu0
        %v4802 = vpop.f32.mrf.mxu0
        %v4803 = vadd.f32 0.0, %v4802
        %v4804 = vpop.f32.mrf.mxu0
        %4805 = vdwg.mxu0
        %v4807 = vsel %vm3189, %v3914, 0
        %4809 = vmatprep.subr.bf16.mxu0 0
        %4810 = vmatpush1.bf16.msra.mxu0 0
        %4811 = vmatprep.subr.bf16.mxu0 0
        %4812 = vmatpush1.bf16.msra.mxu0 0
        %4813 = vmatprep.subr.bf16.mxu0 0
        %4814 = vmatpush1.bf16.msra.mxu0 0
        %4815 = vmatprep.subr.bf16.mxu0 0
        %4816 = vmatpush1.bf16.msra.mxu0 0
        %4817 = vmatprep.subr.bf16.mxu0 0
        %4818 = vmatpush1.bf16.msra.mxu0 0
        %4819 = vmatprep.subr.bf16.mxu0 0
        %4820 = vmatpush1.bf16.msra.mxu0 0
        %4821 = vmatprep.subr.bf16.mxu0 0
        %4822 = vmatpush1.bf16.msra.mxu0 0
        %4823 = vmatprep.subr.bf16.mxu0 0
        %4824 = vmatpush1.bf16.msra.mxu0 %v1645
        %4825 = vmatprep.subr.bf16.mxu0 0
        %4826 = vmatpush2.bf16.msra.mxu0 0
        %4827 = vmatprep.subr.bf16.mxu0 0
        %4828 = vmatpush2.bf16.msra.mxu0 0
        %4829 = vmatprep.subr.bf16.mxu0 0
        %4830 = vmatpush2.bf16.msra.mxu0 0
        %4831 = vmatprep.subr.bf16.mxu0 0
        %4832 = vmatpush2.bf16.msra.mxu0 0
        %4833 = vmatprep.subr.bf16.mxu0 0
        %4834 = vmatpush2.bf16.msra.mxu0 0
        %4835 = vmatprep.subr.bf16.mxu0 0
        %4836 = vmatpush2.bf16.msra.mxu0 0
        %4837 = vmatprep.subr.bf16.mxu0 0
        %4838 = vmatpush2.bf16.msra.mxu0 0
        %4839 = vmatprep.subr.bf16.mxu0 0
        %4840 = vmatpush2.bf16.msra.mxu0 0
        %4841 = vmatprep.mubr.bf16.mxu0 0
        %4842 = vmatmul.mubr.bf16.gmra.mxu0 %v4807
        %v4843 = vpop.f32.mrf.mxu0
        %v4844 = vadd.f32 0.0, %v4843
        %v4845 = vpop.f32.mrf.mxu0
        %v4846 = vpop.f32.mrf.mxu0
        %v4847 = vadd.f32 0.0, %v4846
        %v4848 = vpop.f32.mrf.mxu0
        %4849 = vdwg.mxu0
        %v4851 = vsel %vm3189, %v3915, 0
        %4853 = vmatprep.subr.bf16.mxu0 0
        %4854 = vmatpush1.bf16.msra.mxu0 0
        %4855 = vmatprep.subr.bf16.mxu0 0
        %4856 = vmatpush1.bf16.msra.mxu0 0
        %4857 = vmatprep.subr.bf16.mxu0 0
        %4858 = vmatpush1.bf16.msra.mxu0 0
        %4859 = vmatprep.subr.bf16.mxu0 0
        %4860 = vmatpush1.bf16.msra.mxu0 0
        %4861 = vmatprep.subr.bf16.mxu0 0
        %4862 = vmatpush1.bf16.msra.mxu0 0
        %4863 = vmatprep.subr.bf16.mxu0 0
        %4864 = vmatpush1.bf16.msra.mxu0 0
        %4865 = vmatprep.subr.bf16.mxu0 0
        %4866 = vmatpush1.bf16.msra.mxu0 0
        %4867 = vmatprep.subr.bf16.mxu0 0
        %4868 = vmatpush1.bf16.msra.mxu0 %v1647
        %4869 = vmatprep.subr.bf16.mxu0 0
        %4870 = vmatpush2.bf16.msra.mxu0 0
        %4871 = vmatprep.subr.bf16.mxu0 0
        %4872 = vmatpush2.bf16.msra.mxu0 0
        %4873 = vmatprep.subr.bf16.mxu0 0
        %4874 = vmatpush2.bf16.msra.mxu0 0
        %4875 = vmatprep.subr.bf16.mxu0 0
        %4876 = vmatpush2.bf16.msra.mxu0 0
        %4877 = vmatprep.subr.bf16.mxu0 0
        %4878 = vmatpush2.bf16.msra.mxu0 0
        %4879 = vmatprep.subr.bf16.mxu0 0
        %4880 = vmatpush2.bf16.msra.mxu0 0
        %4881 = vmatprep.subr.bf16.mxu0 0
        %4882 = vmatpush2.bf16.msra.mxu0 0
        %4883 = vmatprep.subr.bf16.mxu0 0
        %4884 = vmatpush2.bf16.msra.mxu0 0
        %4885 = vmatprep.mubr.bf16.mxu0 0
        %4886 = vmatmul.mubr.bf16.gmra.mxu0 %v4851
        %v4887 = vpop.f32.mrf.mxu0
        %v4888 = vadd.f32 0.0, %v4887
        %v4889 = vpop.f32.mrf.mxu0
        %v4890 = vpop.f32.mrf.mxu0
        %v4891 = vadd.f32 0.0, %v4890
        %v4892 = vpop.f32.mrf.mxu0
        %4893 = vdwg.mxu0
        %v4895 = vsel %vm3189, %v3916, 0
        %4897 = vmatprep.subr.bf16.mxu0 0
        %4898 = vmatpush1.bf16.msra.mxu0 0
        %4899 = vmatprep.subr.bf16.mxu0 0
        %4900 = vmatpush1.bf16.msra.mxu0 0
        %4901 = vmatprep.subr.bf16.mxu0 0
        %4902 = vmatpush1.bf16.msra.mxu0 0
        %4903 = vmatprep.subr.bf16.mxu0 0
        %4904 = vmatpush1.bf16.msra.mxu0 0
        %4905 = vmatprep.subr.bf16.mxu0 0
        %4906 = vmatpush1.bf16.msra.mxu0 0
        %4907 = vmatprep.subr.bf16.mxu0 0
        %4908 = vmatpush1.bf16.msra.mxu0 0
        %4909 = vmatprep.subr.bf16.mxu0 0
        %4910 = vmatpush1.bf16.msra.mxu0 0
        %4911 = vmatprep.subr.bf16.mxu0 0
        %4912 = vmatpush1.bf16.msra.mxu0 %v1649
        %4913 = vmatprep.subr.bf16.mxu0 0
        %4914 = vmatpush2.bf16.msra.mxu0 0
        %4915 = vmatprep.subr.bf16.mxu0 0
        %4916 = vmatpush2.bf16.msra.mxu0 0
        %4917 = vmatprep.subr.bf16.mxu0 0
        %4918 = vmatpush2.bf16.msra.mxu0 0
        %4919 = vmatprep.subr.bf16.mxu0 0
        %4920 = vmatpush2.bf16.msra.mxu0 0
        %4921 = vmatprep.subr.bf16.mxu0 0
        %4922 = vmatpush2.bf16.msra.mxu0 0
        %4923 = vmatprep.subr.bf16.mxu0 0
        %4924 = vmatpush2.bf16.msra.mxu0 0
        %4925 = vmatprep.subr.bf16.mxu0 0
        %4926 = vmatpush2.bf16.msra.mxu0 0
        %4927 = vmatprep.subr.bf16.mxu0 0
        %4928 = vmatpush2.bf16.msra.mxu0 0
        %4929 = vmatprep.mubr.bf16.mxu0 0
        %4930 = vmatmul.mubr.bf16.gmra.mxu0 %v4895
        %v4931 = vpop.f32.mrf.mxu0
        %v4932 = vadd.f32 0.0, %v4931
        %v4933 = vpop.f32.mrf.mxu0
        %v4934 = vpop.f32.mrf.mxu0
        %v4935 = vadd.f32 0.0, %v4934
        %v4936 = vpop.f32.mrf.mxu0
        %4937 = vdwg.mxu0
        %v4939 = vsel %vm3189, %v3917, 0
        %4941 = vmatprep.subr.bf16.mxu0 0
        %4942 = vmatpush1.bf16.msra.mxu0 0
        %4943 = vmatprep.subr.bf16.mxu0 0
        %4944 = vmatpush1.bf16.msra.mxu0 0
        %4945 = vmatprep.subr.bf16.mxu0 0
        %4946 = vmatpush1.bf16.msra.mxu0 0
        %4947 = vmatprep.subr.bf16.mxu0 0
        %4948 = vmatpush1.bf16.msra.mxu0 0
        %4949 = vmatprep.subr.bf16.mxu0 0
        %4950 = vmatpush1.bf16.msra.mxu0 0
        %4951 = vmatprep.subr.bf16.mxu0 0
        %4952 = vmatpush1.bf16.msra.mxu0 0
        %4953 = vmatprep.subr.bf16.mxu0 0
        %4954 = vmatpush1.bf16.msra.mxu0 0
        %4955 = vmatprep.subr.bf16.mxu0 0
        %4956 = vmatpush1.bf16.msra.mxu0 %v1651
        %4957 = vmatprep.subr.bf16.mxu0 0
        %4958 = vmatpush2.bf16.msra.mxu0 0
        %4959 = vmatprep.subr.bf16.mxu0 0
        %4960 = vmatpush2.bf16.msra.mxu0 0
        %4961 = vmatprep.subr.bf16.mxu0 0
        %4962 = vmatpush2.bf16.msra.mxu0 0
        %4963 = vmatprep.subr.bf16.mxu0 0
        %4964 = vmatpush2.bf16.msra.mxu0 0
        %4965 = vmatprep.subr.bf16.mxu0 0
        %4966 = vmatpush2.bf16.msra.mxu0 0
        %4967 = vmatprep.subr.bf16.mxu0 0
        %4968 = vmatpush2.bf16.msra.mxu0 0
        %4969 = vmatprep.subr.bf16.mxu0 0
        %4970 = vmatpush2.bf16.msra.mxu0 0
        %4971 = vmatprep.subr.bf16.mxu0 0
        %4972 = vmatpush2.bf16.msra.mxu0 0
        %4973 = vmatprep.mubr.bf16.mxu0 0
        %4974 = vmatmul.mubr.bf16.gmra.mxu0 %v4939
        %v4975 = vpop.f32.mrf.mxu0
        %v4976 = vadd.f32 0.0, %v4975
        %v4977 = vpop.f32.mrf.mxu0
        %v4978 = vpop.f32.mrf.mxu0
        %v4979 = vadd.f32 0.0, %v4978
        %v4980 = vpop.f32.mrf.mxu0
        %4981 = vdwg.mxu0
        %v4983 = vsel %vm3189, %v3918, 0
        %4985 = vmatprep.subr.bf16.mxu0 0
        %4986 = vmatpush1.bf16.msra.mxu0 0
        %4987 = vmatprep.subr.bf16.mxu0 0
        %4988 = vmatpush1.bf16.msra.mxu0 0
        %4989 = vmatprep.subr.bf16.mxu0 0
        %4990 = vmatpush1.bf16.msra.mxu0 0
        %4991 = vmatprep.subr.bf16.mxu0 0
        %4992 = vmatpush1.bf16.msra.mxu0 0
        %4993 = vmatprep.subr.bf16.mxu0 0
        %4994 = vmatpush1.bf16.msra.mxu0 0
        %4995 = vmatprep.subr.bf16.mxu0 0
        %4996 = vmatpush1.bf16.msra.mxu0 0
        %4997 = vmatprep.subr.bf16.mxu0 0
        %4998 = vmatpush1.bf16.msra.mxu0 0
        %4999 = vmatprep.subr.bf16.mxu0 0
        %5000 = vmatpush1.bf16.msra.mxu0 %v1661
        %5001 = vmatprep.subr.bf16.mxu0 0
        %5002 = vmatpush2.bf16.msra.mxu0 0
        %5003 = vmatprep.subr.bf16.mxu0 0
        %5004 = vmatpush2.bf16.msra.mxu0 0
        %5005 = vmatprep.subr.bf16.mxu0 0
        %5006 = vmatpush2.bf16.msra.mxu0 0
        %5007 = vmatprep.subr.bf16.mxu0 0
        %5008 = vmatpush2.bf16.msra.mxu0 0
        %5009 = vmatprep.subr.bf16.mxu0 0
        %5010 = vmatpush2.bf16.msra.mxu0 0
        %5011 = vmatprep.subr.bf16.mxu0 0
        %5012 = vmatpush2.bf16.msra.mxu0 0
        %5013 = vmatprep.subr.bf16.mxu0 0
        %5014 = vmatpush2.bf16.msra.mxu0 0
        %5015 = vmatprep.subr.bf16.mxu0 0
        %5016 = vmatpush2.bf16.msra.mxu0 0
        %5017 = vmatprep.mubr.bf16.mxu0 0
        %5018 = vmatmul.mubr.bf16.gmra.mxu0 %v4983
        %v5019 = vpop.f32.mrf.mxu0
        %v5020 = vadd.f32 0.0, %v5019
        %v5021 = vpop.f32.mrf.mxu0
        %v5022 = vpop.f32.mrf.mxu0
        %v5023 = vadd.f32 0.0, %v5022
        %v5024 = vpop.f32.mrf.mxu0
        %5025 = vdwg.mxu0
        %v5027 = vsel %vm3189, %v3919, 0
        %5029 = vmatprep.subr.bf16.mxu0 0
        %5030 = vmatpush1.bf16.msra.mxu0 0
        %5031 = vmatprep.subr.bf16.mxu0 0
        %5032 = vmatpush1.bf16.msra.mxu0 0
        %5033 = vmatprep.subr.bf16.mxu0 0
        %5034 = vmatpush1.bf16.msra.mxu0 0
        %5035 = vmatprep.subr.bf16.mxu0 0
        %5036 = vmatpush1.bf16.msra.mxu0 0
        %5037 = vmatprep.subr.bf16.mxu0 0
        %5038 = vmatpush1.bf16.msra.mxu0 0
        %5039 = vmatprep.subr.bf16.mxu0 0
        %5040 = vmatpush1.bf16.msra.mxu0 0
        %5041 = vmatprep.subr.bf16.mxu0 0
        %5042 = vmatpush1.bf16.msra.mxu0 0
        %5043 = vmatprep.subr.bf16.mxu0 0
        %5044 = vmatpush1.bf16.msra.mxu0 %v1663
        %5045 = vmatprep.subr.bf16.mxu0 0
        %5046 = vmatpush2.bf16.msra.mxu0 0
        %5047 = vmatprep.subr.bf16.mxu0 0
        %5048 = vmatpush2.bf16.msra.mxu0 0
        %5049 = vmatprep.subr.bf16.mxu0 0
        %5050 = vmatpush2.bf16.msra.mxu0 0
        %5051 = vmatprep.subr.bf16.mxu0 0
        %5052 = vmatpush2.bf16.msra.mxu0 0
        %5053 = vmatprep.subr.bf16.mxu0 0
        %5054 = vmatpush2.bf16.msra.mxu0 0
        %5055 = vmatprep.subr.bf16.mxu0 0
        %5056 = vmatpush2.bf16.msra.mxu0 0
        %5057 = vmatprep.subr.bf16.mxu0 0
        %5058 = vmatpush2.bf16.msra.mxu0 0
        %5059 = vmatprep.subr.bf16.mxu0 0
        %5060 = vmatpush2.bf16.msra.mxu0 0
        %5061 = vmatprep.mubr.bf16.mxu0 0
        %5062 = vmatmul.mubr.bf16.gmra.mxu0 %v5027
        %v5063 = vpop.f32.mrf.mxu0
        %v5064 = vadd.f32 0.0, %v5063
        %v5065 = vpop.f32.mrf.mxu0
        %v5066 = vpop.f32.mrf.mxu0
        %v5067 = vadd.f32 0.0, %v5066
        %v5068 = vpop.f32.mrf.mxu0
        %5069 = vdwg.mxu0
        %v5071 = vsel %vm3189, %v3920, 0
        %5073 = vmatprep.subr.bf16.mxu0 0
        %5074 = vmatpush1.bf16.msra.mxu0 0
        %5075 = vmatprep.subr.bf16.mxu0 0
        %5076 = vmatpush1.bf16.msra.mxu0 0
        %5077 = vmatprep.subr.bf16.mxu0 0
        %5078 = vmatpush1.bf16.msra.mxu0 0
        %5079 = vmatprep.subr.bf16.mxu0 0
        %5080 = vmatpush1.bf16.msra.mxu0 0
        %5081 = vmatprep.subr.bf16.mxu0 0
        %5082 = vmatpush1.bf16.msra.mxu0 0
        %5083 = vmatprep.subr.bf16.mxu0 0
        %5084 = vmatpush1.bf16.msra.mxu0 0
        %5085 = vmatprep.subr.bf16.mxu0 0
        %5086 = vmatpush1.bf16.msra.mxu0 0
        %5087 = vmatprep.subr.bf16.mxu0 0
        %5088 = vmatpush1.bf16.msra.mxu0 %v1665
        %5089 = vmatprep.subr.bf16.mxu0 0
        %5090 = vmatpush2.bf16.msra.mxu0 0
        %5091 = vmatprep.subr.bf16.mxu0 0
        %5092 = vmatpush2.bf16.msra.mxu0 0
        %5093 = vmatprep.subr.bf16.mxu0 0
        %5094 = vmatpush2.bf16.msra.mxu0 0
        %5095 = vmatprep.subr.bf16.mxu0 0
        %5096 = vmatpush2.bf16.msra.mxu0 0
        %5097 = vmatprep.subr.bf16.mxu0 0
        %5098 = vmatpush2.bf16.msra.mxu0 0
        %5099 = vmatprep.subr.bf16.mxu0 0
        %5100 = vmatpush2.bf16.msra.mxu0 0
        %5101 = vmatprep.subr.bf16.mxu0 0
        %5102 = vmatpush2.bf16.msra.mxu0 0
        %5103 = vmatprep.subr.bf16.mxu0 0
        %5104 = vmatpush2.bf16.msra.mxu0 0
        %5105 = vmatprep.mubr.bf16.mxu0 0
        %5106 = vmatmul.mubr.bf16.gmra.mxu0 %v5071
        %v5107 = vpop.f32.mrf.mxu0
        %v5108 = vadd.f32 0.0, %v5107
        %v5109 = vpop.f32.mrf.mxu0
        %v5110 = vpop.f32.mrf.mxu0
        %v5111 = vadd.f32 0.0, %v5110
        %v5112 = vpop.f32.mrf.mxu0
        %5113 = vdwg.mxu0
        %v5115 = vsel %vm3189, %v3921, 0
        %5117 = vmatprep.subr.bf16.mxu0 0
        %5118 = vmatpush1.bf16.msra.mxu0 0
        %5119 = vmatprep.subr.bf16.mxu0 0
        %5120 = vmatpush1.bf16.msra.mxu0 0
        %5121 = vmatprep.subr.bf16.mxu0 0
        %5122 = vmatpush1.bf16.msra.mxu0 0
        %5123 = vmatprep.subr.bf16.mxu0 0
        %5124 = vmatpush1.bf16.msra.mxu0 0
        %5125 = vmatprep.subr.bf16.mxu0 0
        %5126 = vmatpush1.bf16.msra.mxu0 0
        %5127 = vmatprep.subr.bf16.mxu0 0
        %5128 = vmatpush1.bf16.msra.mxu0 0
        %5129 = vmatprep.subr.bf16.mxu0 0
        %5130 = vmatpush1.bf16.msra.mxu0 0
        %5131 = vmatprep.subr.bf16.mxu0 0
        %5132 = vmatpush1.bf16.msra.mxu0 %v1667
        %5133 = vmatprep.subr.bf16.mxu0 0
        %5134 = vmatpush2.bf16.msra.mxu0 0
        %5135 = vmatprep.subr.bf16.mxu0 0
        %5136 = vmatpush2.bf16.msra.mxu0 0
        %5137 = vmatprep.subr.bf16.mxu0 0
        %5138 = vmatpush2.bf16.msra.mxu0 0
        %5139 = vmatprep.subr.bf16.mxu0 0
        %5140 = vmatpush2.bf16.msra.mxu0 0
        %5141 = vmatprep.subr.bf16.mxu0 0
        %5142 = vmatpush2.bf16.msra.mxu0 0
        %5143 = vmatprep.subr.bf16.mxu0 0
        %5144 = vmatpush2.bf16.msra.mxu0 0
        %5145 = vmatprep.subr.bf16.mxu0 0
        %5146 = vmatpush2.bf16.msra.mxu0 0
        %5147 = vmatprep.subr.bf16.mxu0 0
        %5148 = vmatpush2.bf16.msra.mxu0 0
        %5149 = vmatprep.mubr.bf16.mxu0 0
        %5150 = vmatmul.mubr.bf16.gmra.mxu0 %v5115
        %v5151 = vpop.f32.mrf.mxu0
        %v5152 = vadd.f32 0.0, %v5151
        %v5153 = vpop.f32.mrf.mxu0
        %v5154 = vpop.f32.mrf.mxu0
        %v5155 = vadd.f32 0.0, %v5154
        %v5156 = vpop.f32.mrf.mxu0
        %5157 = vdwg.mxu0
        %v5159 = vsel %vm3189, %v3922, 0
        %5161 = vmatprep.subr.bf16.mxu0 0
        %5162 = vmatpush1.bf16.msra.mxu0 0
        %5163 = vmatprep.subr.bf16.mxu0 0
        %5164 = vmatpush1.bf16.msra.mxu0 0
        %5165 = vmatprep.subr.bf16.mxu0 0
        %5166 = vmatpush1.bf16.msra.mxu0 0
        %5167 = vmatprep.subr.bf16.mxu0 0
        %5168 = vmatpush1.bf16.msra.mxu0 0
        %5169 = vmatprep.subr.bf16.mxu0 0
        %5170 = vmatpush1.bf16.msra.mxu0 0
        %5171 = vmatprep.subr.bf16.mxu0 0
        %5172 = vmatpush1.bf16.msra.mxu0 0
        %5173 = vmatprep.subr.bf16.mxu0 0
        %5174 = vmatpush1.bf16.msra.mxu0 0
        %5175 = vmatprep.subr.bf16.mxu0 0
        %5176 = vmatpush1.bf16.msra.mxu0 %v1669
        %5177 = vmatprep.subr.bf16.mxu0 0
        %5178 = vmatpush2.bf16.msra.mxu0 0
        %5179 = vmatprep.subr.bf16.mxu0 0
        %5180 = vmatpush2.bf16.msra.mxu0 0
        %5181 = vmatprep.subr.bf16.mxu0 0
        %5182 = vmatpush2.bf16.msra.mxu0 0
        %5183 = vmatprep.subr.bf16.mxu0 0
        %5184 = vmatpush2.bf16.msra.mxu0 0
        %5185 = vmatprep.subr.bf16.mxu0 0
        %5186 = vmatpush2.bf16.msra.mxu0 0
        %5187 = vmatprep.subr.bf16.mxu0 0
        %5188 = vmatpush2.bf16.msra.mxu0 0
        %5189 = vmatprep.subr.bf16.mxu0 0
        %5190 = vmatpush2.bf16.msra.mxu0 0
        %5191 = vmatprep.subr.bf16.mxu0 0
        %5192 = vmatpush2.bf16.msra.mxu0 0
        %5193 = vmatprep.mubr.bf16.mxu0 0
        %5194 = vmatmul.mubr.bf16.gmra.mxu0 %v5159
        %v5195 = vpop.f32.mrf.mxu0
        %v5196 = vadd.f32 0.0, %v5195
        %v5197 = vpop.f32.mrf.mxu0
        %v5198 = vpop.f32.mrf.mxu0
        %v5199 = vadd.f32 0.0, %v5198
        %v5200 = vpop.f32.mrf.mxu0
        %5201 = vdwg.mxu0
        %v5203 = vsel %vm3189, %v3923, 0
        %5205 = vmatprep.subr.bf16.mxu0 0
        %5206 = vmatpush1.bf16.msra.mxu0 0
        %5207 = vmatprep.subr.bf16.mxu0 0
        %5208 = vmatpush1.bf16.msra.mxu0 0
        %5209 = vmatprep.subr.bf16.mxu0 0
        %5210 = vmatpush1.bf16.msra.mxu0 0
        %5211 = vmatprep.subr.bf16.mxu0 0
        %5212 = vmatpush1.bf16.msra.mxu0 0
        %5213 = vmatprep.subr.bf16.mxu0 0
        %5214 = vmatpush1.bf16.msra.mxu0 0
        %5215 = vmatprep.subr.bf16.mxu0 0
        %5216 = vmatpush1.bf16.msra.mxu0 0
        %5217 = vmatprep.subr.bf16.mxu0 0
        %5218 = vmatpush1.bf16.msra.mxu0 0
        %5219 = vmatprep.subr.bf16.mxu0 0
        %5220 = vmatpush1.bf16.msra.mxu0 %v1671
        %5221 = vmatprep.subr.bf16.mxu0 0
        %5222 = vmatpush2.bf16.msra.mxu0 0
        %5223 = vmatprep.subr.bf16.mxu0 0
        %5224 = vmatpush2.bf16.msra.mxu0 0
        %5225 = vmatprep.subr.bf16.mxu0 0
        %5226 = vmatpush2.bf16.msra.mxu0 0
        %5227 = vmatprep.subr.bf16.mxu0 0
        %5228 = vmatpush2.bf16.msra.mxu0 0
        %5229 = vmatprep.subr.bf16.mxu0 0
        %5230 = vmatpush2.bf16.msra.mxu0 0
        %5231 = vmatprep.subr.bf16.mxu0 0
        %5232 = vmatpush2.bf16.msra.mxu0 0
        %5233 = vmatprep.subr.bf16.mxu0 0
        %5234 = vmatpush2.bf16.msra.mxu0 0
        %5235 = vmatprep.subr.bf16.mxu0 0
        %5236 = vmatpush2.bf16.msra.mxu0 0
        %5237 = vmatprep.mubr.bf16.mxu0 0
        %5238 = vmatmul.mubr.bf16.gmra.mxu0 %v5203
        %v5239 = vpop.f32.mrf.mxu0
        %v5240 = vadd.f32 0.0, %v5239
        %v5241 = vpop.f32.mrf.mxu0
        %v5242 = vpop.f32.mrf.mxu0
        %v5243 = vadd.f32 0.0, %v5242
        %v5244 = vpop.f32.mrf.mxu0
        %5245 = vdwg.mxu0
        %v5247 = vsel %vm3189, %v3924, 0
        %5249 = vmatprep.subr.bf16.mxu0 0
        %5250 = vmatpush1.bf16.msra.mxu0 0
        %5251 = vmatprep.subr.bf16.mxu0 0
        %5252 = vmatpush1.bf16.msra.mxu0 0
        %5253 = vmatprep.subr.bf16.mxu0 0
        %5254 = vmatpush1.bf16.msra.mxu0 0
        %5255 = vmatprep.subr.bf16.mxu0 0
        %5256 = vmatpush1.bf16.msra.mxu0 0
        %5257 = vmatprep.subr.bf16.mxu0 0
        %5258 = vmatpush1.bf16.msra.mxu0 0
        %5259 = vmatprep.subr.bf16.mxu0 0
        %5260 = vmatpush1.bf16.msra.mxu0 0
        %5261 = vmatprep.subr.bf16.mxu0 0
        %5262 = vmatpush1.bf16.msra.mxu0 0
        %5263 = vmatprep.subr.bf16.mxu0 0
        %5264 = vmatpush1.bf16.msra.mxu0 %v1673
        %5265 = vmatprep.subr.bf16.mxu0 0
        %5266 = vmatpush2.bf16.msra.mxu0 0
        %5267 = vmatprep.subr.bf16.mxu0 0
        %5268 = vmatpush2.bf16.msra.mxu0 0
        %5269 = vmatprep.subr.bf16.mxu0 0
        %5270 = vmatpush2.bf16.msra.mxu0 0
        %5271 = vmatprep.subr.bf16.mxu0 0
        %5272 = vmatpush2.bf16.msra.mxu0 0
        %5273 = vmatprep.subr.bf16.mxu0 0
        %5274 = vmatpush2.bf16.msra.mxu0 0
        %5275 = vmatprep.subr.bf16.mxu0 0
        %5276 = vmatpush2.bf16.msra.mxu0 0
        %5277 = vmatprep.subr.bf16.mxu0 0
        %5278 = vmatpush2.bf16.msra.mxu0 0
        %5279 = vmatprep.subr.bf16.mxu0 0
        %5280 = vmatpush2.bf16.msra.mxu0 0
        %5281 = vmatprep.mubr.bf16.mxu0 0
        %5282 = vmatmul.mubr.bf16.gmra.mxu0 %v5247
        %v5283 = vpop.f32.mrf.mxu0
        %v5284 = vadd.f32 0.0, %v5283
        %v5285 = vpop.f32.mrf.mxu0
        %v5286 = vpop.f32.mrf.mxu0
        %v5287 = vadd.f32 0.0, %v5286
        %v5288 = vpop.f32.mrf.mxu0
        %5289 = vdwg.mxu0
        %v5291 = vsel %vm3189, %v3925, 0
        %5293 = vmatprep.subr.bf16.mxu0 0
        %5294 = vmatpush1.bf16.msra.mxu0 0
        %5295 = vmatprep.subr.bf16.mxu0 0
        %5296 = vmatpush1.bf16.msra.mxu0 0
        %5297 = vmatprep.subr.bf16.mxu0 0
        %5298 = vmatpush1.bf16.msra.mxu0 0
        %5299 = vmatprep.subr.bf16.mxu0 0
        %5300 = vmatpush1.bf16.msra.mxu0 0
        %5301 = vmatprep.subr.bf16.mxu0 0
        %5302 = vmatpush1.bf16.msra.mxu0 0
        %5303 = vmatprep.subr.bf16.mxu0 0
        %5304 = vmatpush1.bf16.msra.mxu0 0
        %5305 = vmatprep.subr.bf16.mxu0 0
        %5306 = vmatpush1.bf16.msra.mxu0 0
        %5307 = vmatprep.subr.bf16.mxu0 0
        %5308 = vmatpush1.bf16.msra.mxu0 %v1675
        %5309 = vmatprep.subr.bf16.mxu0 0
        %5310 = vmatpush2.bf16.msra.mxu0 0
        %5311 = vmatprep.subr.bf16.mxu0 0
        %5312 = vmatpush2.bf16.msra.mxu0 0
        %5313 = vmatprep.subr.bf16.mxu0 0
        %5314 = vmatpush2.bf16.msra.mxu0 0
        %5315 = vmatprep.subr.bf16.mxu0 0
        %5316 = vmatpush2.bf16.msra.mxu0 0
        %5317 = vmatprep.subr.bf16.mxu0 0
        %5318 = vmatpush2.bf16.msra.mxu0 0
        %5319 = vmatprep.subr.bf16.mxu0 0
        %5320 = vmatpush2.bf16.msra.mxu0 0
        %5321 = vmatprep.subr.bf16.mxu0 0
        %5322 = vmatpush2.bf16.msra.mxu0 0
        %5323 = vmatprep.subr.bf16.mxu0 0
        %5324 = vmatpush2.bf16.msra.mxu0 0
        %5325 = vmatprep.mubr.bf16.mxu0 0
        %5326 = vmatmul.mubr.bf16.gmra.mxu0 %v5291
        %v5327 = vpop.f32.mrf.mxu0
        %v5328 = vadd.f32 0.0, %v5327
        %v5329 = vpop.f32.mrf.mxu0
        %v5330 = vpop.f32.mrf.mxu0
        %v5331 = vadd.f32 0.0, %v5330
        %v5332 = vpop.f32.mrf.mxu0
        %5333 = vdwg.mxu0
        %v5334 = vpack.c.bf16 %v3967, %v3964
        %v5335 = vpack.c.bf16 %v4011, %v4008
        %v5336 = vpack.c.bf16 %v4055, %v4052
        %v5337 = vpack.c.bf16 %v4099, %v4096
        %v5338 = vpack.c.bf16 %v4143, %v4140
        %v5339 = vpack.c.bf16 %v4187, %v4184
        %v5340 = vpack.c.bf16 %v4231, %v4228
        %v5341 = vpack.c.bf16 %v4275, %v4272
        %v5342 = vpack.c.bf16 %v4319, %v4316
        %v5343 = vpack.c.bf16 %v4363, %v4360
        %v5344 = vpack.c.bf16 %v4407, %v4404
        %v5345 = vpack.c.bf16 %v4451, %v4448
        %v5346 = vpack.c.bf16 %v4495, %v4492
        %v5347 = vpack.c.bf16 %v4539, %v4536
        %v5348 = vpack.c.bf16 %v4583, %v4580
        %v5349 = vpack.c.bf16 %v4627, %v4624
        %v5350 = vpack.c.bf16 %v4671, %v4668
        %v5351 = vpack.c.bf16 %v4715, %v4712
        %v5352 = vpack.c.bf16 %v4759, %v4756
        %v5353 = vpack.c.bf16 %v4803, %v4800
        %v5354 = vpack.c.bf16 %v4847, %v4844
        %v5355 = vpack.c.bf16 %v4891, %v4888
        %v5356 = vpack.c.bf16 %v4935, %v4932
        %v5357 = vpack.c.bf16 %v4979, %v4976
        %v5358 = vpack.c.bf16 %v5023, %v5020
        %v5359 = vpack.c.bf16 %v5067, %v5064
        %v5360 = vpack.c.bf16 %v5111, %v5108
        %v5361 = vpack.c.bf16 %v5155, %v5152
        %v5362 = vpack.c.bf16 %v5199, %v5196
        %v5363 = vpack.c.bf16 %v5243, %v5240
        %v5364 = vpack.c.bf16 %v5287, %v5284
        %v5365 = vpack.c.bf16 %v5331, %v5328
        %v5374 = vunpack.c.l.b16 %v5334
        %v5375 = vunpack.c.h.b16 %v5334
        %v5376 = vunpack.c.l.b16 %v5335
        %v5377 = vunpack.c.h.b16 %v5335
        %v5378 = vunpack.c.l.b16 %v5336
        %v5379 = vunpack.c.h.b16 %v5336
        %v5380 = vunpack.c.l.b16 %v5337
        %v5381 = vunpack.c.h.b16 %v5337
        %v5382 = vunpack.c.l.b16 %v5338
        %v5383 = vunpack.c.h.b16 %v5338
        %v5384 = vunpack.c.l.b16 %v5339
        %v5385 = vunpack.c.h.b16 %v5339
        %v5386 = vunpack.c.l.b16 %v5340
        %v5387 = vunpack.c.h.b16 %v5340
        %v5388 = vunpack.c.l.b16 %v5341
        %v5389 = vunpack.c.h.b16 %v5341
        %v5390 = vpack.c.b16 %v5374, %v5374
        %v5391 = vpack.c.b16 %v5375, %v5375
        %v5392 = vpack.c.b16 %v5376, %v5376
        %v5393 = vpack.c.b16 %v5377, %v5377
        %v5394 = vpack.c.b16 %v5378, %v5378
        %v5395 = vpack.c.b16 %v5379, %v5379
        %v5396 = vpack.c.b16 %v5380, %v5380
        %v5397 = vpack.c.b16 %v5381, %v5381
        %v5398 = vpack.c.b16 %v5382, %v5382
        %v5399 = vpack.c.b16 %v5383, %v5383
        %v5400 = vpack.c.b16 %v5384, %v5384
        %v5401 = vpack.c.b16 %v5385, %v5385
        %v5402 = vpack.c.b16 %v5386, %v5386
        %v5403 = vpack.c.b16 %v5387, %v5387
        %v5404 = vpack.c.b16 %v5388, %v5388
        %v5405 = vpack.c.b16 %v5389, %v5389
        %vm5422 = vcmask 257024
        %5423 = vst.msk [vmem:[#allocation2] sm:$0xf] %vm5422, %v5390
        %5424 = vst.msk [vmem:[#allocation2 + $0x4] sm:$0xf] %vm5422, %v5391
        %5425 = vst.msk [vmem:[#allocation2 + $0x8] sm:$0xf] %vm5422, %v5392
        %5426 = vst.msk [vmem:[#allocation2 + $0xc] sm:$0xf] %vm5422, %v5393
        %5427 = vst.msk [vmem:[#allocation2 + $0x10] sm:$0xf] %vm5422, %v5394
        %5428 = vst.msk [vmem:[#allocation2 + $0x14] sm:$0xf] %vm5422, %v5395
        %5429 = vst.msk [vmem:[#allocation2 + $0x18] sm:$0xf] %vm5422, %v5396
        %5430 = vst.msk [vmem:[#allocation2 + $0x1c] sm:$0xf] %vm5422, %v5397
        %5431 = vst.msk [vmem:[#allocation2 + $0x20] sm:$0xf] %vm5422, %v5398
        %5432 = vst.msk [vmem:[#allocation2 + $0x24] sm:$0xf] %vm5422, %v5399
        %5433 = vst.msk [vmem:[#allocation2 + $0x28] sm:$0xf] %vm5422, %v5400
        %5434 = vst.msk [vmem:[#allocation2 + $0x2c] sm:$0xf] %vm5422, %v5401
        %5435 = vst.msk [vmem:[#allocation2 + $0x30] sm:$0xf] %vm5422, %v5402
        %5436 = vst.msk [vmem:[#allocation2 + $0x34] sm:$0xf] %vm5422, %v5403
        %5437 = vst.msk [vmem:[#allocation2 + $0x38] sm:$0xf] %vm5422, %v5404
        %5438 = vst.msk [vmem:[#allocation2 + $0x3c] sm:$0xf] %vm5422, %v5405
        %v5447 = vunpack.c.l.b16 %v5342
        %v5448 = vunpack.c.h.b16 %v5342
        %v5449 = vunpack.c.l.b16 %v5343
        %v5450 = vunpack.c.h.b16 %v5343
        %v5451 = vunpack.c.l.b16 %v5344
        %v5452 = vunpack.c.h.b16 %v5344
        %v5453 = vunpack.c.l.b16 %v5345
        %v5454 = vunpack.c.h.b16 %v5345
        %v5455 = vunpack.c.l.b16 %v5346
        %v5456 = vunpack.c.h.b16 %v5346
        %v5457 = vunpack.c.l.b16 %v5347
        %v5458 = vunpack.c.h.b16 %v5347
        %v5459 = vunpack.c.l.b16 %v5348
        %v5460 = vunpack.c.h.b16 %v5348
        %v5461 = vunpack.c.l.b16 %v5349
        %v5462 = vunpack.c.h.b16 %v5349
        %v5463 = vpack.c.b16 %v5447, %v5447
        %v5464 = vpack.c.b16 %v5448, %v5448
        %v5465 = vpack.c.b16 %v5449, %v5449
        %v5466 = vpack.c.b16 %v5450, %v5450
        %v5467 = vpack.c.b16 %v5451, %v5451
        %v5468 = vpack.c.b16 %v5452, %v5452
        %v5469 = vpack.c.b16 %v5453, %v5453
        %v5470 = vpack.c.b16 %v5454, %v5454
        %v5471 = vpack.c.b16 %v5455, %v5455
        %v5472 = vpack.c.b16 %v5456, %v5456
        %v5473 = vpack.c.b16 %v5457, %v5457
        %v5474 = vpack.c.b16 %v5458, %v5458
        %v5475 = vpack.c.b16 %v5459, %v5459
        %v5476 = vpack.c.b16 %v5460, %v5460
        %v5477 = vpack.c.b16 %v5461, %v5461
        %v5478 = vpack.c.b16 %v5462, %v5462
        %5479 = vrot.lane.b32.xlu0 %v5463, 32
        %v5480 = vpop.permute.xlu0 %5479
        %5481 = vrot.lane.b32.xlu0 %v5464, 32
        %v5482 = vpop.permute.xlu0 %5481
        %5483 = vrot.lane.b32.xlu0 %v5465, 32
        %v5484 = vpop.permute.xlu0 %5483
        %5485 = vrot.lane.b32.xlu0 %v5466, 32
        %v5486 = vpop.permute.xlu0 %5485
        %5487 = vrot.lane.b32.xlu0 %v5467, 32
        %v5488 = vpop.permute.xlu0 %5487
        %5489 = vrot.lane.b32.xlu0 %v5468, 32
        %v5490 = vpop.permute.xlu0 %5489
        %5491 = vrot.lane.b32.xlu0 %v5469, 32
        %v5492 = vpop.permute.xlu0 %5491
        %5493 = vrot.lane.b32.xlu0 %v5470, 32
        %v5494 = vpop.permute.xlu0 %5493
        %5495 = vrot.lane.b32.xlu0 %v5471, 32
        %v5496 = vpop.permute.xlu0 %5495
        %5497 = vrot.lane.b32.xlu0 %v5472, 32
        %v5498 = vpop.permute.xlu0 %5497
        %5499 = vrot.lane.b32.xlu0 %v5473, 32
        %v5500 = vpop.permute.xlu0 %5499
        %5501 = vrot.lane.b32.xlu0 %v5474, 32
        %v5502 = vpop.permute.xlu0 %5501
        %5503 = vrot.lane.b32.xlu0 %v5475, 32
        %v5504 = vpop.permute.xlu0 %5503
        %5505 = vrot.lane.b32.xlu0 %v5476, 32
        %v5506 = vpop.permute.xlu0 %5505
        %5507 = vrot.lane.b32.xlu0 %v5477, 32
        %v5508 = vpop.permute.xlu0 %5507
        %5509 = vrot.lane.b32.xlu0 %v5478, 32
        %v5510 = vpop.permute.xlu0 %5509
        %vm5527 = vcmask 519424
        %5528 = vst.msk [vmem:[#allocation2] sm:$0xf] %vm5527, %v5480
        %5529 = vst.msk [vmem:[#allocation2 + $0x4] sm:$0xf] %vm5527, %v5482
        %5530 = vst.msk [vmem:[#allocation2 + $0x8] sm:$0xf] %vm5527, %v5484
        %5531 = vst.msk [vmem:[#allocation2 + $0xc] sm:$0xf] %vm5527, %v5486
        %5532 = vst.msk [vmem:[#allocation2 + $0x10] sm:$0xf] %vm5527, %v5488
        %5533 = vst.msk [vmem:[#allocation2 + $0x14] sm:$0xf] %vm5527, %v5490
        %5534 = vst.msk [vmem:[#allocation2 + $0x18] sm:$0xf] %vm5527, %v5492
        %5535 = vst.msk [vmem:[#allocation2 + $0x1c] sm:$0xf] %vm5527, %v5494
        %5536 = vst.msk [vmem:[#allocation2 + $0x20] sm:$0xf] %vm5527, %v5496
        %5537 = vst.msk [vmem:[#allocation2 + $0x24] sm:$0xf] %vm5527, %v5498
        %5538 = vst.msk [vmem:[#allocation2 + $0x28] sm:$0xf] %vm5527, %v5500
        %5539 = vst.msk [vmem:[#allocation2 + $0x2c] sm:$0xf] %vm5527, %v5502
        %5540 = vst.msk [vmem:[#allocation2 + $0x30] sm:$0xf] %vm5527, %v5504
        %5541 = vst.msk [vmem:[#allocation2 + $0x34] sm:$0xf] %vm5527, %v5506
        %5542 = vst.msk [vmem:[#allocation2 + $0x38] sm:$0xf] %vm5527, %v5508
        %5543 = vst.msk [vmem:[#allocation2 + $0x3c] sm:$0xf] %vm5527, %v5510
        %v5552 = vunpack.c.l.b16 %v5350
        %v5553 = vunpack.c.h.b16 %v5350
        %v5554 = vunpack.c.l.b16 %v5351
        %v5555 = vunpack.c.h.b16 %v5351
        %v5556 = vunpack.c.l.b16 %v5352
        %v5557 = vunpack.c.h.b16 %v5352
        %v5558 = vunpack.c.l.b16 %v5353
        %v5559 = vunpack.c.h.b16 %v5353
        %v5560 = vunpack.c.l.b16 %v5354
        %v5561 = vunpack.c.h.b16 %v5354
        %v5562 = vunpack.c.l.b16 %v5355
        %v5563 = vunpack.c.h.b16 %v5355
        %v5564 = vunpack.c.l.b16 %v5356
        %v5565 = vunpack.c.h.b16 %v5356
        %v5566 = vunpack.c.l.b16 %v5357
        %v5567 = vunpack.c.h.b16 %v5357
        %v5568 = vpack.c.b16 %v5552, %v5552
        %v5569 = vpack.c.b16 %v5553, %v5553
        %v5570 = vpack.c.b16 %v5554, %v5554
        %v5571 = vpack.c.b16 %v5555, %v5555
        %v5572 = vpack.c.b16 %v5556, %v5556
        %v5573 = vpack.c.b16 %v5557, %v5557
        %v5574 = vpack.c.b16 %v5558, %v5558
        %v5575 = vpack.c.b16 %v5559, %v5559
        %v5576 = vpack.c.b16 %v5560, %v5560
        %v5577 = vpack.c.b16 %v5561, %v5561
        %v5578 = vpack.c.b16 %v5562, %v5562
        %v5579 = vpack.c.b16 %v5563, %v5563
        %v5580 = vpack.c.b16 %v5564, %v5564
        %v5581 = vpack.c.b16 %v5565, %v5565
        %v5582 = vpack.c.b16 %v5566, %v5566
        %v5583 = vpack.c.b16 %v5567, %v5567
        %5584 = vrot.lane.b32.xlu0 %v5568, 64
        %v5585 = vpop.permute.xlu0 %5584
        %5586 = vrot.lane.b32.xlu0 %v5569, 64
        %v5587 = vpop.permute.xlu0 %5586
        %5588 = vrot.lane.b32.xlu0 %v5570, 64
        %v5589 = vpop.permute.xlu0 %5588
        %5590 = vrot.lane.b32.xlu0 %v5571, 64
        %v5591 = vpop.permute.xlu0 %5590
        %5592 = vrot.lane.b32.xlu0 %v5572, 64
        %v5593 = vpop.permute.xlu0 %5592
        %5594 = vrot.lane.b32.xlu0 %v5573, 64
        %v5595 = vpop.permute.xlu0 %5594
        %5596 = vrot.lane.b32.xlu0 %v5574, 64
        %v5597 = vpop.permute.xlu0 %5596
        %5598 = vrot.lane.b32.xlu0 %v5575, 64
        %v5599 = vpop.permute.xlu0 %5598
        %5600 = vrot.lane.b32.xlu0 %v5576, 64
        %v5601 = vpop.permute.xlu0 %5600
        %5602 = vrot.lane.b32.xlu0 %v5577, 64
        %v5603 = vpop.permute.xlu0 %5602
        %5604 = vrot.lane.b32.xlu0 %v5578, 64
        %v5605 = vpop.permute.xlu0 %5604
        %5606 = vrot.lane.b32.xlu0 %v5579, 64
        %v5607 = vpop.permute.xlu0 %5606
        %5608 = vrot.lane.b32.xlu0 %v5580, 64
        %v5609 = vpop.permute.xlu0 %5608
        %5610 = vrot.lane.b32.xlu0 %v5581, 64
        %v5611 = vpop.permute.xlu0 %5610
        %5612 = vrot.lane.b32.xlu0 %v5582, 64
        %v5613 = vpop.permute.xlu0 %5612
        %5614 = vrot.lane.b32.xlu0 %v5583, 64
        %v5615 = vpop.permute.xlu0 %5614
        %vm5632 = vcmask 781824
        %5633 = vst.msk [vmem:[#allocation2] sm:$0xf] %vm5632, %v5585
        %5634 = vst.msk [vmem:[#allocation2 + $0x4] sm:$0xf] %vm5632, %v5587
        %5635 = vst.msk [vmem:[#allocation2 + $0x8] sm:$0xf] %vm5632, %v5589
        %5636 = vst.msk [vmem:[#allocation2 + $0xc] sm:$0xf] %vm5632, %v5591
        %5637 = vst.msk [vmem:[#allocation2 + $0x10] sm:$0xf] %vm5632, %v5593
        %5638 = vst.msk [vmem:[#allocation2 + $0x14] sm:$0xf] %vm5632, %v5595
        %5639 = vst.msk [vmem:[#allocation2 + $0x18] sm:$0xf] %vm5632, %v5597
        %5640 = vst.msk [vmem:[#allocation2 + $0x1c] sm:$0xf] %vm5632, %v5599
        %5641 = vst.msk [vmem:[#allocation2 + $0x20] sm:$0xf] %vm5632, %v5601
        %5642 = vst.msk [vmem:[#allocation2 + $0x24] sm:$0xf] %vm5632, %v5603
        %5643 = vst.msk [vmem:[#allocation2 + $0x28] sm:$0xf] %vm5632, %v5605
        %5644 = vst.msk [vmem:[#allocation2 + $0x2c] sm:$0xf] %vm5632, %v5607
        %5645 = vst.msk [vmem:[#allocation2 + $0x30] sm:$0xf] %vm5632, %v5609
        %5646 = vst.msk [vmem:[#allocation2 + $0x34] sm:$0xf] %vm5632, %v5611
        %5647 = vst.msk [vmem:[#allocation2 + $0x38] sm:$0xf] %vm5632, %v5613
        %5648 = vst.msk [vmem:[#allocation2 + $0x3c] sm:$0xf] %vm5632, %v5615
        %v5657 = vunpack.c.l.b16 %v5358
        %v5658 = vunpack.c.h.b16 %v5358
        %v5659 = vunpack.c.l.b16 %v5359
        %v5660 = vunpack.c.h.b16 %v5359
        %v5661 = vunpack.c.l.b16 %v5360
        %v5662 = vunpack.c.h.b16 %v5360
        %v5663 = vunpack.c.l.b16 %v5361
        %v5664 = vunpack.c.h.b16 %v5361
        %v5665 = vunpack.c.l.b16 %v5362
        %v5666 = vunpack.c.h.b16 %v5362
        %v5667 = vunpack.c.l.b16 %v5363
        %v5668 = vunpack.c.h.b16 %v5363
        %v5669 = vunpack.c.l.b16 %v5364
        %v5670 = vunpack.c.h.b16 %v5364
        %v5671 = vunpack.c.l.b16 %v5365
        %v5672 = vunpack.c.h.b16 %v5365
        %v5673 = vpack.c.b16 %v5657, %v5657
        %v5674 = vpack.c.b16 %v5658, %v5658
        %v5675 = vpack.c.b16 %v5659, %v5659
        %v5676 = vpack.c.b16 %v5660, %v5660
        %v5677 = vpack.c.b16 %v5661, %v5661
        %v5678 = vpack.c.b16 %v5662, %v5662
        %v5679 = vpack.c.b16 %v5663, %v5663
        %v5680 = vpack.c.b16 %v5664, %v5664
        %v5681 = vpack.c.b16 %v5665, %v5665
        %v5682 = vpack.c.b16 %v5666, %v5666
        %v5683 = vpack.c.b16 %v5667, %v5667
        %v5684 = vpack.c.b16 %v5668, %v5668
        %v5685 = vpack.c.b16 %v5669, %v5669
        %v5686 = vpack.c.b16 %v5670, %v5670
        %v5687 = vpack.c.b16 %v5671, %v5671
        %v5688 = vpack.c.b16 %v5672, %v5672
        %5689 = vrot.lane.b32.xlu0 %v5673, 96
        %v5690 = vpop.permute.xlu0 %5689
        %5691 = vrot.lane.b32.xlu0 %v5674, 96
        %v5692 = vpop.permute.xlu0 %5691
        %5693 = vrot.lane.b32.xlu0 %v5675, 96
        %v5694 = vpop.permute.xlu0 %5693
        %5695 = vrot.lane.b32.xlu0 %v5676, 96
        %v5696 = vpop.permute.xlu0 %5695
        %5697 = vrot.lane.b32.xlu0 %v5677, 96
        %v5698 = vpop.permute.xlu0 %5697
        %5699 = vrot.lane.b32.xlu0 %v5678, 96
        %v5700 = vpop.permute.xlu0 %5699
        %5701 = vrot.lane.b32.xlu0 %v5679, 96
        %v5702 = vpop.permute.xlu0 %5701
        %5703 = vrot.lane.b32.xlu0 %v5680, 96
        %v5704 = vpop.permute.xlu0 %5703
        %5705 = vrot.lane.b32.xlu0 %v5681, 96
        %v5706 = vpop.permute.xlu0 %5705
        %5707 = vrot.lane.b32.xlu0 %v5682, 96
        %v5708 = vpop.permute.xlu0 %5707
        %5709 = vrot.lane.b32.xlu0 %v5683, 96
        %v5710 = vpop.permute.xlu0 %5709
        %5711 = vrot.lane.b32.xlu0 %v5684, 96
        %v5712 = vpop.permute.xlu0 %5711
        %5713 = vrot.lane.b32.xlu0 %v5685, 96
        %v5714 = vpop.permute.xlu0 %5713
        %5715 = vrot.lane.b32.xlu0 %v5686, 96
        %v5716 = vpop.permute.xlu0 %5715
        %5717 = vrot.lane.b32.xlu0 %v5687, 96
        %v5718 = vpop.permute.xlu0 %5717
        %5719 = vrot.lane.b32.xlu0 %v5688, 96
        %v5720 = vpop.permute.xlu0 %5719
        %vm5737 = vcmask 1044224
        %5738 = vst.msk [vmem:[#allocation2] sm:$0xf] %vm5737, %v5690
        %5739 = vst.msk [vmem:[#allocation2 + $0x4] sm:$0xf] %vm5737, %v5692
        %5740 = vst.msk [vmem:[#allocation2 + $0x8] sm:$0xf] %vm5737, %v5694
        %5741 = vst.msk [vmem:[#allocation2 + $0xc] sm:$0xf] %vm5737, %v5696
        %5742 = vst.msk [vmem:[#allocation2 + $0x10] sm:$0xf] %vm5737, %v5698
        %5743 = vst.msk [vmem:[#allocation2 + $0x14] sm:$0xf] %vm5737, %v5700
        %5744 = vst.msk [vmem:[#allocation2 + $0x18] sm:$0xf] %vm5737, %v5702
        %5745 = vst.msk [vmem:[#allocation2 + $0x1c] sm:$0xf] %vm5737, %v5704
        %5746 = vst.msk [vmem:[#allocation2 + $0x20] sm:$0xf] %vm5737, %v5706
        %5747 = vst.msk [vmem:[#allocation2 + $0x24] sm:$0xf] %vm5737, %v5708
        %5748 = vst.msk [vmem:[#allocation2 + $0x28] sm:$0xf] %vm5737, %v5710
        %5749 = vst.msk [vmem:[#allocation2 + $0x2c] sm:$0xf] %vm5737, %v5712
        %5750 = vst.msk [vmem:[#allocation2 + $0x30] sm:$0xf] %vm5737, %v5714
        %5751 = vst.msk [vmem:[#allocation2 + $0x34] sm:$0xf] %vm5737, %v5716
        %5752 = vst.msk [vmem:[#allocation2 + $0x38] sm:$0xf] %vm5737, %v5718
        %5753 = vst.msk [vmem:[#allocation2 + $0x3c] sm:$0xf] %vm5737, %v5720
        %v5754 = vld [vmem:[#allocation2] sm:$0xf]
        %v5755 = vld [vmem:[#allocation2 + $0x4] sm:$0xf]
        %v5756 = vld [vmem:[#allocation2 + $0x8] sm:$0xf]
        %v5757 = vld [vmem:[#allocation2 + $0xc] sm:$0xf]
        %v5758 = vld [vmem:[#allocation2 + $0x10] sm:$0xf]
        %v5759 = vld [vmem:[#allocation2 + $0x14] sm:$0xf]
        %v5760 = vld [vmem:[#allocation2 + $0x18] sm:$0xf]
        %v5761 = vld [vmem:[#allocation2 + $0x1c] sm:$0xf]
        %v5762 = vld [vmem:[#allocation2 + $0x20] sm:$0xf]
        %v5763 = vld [vmem:[#allocation2 + $0x24] sm:$0xf]
        %v5764 = vld [vmem:[#allocation2 + $0x28] sm:$0xf]
        %v5765 = vld [vmem:[#allocation2 + $0x2c] sm:$0xf]
        %v5766 = vld [vmem:[#allocation2 + $0x30] sm:$0xf]
        %v5767 = vld [vmem:[#allocation2 + $0x34] sm:$0xf]
        %v5768 = vld [vmem:[#allocation2 + $0x38] sm:$0xf]
        %v5769 = vld [vmem:[#allocation2 + $0x3c] sm:$0xf]
        %v5770 = vld [vmem:[#allocation11] sm:$0xf]
        %v5771 = vld [vmem:[#allocation11 + $0x4] sm:$0xf]
        %v5772 = vld [vmem:[#allocation11 + $0x8] sm:$0xf]
        %v5773 = vld [vmem:[#allocation11 + $0xc] sm:$0xf]
        %v5774 = vld [vmem:[#allocation11 + $0x10] sm:$0xf]
        %v5775 = vld [vmem:[#allocation11 + $0x14] sm:$0xf]
        %v5776 = vld [vmem:[#allocation11 + $0x18] sm:$0xf]
        %v5777 = vld [vmem:[#allocation11 + $0x1c] sm:$0xf]
        %v5778 = vld [vmem:[#allocation11 + $0x20] sm:$0xf]
        %v5779 = vld [vmem:[#allocation11 + $0x24] sm:$0xf]
        %v5780 = vld [vmem:[#allocation11 + $0x28] sm:$0xf]
        %v5781 = vld [vmem:[#allocation11 + $0x2c] sm:$0xf]
        %v5782 = vld [vmem:[#allocation11 + $0x30] sm:$0xf]
        %v5783 = vld [vmem:[#allocation11 + $0x34] sm:$0xf]
        %v5784 = vld [vmem:[#allocation11 + $0x38] sm:$0xf]
        %v5785 = vld [vmem:[#allocation11 + $0x3c] sm:$0xf]
        %v5786 = vld [vmem:[%s7] sm:$0x1]
        %v5788 = vlaneseq
        %v5789 = vshrl.u32 %v5788, 7
        %v5790 = vsub.s32 0, %v5789
        %v5791 = vrot.slane %v5786, %v5790
        %v5809 = vunpack.c.l.b16 %v5754
        %v5810 = vunpack.c.l.b16 %v5755
        %v5811 = vunpack.c.l.b16 %v5756
        %v5812 = vunpack.c.l.b16 %v5757
        %v5813 = vunpack.c.l.b16 %v5758
        %v5814 = vunpack.c.l.b16 %v5759
        %v5815 = vunpack.c.l.b16 %v5760
        %v5816 = vunpack.c.l.b16 %v5761
        %v5817 = vunpack.c.l.b16 %v5762
        %v5818 = vunpack.c.l.b16 %v5763
        %v5819 = vunpack.c.l.b16 %v5764
        %v5820 = vunpack.c.l.b16 %v5765
        %v5821 = vunpack.c.l.b16 %v5766
        %v5822 = vunpack.c.l.b16 %v5767
        %v5823 = vunpack.c.l.b16 %v5768
        %v5824 = vunpack.c.l.b16 %v5769
        %v5825 = vpack.c.b16 %v5810, %v5809
        %v5826 = vpack.c.b16 %v5812, %v5811
        %v5827 = vpack.c.b16 %v5814, %v5813
        %v5828 = vpack.c.b16 %v5816, %v5815
        %v5829 = vpack.c.b16 %v5818, %v5817
        %v5830 = vpack.c.b16 %v5820, %v5819
        %v5831 = vpack.c.b16 %v5822, %v5821
        %v5832 = vpack.c.b16 %v5824, %v5823
        %v5857 = vunpack.c.l.b16 %v5770
        %v5858 = vunpack.c.l.b16 %v5771
        %v5859 = vunpack.c.l.b16 %v5772
        %v5860 = vunpack.c.l.b16 %v5773
        %v5861 = vunpack.c.l.b16 %v5774
        %v5862 = vunpack.c.l.b16 %v5775
        %v5863 = vunpack.c.l.b16 %v5776
        %v5864 = vunpack.c.l.b16 %v5777
        %v5865 = vunpack.c.l.b16 %v5778
        %v5866 = vunpack.c.l.b16 %v5779
        %v5867 = vunpack.c.l.b16 %v5780
        %v5868 = vunpack.c.l.b16 %v5781
        %v5869 = vunpack.c.l.b16 %v5782
        %v5870 = vunpack.c.l.b16 %v5783
        %v5871 = vunpack.c.l.b16 %v5784
        %v5872 = vunpack.c.l.b16 %v5785
        %v5873 = vpack.c.b16 %v5858, %v5857
        %v5874 = vpack.c.b16 %v5860, %v5859
        %v5875 = vpack.c.b16 %v5862, %v5861
        %v5876 = vpack.c.b16 %v5864, %v5863
        %v5877 = vpack.c.b16 %v5866, %v5865
        %v5878 = vpack.c.b16 %v5868, %v5867
        %v5879 = vpack.c.b16 %v5870, %v5869
        %v5880 = vpack.c.b16 %v5872, %v5871
        %5889 = vmatprep.subr.bf16.mxu0 0
        %5890 = vmatpush1.bf16.msra.mxu0 %v5880
        %5891 = vmatprep.subr.bf16.mxu0 0
        %5892 = vmatpush1.bf16.msra.mxu0 %v5879
        %5893 = vmatprep.subr.bf16.mxu0 0
        %5894 = vmatpush1.bf16.msra.mxu0 %v5878
        %5895 = vmatprep.subr.bf16.mxu0 0
        %5896 = vmatpush1.bf16.msra.mxu0 %v5877
        %5897 = vmatprep.subr.bf16.mxu0 0
        %5898 = vmatpush1.bf16.msra.mxu0 %v5876
        %5899 = vmatprep.subr.bf16.mxu0 0
        %5900 = vmatpush1.bf16.msra.mxu0 %v5875
        %5901 = vmatprep.subr.bf16.mxu0 0
        %5902 = vmatpush1.bf16.msra.mxu0 %v5874
        %5903 = vmatprep.subr.bf16.mxu0 0
        %5904 = vmatpush1.bf16.msra.mxu0 %v5873
        %5905 = vmatprep.subr.bf16.mxu0 0
        %5906 = vmatpush2.bf16.msra.mxu0 0
        %5907 = vmatprep.subr.bf16.mxu0 0
        %5908 = vmatpush2.bf16.msra.mxu0 0
        %5909 = vmatprep.subr.bf16.mxu0 0
        %5910 = vmatpush2.bf16.msra.mxu0 0
        %5911 = vmatprep.subr.bf16.mxu0 0
        %5912 = vmatpush2.bf16.msra.mxu0 0
        %5913 = vmatprep.subr.bf16.mxu0 0
        %5914 = vmatpush2.bf16.msra.mxu0 0
        %5915 = vmatprep.subr.bf16.mxu0 0
        %5916 = vmatpush2.bf16.msra.mxu0 0
        %5917 = vmatprep.subr.bf16.mxu0 0
        %5918 = vmatpush2.bf16.msra.mxu0 0
        %5919 = vmatprep.subr.bf16.mxu0 0
        %5920 = vmatpush2.bf16.msra.mxu0 0
        %5921 = vmatprep.mubr.bf16.mxu0 0
        %5922 = vmatmul.mubr.bf16.gmra.mxu0 %v5825
        %v5923 = vpop.f32.mrf.mxu0
        %v5924 = vadd.f32 %v5791, %v5923
        %v5925 = vpop.f32.mrf.mxu0
        %v5926 = vpop.f32.mrf.mxu0
        %v5927 = vadd.f32 %v5791, %v5926
        %v5928 = vpop.f32.mrf.mxu0
        %5929 = vmatprep.mubr.bf16.mxu0 0
        %5930 = vmatmul.mubr.bf16.gmra.mxu0 %v5826
        %v5931 = vpop.f32.mrf.mxu0
        %v5932 = vadd.f32 %v5791, %v5931
        %v5933 = vpop.f32.mrf.mxu0
        %v5934 = vpop.f32.mrf.mxu0
        %v5935 = vadd.f32 %v5791, %v5934
        %v5936 = vpop.f32.mrf.mxu0
        %5937 = vmatprep.mubr.bf16.mxu0 0
        %5938 = vmatmul.mubr.bf16.gmra.mxu0 %v5827
        %v5939 = vpop.f32.mrf.mxu0
        %v5940 = vadd.f32 %v5791, %v5939
        %v5941 = vpop.f32.mrf.mxu0
        %v5942 = vpop.f32.mrf.mxu0
        %v5943 = vadd.f32 %v5791, %v5942
        %v5944 = vpop.f32.mrf.mxu0
        %5945 = vmatprep.mubr.bf16.mxu0 0
        %5946 = vmatmul.mubr.bf16.gmra.mxu0 %v5828
        %v5947 = vpop.f32.mrf.mxu0
        %v5948 = vadd.f32 %v5791, %v5947
        %v5949 = vpop.f32.mrf.mxu0
        %v5950 = vpop.f32.mrf.mxu0
        %v5951 = vadd.f32 %v5791, %v5950
        %v5952 = vpop.f32.mrf.mxu0
        %5953 = vmatprep.mubr.bf16.mxu0 0
        %5954 = vmatmul.mubr.bf16.gmra.mxu0 %v5829
        %v5955 = vpop.f32.mrf.mxu0
        %v5956 = vadd.f32 %v5791, %v5955
        %v5957 = vpop.f32.mrf.mxu0
        %v5958 = vpop.f32.mrf.mxu0
        %v5959 = vadd.f32 %v5791, %v5958
        %v5960 = vpop.f32.mrf.mxu0
        %5961 = vmatprep.mubr.bf16.mxu0 0
        %5962 = vmatmul.mubr.bf16.gmra.mxu0 %v5830
        %v5963 = vpop.f32.mrf.mxu0
        %v5964 = vadd.f32 %v5791, %v5963
        %v5965 = vpop.f32.mrf.mxu0
        %v5966 = vpop.f32.mrf.mxu0
        %v5967 = vadd.f32 %v5791, %v5966
        %v5968 = vpop.f32.mrf.mxu0
        %5969 = vmatprep.mubr.bf16.mxu0 0
        %5970 = vmatmul.mubr.bf16.gmra.mxu0 %v5831
        %v5971 = vpop.f32.mrf.mxu0
        %v5972 = vadd.f32 %v5791, %v5971
        %v5973 = vpop.f32.mrf.mxu0
        %v5974 = vpop.f32.mrf.mxu0
        %v5975 = vadd.f32 %v5791, %v5974
        %v5976 = vpop.f32.mrf.mxu0
        %5977 = vmatprep.mubr.bf16.mxu0 0
        %5978 = vmatmul.mubr.bf16.gmra.mxu0 %v5832
        %v5979 = vpop.f32.mrf.mxu0
        %v5980 = vadd.f32 %v5791, %v5979
        %v5981 = vpop.f32.mrf.mxu0
        %v5982 = vpop.f32.mrf.mxu0
        %v5983 = vadd.f32 %v5791, %v5982
        %v5984 = vpop.f32.mrf.mxu0
        %5985 = vdwg.mxu0
        %v5986 = vadd.f32 %v636, %v5924
        %v5987 = vadd.f32 %v772, %v5927
        %v5988 = vadd.f32 %v637, %v5932
        %v5989 = vadd.f32 %v773, %v5935
        %v5990 = vadd.f32 %v638, %v5940
        %v5991 = vadd.f32 %v774, %v5943
        %v5992 = vadd.f32 %v639, %v5948
        %v5993 = vadd.f32 %v775, %v5951
        %v5994 = vadd.f32 %v640, %v5956
        %v5995 = vadd.f32 %v776, %v5959
        %v5996 = vadd.f32 %v641, %v5964
        %v5997 = vadd.f32 %v777, %v5967
        %v5998 = vadd.f32 %v642, %v5972
        %v5999 = vadd.f32 %v778, %v5975
        %v6000 = vadd.f32 %v643, %v5980
        %v6001 = vadd.f32 %v779, %v5983
        %6002 = vadd.xlane.f32.xlu0 %v5986
        %v6003 = vpop.xlane.xlu0 %6002
        %6004 = vadd.xlane.f32.xlu0 %v5987
        %v6005 = vpop.xlane.xlu0 %6004
        %6006 = vadd.xlane.f32.xlu0 %v5988
        %v6007 = vpop.xlane.xlu0 %6006
        %6008 = vadd.xlane.f32.xlu0 %v5989
        %v6009 = vpop.xlane.xlu0 %6008
        %6010 = vadd.xlane.f32.xlu0 %v5990
        %v6011 = vpop.xlane.xlu0 %6010
        %6012 = vadd.xlane.f32.xlu0 %v5991
        %v6013 = vpop.xlane.xlu0 %6012
        %6014 = vadd.xlane.f32.xlu0 %v5992
        %v6015 = vpop.xlane.xlu0 %6014
        %6016 = vadd.xlane.f32.xlu0 %v5993
        %v6017 = vpop.xlane.xlu0 %6016
        %6018 = vadd.xlane.f32.xlu0 %v5994
        %v6019 = vpop.xlane.xlu0 %6018
        %6020 = vadd.xlane.f32.xlu0 %v5995
        %v6021 = vpop.xlane.xlu0 %6020
        %6022 = vadd.xlane.f32.xlu0 %v5996
        %v6023 = vpop.xlane.xlu0 %6022
        %6024 = vadd.xlane.f32.xlu0 %v5997
        %v6025 = vpop.xlane.xlu0 %6024
        %6026 = vadd.xlane.f32.xlu0 %v5998
        %v6027 = vpop.xlane.xlu0 %6026
        %6028 = vadd.xlane.f32.xlu0 %v5999
        %v6029 = vpop.xlane.xlu0 %6028
        %6030 = vadd.xlane.f32.xlu0 %v6000
        %v6031 = vpop.xlane.xlu0 %6030
        %6032 = vadd.xlane.f32.xlu0 %v6001
        %v6033 = vpop.xlane.xlu0 %6032
        %v6034 = vrcp.pop 128.0
        %v6035 = vmul.f32 %v6003, %v6034
        %v6036 = vmul.f32 %v6005, %v6034
        %v6037 = vmul.f32 %v6007, %v6034
        %v6038 = vmul.f32 %v6009, %v6034
        %v6039 = vmul.f32 %v6011, %v6034
        %v6040 = vmul.f32 %v6013, %v6034
        %v6041 = vmul.f32 %v6015, %v6034
        %v6042 = vmul.f32 %v6017, %v6034
        %v6043 = vmul.f32 %v6019, %v6034
        %v6044 = vmul.f32 %v6021, %v6034
        %v6045 = vmul.f32 %v6023, %v6034
        %v6046 = vmul.f32 %v6025, %v6034
        %v6047 = vmul.f32 %v6027, %v6034
        %v6048 = vmul.f32 %v6029, %v6034
        %v6049 = vmul.f32 %v6031, %v6034
        %v6050 = vmul.f32 %v6033, %v6034
        %v6051 = vsub.f32 %v5986, %v6035
        %v6052 = vsub.f32 %v5987, %v6036
        %v6053 = vsub.f32 %v5988, %v6037
        %v6054 = vsub.f32 %v5989, %v6038
        %v6055 = vsub.f32 %v5990, %v6039
        %v6056 = vsub.f32 %v5991, %v6040
        %v6057 = vsub.f32 %v5992, %v6041
        %v6058 = vsub.f32 %v5993, %v6042
        %v6059 = vsub.f32 %v5994, %v6043
        %v6060 = vsub.f32 %v5995, %v6044
        %v6061 = vsub.f32 %v5996, %v6045
        %v6062 = vsub.f32 %v5997, %v6046
        %v6063 = vsub.f32 %v5998, %v6047
        %v6064 = vsub.f32 %v5999, %v6048
        %v6065 = vsub.f32 %v6000, %v6049
        %v6066 = vsub.f32 %v6001, %v6050
        %v6067 = vmul.f32 %v6051, %v6051
        %v6068 = vmul.f32 %v6052, %v6052
        %v6069 = vmul.f32 %v6053, %v6053
        %v6070 = vmul.f32 %v6054, %v6054
        %v6071 = vmul.f32 %v6055, %v6055
        %v6072 = vmul.f32 %v6056, %v6056
        %v6073 = vmul.f32 %v6057, %v6057
        %v6074 = vmul.f32 %v6058, %v6058
        %v6075 = vmul.f32 %v6059, %v6059
        %v6076 = vmul.f32 %v6060, %v6060
        %v6077 = vmul.f32 %v6061, %v6061
        %v6078 = vmul.f32 %v6062, %v6062
        %v6079 = vmul.f32 %v6063, %v6063
        %v6080 = vmul.f32 %v6064, %v6064
        %v6081 = vmul.f32 %v6065, %v6065
        %v6082 = vmul.f32 %v6066, %v6066
        %6083 = vadd.xlane.f32.xlu0 %v6067
        %v6084 = vpop.xlane.xlu0 %6083
        %6085 = vadd.xlane.f32.xlu0 %v6068
        %v6086 = vpop.xlane.xlu0 %6085
        %6087 = vadd.xlane.f32.xlu0 %v6069
        %v6088 = vpop.xlane.xlu0 %6087
        %6089 = vadd.xlane.f32.xlu0 %v6070
        %v6090 = vpop.xlane.xlu0 %6089
        %6091 = vadd.xlane.f32.xlu0 %v6071
        %v6092 = vpop.xlane.xlu0 %6091
        %6093 = vadd.xlane.f32.xlu0 %v6072
        %v6094 = vpop.xlane.xlu0 %6093
        %6095 = vadd.xlane.f32.xlu0 %v6073
        %v6096 = vpop.xlane.xlu0 %6095
        %6097 = vadd.xlane.f32.xlu0 %v6074
        %v6098 = vpop.xlane.xlu0 %6097
        %6099 = vadd.xlane.f32.xlu0 %v6075
        %v6100 = vpop.xlane.xlu0 %6099
        %6101 = vadd.xlane.f32.xlu0 %v6076
        %v6102 = vpop.xlane.xlu0 %6101
        %6103 = vadd.xlane.f32.xlu0 %v6077
        %v6104 = vpop.xlane.xlu0 %6103
        %6105 = vadd.xlane.f32.xlu0 %v6078
        %v6106 = vpop.xlane.xlu0 %6105
        %6107 = vadd.xlane.f32.xlu0 %v6079
        %v6108 = vpop.xlane.xlu0 %6107
        %6109 = vadd.xlane.f32.xlu0 %v6080
        %v6110 = vpop.xlane.xlu0 %6109
        %6111 = vadd.xlane.f32.xlu0 %v6081
        %v6112 = vpop.xlane.xlu0 %6111
        %6113 = vadd.xlane.f32.xlu0 %v6082
        %v6114 = vpop.xlane.xlu0 %6113
        %v6115 = vmul.f32 %v6084, %v6034
        %v6116 = vmul.f32 %v6086, %v6034
        %v6117 = vmul.f32 %v6088, %v6034
        %v6118 = vmul.f32 %v6090, %v6034
        %v6119 = vmul.f32 %v6092, %v6034
        %v6120 = vmul.f32 %v6094, %v6034
        %v6121 = vmul.f32 %v6096, %v6034
        %v6122 = vmul.f32 %v6098, %v6034
        %v6123 = vmul.f32 %v6100, %v6034
        %v6124 = vmul.f32 %v6102, %v6034
        %v6125 = vmul.f32 %v6104, %v6034
        %v6126 = vmul.f32 %v6106, %v6034
        %v6127 = vmul.f32 %v6108, %v6034
        %v6128 = vmul.f32 %v6110, %v6034
        %v6129 = vmul.f32 %v6112, %v6034
        %v6130 = vmul.f32 %v6114, %v6034
        %v6131 = vadd.f32 %v6115, 1e-05
        %v6132 = vadd.f32 %v6116, 1e-05
        %v6133 = vadd.f32 %v6117, 1e-05
        %v6134 = vadd.f32 %v6118, 1e-05
        %v6135 = vadd.f32 %v6119, 1e-05
        %v6136 = vadd.f32 %v6120, 1e-05
        %v6137 = vadd.f32 %v6121, 1e-05
        %v6138 = vadd.f32 %v6122, 1e-05
        %v6139 = vadd.f32 %v6123, 1e-05
        %v6140 = vadd.f32 %v6124, 1e-05
        %v6141 = vadd.f32 %v6125, 1e-05
        %v6142 = vadd.f32 %v6126, 1e-05
        %v6143 = vadd.f32 %v6127, 1e-05
        %v6144 = vadd.f32 %v6128, 1e-05
        %v6145 = vadd.f32 %v6129, 1e-05
        %v6146 = vadd.f32 %v6130, 1e-05
        %v6147 = vrsqrt.pop %v6131
        %v6148 = vrsqrt.pop %v6132
        %v6149 = vrsqrt.pop %v6133
        %v6150 = vrsqrt.pop %v6134
        %v6151 = vrsqrt.pop %v6135
        %v6152 = vrsqrt.pop %v6136
        %v6153 = vrsqrt.pop %v6137
        %v6154 = vrsqrt.pop %v6138
        %v6155 = vrsqrt.pop %v6139
        %v6156 = vrsqrt.pop %v6140
        %v6157 = vrsqrt.pop %v6141
        %v6158 = vrsqrt.pop %v6142
        %v6159 = vrsqrt.pop %v6143
        %v6160 = vrsqrt.pop %v6144
        %v6161 = vrsqrt.pop %v6145
        %v6162 = vrsqrt.pop %v6146
        %v6163 = vmul.f32 %v6051, %v6147
        %v6164 = vmul.f32 %v6052, %v6148
        %v6165 = vmul.f32 %v6053, %v6149
        %v6166 = vmul.f32 %v6054, %v6150
        %v6167 = vmul.f32 %v6055, %v6151
        %v6168 = vmul.f32 %v6056, %v6152
        %v6169 = vmul.f32 %v6057, %v6153
        %v6170 = vmul.f32 %v6058, %v6154
        %v6171 = vmul.f32 %v6059, %v6155
        %v6172 = vmul.f32 %v6060, %v6156
        %v6173 = vmul.f32 %v6061, %v6157
        %v6174 = vmul.f32 %v6062, %v6158
        %v6175 = vmul.f32 %v6063, %v6159
        %v6176 = vmul.f32 %v6064, %v6160
        %v6177 = vmul.f32 %v6065, %v6161
        %v6178 = vmul.f32 %v6066, %v6162
        %v6179 = vld [vmem:[%s8] sm:$0x1]
        %v6181 = vlaneseq
        %v6182 = vshrl.u32 %v6181, 7
        %v6183 = vsub.s32 0, %v6182
        %v6184 = vrot.slane %v6179, %v6183
        %v6186 = vmul.f32 %v6163, %v6184
        %v6187 = vmul.f32 %v6164, %v6184
        %v6188 = vmul.f32 %v6165, %v6184
        %v6189 = vmul.f32 %v6166, %v6184
        %v6190 = vmul.f32 %v6167, %v6184
        %v6191 = vmul.f32 %v6168, %v6184
        %v6192 = vmul.f32 %v6169, %v6184
        %v6193 = vmul.f32 %v6170, %v6184
        %v6194 = vmul.f32 %v6171, %v6184
        %v6195 = vmul.f32 %v6172, %v6184
        %v6196 = vmul.f32 %v6173, %v6184
        %v6197 = vmul.f32 %v6174, %v6184
        %v6198 = vmul.f32 %v6175, %v6184
        %v6199 = vmul.f32 %v6176, %v6184
        %v6200 = vmul.f32 %v6177, %v6184
        %v6201 = vmul.f32 %v6178, %v6184
        %v6202 = vld [vmem:[%s9] sm:$0x1]
        %v6204 = vlaneseq
        %v6205 = vshrl.u32 %v6204, 7
        %v6206 = vsub.s32 0, %v6205
        %v6207 = vrot.slane %v6202, %v6206
        %v6209 = vadd.f32 %v6186, %v6207
        %v6210 = vadd.f32 %v6187, %v6207
        %v6211 = vadd.f32 %v6188, %v6207
        %v6212 = vadd.f32 %v6189, %v6207
        %v6213 = vadd.f32 %v6190, %v6207
        %v6214 = vadd.f32 %v6191, %v6207
        %v6215 = vadd.f32 %v6192, %v6207
        %v6216 = vadd.f32 %v6193, %v6207
        %v6217 = vadd.f32 %v6194, %v6207
        %v6218 = vadd.f32 %v6195, %v6207
        %v6219 = vadd.f32 %v6196, %v6207
        %v6220 = vadd.f32 %v6197, %v6207
        %v6221 = vadd.f32 %v6198, %v6207
        %v6222 = vadd.f32 %v6199, %v6207
        %v6223 = vadd.f32 %v6200, %v6207
        %v6224 = vadd.f32 %v6201, %v6207
        %v6225 = vcombine.low %v6209, %v6213
        %v6226 = vcombine.high %v6209, %v6213
        %v6228 = vunpack.c.l.s4 1983009808
        %v6229 = vunpack.c.0.s8 %v6228
        %v6230 = vlaneseq
        %v6231 = vshrl.u32 %v6230, 7
        %v6232 = vsub.s32 %v6229, %v6231
        %v6233 = vrot.slane %v6225, %v6232
        %v6235 = vunpack.c.l.s4 1983009808
        %v6236 = vunpack.c.0.s8 %v6235
        %v6237 = vlaneseq
        %v6238 = vshrl.u32 %v6237, 7
        %v6239 = vsub.s32 %v6236, %v6238
        %v6240 = vrot.slane %v6226, %v6239
        %v6241 = vcombine.low %v6211, %v6215
        %v6242 = vcombine.high %v6211, %v6215
        %v6244 = vunpack.c.l.s4 1983009808
        %v6245 = vunpack.c.0.s8 %v6244
        %v6246 = vlaneseq
        %v6247 = vshrl.u32 %v6246, 7
        %v6248 = vsub.s32 %v6245, %v6247
        %v6249 = vrot.slane %v6241, %v6248
        %v6251 = vunpack.c.l.s4 1983009808
        %v6252 = vunpack.c.0.s8 %v6251
        %v6253 = vlaneseq
        %v6254 = vshrl.u32 %v6253, 7
        %v6255 = vsub.s32 %v6252, %v6254
        %v6256 = vrot.slane %v6242, %v6255
        %v6257 = vcombine.low %v6217, %v6221
        %v6258 = vcombine.high %v6217, %v6221
        %v6260 = vunpack.c.l.s4 1983009808
        %v6261 = vunpack.c.0.s8 %v6260
        %v6262 = vlaneseq
        %v6263 = vshrl.u32 %v6262, 7
        %v6264 = vsub.s32 %v6261, %v6263
        %v6265 = vrot.slane %v6257, %v6264
        %v6267 = vunpack.c.l.s4 1983009808
        %v6268 = vunpack.c.0.s8 %v6267
        %v6269 = vlaneseq
        %v6270 = vshrl.u32 %v6269, 7
        %v6271 = vsub.s32 %v6268, %v6270
        %v6272 = vrot.slane %v6258, %v6271
        %v6273 = vcombine.low %v6219, %v6223
        %v6274 = vcombine.high %v6219, %v6223
        %v6276 = vunpack.c.l.s4 1983009808
        %v6277 = vunpack.c.0.s8 %v6276
        %v6278 = vlaneseq
        %v6279 = vshrl.u32 %v6278, 7
        %v6280 = vsub.s32 %v6277, %v6279
        %v6281 = vrot.slane %v6273, %v6280
        %v6283 = vunpack.c.l.s4 1983009808
        %v6284 = vunpack.c.0.s8 %v6283
        %v6285 = vlaneseq
        %v6286 = vshrl.u32 %v6285, 7
        %v6287 = vsub.s32 %v6284, %v6286
        %v6288 = vrot.slane %v6274, %v6287
        %v6289 = vcombine.low %v6233, %v6249
        %v6290 = vcombine.high %v6233, %v6249
        %v6292 = vunpack.c.l.s4 1934713408
        %v6293 = vunpack.c.0.s8 %v6292
        %v6294 = vlaneseq
        %v6295 = vshrl.u32 %v6294, 7
        %v6296 = vsub.s32 %v6293, %v6295
        %v6297 = vrot.slane %v6289, %v6296
        %v6299 = vunpack.c.l.s4 1934713408
        %v6300 = vunpack.c.0.s8 %v6299
        %v6301 = vlaneseq
        %v6302 = vshrl.u32 %v6301, 7
        %v6303 = vsub.s32 %v6300, %v6302
        %v6304 = vrot.slane %v6290, %v6303
        %v6305 = vcombine.low %v6240, %v6256
        %v6306 = vcombine.high %v6240, %v6256
        %v6308 = vunpack.c.l.s4 1934713408
        %v6309 = vunpack.c.0.s8 %v6308
        %v6310 = vlaneseq
        %v6311 = vshrl.u32 %v6310, 7
        %v6312 = vsub.s32 %v6309, %v6311
        %v6313 = vrot.slane %v6305, %v6312
        %v6315 = vunpack.c.l.s4 1934713408
        %v6316 = vunpack.c.0.s8 %v6315
        %v6317 = vlaneseq
        %v6318 = vshrl.u32 %v6317, 7
        %v6319 = vsub.s32 %v6316, %v6318
        %v6320 = vrot.slane %v6306, %v6319
        %v6321 = vcombine.low %v6265, %v6281
        %v6322 = vcombine.high %v6265, %v6281
        %v6324 = vunpack.c.l.s4 1934713408
        %v6325 = vunpack.c.0.s8 %v6324
        %v6326 = vlaneseq
        %v6327 = vshrl.u32 %v6326, 7
        %v6328 = vsub.s32 %v6325, %v6327
        %v6329 = vrot.slane %v6321, %v6328
        %v6331 = vunpack.c.l.s4 1934713408
        %v6332 = vunpack.c.0.s8 %v6331
        %v6333 = vlaneseq
        %v6334 = vshrl.u32 %v6333, 7
        %v6335 = vsub.s32 %v6332, %v6334
        %v6336 = vrot.slane %v6322, %v6335
        %v6337 = vcombine.low %v6272, %v6288
        %v6338 = vcombine.high %v6272, %v6288
        %v6340 = vunpack.c.l.s4 1934713408
        %v6341 = vunpack.c.0.s8 %v6340
        %v6342 = vlaneseq
        %v6343 = vshrl.u32 %v6342, 7
        %v6344 = vsub.s32 %v6341, %v6343
        %v6345 = vrot.slane %v6337, %v6344
        %v6347 = vunpack.c.l.s4 1934713408
        %v6348 = vunpack.c.0.s8 %v6347
        %v6349 = vlaneseq
        %v6350 = vshrl.u32 %v6349, 7
        %v6351 = vsub.s32 %v6348, %v6350
        %v6352 = vrot.slane %v6338, %v6351
        %v6353 = vcombine.low %v6297, %v6329
        %v6354 = vcombine.high %v6297, %v6329
        %v6355 = vcombine.low %v6304, %v6336
        %v6356 = vcombine.high %v6304, %v6336
        %v6357 = vcombine.low %v6313, %v6345
        %v6358 = vcombine.high %v6313, %v6345
        %v6359 = vcombine.low %v6320, %v6352
        %v6360 = vcombine.high %v6320, %v6352
        %v6361 = vcombine.low %v6210, %v6214
        %v6362 = vcombine.high %v6210, %v6214
        %v6364 = vunpack.c.l.s4 1983009808
        %v6365 = vunpack.c.0.s8 %v6364
        %v6366 = vlaneseq
        %v6367 = vshrl.u32 %v6366, 7
        %v6368 = vsub.s32 %v6365, %v6367
        %v6369 = vrot.slane %v6361, %v6368
        %v6371 = vunpack.c.l.s4 1983009808
        %v6372 = vunpack.c.0.s8 %v6371
        %v6373 = vlaneseq
        %v6374 = vshrl.u32 %v6373, 7
        %v6375 = vsub.s32 %v6372, %v6374
        %v6376 = vrot.slane %v6362, %v6375
        %v6377 = vcombine.low %v6212, %v6216
        %v6378 = vcombine.high %v6212, %v6216
        %v6380 = vunpack.c.l.s4 1983009808
        %v6381 = vunpack.c.0.s8 %v6380
        %v6382 = vlaneseq
        %v6383 = vshrl.u32 %v6382, 7
        %v6384 = vsub.s32 %v6381, %v6383
        %v6385 = vrot.slane %v6377, %v6384
        %v6387 = vunpack.c.l.s4 1983009808
        %v6388 = vunpack.c.0.s8 %v6387
        %v6389 = vlaneseq
        %v6390 = vshrl.u32 %v6389, 7
        %v6391 = vsub.s32 %v6388, %v6390
        %v6392 = vrot.slane %v6378, %v6391
        %v6393 = vcombine.low %v6218, %v6222
        %v6394 = vcombine.high %v6218, %v6222
        %v6396 = vunpack.c.l.s4 1983009808
        %v6397 = vunpack.c.0.s8 %v6396
        %v6398 = vlaneseq
        %v6399 = vshrl.u32 %v6398, 7
        %v6400 = vsub.s32 %v6397, %v6399
        %v6401 = vrot.slane %v6393, %v6400
        %v6403 = vunpack.c.l.s4 1983009808
        %v6404 = vunpack.c.0.s8 %v6403
        %v6405 = vlaneseq
        %v6406 = vshrl.u32 %v6405, 7
        %v6407 = vsub.s32 %v6404, %v6406
        %v6408 = vrot.slane %v6394, %v6407
        %v6409 = vcombine.low %v6220, %v6224
        %v6410 = vcombine.high %v6220, %v6224
        %v6412 = vunpack.c.l.s4 1983009808
        %v6413 = vunpack.c.0.s8 %v6412
        %v6414 = vlaneseq
        %v6415 = vshrl.u32 %v6414, 7
        %v6416 = vsub.s32 %v6413, %v6415
        %v6417 = vrot.slane %v6409, %v6416
        %v6419 = vunpack.c.l.s4 1983009808
        %v6420 = vunpack.c.0.s8 %v6419
        %v6421 = vlaneseq
        %v6422 = vshrl.u32 %v6421, 7
        %v6423 = vsub.s32 %v6420, %v6422
        %v6424 = vrot.slane %v6410, %v6423
        %v6425 = vcombine.low %v6369, %v6385
        %v6426 = vcombine.high %v6369, %v6385
        %v6428 = vunpack.c.l.s4 1934713408
        %v6429 = vunpack.c.0.s8 %v6428
        %v6430 = vlaneseq
        %v6431 = vshrl.u32 %v6430, 7
        %v6432 = vsub.s32 %v6429, %v6431
        %v6433 = vrot.slane %v6425, %v6432
        %v6435 = vunpack.c.l.s4 1934713408
        %v6436 = vunpack.c.0.s8 %v6435
        %v6437 = vlaneseq
        %v6438 = vshrl.u32 %v6437, 7
        %v6439 = vsub.s32 %v6436, %v6438
        %v6440 = vrot.slane %v6426, %v6439
        %v6441 = vcombine.low %v6376, %v6392
        %v6442 = vcombine.high %v6376, %v6392
        %v6444 = vunpack.c.l.s4 1934713408
        %v6445 = vunpack.c.0.s8 %v6444
        %v6446 = vlaneseq
        %v6447 = vshrl.u32 %v6446, 7
        %v6448 = vsub.s32 %v6445, %v6447
        %v6449 = vrot.slane %v6441, %v6448
        %v6451 = vunpack.c.l.s4 1934713408
        %v6452 = vunpack.c.0.s8 %v6451
        %v6453 = vlaneseq
        %v6454 = vshrl.u32 %v6453, 7
        %v6455 = vsub.s32 %v6452, %v6454
        %v6456 = vrot.slane %v6442, %v6455
        %v6457 = vcombine.low %v6401, %v6417
        %v6458 = vcombine.high %v6401, %v6417
        %v6460 = vunpack.c.l.s4 1934713408
        %v6461 = vunpack.c.0.s8 %v6460
        %v6462 = vlaneseq
        %v6463 = vshrl.u32 %v6462, 7
        %v6464 = vsub.s32 %v6461, %v6463
        %v6465 = vrot.slane %v6457, %v6464
        %v6467 = vunpack.c.l.s4 1934713408
        %v6468 = vunpack.c.0.s8 %v6467
        %v6469 = vlaneseq
        %v6470 = vshrl.u32 %v6469, 7
        %v6471 = vsub.s32 %v6468, %v6470
        %v6472 = vrot.slane %v6458, %v6471
        %v6473 = vcombine.low %v6408, %v6424
        %v6474 = vcombine.high %v6408, %v6424
        %v6476 = vunpack.c.l.s4 1934713408
        %v6477 = vunpack.c.0.s8 %v6476
        %v6478 = vlaneseq
        %v6479 = vshrl.u32 %v6478, 7
        %v6480 = vsub.s32 %v6477, %v6479
        %v6481 = vrot.slane %v6473, %v6480
        %v6483 = vunpack.c.l.s4 1934713408
        %v6484 = vunpack.c.0.s8 %v6483
        %v6485 = vlaneseq
        %v6486 = vshrl.u32 %v6485, 7
        %v6487 = vsub.s32 %v6484, %v6486
        %v6488 = vrot.slane %v6474, %v6487
        %v6489 = vcombine.low %v6433, %v6465
        %v6490 = vcombine.high %v6433, %v6465
        %v6491 = vcombine.low %v6440, %v6472
        %v6492 = vcombine.high %v6440, %v6472
        %v6493 = vcombine.low %v6449, %v6481
        %v6494 = vcombine.high %v6449, %v6481
        %v6495 = vcombine.low %v6456, %v6488
        %v6496 = vcombine.high %v6456, %v6488
        %6497 = vst [vmem:[%s458] sm:$0xff] %v6353
        %6498 = vst [vmem:[%s458 + $0x8] sm:$0xff] %v6354
        %6499 = vst [vmem:[%s458 + $0x10] sm:$0xff] %v6355
        %6500 = vst [vmem:[%s458 + $0x18] sm:$0xff] %v6356
        %6501 = vst [vmem:[%s458 + $0x20] sm:$0xff] %v6357
        %6502 = vst [vmem:[%s458 + $0x28] sm:$0xff] %v6358
        %6503 = vst [vmem:[%s458 + $0x30] sm:$0xff] %v6359
        %6504 = vst [vmem:[%s458 + $0x38] sm:$0xff] %v6360
        %6505 = vst [vmem:[%s458 + $0x40] sm:$0xff] %v6489
        %6506 = vst [vmem:[%s458 + $0x48] sm:$0xff] %v6490
        %6507 = vst [vmem:[%s458 + $0x50] sm:$0xff] %v6491
        %6508 = vst [vmem:[%s458 + $0x58] sm:$0xff] %v6492
        %6509 = vst [vmem:[%s458 + $0x60] sm:$0xff] %v6493
        %6510 = vst [vmem:[%s458 + $0x68] sm:$0xff] %v6494
        %6511 = vst [vmem:[%s458 + $0x70] sm:$0xff] %v6495
        %6512 = vst [vmem:[%s458 + $0x78] sm:$0xff] %v6496
        %s6513 = sand.u32 %s259, 1
        %s6514 = scalar_lea.sflag [#allocation5], %s6513
        %s6515 = sand.u32 %s259, 1
        %s6516 = smul.addr %s6515, 128
        %s6517 = scalar_lea.vmem [#allocation12], %s6516
        // Predicated region
        $region81: #{tpu_custom_call.1} parent=59 // pred_check
          %p6518 = pneg %p269
        $region82: #{tpu_custom_call.1} parent=59 // pred_check_branch
          %6520 = sbr.rel (%p6518) target = $region84
        $region83: #{tpu_custom_call.1} parent=59 // pred_region
          %s6522 = ssub.s32 2048, 2048
          %6523 = vsyncadd %s6514, %s6522
          %s6524 = smul.addr %s31, 128
          %s6525 = scalar_lea.hbm %s10, %s6524
          %s6526 = sshll.u32 %s6517, 4
          %s6527 = int_to_ptr.vmem [resolvable:$true] %s6526
          %6532 = dma.vmem_to_hbm [thread:$0]  %s6527, 2048, %s6525, %s6514, 128, 256, 8
        $region84: #{tpu_custom_call.1} parent=59 // pred_fallthru
          _
      $region60: #{tpu_custom_call.1} parent=5 // pred_fallthru
        _
      %p6533 = scmp.le.s32.totalorder 2, %s26
      // Predicated region
      $region85: #{tpu_custom_call.1} parent=5 // pred_check
        %p6534 = pneg %p6533
      $region86: #{tpu_custom_call.1} parent=5 // pred_check_branch
        %6536 = sbr.rel (%p6534) target = $region88
      $region87: #{tpu_custom_call.1} parent=5 // pred_region
        %s6537 = ssub.s32 %s26, 2
        // Predicated region
        $region89: #{tpu_custom_call.1} parent=87 // pred_check
          %p6538 = pneg %p275
        $region90: #{tpu_custom_call.1} parent=87 // pred_check_branch
          %6540 = sbr.rel (%p6538) target = $region92
        $region91: #{tpu_custom_call.1} parent=87 // pred_region
          %s6541 = sand.u32 %s260, 1
          %s6542 = scalar_lea.sflag [#allocation5], %s6541
          %s6543 = sand.u32 %s260, 1
          %s6544 = smul.addr %s6543, 128
          %s6545 = scalar_lea.vmem [#allocation12], %s6544
          %6546 = dma.done %s6542, 2048
        $region92: #{tpu_custom_call.1} parent=87 // pred_fallthru
          _
      $region88: #{tpu_custom_call.1} parent=5 // pred_fallthru
        _
    $region6: #{tpu_custom_call.1} parent=1 // loop_footer
      %s30 = sadd.s32 1, %s26
    $region7: #{tpu_custom_call.1} parent=1 // loop_footer_branch
      %25 = sbr.rel target = $region3
    $region8: #{tpu_custom_call.1} parent=1 // loop_exit
      _
    %6547 = vsyncpa [#allocation4], 1
    %s6548 = scalar_lea.sflag [#allocation4], 1
    %6549 = vsyncpa %s6548, 1
    %6550 = vsyncpa [#allocation7], 1
    %s6551 = scalar_lea.sflag [#allocation7], 1
    %6552 = vsyncpa %s6551, 1
    %6553 = vsyncpa [#allocation10], 1
    %6554 = vsyncpa [#allocation5], 1
    %s6555 = scalar_lea.sflag [#allocation5], 1
    %6556 = vsyncpa %s6555, 1

</llo_original>
